<compile_context>
chip_gen: v7x
topology: tpu7x:2x2x1
jax: 0.10.0
libtpu: 0.0.40
codegen_flags: <defaults>
</compile_context>

<pallas_src>
import functools
import math

import numpy as np
import jax
import jax.numpy as jnp
from jax.experimental import pallas as pl
from jax.experimental.pallas import tpu as pltpu

# ----------------------- scaled-down VGG16 configuration -----------------------
E = 32                     # hidden_size1 (PyTorch: 1000); divisible by NUM_HEADS
NUM_HEADS = 8
HEAD_DIM = E // NUM_HEADS
CFG = [4, 4, 'M', 8, 8, 'M', 16, 16, 16, 'M', 32, 32, 32, 'M', 32, 32, 32, 'M']
FC_HIDDEN = 64             # PyTorch: 4096
B = 2                      # batch (== attention sequence length)
IMG = 32                   # input spatial size
LANES = 128                # all slabs / packed parameter blocks are 128 lanes wide
VMEM = pltpu.MemorySpace.VMEM


# ------------------------------ parameters (PyTorch layout) ---------------------
def init_params(key):
    keys = jax.random.split(key, 64)
    ki = iter(keys)

    def nrm(shape, std):
        return std * jax.random.normal(next(ki), shape, dtype=jnp.float32)

    params = {}
    # stem: nn.Conv2d(1, 3, 1)
    params['stem_w'] = nrm((3, 1, 1, 1), 1.0)
    params['stem_b'] = nrm((3,), 0.1)
    # VGG16 features (scaled): 13x conv3x3 + ReLU, 5 maxpools
    convs = []
    cin = 3
    for c in CFG:
        if c == 'M':
            continue
        convs.append((nrm((c, cin, 3, 3), 1.0 / math.sqrt(9.0 * cin)), nrm((c,), 0.01)))
        cin = c
    params['convs'] = convs
    # VGG classifier (scaled): Linear->ReLU->Dropout->Linear->ReLU->Dropout->Linear
    flat = cin * 7 * 7
    params['fc1_w'] = nrm((flat, FC_HIDDEN), 1.0 / math.sqrt(flat))
    params['fc1_b'] = nrm((1, FC_HIDDEN), 0.01)
    params['fc2_w'] = nrm((FC_HIDDEN, FC_HIDDEN), 1.0 / math.sqrt(FC_HIDDEN))
    params['fc2_b'] = nrm((1, FC_HIDDEN), 0.01)
    params['fc3_w'] = nrm((FC_HIDDEN, E), 1.0 / math.sqrt(FC_HIDDEN))
    params['fc3_b'] = nrm((1, E), 0.01)
    # nn.MultiheadAttention(E, 8): in_proj (q,k,v) + out_proj  (stored as x @ W)
    std_e = 1.0 / math.sqrt(E)
    for name in ('wq', 'wk', 'wv', 'wo'):
        params['att_' + name] = nrm((E, E), std_e)
    for name in ('bq', 'bk', 'bv', 'bo'):
        params['att_' + name] = nrm((1, E), 0.01)
    # nn.Linear(E, 1)
    params['cls_w'] = nrm((E, 1), std_e)
    params['cls_b'] = nrm((1, 1), 0.01)
    return params


# ------------------------------ offline parameter packing -----------------------
def _align8(n):
    return ((n + 7) // 8) * 8


class _Packer:
    """Packs many small matrices into one (rows, 128) f32 slab.
    Every block starts at an 8-aligned row offset; layout[name] = (row0, nrows, ncols)."""

    def __init__(self):
        self._blocks = []
        self.layout = {}

    def add(self, name, mat):
        mat = np.asarray(mat, np.float32)
        if mat.ndim == 1:
            mat = mat[None, :]
        self._blocks.append((name, mat))

    def pack(self):
        chunks, off = [], 0
        for name, mat in self._blocks:
            nr, nc = mat.shape
            nrp = _align8(nr)
            buf = np.zeros((nrp, LANES), np.float32)
            buf[:nr, :nc] = mat
            self.layout[name] = (off, nr, nc)
            chunks.append(buf)
            off += nrp
        return np.concatenate(chunks, axis=0)


def _embed128(mat):
    out = np.zeros((LANES, LANES), np.float32)
    m = np.asarray(mat, np.float32)
    out[:m.shape[0], :m.shape[1]] = m
    return out


def _bias_row(v):
    v = np.asarray(v, np.float32).reshape(-1)
    out = np.zeros((1, LANES), np.float32)
    out[0, :v.size] = v
    return out


def _conv_tap_mats(w, sp):
    """w: (Cout, Cin, 3, 3) torch layout.  Returns 3 matrices (ky = 0,1,2), each
    128x128, with R[xi*Cin+ci, xo*Cout+co] = w[co, ci, ky, xi-xo+1] (zero-padded
    horizontal border handled by simply dropping out-of-range xi)."""
    cout, cin = w.shape[0], w.shape[1]
    mats = []
    for ky in range(3):
        R = np.zeros((LANES, LANES), np.float32)
        for xo in range(sp):
            for kx in range(3):
                xi = xo + kx - 1
                if 0 <= xi < sp:
                    R[xi * cin:(xi + 1) * cin, xo * cout:(xo + 1) * cout] = w[:, :, ky, kx].T
        mats.append(R)
    return mats


def _vshift_mat(batch, h, dy):
    """0/1 matrix M with (M @ X)[b*h+y] = X[b*h+y+dy] (zero outside the image)."""
    M = np.zeros((batch * h, batch * h), np.float32)
    for b in range(batch):
        for y in range(h):
            yi = y + dy
            if 0 <= yi < h:
                M[b * h + y, b * h + yi] = 1.0
    return M


def _pool_row_mat(batch, h, parity):
    ho = h // 2
    M = np.zeros((batch * ho, batch * h), np.float32)
    for b in range(batch):
        for yo in range(ho):
            M[b * ho + yo, b * h + 2 * yo + parity] = 1.0
    return M


def _pool_lane_mat(sp, c, parity):
    wo = sp // 2
    M = np.zeros((LANES, LANES), np.float32)
    for xo in range(wo):
        xi = 2 * xo + parity
        for ch in range(c):
            M[xi * c + ch, xo * c + ch] = 1.0
    return M


def _head_group_mats():
    G = np.zeros((LANES, LANES), np.float32)
    GT = np.zeros((LANES, LANES), np.float32)
    for h in range(NUM_HEADS):
        for d in range(HEAD_DIM):
            G[h * HEAD_DIM + d, h] = 1.0
            GT[h, h * HEAD_DIM + d] = 1.0
    return G, GT


def pack_params(params):
    """Offline weight prep: lower convs to lane-dense tap matrices, build the exact
    0/1 shift / pool / head-grouping selectors, fold AdaptiveAvgPool(7,7) into fc1,
    and pack everything into a single (rows, 128) f32 slab."""
    pk = _Packer()
    get = lambda a: np.asarray(jax.device_get(a), np.float32)

    # stem Conv2d(1, 3, 1) as a lane-expansion matmul (kept separate from conv1 so the
    # zero-padding of conv1 stays exact at the image border; it is fused in-kernel anyway)
    ws = get(params['stem_w']).reshape(3)
    rstem = np.zeros((LANES, LANES), np.float32)
    for x in range(IMG):
        rstem[x, x * 3:(x + 1) * 3] = ws
    pk.add('stem_w', rstem)
    pk.add('stem_b', _bias_row(np.tile(get(params['stem_b']), IMG)))

    sp, cin, ci = IMG, 3, 0
    sv_added = set()
    for c in CFG:
        if c == 'M':
            pk.add(f'pool{sp}_pe', _pool_row_mat(B, sp, 0))
            pk.add(f'pool{sp}_po', _pool_row_mat(B, sp, 1))
            pk.add(f'pool{sp}_qe', _pool_lane_mat(sp, cin, 0))
            pk.add(f'pool{sp}_qo', _pool_lane_mat(sp, cin, 1))
            sp //= 2
        else:
            w, b = params['convs'][ci]
            taps = _conv_tap_mats(get(w), sp)
            for t in range(3):
                pk.add(f'conv{ci}_r{t}', taps[t])
            pk.add(f'conv{ci}_b', _bias_row(np.tile(get(b), sp)))
            if sp not in sv_added:
                pk.add(f'sv{sp}_m', _vshift_mat(B, sp, -1))
                pk.add(f'sv{sp}_p', _vshift_mat(B, sp, +1))
                sv_added.add(sp)
            cin, ci = c, ci + 1

    # AdaptiveAvgPool2d((7,7)) on a 1x1 map replicates each channel 49x; fold the 49
    # identical fc1 weight rows per channel into one (exact up to summation order).
    fc1 = get(params['fc1_w']).reshape(cin, 49, FC_HIDDEN).sum(axis=1)
    pk.add('fc1_w', _embed128(fc1));                    pk.add('fc1_b', _bias_row(get(params['fc1_b'])))
    pk.add('fc2_w', _embed128(get(params['fc2_w'])));   pk.add('fc2_b', _bias_row(get(params['fc2_b'])))
    pk.add('fc3_w', _embed128(get(params['fc3_w'])));   pk.add('fc3_b', _bias_row(get(params['fc3_b'])))

    for n in ('wq', 'wk', 'wv', 'wo'):
        pk.add(f'att_{n}', _embed128(get(params['att_' + n])))
    for n in ('bq', 'bk', 'bv', 'bo'):
        pk.add(f'att_{n}', _bias_row(get(params['att_' + n])))
    G, GT = _head_group_mats()
    pk.add('att_g', G)
    pk.add('att_gt', GT)
    pk.add('cls_w', _embed128(get(params['cls_w'])))
    pk.add('cls_b', _bias_row(get(params['cls_b'])))

    return jnp.asarray(pk.pack()), pk.layout


# ------------------------------ fused Pallas kernel ------------------------------
def _vgg_mha_kernel(x_ref, p_ref, o_ref, *, layout):
    def blk(name):
        r0, nr, nc = layout[name]
        return p_ref[r0:r0 + nr, 0:nc]

    def mm(a, b):
        return jnp.dot(a, b, preferred_element_type=jnp.float32)

    # ---- stem 1x1 conv (1 -> 3 channels), no activation ----
    a = mm(x_ref[...], blk('stem_w')) + blk('stem_b')          # (B*32, 128)

    # ---- VGG features: slab layout (B*H, 128), lane = x*C + c ----
    sp, ci = IMG, 0
    for c in CFG:
        if c == 'M':
            # 2x2 max-pool: exact 0/1 row-selection then lane-selection matmuls
            a = jnp.maximum(mm(blk(f'pool{sp}_pe'), a), mm(blk(f'pool{sp}_po'), a))
            a = jnp.maximum(mm(a, blk(f'pool{sp}_qe')), mm(a, blk(f'pool{sp}_qo')))
            sp //= 2
        else:
            # conv3x3 (pad=1): three tap-group matmuls + vertical shift matmuls
            t_m = mm(a, blk(f'conv{ci}_r0'))                   # dy = -1 taps
            t_0 = mm(a, blk(f'conv{ci}_r1'))                   # dy =  0 taps
            t_p = mm(a, blk(f'conv{ci}_r2'))                   # dy = +1 taps
            acc = t_0 + mm(blk(f'sv{sp}_m'), t_m) + mm(blk(f'sv{sp}_p'), t_p)
            a = jnp.maximum(acc + blk(f'conv{ci}_b'), 0.0)
            ci += 1

    # ---- classifier FCs (adaptive-pool replication folded into fc1) ----
    # TODO(synk): Dropout layers treated as identity (eval-mode); train-mode RNG dropout not implemented.
    a = jnp.maximum(mm(a, blk('fc1_w')) + blk('fc1_b'), 0.0)
    a = jnp.maximum(mm(a, blk('fc2_w')) + blk('fc2_b'), 0.0)
    f = mm(a, blk('fc3_w')) + blk('fc3_b')                     # (B, 128), real lanes = E

    # ---- multi-head attention: query = mean over the B "sequence" rows ----
    q = mm(jnp.mean(f, axis=0, keepdims=True), blk('att_wq')) + blk('att_bq')   # (1, 128)
    k = mm(f, blk('att_wk')) + blk('att_bk')                                     # (B, 128)
    v = mm(f, blk('att_wv')) + blk('att_bv')                                     # (B, 128)
    # per-head scores via a head-grouping matmul (no per-head loop / concatenate)
    s = mm(k * q, blk('att_g')) * (1.0 / math.sqrt(HEAD_DIM))  # (B, 128), real lanes = heads
    s = s - jnp.max(s, axis=0, keepdims=True)
    p = jnp.exp(s)
    p = p / jnp.sum(p, axis=0, keepdims=True)                  # softmax over the seq axis
    p_full = mm(p, blk('att_gt'))                              # expand head weights to lanes
    attn = jnp.sum(p_full * v, axis=0, keepdims=True)          # (1, 128)
    attn = mm(attn, blk('att_wo')) + blk('att_bo')
    out = mm(attn, blk('cls_w')) + blk('cls_b')                # (1, 128), real lane 0
    o_ref[...] = out[:, 0:1]


# ------------------------------ wrapper -------------------------------------------
def build_forward(layout):
    kernel = functools.partial(_vgg_mha_kernel, layout=layout)

    def forward(packed_params, x_nchw):
        n = x_nchw.shape[0]
        # NCHW (n,1,H,W) -> slab (n*H, W) with lane = x (Cin = 1), lane-padded to 128.
        xs = x_nchw[:, 0, :, :].reshape(n * IMG, IMG)
        xs = jnp.pad(xs, ((0, 0), (0, LANES - IMG)))
        return pl.pallas_call(
            kernel,
            out_shape=jax.ShapeDtypeStruct((1, 1), jnp.float32),
            in_specs=[pl.BlockSpec(memory_space=VMEM),
                      pl.BlockSpec(memory_space=VMEM)],
            out_specs=pl.BlockSpec(memory_space=VMEM),
        )(xs, packed_params)

    return forward


if __name__ == "__main__":
    key = jax.random.PRNGKey(0)
    pkey, xkey = jax.random.split(key)
    params = init_params(pkey)
    packed, layout = pack_params(params)       # offline weight prep + packing
    forward = jax.jit(build_forward(layout))
    # PyTorch input: NCHW, single input channel (stem conv is Conv2d(1, 3, 1))
    x = jax.random.normal(xkey, (B, 1, IMG, IMG), dtype=jnp.float32)
    out = forward(packed, x)
    jax.block_until_ready(out)
    assert out.shape == (1, 1) and out.dtype == jnp.float32
    assert bool(jnp.isfinite(out).all())
    print("KERNEL_OK")
</pallas_src>

<mosaic_0001>
module attributes {stable_mosaic.version = 11 : i64} {
  func.func @_vgg_mha_kernel(%arg0: memref<64x128xf32, #tpu.memory_space<vmem>>, %arg1: memref<8256x128xf32, #tpu.memory_space<vmem>>, %arg2: memref<1x1xf32, #tpu.memory_space<vmem>>) attributes {dimension_semantics = [], scalar_prefetch = 0 : i64, scratch_operands = 0 : i64, tpu.core_type = #tpu.core_type<tc>} {
    %c0 = arith.constant 0 : index
    %c0_0 = arith.constant 0 : index
    %0 = vector.load %arg0[%c0, %c0_0] : memref<64x128xf32, #tpu.memory_space<vmem>>, vector<64x128xf32>
    %c0_1 = arith.constant 0 : index
    %c0_2 = arith.constant 0 : index
    %1 = vector.load %arg1[%c0_1, %c0_2] : memref<8256x128xf32, #tpu.memory_space<vmem>>, vector<128x128xf32>
    %cst = arith.constant dense<0.000000e+00> : vector<64x128xf32>
    %2 = tpu.matmul %0, %1, %cst {dimension_numbers = #tpu.dot_dimension_numbers<[1], [0], [0], [1], [0, 0, 1, 1], [], []>} : vector<64x128xf32>, vector<128x128xf32>, vector<64x128xf32> -> vector<64x128xf32>
    %c128 = arith.constant 128 : index
    %c0_3 = arith.constant 0 : index
    %3 = vector.load %arg1[%c128, %c0_3] : memref<8256x128xf32, #tpu.memory_space<vmem>>, vector<1x128xf32>
    %4 = vector.broadcast %3 : vector<1x128xf32> to vector<64x128xf32>
    %5 = arith.addf %2, %4 : vector<64x128xf32>
    %c136 = arith.constant 136 : index
    %c0_4 = arith.constant 0 : index
    %6 = vector.load %arg1[%c136, %c0_4] : memref<8256x128xf32, #tpu.memory_space<vmem>>, vector<128x128xf32>
    %cst_5 = arith.constant dense<0.000000e+00> : vector<64x128xf32>
    %7 = tpu.matmul %5, %6, %cst_5 {dimension_numbers = #tpu.dot_dimension_numbers<[1], [0], [0], [1], [0, 0, 1, 1], [], []>} : vector<64x128xf32>, vector<128x128xf32>, vector<64x128xf32> -> vector<64x128xf32>
    %c264 = arith.constant 264 : index
    %c0_6 = arith.constant 0 : index
    %8 = vector.load %arg1[%c264, %c0_6] : memref<8256x128xf32, #tpu.memory_space<vmem>>, vector<128x128xf32>
    %cst_7 = arith.constant dense<0.000000e+00> : vector<64x128xf32>
    %9 = tpu.matmul %5, %8, %cst_7 {dimension_numbers = #tpu.dot_dimension_numbers<[1], [0], [0], [1], [0, 0, 1, 1], [], []>} : vector<64x128xf32>, vector<128x128xf32>, vector<64x128xf32> -> vector<64x128xf32>
    %c392 = arith.constant 392 : index
    %c0_8 = arith.constant 0 : index
    %10 = vector.load %arg1[%c392, %c0_8] : memref<8256x128xf32, #tpu.memory_space<vmem>>, vector<128x128xf32>
    %cst_9 = arith.constant dense<0.000000e+00> : vector<64x128xf32>
    %11 = tpu.matmul %5, %10, %cst_9 {dimension_numbers = #tpu.dot_dimension_numbers<[1], [0], [0], [1], [0, 0, 1, 1], [], []>} : vector<64x128xf32>, vector<128x128xf32>, vector<64x128xf32> -> vector<64x128xf32>
    %c528 = arith.constant 528 : index
    %c0_10 = arith.constant 0 : index
    %12 = vector.load %arg1[%c528, %c0_10] : memref<8256x128xf32, #tpu.memory_space<vmem>>, vector<64x64xf32>
    %cst_11 = arith.constant dense<0.000000e+00> : vector<64x128xf32>
    %13 = tpu.matmul %12, %7, %cst_11 {dimension_numbers = #tpu.dot_dimension_numbers<[1], [0], [0], [1], [0, 0, 1, 1], [], []>} : vector<64x64xf32>, vector<64x128xf32>, vector<64x128xf32> -> vector<64x128xf32>
    %14 = arith.addf %9, %13 : vector<64x128xf32>
    %c592 = arith.constant 592 : index
    %c0_12 = arith.constant 0 : index
    %15 = vector.load %arg1[%c592, %c0_12] : memref<8256x128xf32, #tpu.memory_space<vmem>>, vector<64x64xf32>
    %cst_13 = arith.constant dense<0.000000e+00> : vector<64x128xf32>
    %16 = tpu.matmul %15, %11, %cst_13 {dimension_numbers = #tpu.dot_dimension_numbers<[1], [0], [0], [1], [0, 0, 1, 1], [], []>} : vector<64x64xf32>, vector<64x128xf32>, vector<64x128xf32> -> vector<64x128xf32>
    %17 = arith.addf %14, %16 : vector<64x128xf32>
    %c520 = arith.constant 520 : index
    %c0_14 = arith.constant 0 : index
    %18 = vector.load %arg1[%c520, %c0_14] : memref<8256x128xf32, #tpu.memory_space<vmem>>, vector<1x128xf32>
    %19 = vector.broadcast %18 : vector<1x128xf32> to vector<64x128xf32>
    %20 = arith.addf %17, %19 : vector<64x128xf32>
    %cst_15 = arith.constant 0.000000e+00 : f32
    %21 = vector.broadcast %cst_15 : f32 to vector<64x128xf32>
    %22 = arith.maximumf %20, %21 : vector<64x128xf32>
    %c656 = arith.constant 656 : index
    %c0_16 = arith.constant 0 : index
    %23 = vector.load %arg1[%c656, %c0_16] : memref<8256x128xf32, #tpu.memory_space<vmem>>, vector<128x128xf32>
    %cst_17 = arith.constant dense<0.000000e+00> : vector<64x128xf32>
    %24 = tpu.matmul %22, %23, %cst_17 {dimension_numbers = #tpu.dot_dimension_numbers<[1], [0], [0], [1], [0, 0, 1, 1], [], []>} : vector<64x128xf32>, vector<128x128xf32>, vector<64x128xf32> -> vector<64x128xf32>
    %c784 = arith.constant 784 : index
    %c0_18 = arith.constant 0 : index
    %25 = vector.load %arg1[%c784, %c0_18] : memref<8256x128xf32, #tpu.memory_space<vmem>>, vector<128x128xf32>
    %cst_19 = arith.constant dense<0.000000e+00> : vector<64x128xf32>
    %26 = tpu.matmul %22, %25, %cst_19 {dimension_numbers = #tpu.dot_dimension_numbers<[1], [0], [0], [1], [0, 0, 1, 1], [], []>} : vector<64x128xf32>, vector<128x128xf32>, vector<64x128xf32> -> vector<64x128xf32>
    %c912 = arith.constant 912 : index
    %c0_20 = arith.constant 0 : index
    %27 = vector.load %arg1[%c912, %c0_20] : memref<8256x128xf32, #tpu.memory_space<vmem>>, vector<128x128xf32>
    %cst_21 = arith.constant dense<0.000000e+00> : vector<64x128xf32>
    %28 = tpu.matmul %22, %27, %cst_21 {dimension_numbers = #tpu.dot_dimension_numbers<[1], [0], [0], [1], [0, 0, 1, 1], [], []>} : vector<64x128xf32>, vector<128x128xf32>, vector<64x128xf32> -> vector<64x128xf32>
    %c528_22 = arith.constant 528 : index
    %c0_23 = arith.constant 0 : index
    %29 = vector.load %arg1[%c528_22, %c0_23] : memref<8256x128xf32, #tpu.memory_space<vmem>>, vector<64x64xf32>
    %cst_24 = arith.constant dense<0.000000e+00> : vector<64x128xf32>
    %30 = tpu.matmul %29, %24, %cst_24 {dimension_numbers = #tpu.dot_dimension_numbers<[1], [0], [0], [1], [0, 0, 1, 1], [], []>} : vector<64x64xf32>, vector<64x128xf32>, vector<64x128xf32> -> vector<64x128xf32>
    %31 = arith.addf %26, %30 : vector<64x128xf32>
    %c592_25 = arith.constant 592 : index
    %c0_26 = arith.constant 0 : index
    %32 = vector.load %arg1[%c592_25, %c0_26] : memref<8256x128xf32, #tpu.memory_space<vmem>>, vector<64x64xf32>
    %cst_27 = arith.constant dense<0.000000e+00> : vector<64x128xf32>
    %33 = tpu.matmul %32, %28, %cst_27 {dimension_numbers = #tpu.dot_dimension_numbers<[1], [0], [0], [1], [0, 0, 1, 1], [], []>} : vector<64x64xf32>, vector<64x128xf32>, vector<64x128xf32> -> vector<64x128xf32>
    %34 = arith.addf %31, %33 : vector<64x128xf32>
    %c1040 = arith.constant 1040 : index
    %c0_28 = arith.constant 0 : index
    %35 = vector.load %arg1[%c1040, %c0_28] : memref<8256x128xf32, #tpu.memory_space<vmem>>, vector<1x128xf32>
    %36 = vector.broadcast %35 : vector<1x128xf32> to vector<64x128xf32>
    %37 = arith.addf %34, %36 : vector<64x128xf32>
    %cst_29 = arith.constant 0.000000e+00 : f32
    %38 = vector.broadcast %cst_29 : f32 to vector<64x128xf32>
    %39 = arith.maximumf %37, %38 : vector<64x128xf32>
    %c1048 = arith.constant 1048 : index
    %c0_30 = arith.constant 0 : index
    %40 = vector.load %arg1[%c1048, %c0_30] : memref<8256x128xf32, #tpu.memory_space<vmem>>, vector<32x64xf32>
    %cst_31 = arith.constant dense<0.000000e+00> : vector<32x128xf32>
    %41 = tpu.matmul %40, %39, %cst_31 {dimension_numbers = #tpu.dot_dimension_numbers<[1], [0], [0], [1], [0, 0, 1, 1], [], []>} : vector<32x64xf32>, vector<64x128xf32>, vector<32x128xf32> -> vector<32x128xf32>
    %c1080 = arith.constant 1080 : index
    %c0_32 = arith.constant 0 : index
    %42 = vector.load %arg1[%c1080, %c0_32] : memref<8256x128xf32, #tpu.memory_space<vmem>>, vector<32x64xf32>
    %cst_33 = arith.constant dense<0.000000e+00> : vector<32x128xf32>
    %43 = tpu.matmul %42, %39, %cst_33 {dimension_numbers = #tpu.dot_dimension_numbers<[1], [0], [0], [1], [0, 0, 1, 1], [], []>} : vector<32x64xf32>, vector<64x128xf32>, vector<32x128xf32> -> vector<32x128xf32>
    %44 = arith.maximumf %41, %43 : vector<32x128xf32>
    %c1112 = arith.constant 1112 : index
    %c0_34 = arith.constant 0 : index
    %45 = vector.load %arg1[%c1112, %c0_34] : memref<8256x128xf32, #tpu.memory_space<vmem>>, vector<128x128xf32>
    %cst_35 = arith.constant dense<0.000000e+00> : vector<32x128xf32>
    %46 = tpu.matmul %44, %45, %cst_35 {dimension_numbers = #tpu.dot_dimension_numbers<[1], [0], [0], [1], [0, 0, 1, 1], [], []>} : vector<32x128xf32>, vector<128x128xf32>, vector<32x128xf32> -> vector<32x128xf32>
    %c1240 = arith.constant 1240 : index
    %c0_36 = arith.constant 0 : index
    %47 = vector.load %arg1[%c1240, %c0_36] : memref<8256x128xf32, #tpu.memory_space<vmem>>, vector<128x128xf32>
    %cst_37 = arith.constant dense<0.000000e+00> : vector<32x128xf32>
    %48 = tpu.matmul %44, %47, %cst_37 {dimension_numbers = #tpu.dot_dimension_numbers<[1], [0], [0], [1], [0, 0, 1, 1], [], []>} : vector<32x128xf32>, vector<128x128xf32>, vector<32x128xf32> -> vector<32x128xf32>
    %49 = arith.maximumf %46, %48 : vector<32x128xf32>
    %c1368 = arith.constant 1368 : index
    %c0_38 = arith.constant 0 : index
    %50 = vector.load %arg1[%c1368, %c0_38] : memref<8256x128xf32, #tpu.memory_space<vmem>>, vector<128x128xf32>
    %cst_39 = arith.constant dense<0.000000e+00> : vector<32x128xf32>
    %51 = tpu.matmul %49, %50, %cst_39 {dimension_numbers = #tpu.dot_dimension_numbers<[1], [0], [0], [1], [0, 0, 1, 1], [], []>} : vector<32x128xf32>, vector<128x128xf32>, vector<32x128xf32> -> vector<32x128xf32>
    %c1496 = arith.constant 1496 : index
    %c0_40 = arith.constant 0 : index
    %52 = vector.load %arg1[%c1496, %c0_40] : memref<8256x128xf32, #tpu.memory_space<vmem>>, vector<128x128xf32>
    %cst_41 = arith.constant dense<0.000000e+00> : vector<32x128xf32>
    %53 = tpu.matmul %49, %52, %cst_41 {dimension_numbers = #tpu.dot_dimension_numbers<[1], [0], [0], [1], [0, 0, 1, 1], [], []>} : vector<32x128xf32>, vector<128x128xf32>, vector<32x128xf32> -> vector<32x128xf32>
    %c1624 = arith.constant 1624 : index
    %c0_42 = arith.constant 0 : index
    %54 = vector.load %arg1[%c1624, %c0_42] : memref<8256x128xf32, #tpu.memory_space<vmem>>, vector<128x128xf32>
    %cst_43 = arith.constant dense<0.000000e+00> : vector<32x128xf32>
    %55 = tpu.matmul %49, %54, %cst_43 {dimension_numbers = #tpu.dot_dimension_numbers<[1], [0], [0], [1], [0, 0, 1, 1], [], []>} : vector<32x128xf32>, vector<128x128xf32>, vector<32x128xf32> -> vector<32x128xf32>
    %c1760 = arith.constant 1760 : index
    %c0_44 = arith.constant 0 : index
    %56 = vector.load %arg1[%c1760, %c0_44] : memref<8256x128xf32, #tpu.memory_space<vmem>>, vector<32x32xf32>
    %cst_45 = arith.constant dense<0.000000e+00> : vector<32x128xf32>
    %57 = tpu.matmul %56, %51, %cst_45 {dimension_numbers = #tpu.dot_dimension_numbers<[1], [0], [0], [1], [0, 0, 1, 1], [], []>} : vector<32x32xf32>, vector<32x128xf32>, vector<32x128xf32> -> vector<32x128xf32>
    %58 = arith.addf %53, %57 : vector<32x128xf32>
    %c1792 = arith.constant 1792 : index
    %c0_46 = arith.constant 0 : index
    %59 = vector.load %arg1[%c1792, %c0_46] : memref<8256x128xf32, #tpu.memory_space<vmem>>, vector<32x32xf32>
    %cst_47 = arith.constant dense<0.000000e+00> : vector<32x128xf32>
    %60 = tpu.matmul %59, %55, %cst_47 {dimension_numbers = #tpu.dot_dimension_numbers<[1], [0], [0], [1], [0, 0, 1, 1], [], []>} : vector<32x32xf32>, vector<32x128xf32>, vector<32x128xf32> -> vector<32x128xf32>
    %61 = arith.addf %58, %60 : vector<32x128xf32>
    %c1752 = arith.constant 1752 : index
    %c0_48 = arith.constant 0 : index
    %62 = vector.load %arg1[%c1752, %c0_48] : memref<8256x128xf32, #tpu.memory_space<vmem>>, vector<1x128xf32>
    %63 = vector.broadcast %62 : vector<1x128xf32> to vector<32x128xf32>
    %64 = arith.addf %61, %63 : vector<32x128xf32>
    %cst_49 = arith.constant 0.000000e+00 : f32
    %65 = vector.broadcast %cst_49 : f32 to vector<32x128xf32>
    %66 = arith.maximumf %64, %65 : vector<32x128xf32>
    %c1824 = arith.constant 1824 : index
    %c0_50 = arith.constant 0 : index
    %67 = vector.load %arg1[%c1824, %c0_50] : memref<8256x128xf32, #tpu.memory_space<vmem>>, vector<128x128xf32>
    %cst_51 = arith.constant dense<0.000000e+00> : vector<32x128xf32>
    %68 = tpu.matmul %66, %67, %cst_51 {dimension_numbers = #tpu.dot_dimension_numbers<[1], [0], [0], [1], [0, 0, 1, 1], [], []>} : vector<32x128xf32>, vector<128x128xf32>, vector<32x128xf32> -> vector<32x128xf32>
    %c1952 = arith.constant 1952 : index
    %c0_52 = arith.constant 0 : index
    %69 = vector.load %arg1[%c1952, %c0_52] : memref<8256x128xf32, #tpu.memory_space<vmem>>, vector<128x128xf32>
    %cst_53 = arith.constant dense<0.000000e+00> : vector<32x128xf32>
    %70 = tpu.matmul %66, %69, %cst_53 {dimension_numbers = #tpu.dot_dimension_numbers<[1], [0], [0], [1], [0, 0, 1, 1], [], []>} : vector<32x128xf32>, vector<128x128xf32>, vector<32x128xf32> -> vector<32x128xf32>
    %c2080 = arith.constant 2080 : index
    %c0_54 = arith.constant 0 : index
    %71 = vector.load %arg1[%c2080, %c0_54] : memref<8256x128xf32, #tpu.memory_space<vmem>>, vector<128x128xf32>
    %cst_55 = arith.constant dense<0.000000e+00> : vector<32x128xf32>
    %72 = tpu.matmul %66, %71, %cst_55 {dimension_numbers = #tpu.dot_dimension_numbers<[1], [0], [0], [1], [0, 0, 1, 1], [], []>} : vector<32x128xf32>, vector<128x128xf32>, vector<32x128xf32> -> vector<32x128xf32>
    %c1760_56 = arith.constant 1760 : index
    %c0_57 = arith.constant 0 : index
    %73 = vector.load %arg1[%c1760_56, %c0_57] : memref<8256x128xf32, #tpu.memory_space<vmem>>, vector<32x32xf32>
    %cst_58 = arith.constant dense<0.000000e+00> : vector<32x128xf32>
    %74 = tpu.matmul %73, %68, %cst_58 {dimension_numbers = #tpu.dot_dimension_numbers<[1], [0], [0], [1], [0, 0, 1, 1], [], []>} : vector<32x32xf32>, vector<32x128xf32>, vector<32x128xf32> -> vector<32x128xf32>
    %75 = arith.addf %70, %74 : vector<32x128xf32>
    %c1792_59 = arith.constant 1792 : index
    %c0_60 = arith.constant 0 : index
    %76 = vector.load %arg1[%c1792_59, %c0_60] : memref<8256x128xf32, #tpu.memory_space<vmem>>, vector<32x32xf32>
    %cst_61 = arith.constant dense<0.000000e+00> : vector<32x128xf32>
    %77 = tpu.matmul %76, %72, %cst_61 {dimension_numbers = #tpu.dot_dimension_numbers<[1], [0], [0], [1], [0, 0, 1, 1], [], []>} : vector<32x32xf32>, vector<32x128xf32>, vector<32x128xf32> -> vector<32x128xf32>
    %78 = arith.addf %75, %77 : vector<32x128xf32>
    %c2208 = arith.constant 2208 : index
    %c0_62 = arith.constant 0 : index
    %79 = vector.load %arg1[%c2208, %c0_62] : memref<8256x128xf32, #tpu.memory_space<vmem>>, vector<1x128xf32>
    %80 = vector.broadcast %79 : vector<1x128xf32> to vector<32x128xf32>
    %81 = arith.addf %78, %80 : vector<32x128xf32>
    %cst_63 = arith.constant 0.000000e+00 : f32
    %82 = vector.broadcast %cst_63 : f32 to vector<32x128xf32>
    %83 = arith.maximumf %81, %82 : vector<32x128xf32>
    %c2216 = arith.constant 2216 : index
    %c0_64 = arith.constant 0 : index
    %84 = vector.load %arg1[%c2216, %c0_64] : memref<8256x128xf32, #tpu.memory_space<vmem>>, vector<16x32xf32>
    %cst_65 = arith.constant dense<0.000000e+00> : vector<16x128xf32>
    %85 = tpu.matmul %84, %83, %cst_65 {dimension_numbers = #tpu.dot_dimension_numbers<[1], [0], [0], [1], [0, 0, 1, 1], [], []>} : vector<16x32xf32>, vector<32x128xf32>, vector<16x128xf32> -> vector<16x128xf32>
    %c2232 = arith.constant 2232 : index
    %c0_66 = arith.constant 0 : index
    %86 = vector.load %arg1[%c2232, %c0_66] : memref<8256x128xf32, #tpu.memory_space<vmem>>, vector<16x32xf32>
    %cst_67 = arith.constant dense<0.000000e+00> : vector<16x128xf32>
    %87 = tpu.matmul %86, %83, %cst_67 {dimension_numbers = #tpu.dot_dimension_numbers<[1], [0], [0], [1], [0, 0, 1, 1], [], []>} : vector<16x32xf32>, vector<32x128xf32>, vector<16x128xf32> -> vector<16x128xf32>
    %88 = arith.maximumf %85, %87 : vector<16x128xf32>
    %c2248 = arith.constant 2248 : index
    %c0_68 = arith.constant 0 : index
    %89 = vector.load %arg1[%c2248, %c0_68] : memref<8256x128xf32, #tpu.memory_space<vmem>>, vector<128x128xf32>
    %cst_69 = arith.constant dense<0.000000e+00> : vector<16x128xf32>
    %90 = tpu.matmul %88, %89, %cst_69 {dimension_numbers = #tpu.dot_dimension_numbers<[1], [0], [0], [1], [0, 0, 1, 1], [], []>} : vector<16x128xf32>, vector<128x128xf32>, vector<16x128xf32> -> vector<16x128xf32>
    %c2376 = arith.constant 2376 : index
    %c0_70 = arith.constant 0 : index
    %91 = vector.load %arg1[%c2376, %c0_70] : memref<8256x128xf32, #tpu.memory_space<vmem>>, vector<128x128xf32>
    %cst_71 = arith.constant dense<0.000000e+00> : vector<16x128xf32>
    %92 = tpu.matmul %88, %91, %cst_71 {dimension_numbers = #tpu.dot_dimension_numbers<[1], [0], [0], [1], [0, 0, 1, 1], [], []>} : vector<16x128xf32>, vector<128x128xf32>, vector<16x128xf32> -> vector<16x128xf32>
    %93 = arith.maximumf %90, %92 : vector<16x128xf32>
    %c2504 = arith.constant 2504 : index
    %c0_72 = arith.constant 0 : index
    %94 = vector.load %arg1[%c2504, %c0_72] : memref<8256x128xf32, #tpu.memory_space<vmem>>, vector<128x128xf32>
    %cst_73 = arith.constant dense<0.000000e+00> : vector<16x128xf32>
    %95 = tpu.matmul %93, %94, %cst_73 {dimension_numbers = #tpu.dot_dimension_numbers<[1], [0], [0], [1], [0, 0, 1, 1], [], []>} : vector<16x128xf32>, vector<128x128xf32>, vector<16x128xf32> -> vector<16x128xf32>
    %c2632 = arith.constant 2632 : index
    %c0_74 = arith.constant 0 : index
    %96 = vector.load %arg1[%c2632, %c0_74] : memref<8256x128xf32, #tpu.memory_space<vmem>>, vector<128x128xf32>
    %cst_75 = arith.constant dense<0.000000e+00> : vector<16x128xf32>
    %97 = tpu.matmul %93, %96, %cst_75 {dimension_numbers = #tpu.dot_dimension_numbers<[1], [0], [0], [1], [0, 0, 1, 1], [], []>} : vector<16x128xf32>, vector<128x128xf32>, vector<16x128xf32> -> vector<16x128xf32>
    %c2760 = arith.constant 2760 : index
    %c0_76 = arith.constant 0 : index
    %98 = vector.load %arg1[%c2760, %c0_76] : memref<8256x128xf32, #tpu.memory_space<vmem>>, vector<128x128xf32>
    %cst_77 = arith.constant dense<0.000000e+00> : vector<16x128xf32>
    %99 = tpu.matmul %93, %98, %cst_77 {dimension_numbers = #tpu.dot_dimension_numbers<[1], [0], [0], [1], [0, 0, 1, 1], [], []>} : vector<16x128xf32>, vector<128x128xf32>, vector<16x128xf32> -> vector<16x128xf32>
    %c2896 = arith.constant 2896 : index
    %c0_78 = arith.constant 0 : index
    %100 = vector.load %arg1[%c2896, %c0_78] : memref<8256x128xf32, #tpu.memory_space<vmem>>, vector<16x16xf32>
    %cst_79 = arith.constant dense<0.000000e+00> : vector<16x128xf32>
    %101 = tpu.matmul %100, %95, %cst_79 {dimension_numbers = #tpu.dot_dimension_numbers<[1], [0], [0], [1], [0, 0, 1, 1], [], []>} : vector<16x16xf32>, vector<16x128xf32>, vector<16x128xf32> -> vector<16x128xf32>
    %102 = arith.addf %97, %101 : vector<16x128xf32>
    %c2912 = arith.constant 2912 : index
    %c0_80 = arith.constant 0 : index
    %103 = vector.load %arg1[%c2912, %c0_80] : memref<8256x128xf32, #tpu.memory_space<vmem>>, vector<16x16xf32>
    %cst_81 = arith.constant dense<0.000000e+00> : vector<16x128xf32>
    %104 = tpu.matmul %103, %99, %cst_81 {dimension_numbers = #tpu.dot_dimension_numbers<[1], [0], [0], [1], [0, 0, 1, 1], [], []>} : vector<16x16xf32>, vector<16x128xf32>, vector<16x128xf32> -> vector<16x128xf32>
    %105 = arith.addf %102, %104 : vector<16x128xf32>
    %c2888 = arith.constant 2888 : index
    %c0_82 = arith.constant 0 : index
    %106 = vector.load %arg1[%c2888, %c0_82] : memref<8256x128xf32, #tpu.memory_space<vmem>>, vector<1x128xf32>
    %107 = vector.broadcast %106 : vector<1x128xf32> to vector<16x128xf32>
    %108 = arith.addf %105, %107 : vector<16x128xf32>
    %cst_83 = arith.constant 0.000000e+00 : f32
    %109 = vector.broadcast %cst_83 : f32 to vector<16x128xf32>
    %110 = arith.maximumf %108, %109 : vector<16x128xf32>
    %c2928 = arith.constant 2928 : index
    %c0_84 = arith.constant 0 : index
    %111 = vector.load %arg1[%c2928, %c0_84] : memref<8256x128xf32, #tpu.memory_space<vmem>>, vector<128x128xf32>
    %cst_85 = arith.constant dense<0.000000e+00> : vector<16x128xf32>
    %112 = tpu.matmul %110, %111, %cst_85 {dimension_numbers = #tpu.dot_dimension_numbers<[1], [0], [0], [1], [0, 0, 1, 1], [], []>} : vector<16x128xf32>, vector<128x128xf32>, vector<16x128xf32> -> vector<16x128xf32>
    %c3056 = arith.constant 3056 : index
    %c0_86 = arith.constant 0 : index
    %113 = vector.load %arg1[%c3056, %c0_86] : memref<8256x128xf32, #tpu.memory_space<vmem>>, vector<128x128xf32>
    %cst_87 = arith.constant dense<0.000000e+00> : vector<16x128xf32>
    %114 = tpu.matmul %110, %113, %cst_87 {dimension_numbers = #tpu.dot_dimension_numbers<[1], [0], [0], [1], [0, 0, 1, 1], [], []>} : vector<16x128xf32>, vector<128x128xf32>, vector<16x128xf32> -> vector<16x128xf32>
    %c3184 = arith.constant 3184 : index
    %c0_88 = arith.constant 0 : index
    %115 = vector.load %arg1[%c3184, %c0_88] : memref<8256x128xf32, #tpu.memory_space<vmem>>, vector<128x128xf32>
    %cst_89 = arith.constant dense<0.000000e+00> : vector<16x128xf32>
    %116 = tpu.matmul %110, %115, %cst_89 {dimension_numbers = #tpu.dot_dimension_numbers<[1], [0], [0], [1], [0, 0, 1, 1], [], []>} : vector<16x128xf32>, vector<128x128xf32>, vector<16x128xf32> -> vector<16x128xf32>
    %c2896_90 = arith.constant 2896 : index
    %c0_91 = arith.constant 0 : index
    %117 = vector.load %arg1[%c2896_90, %c0_91] : memref<8256x128xf32, #tpu.memory_space<vmem>>, vector<16x16xf32>
    %cst_92 = arith.constant dense<0.000000e+00> : vector<16x128xf32>
    %118 = tpu.matmul %117, %112, %cst_92 {dimension_numbers = #tpu.dot_dimension_numbers<[1], [0], [0], [1], [0, 0, 1, 1], [], []>} : vector<16x16xf32>, vector<16x128xf32>, vector<16x128xf32> -> vector<16x128xf32>
    %119 = arith.addf %114, %118 : vector<16x128xf32>
    %c2912_93 = arith.constant 2912 : index
    %c0_94 = arith.constant 0 : index
    %120 = vector.load %arg1[%c2912_93, %c0_94] : memref<8256x128xf32, #tpu.memory_space<vmem>>, vector<16x16xf32>
    %cst_95 = arith.constant dense<0.000000e+00> : vector<16x128xf32>
    %121 = tpu.matmul %120, %116, %cst_95 {dimension_numbers = #tpu.dot_dimension_numbers<[1], [0], [0], [1], [0, 0, 1, 1], [], []>} : vector<16x16xf32>, vector<16x128xf32>, vector<16x128xf32> -> vector<16x128xf32>
    %122 = arith.addf %119, %121 : vector<16x128xf32>
    %c3312 = arith.constant 3312 : index
    %c0_96 = arith.constant 0 : index
    %123 = vector.load %arg1[%c3312, %c0_96] : memref<8256x128xf32, #tpu.memory_space<vmem>>, vector<1x128xf32>
    %124 = vector.broadcast %123 : vector<1x128xf32> to vector<16x128xf32>
    %125 = arith.addf %122, %124 : vector<16x128xf32>
    %cst_97 = arith.constant 0.000000e+00 : f32
    %126 = vector.broadcast %cst_97 : f32 to vector<16x128xf32>
    %127 = arith.maximumf %125, %126 : vector<16x128xf32>
    %c3320 = arith.constant 3320 : index
    %c0_98 = arith.constant 0 : index
    %128 = vector.load %arg1[%c3320, %c0_98] : memref<8256x128xf32, #tpu.memory_space<vmem>>, vector<128x128xf32>
    %cst_99 = arith.constant dense<0.000000e+00> : vector<16x128xf32>
    %129 = tpu.matmul %127, %128, %cst_99 {dimension_numbers = #tpu.dot_dimension_numbers<[1], [0], [0], [1], [0, 0, 1, 1], [], []>} : vector<16x128xf32>, vector<128x128xf32>, vector<16x128xf32> -> vector<16x128xf32>
    %c3448 = arith.constant 3448 : index
    %c0_100 = arith.constant 0 : index
    %130 = vector.load %arg1[%c3448, %c0_100] : memref<8256x128xf32, #tpu.memory_space<vmem>>, vector<128x128xf32>
    %cst_101 = arith.constant dense<0.000000e+00> : vector<16x128xf32>
    %131 = tpu.matmul %127, %130, %cst_101 {dimension_numbers = #tpu.dot_dimension_numbers<[1], [0], [0], [1], [0, 0, 1, 1], [], []>} : vector<16x128xf32>, vector<128x128xf32>, vector<16x128xf32> -> vector<16x128xf32>
    %c3576 = arith.constant 3576 : index
    %c0_102 = arith.constant 0 : index
    %132 = vector.load %arg1[%c3576, %c0_102] : memref<8256x128xf32, #tpu.memory_space<vmem>>, vector<128x128xf32>
    %cst_103 = arith.constant dense<0.000000e+00> : vector<16x128xf32>
    %133 = tpu.matmul %127, %132, %cst_103 {dimension_numbers = #tpu.dot_dimension_numbers<[1], [0], [0], [1], [0, 0, 1, 1], [], []>} : vector<16x128xf32>, vector<128x128xf32>, vector<16x128xf32> -> vector<16x128xf32>
    %c2896_104 = arith.constant 2896 : index
    %c0_105 = arith.constant 0 : index
    %134 = vector.load %arg1[%c2896_104, %c0_105] : memref<8256x128xf32, #tpu.memory_space<vmem>>, vector<16x16xf32>
    %cst_106 = arith.constant dense<0.000000e+00> : vector<16x128xf32>
    %135 = tpu.matmul %134, %129, %cst_106 {dimension_numbers = #tpu.dot_dimension_numbers<[1], [0], [0], [1], [0, 0, 1, 1], [], []>} : vector<16x16xf32>, vector<16x128xf32>, vector<16x128xf32> -> vector<16x128xf32>
    %136 = arith.addf %131, %135 : vector<16x128xf32>
    %c2912_107 = arith.constant 2912 : index
    %c0_108 = arith.constant 0 : index
    %137 = vector.load %arg1[%c2912_107, %c0_108] : memref<8256x128xf32, #tpu.memory_space<vmem>>, vector<16x16xf32>
    %cst_109 = arith.constant dense<0.000000e+00> : vector<16x128xf32>
    %138 = tpu.matmul %137, %133, %cst_109 {dimension_numbers = #tpu.dot_dimension_numbers<[1], [0], [0], [1], [0, 0, 1, 1], [], []>} : vector<16x16xf32>, vector<16x128xf32>, vector<16x128xf32> -> vector<16x128xf32>
    %139 = arith.addf %136, %138 : vector<16x128xf32>
    %c3704 = arith.constant 3704 : index
    %c0_110 = arith.constant 0 : index
    %140 = vector.load %arg1[%c3704, %c0_110] : memref<8256x128xf32, #tpu.memory_space<vmem>>, vector<1x128xf32>
    %141 = vector.broadcast %140 : vector<1x128xf32> to vector<16x128xf32>
    %142 = arith.addf %139, %141 : vector<16x128xf32>
    %cst_111 = arith.constant 0.000000e+00 : f32
    %143 = vector.broadcast %cst_111 : f32 to vector<16x128xf32>
    %144 = arith.maximumf %142, %143 : vector<16x128xf32>
    %c3712 = arith.constant 3712 : index
    %c0_112 = arith.constant 0 : index
    %145 = vector.load %arg1[%c3712, %c0_112] : memref<8256x128xf32, #tpu.memory_space<vmem>>, vector<8x16xf32>
    %cst_113 = arith.constant dense<0.000000e+00> : vector<8x128xf32>
    %146 = tpu.matmul %145, %144, %cst_113 {dimension_numbers = #tpu.dot_dimension_numbers<[1], [0], [0], [1], [0, 0, 1, 1], [], []>} : vector<8x16xf32>, vector<16x128xf32>, vector<8x128xf32> -> vector<8x128xf32>
    %c3720 = arith.constant 3720 : index
    %c0_114 = arith.constant 0 : index
    %147 = vector.load %arg1[%c3720, %c0_114] : memref<8256x128xf32, #tpu.memory_space<vmem>>, vector<8x16xf32>
    %cst_115 = arith.constant dense<0.000000e+00> : vector<8x128xf32>
    %148 = tpu.matmul %147, %144, %cst_115 {dimension_numbers = #tpu.dot_dimension_numbers<[1], [0], [0], [1], [0, 0, 1, 1], [], []>} : vector<8x16xf32>, vector<16x128xf32>, vector<8x128xf32> -> vector<8x128xf32>
    %149 = arith.maximumf %146, %148 : vector<8x128xf32>
    %c3728 = arith.constant 3728 : index
    %c0_116 = arith.constant 0 : index
    %150 = vector.load %arg1[%c3728, %c0_116] : memref<8256x128xf32, #tpu.memory_space<vmem>>, vector<128x128xf32>
    %cst_117 = arith.constant dense<0.000000e+00> : vector<8x128xf32>
    %151 = tpu.matmul %149, %150, %cst_117 {dimension_numbers = #tpu.dot_dimension_numbers<[1], [0], [0], [1], [0, 0, 1, 1], [], []>} : vector<8x128xf32>, vector<128x128xf32>, vector<8x128xf32> -> vector<8x128xf32>
    %c3856 = arith.constant 3856 : index
    %c0_118 = arith.constant 0 : index
    %152 = vector.load %arg1[%c3856, %c0_118] : memref<8256x128xf32, #tpu.memory_space<vmem>>, vector<128x128xf32>
    %cst_119 = arith.constant dense<0.000000e+00> : vector<8x128xf32>
    %153 = tpu.matmul %149, %152, %cst_119 {dimension_numbers = #tpu.dot_dimension_numbers<[1], [0], [0], [1], [0, 0, 1, 1], [], []>} : vector<8x128xf32>, vector<128x128xf32>, vector<8x128xf32> -> vector<8x128xf32>
    %154 = arith.maximumf %151, %153 : vector<8x128xf32>
    %c3984 = arith.constant 3984 : index
    %c0_120 = arith.constant 0 : index
    %155 = vector.load %arg1[%c3984, %c0_120] : memref<8256x128xf32, #tpu.memory_space<vmem>>, vector<128x128xf32>
    %cst_121 = arith.constant dense<0.000000e+00> : vector<8x128xf32>
    %156 = tpu.matmul %154, %155, %cst_121 {dimension_numbers = #tpu.dot_dimension_numbers<[1], [0], [0], [1], [0, 0, 1, 1], [], []>} : vector<8x128xf32>, vector<128x128xf32>, vector<8x128xf32> -> vector<8x128xf32>
    %c4112 = arith.constant 4112 : index
    %c0_122 = arith.constant 0 : index
    %157 = vector.load %arg1[%c4112, %c0_122] : memref<8256x128xf32, #tpu.memory_space<vmem>>, vector<128x128xf32>
    %cst_123 = arith.constant dense<0.000000e+00> : vector<8x128xf32>
    %158 = tpu.matmul %154, %157, %cst_123 {dimension_numbers = #tpu.dot_dimension_numbers<[1], [0], [0], [1], [0, 0, 1, 1], [], []>} : vector<8x128xf32>, vector<128x128xf32>, vector<8x128xf32> -> vector<8x128xf32>
    %c4240 = arith.constant 4240 : index
    %c0_124 = arith.constant 0 : index
    %159 = vector.load %arg1[%c4240, %c0_124] : memref<8256x128xf32, #tpu.memory_space<vmem>>, vector<128x128xf32>
    %cst_125 = arith.constant dense<0.000000e+00> : vector<8x128xf32>
    %160 = tpu.matmul %154, %159, %cst_125 {dimension_numbers = #tpu.dot_dimension_numbers<[1], [0], [0], [1], [0, 0, 1, 1], [], []>} : vector<8x128xf32>, vector<128x128xf32>, vector<8x128xf32> -> vector<8x128xf32>
    %c4376 = arith.constant 4376 : index
    %c0_126 = arith.constant 0 : index
    %161 = vector.load %arg1[%c4376, %c0_126] : memref<8256x128xf32, #tpu.memory_space<vmem>>, vector<8x8xf32>
    %cst_127 = arith.constant dense<0.000000e+00> : vector<8x128xf32>
    %162 = tpu.matmul %161, %156, %cst_127 {dimension_numbers = #tpu.dot_dimension_numbers<[1], [0], [0], [1], [0, 0, 1, 1], [], []>} : vector<8x8xf32>, vector<8x128xf32>, vector<8x128xf32> -> vector<8x128xf32>
    %163 = arith.addf %158, %162 : vector<8x128xf32>
    %c4384 = arith.constant 4384 : index
    %c0_128 = arith.constant 0 : index
    %164 = vector.load %arg1[%c4384, %c0_128] : memref<8256x128xf32, #tpu.memory_space<vmem>>, vector<8x8xf32>
    %cst_129 = arith.constant dense<0.000000e+00> : vector<8x128xf32>
    %165 = tpu.matmul %164, %160, %cst_129 {dimension_numbers = #tpu.dot_dimension_numbers<[1], [0], [0], [1], [0, 0, 1, 1], [], []>} : vector<8x8xf32>, vector<8x128xf32>, vector<8x128xf32> -> vector<8x128xf32>
    %166 = arith.addf %163, %165 : vector<8x128xf32>
    %c4368 = arith.constant 4368 : index
    %c0_130 = arith.constant 0 : index
    %167 = vector.load %arg1[%c4368, %c0_130] : memref<8256x128xf32, #tpu.memory_space<vmem>>, vector<1x128xf32>
    %168 = vector.broadcast %167 : vector<1x128xf32> to vector<8x128xf32>
    %169 = arith.addf %166, %168 : vector<8x128xf32>
    %cst_131 = arith.constant 0.000000e+00 : f32
    %170 = vector.broadcast %cst_131 : f32 to vector<8x128xf32>
    %171 = arith.maximumf %169, %170 : vector<8x128xf32>
    %c4392 = arith.constant 4392 : index
    %c0_132 = arith.constant 0 : index
    %172 = vector.load %arg1[%c4392, %c0_132] : memref<8256x128xf32, #tpu.memory_space<vmem>>, vector<128x128xf32>
    %cst_133 = arith.constant dense<0.000000e+00> : vector<8x128xf32>
    %173 = tpu.matmul %171, %172, %cst_133 {dimension_numbers = #tpu.dot_dimension_numbers<[1], [0], [0], [1], [0, 0, 1, 1], [], []>} : vector<8x128xf32>, vector<128x128xf32>, vector<8x128xf32> -> vector<8x128xf32>
    %c4520 = arith.constant 4520 : index
    %c0_134 = arith.constant 0 : index
    %174 = vector.load %arg1[%c4520, %c0_134] : memref<8256x128xf32, #tpu.memory_space<vmem>>, vector<128x128xf32>
    %cst_135 = arith.constant dense<0.000000e+00> : vector<8x128xf32>
    %175 = tpu.matmul %171, %174, %cst_135 {dimension_numbers = #tpu.dot_dimension_numbers<[1], [0], [0], [1], [0, 0, 1, 1], [], []>} : vector<8x128xf32>, vector<128x128xf32>, vector<8x128xf32> -> vector<8x128xf32>
    %c4648 = arith.constant 4648 : index
    %c0_136 = arith.constant 0 : index
    %176 = vector.load %arg1[%c4648, %c0_136] : memref<8256x128xf32, #tpu.memory_space<vmem>>, vector<128x128xf32>
    %cst_137 = arith.constant dense<0.000000e+00> : vector<8x128xf32>
    %177 = tpu.matmul %171, %176, %cst_137 {dimension_numbers = #tpu.dot_dimension_numbers<[1], [0], [0], [1], [0, 0, 1, 1], [], []>} : vector<8x128xf32>, vector<128x128xf32>, vector<8x128xf32> -> vector<8x128xf32>
    %c4376_138 = arith.constant 4376 : index
    %c0_139 = arith.constant 0 : index
    %178 = vector.load %arg1[%c4376_138, %c0_139] : memref<8256x128xf32, #tpu.memory_space<vmem>>, vector<8x8xf32>
    %cst_140 = arith.constant dense<0.000000e+00> : vector<8x128xf32>
    %179 = tpu.matmul %178, %173, %cst_140 {dimension_numbers = #tpu.dot_dimension_numbers<[1], [0], [0], [1], [0, 0, 1, 1], [], []>} : vector<8x8xf32>, vector<8x128xf32>, vector<8x128xf32> -> vector<8x128xf32>
    %180 = arith.addf %175, %179 : vector<8x128xf32>
    %c4384_141 = arith.constant 4384 : index
    %c0_142 = arith.constant 0 : index
    %181 = vector.load %arg1[%c4384_141, %c0_142] : memref<8256x128xf32, #tpu.memory_space<vmem>>, vector<8x8xf32>
    %cst_143 = arith.constant dense<0.000000e+00> : vector<8x128xf32>
    %182 = tpu.matmul %181, %177, %cst_143 {dimension_numbers = #tpu.dot_dimension_numbers<[1], [0], [0], [1], [0, 0, 1, 1], [], []>} : vector<8x8xf32>, vector<8x128xf32>, vector<8x128xf32> -> vector<8x128xf32>
    %183 = arith.addf %180, %182 : vector<8x128xf32>
    %c4776 = arith.constant 4776 : index
    %c0_144 = arith.constant 0 : index
    %184 = vector.load %arg1[%c4776, %c0_144] : memref<8256x128xf32, #tpu.memory_space<vmem>>, vector<1x128xf32>
    %185 = vector.broadcast %184 : vector<1x128xf32> to vector<8x128xf32>
    %186 = arith.addf %183, %185 : vector<8x128xf32>
    %cst_145 = arith.constant 0.000000e+00 : f32
    %187 = vector.broadcast %cst_145 : f32 to vector<8x128xf32>
    %188 = arith.maximumf %186, %187 : vector<8x128xf32>
    %c4784 = arith.constant 4784 : index
    %c0_146 = arith.constant 0 : index
    %189 = vector.load %arg1[%c4784, %c0_146] : memref<8256x128xf32, #tpu.memory_space<vmem>>, vector<128x128xf32>
    %cst_147 = arith.constant dense<0.000000e+00> : vector<8x128xf32>
    %190 = tpu.matmul %188, %189, %cst_147 {dimension_numbers = #tpu.dot_dimension_numbers<[1], [0], [0], [1], [0, 0, 1, 1], [], []>} : vector<8x128xf32>, vector<128x128xf32>, vector<8x128xf32> -> vector<8x128xf32>
    %c4912 = arith.constant 4912 : index
    %c0_148 = arith.constant 0 : index
    %191 = vector.load %arg1[%c4912, %c0_148] : memref<8256x128xf32, #tpu.memory_space<vmem>>, vector<128x128xf32>
    %cst_149 = arith.constant dense<0.000000e+00> : vector<8x128xf32>
    %192 = tpu.matmul %188, %191, %cst_149 {dimension_numbers = #tpu.dot_dimension_numbers<[1], [0], [0], [1], [0, 0, 1, 1], [], []>} : vector<8x128xf32>, vector<128x128xf32>, vector<8x128xf32> -> vector<8x128xf32>
    %c5040 = arith.constant 5040 : index
    %c0_150 = arith.constant 0 : index
    %193 = vector.load %arg1[%c5040, %c0_150] : memref<8256x128xf32, #tpu.memory_space<vmem>>, vector<128x128xf32>
    %cst_151 = arith.constant dense<0.000000e+00> : vector<8x128xf32>
    %194 = tpu.matmul %188, %193, %cst_151 {dimension_numbers = #tpu.dot_dimension_numbers<[1], [0], [0], [1], [0, 0, 1, 1], [], []>} : vector<8x128xf32>, vector<128x128xf32>, vector<8x128xf32> -> vector<8x128xf32>
    %c4376_152 = arith.constant 4376 : index
    %c0_153 = arith.constant 0 : index
    %195 = vector.load %arg1[%c4376_152, %c0_153] : memref<8256x128xf32, #tpu.memory_space<vmem>>, vector<8x8xf32>
    %cst_154 = arith.constant dense<0.000000e+00> : vector<8x128xf32>
    %196 = tpu.matmul %195, %190, %cst_154 {dimension_numbers = #tpu.dot_dimension_numbers<[1], [0], [0], [1], [0, 0, 1, 1], [], []>} : vector<8x8xf32>, vector<8x128xf32>, vector<8x128xf32> -> vector<8x128xf32>
    %197 = arith.addf %192, %196 : vector<8x128xf32>
    %c4384_155 = arith.constant 4384 : index
    %c0_156 = arith.constant 0 : index
    %198 = vector.load %arg1[%c4384_155, %c0_156] : memref<8256x128xf32, #tpu.memory_space<vmem>>, vector<8x8xf32>
    %cst_157 = arith.constant dense<0.000000e+00> : vector<8x128xf32>
    %199 = tpu.matmul %198, %194, %cst_157 {dimension_numbers = #tpu.dot_dimension_numbers<[1], [0], [0], [1], [0, 0, 1, 1], [], []>} : vector<8x8xf32>, vector<8x128xf32>, vector<8x128xf32> -> vector<8x128xf32>
    %200 = arith.addf %197, %199 : vector<8x128xf32>
    %c5168 = arith.constant 5168 : index
    %c0_158 = arith.constant 0 : index
    %201 = vector.load %arg1[%c5168, %c0_158] : memref<8256x128xf32, #tpu.memory_space<vmem>>, vector<1x128xf32>
    %202 = vector.broadcast %201 : vector<1x128xf32> to vector<8x128xf32>
    %203 = arith.addf %200, %202 : vector<8x128xf32>
    %cst_159 = arith.constant 0.000000e+00 : f32
    %204 = vector.broadcast %cst_159 : f32 to vector<8x128xf32>
    %205 = arith.maximumf %203, %204 : vector<8x128xf32>
    %c5176 = arith.constant 5176 : index
    %c0_160 = arith.constant 0 : index
    %206 = vector.load %arg1[%c5176, %c0_160] : memref<8256x128xf32, #tpu.memory_space<vmem>>, vector<4x8xf32>
    %cst_161 = arith.constant dense<0.000000e+00> : vector<4x128xf32>
    %207 = tpu.matmul %206, %205, %cst_161 {dimension_numbers = #tpu.dot_dimension_numbers<[1], [0], [0], [1], [0, 0, 1, 1], [], []>} : vector<4x8xf32>, vector<8x128xf32>, vector<4x128xf32> -> vector<4x128xf32>
    %c5184 = arith.constant 5184 : index
    %c0_162 = arith.constant 0 : index
    %208 = vector.load %arg1[%c5184, %c0_162] : memref<8256x128xf32, #tpu.memory_space<vmem>>, vector<4x8xf32>
    %cst_163 = arith.constant dense<0.000000e+00> : vector<4x128xf32>
    %209 = tpu.matmul %208, %205, %cst_163 {dimension_numbers = #tpu.dot_dimension_numbers<[1], [0], [0], [1], [0, 0, 1, 1], [], []>} : vector<4x8xf32>, vector<8x128xf32>, vector<4x128xf32> -> vector<4x128xf32>
    %210 = arith.maximumf %207, %209 : vector<4x128xf32>
    %c5192 = arith.constant 5192 : index
    %c0_164 = arith.constant 0 : index
    %211 = vector.load %arg1[%c5192, %c0_164] : memref<8256x128xf32, #tpu.memory_space<vmem>>, vector<128x128xf32>
    %cst_165 = arith.constant dense<0.000000e+00> : vector<4x128xf32>
    %212 = tpu.matmul %210, %211, %cst_165 {dimension_numbers = #tpu.dot_dimension_numbers<[1], [0], [0], [1], [0, 0, 1, 1], [], []>} : vector<4x128xf32>, vector<128x128xf32>, vector<4x128xf32> -> vector<4x128xf32>
    %c5320 = arith.constant 5320 : index
    %c0_166 = arith.constant 0 : index
    %213 = vector.load %arg1[%c5320, %c0_166] : memref<8256x128xf32, #tpu.memory_space<vmem>>, vector<128x128xf32>
    %cst_167 = arith.constant dense<0.000000e+00> : vector<4x128xf32>
    %214 = tpu.matmul %210, %213, %cst_167 {dimension_numbers = #tpu.dot_dimension_numbers<[1], [0], [0], [1], [0, 0, 1, 1], [], []>} : vector<4x128xf32>, vector<128x128xf32>, vector<4x128xf32> -> vector<4x128xf32>
    %215 = arith.maximumf %212, %214 : vector<4x128xf32>
    %c5448 = arith.constant 5448 : index
    %c0_168 = arith.constant 0 : index
    %216 = vector.load %arg1[%c5448, %c0_168] : memref<8256x128xf32, #tpu.memory_space<vmem>>, vector<128x128xf32>
    %cst_169 = arith.constant dense<0.000000e+00> : vector<4x128xf32>
    %217 = tpu.matmul %215, %216, %cst_169 {dimension_numbers = #tpu.dot_dimension_numbers<[1], [0], [0], [1], [0, 0, 1, 1], [], []>} : vector<4x128xf32>, vector<128x128xf32>, vector<4x128xf32> -> vector<4x128xf32>
    %c5576 = arith.constant 5576 : index
    %c0_170 = arith.constant 0 : index
    %218 = vector.load %arg1[%c5576, %c0_170] : memref<8256x128xf32, #tpu.memory_space<vmem>>, vector<128x128xf32>
    %cst_171 = arith.constant dense<0.000000e+00> : vector<4x128xf32>
    %219 = tpu.matmul %215, %218, %cst_171 {dimension_numbers = #tpu.dot_dimension_numbers<[1], [0], [0], [1], [0, 0, 1, 1], [], []>} : vector<4x128xf32>, vector<128x128xf32>, vector<4x128xf32> -> vector<4x128xf32>
    %c5704 = arith.constant 5704 : index
    %c0_172 = arith.constant 0 : index
    %220 = vector.load %arg1[%c5704, %c0_172] : memref<8256x128xf32, #tpu.memory_space<vmem>>, vector<128x128xf32>
    %cst_173 = arith.constant dense<0.000000e+00> : vector<4x128xf32>
    %221 = tpu.matmul %215, %220, %cst_173 {dimension_numbers = #tpu.dot_dimension_numbers<[1], [0], [0], [1], [0, 0, 1, 1], [], []>} : vector<4x128xf32>, vector<128x128xf32>, vector<4x128xf32> -> vector<4x128xf32>
    %c5840 = arith.constant 5840 : index
    %c0_174 = arith.constant 0 : index
    %222 = vector.load %arg1[%c5840, %c0_174] : memref<8256x128xf32, #tpu.memory_space<vmem>>, vector<4x4xf32>
    %cst_175 = arith.constant dense<0.000000e+00> : vector<4x128xf32>
    %223 = tpu.matmul %222, %217, %cst_175 {dimension_numbers = #tpu.dot_dimension_numbers<[1], [0], [0], [1], [0, 0, 1, 1], [], []>} : vector<4x4xf32>, vector<4x128xf32>, vector<4x128xf32> -> vector<4x128xf32>
    %224 = arith.addf %219, %223 : vector<4x128xf32>
    %c5848 = arith.constant 5848 : index
    %c0_176 = arith.constant 0 : index
    %225 = vector.load %arg1[%c5848, %c0_176] : memref<8256x128xf32, #tpu.memory_space<vmem>>, vector<4x4xf32>
    %cst_177 = arith.constant dense<0.000000e+00> : vector<4x128xf32>
    %226 = tpu.matmul %225, %221, %cst_177 {dimension_numbers = #tpu.dot_dimension_numbers<[1], [0], [0], [1], [0, 0, 1, 1], [], []>} : vector<4x4xf32>, vector<4x128xf32>, vector<4x128xf32> -> vector<4x128xf32>
    %227 = arith.addf %224, %226 : vector<4x128xf32>
    %c5832 = arith.constant 5832 : index
    %c0_178 = arith.constant 0 : index
    %228 = vector.load %arg1[%c5832, %c0_178] : memref<8256x128xf32, #tpu.memory_space<vmem>>, vector<1x128xf32>
    %229 = vector.broadcast %228 : vector<1x128xf32> to vector<4x128xf32>
    %230 = arith.addf %227, %229 : vector<4x128xf32>
    %cst_179 = arith.constant 0.000000e+00 : f32
    %231 = vector.broadcast %cst_179 : f32 to vector<4x128xf32>
    %232 = arith.maximumf %230, %231 : vector<4x128xf32>
    %c5856 = arith.constant 5856 : index
    %c0_180 = arith.constant 0 : index
    %233 = vector.load %arg1[%c5856, %c0_180] : memref<8256x128xf32, #tpu.memory_space<vmem>>, vector<128x128xf32>
    %cst_181 = arith.constant dense<0.000000e+00> : vector<4x128xf32>
    %234 = tpu.matmul %232, %233, %cst_181 {dimension_numbers = #tpu.dot_dimension_numbers<[1], [0], [0], [1], [0, 0, 1, 1], [], []>} : vector<4x128xf32>, vector<128x128xf32>, vector<4x128xf32> -> vector<4x128xf32>
    %c5984 = arith.constant 5984 : index
    %c0_182 = arith.constant 0 : index
    %235 = vector.load %arg1[%c5984, %c0_182] : memref<8256x128xf32, #tpu.memory_space<vmem>>, vector<128x128xf32>
    %cst_183 = arith.constant dense<0.000000e+00> : vector<4x128xf32>
    %236 = tpu.matmul %232, %235, %cst_183 {dimension_numbers = #tpu.dot_dimension_numbers<[1], [0], [0], [1], [0, 0, 1, 1], [], []>} : vector<4x128xf32>, vector<128x128xf32>, vector<4x128xf32> -> vector<4x128xf32>
    %c6112 = arith.constant 6112 : index
    %c0_184 = arith.constant 0 : index
    %237 = vector.load %arg1[%c6112, %c0_184] : memref<8256x128xf32, #tpu.memory_space<vmem>>, vector<128x128xf32>
    %cst_185 = arith.constant dense<0.000000e+00> : vector<4x128xf32>
    %238 = tpu.matmul %232, %237, %cst_185 {dimension_numbers = #tpu.dot_dimension_numbers<[1], [0], [0], [1], [0, 0, 1, 1], [], []>} : vector<4x128xf32>, vector<128x128xf32>, vector<4x128xf32> -> vector<4x128xf32>
    %c5840_186 = arith.constant 5840 : index
    %c0_187 = arith.constant 0 : index
    %239 = vector.load %arg1[%c5840_186, %c0_187] : memref<8256x128xf32, #tpu.memory_space<vmem>>, vector<4x4xf32>
    %cst_188 = arith.constant dense<0.000000e+00> : vector<4x128xf32>
    %240 = tpu.matmul %239, %234, %cst_188 {dimension_numbers = #tpu.dot_dimension_numbers<[1], [0], [0], [1], [0, 0, 1, 1], [], []>} : vector<4x4xf32>, vector<4x128xf32>, vector<4x128xf32> -> vector<4x128xf32>
    %241 = arith.addf %236, %240 : vector<4x128xf32>
    %c5848_189 = arith.constant 5848 : index
    %c0_190 = arith.constant 0 : index
    %242 = vector.load %arg1[%c5848_189, %c0_190] : memref<8256x128xf32, #tpu.memory_space<vmem>>, vector<4x4xf32>
    %cst_191 = arith.constant dense<0.000000e+00> : vector<4x128xf32>
    %243 = tpu.matmul %242, %238, %cst_191 {dimension_numbers = #tpu.dot_dimension_numbers<[1], [0], [0], [1], [0, 0, 1, 1], [], []>} : vector<4x4xf32>, vector<4x128xf32>, vector<4x128xf32> -> vector<4x128xf32>
    %244 = arith.addf %241, %243 : vector<4x128xf32>
    %c6240 = arith.constant 6240 : index
    %c0_192 = arith.constant 0 : index
    %245 = vector.load %arg1[%c6240, %c0_192] : memref<8256x128xf32, #tpu.memory_space<vmem>>, vector<1x128xf32>
    %246 = vector.broadcast %245 : vector<1x128xf32> to vector<4x128xf32>
    %247 = arith.addf %244, %246 : vector<4x128xf32>
    %cst_193 = arith.constant 0.000000e+00 : f32
    %248 = vector.broadcast %cst_193 : f32 to vector<4x128xf32>
    %249 = arith.maximumf %247, %248 : vector<4x128xf32>
    %c6248 = arith.constant 6248 : index
    %c0_194 = arith.constant 0 : index
    %250 = vector.load %arg1[%c6248, %c0_194] : memref<8256x128xf32, #tpu.memory_space<vmem>>, vector<128x128xf32>
    %cst_195 = arith.constant dense<0.000000e+00> : vector<4x128xf32>
    %251 = tpu.matmul %249, %250, %cst_195 {dimension_numbers = #tpu.dot_dimension_numbers<[1], [0], [0], [1], [0, 0, 1, 1], [], []>} : vector<4x128xf32>, vector<128x128xf32>, vector<4x128xf32> -> vector<4x128xf32>
    %c6376 = arith.constant 6376 : index
    %c0_196 = arith.constant 0 : index
    %252 = vector.load %arg1[%c6376, %c0_196] : memref<8256x128xf32, #tpu.memory_space<vmem>>, vector<128x128xf32>
    %cst_197 = arith.constant dense<0.000000e+00> : vector<4x128xf32>
    %253 = tpu.matmul %249, %252, %cst_197 {dimension_numbers = #tpu.dot_dimension_numbers<[1], [0], [0], [1], [0, 0, 1, 1], [], []>} : vector<4x128xf32>, vector<128x128xf32>, vector<4x128xf32> -> vector<4x128xf32>
    %c6504 = arith.constant 6504 : index
    %c0_198 = arith.constant 0 : index
    %254 = vector.load %arg1[%c6504, %c0_198] : memref<8256x128xf32, #tpu.memory_space<vmem>>, vector<128x128xf32>
    %cst_199 = arith.constant dense<0.000000e+00> : vector<4x128xf32>
    %255 = tpu.matmul %249, %254, %cst_199 {dimension_numbers = #tpu.dot_dimension_numbers<[1], [0], [0], [1], [0, 0, 1, 1], [], []>} : vector<4x128xf32>, vector<128x128xf32>, vector<4x128xf32> -> vector<4x128xf32>
    %c5840_200 = arith.constant 5840 : index
    %c0_201 = arith.constant 0 : index
    %256 = vector.load %arg1[%c5840_200, %c0_201] : memref<8256x128xf32, #tpu.memory_space<vmem>>, vector<4x4xf32>
    %cst_202 = arith.constant dense<0.000000e+00> : vector<4x128xf32>
    %257 = tpu.matmul %256, %251, %cst_202 {dimension_numbers = #tpu.dot_dimension_numbers<[1], [0], [0], [1], [0, 0, 1, 1], [], []>} : vector<4x4xf32>, vector<4x128xf32>, vector<4x128xf32> -> vector<4x128xf32>
    %258 = arith.addf %253, %257 : vector<4x128xf32>
    %c5848_203 = arith.constant 5848 : index
    %c0_204 = arith.constant 0 : index
    %259 = vector.load %arg1[%c5848_203, %c0_204] : memref<8256x128xf32, #tpu.memory_space<vmem>>, vector<4x4xf32>
    %cst_205 = arith.constant dense<0.000000e+00> : vector<4x128xf32>
    %260 = tpu.matmul %259, %255, %cst_205 {dimension_numbers = #tpu.dot_dimension_numbers<[1], [0], [0], [1], [0, 0, 1, 1], [], []>} : vector<4x4xf32>, vector<4x128xf32>, vector<4x128xf32> -> vector<4x128xf32>
    %261 = arith.addf %258, %260 : vector<4x128xf32>
    %c6632 = arith.constant 6632 : index
    %c0_206 = arith.constant 0 : index
    %262 = vector.load %arg1[%c6632, %c0_206] : memref<8256x128xf32, #tpu.memory_space<vmem>>, vector<1x128xf32>
    %263 = vector.broadcast %262 : vector<1x128xf32> to vector<4x128xf32>
    %264 = arith.addf %261, %263 : vector<4x128xf32>
    %cst_207 = arith.constant 0.000000e+00 : f32
    %265 = vector.broadcast %cst_207 : f32 to vector<4x128xf32>
    %266 = arith.maximumf %264, %265 : vector<4x128xf32>
    %c6640 = arith.constant 6640 : index
    %c0_208 = arith.constant 0 : index
    %267 = vector.load %arg1[%c6640, %c0_208] : memref<8256x128xf32, #tpu.memory_space<vmem>>, vector<2x4xf32>
    %cst_209 = arith.constant dense<0.000000e+00> : vector<2x128xf32>
    %268 = tpu.matmul %267, %266, %cst_209 {dimension_numbers = #tpu.dot_dimension_numbers<[1], [0], [0], [1], [0, 0, 1, 1], [], []>} : vector<2x4xf32>, vector<4x128xf32>, vector<2x128xf32> -> vector<2x128xf32>
    %c6648 = arith.constant 6648 : index
    %c0_210 = arith.constant 0 : index
    %269 = vector.load %arg1[%c6648, %c0_210] : memref<8256x128xf32, #tpu.memory_space<vmem>>, vector<2x4xf32>
    %cst_211 = arith.constant dense<0.000000e+00> : vector<2x128xf32>
    %270 = tpu.matmul %269, %266, %cst_211 {dimension_numbers = #tpu.dot_dimension_numbers<[1], [0], [0], [1], [0, 0, 1, 1], [], []>} : vector<2x4xf32>, vector<4x128xf32>, vector<2x128xf32> -> vector<2x128xf32>
    %271 = arith.maximumf %268, %270 : vector<2x128xf32>
    %c6656 = arith.constant 6656 : index
    %c0_212 = arith.constant 0 : index
    %272 = vector.load %arg1[%c6656, %c0_212] : memref<8256x128xf32, #tpu.memory_space<vmem>>, vector<128x128xf32>
    %cst_213 = arith.constant dense<0.000000e+00> : vector<2x128xf32>
    %273 = tpu.matmul %271, %272, %cst_213 {dimension_numbers = #tpu.dot_dimension_numbers<[1], [0], [0], [1], [0, 0, 1, 1], [], []>} : vector<2x128xf32>, vector<128x128xf32>, vector<2x128xf32> -> vector<2x128xf32>
    %c6784 = arith.constant 6784 : index
    %c0_214 = arith.constant 0 : index
    %274 = vector.load %arg1[%c6784, %c0_214] : memref<8256x128xf32, #tpu.memory_space<vmem>>, vector<128x128xf32>
    %cst_215 = arith.constant dense<0.000000e+00> : vector<2x128xf32>
    %275 = tpu.matmul %271, %274, %cst_215 {dimension_numbers = #tpu.dot_dimension_numbers<[1], [0], [0], [1], [0, 0, 1, 1], [], []>} : vector<2x128xf32>, vector<128x128xf32>, vector<2x128xf32> -> vector<2x128xf32>
    %276 = arith.maximumf %273, %275 : vector<2x128xf32>
    %c6912 = arith.constant 6912 : index
    %c0_216 = arith.constant 0 : index
    %277 = vector.load %arg1[%c6912, %c0_216] : memref<8256x128xf32, #tpu.memory_space<vmem>>, vector<128x128xf32>
    %cst_217 = arith.constant dense<0.000000e+00> : vector<2x128xf32>
    %278 = tpu.matmul %276, %277, %cst_217 {dimension_numbers = #tpu.dot_dimension_numbers<[1], [0], [0], [1], [0, 0, 1, 1], [], []>} : vector<2x128xf32>, vector<128x128xf32>, vector<2x128xf32> -> vector<2x128xf32>
    %c7040 = arith.constant 7040 : index
    %c0_218 = arith.constant 0 : index
    %279 = vector.load %arg1[%c7040, %c0_218] : memref<8256x128xf32, #tpu.memory_space<vmem>>, vector<1x128xf32>
    %280 = vector.broadcast %279 : vector<1x128xf32> to vector<2x128xf32>
    %281 = arith.addf %278, %280 : vector<2x128xf32>
    %cst_219 = arith.constant 0.000000e+00 : f32
    %282 = vector.broadcast %cst_219 : f32 to vector<2x128xf32>
    %283 = arith.maximumf %281, %282 : vector<2x128xf32>
    %c7048 = arith.constant 7048 : index
    %c0_220 = arith.constant 0 : index
    %284 = vector.load %arg1[%c7048, %c0_220] : memref<8256x128xf32, #tpu.memory_space<vmem>>, vector<128x128xf32>
    %cst_221 = arith.constant dense<0.000000e+00> : vector<2x128xf32>
    %285 = tpu.matmul %283, %284, %cst_221 {dimension_numbers = #tpu.dot_dimension_numbers<[1], [0], [0], [1], [0, 0, 1, 1], [], []>} : vector<2x128xf32>, vector<128x128xf32>, vector<2x128xf32> -> vector<2x128xf32>
    %c7176 = arith.constant 7176 : index
    %c0_222 = arith.constant 0 : index
    %286 = vector.load %arg1[%c7176, %c0_222] : memref<8256x128xf32, #tpu.memory_space<vmem>>, vector<1x128xf32>
    %287 = vector.broadcast %286 : vector<1x128xf32> to vector<2x128xf32>
    %288 = arith.addf %285, %287 : vector<2x128xf32>
    %cst_223 = arith.constant 0.000000e+00 : f32
    %289 = vector.broadcast %cst_223 : f32 to vector<2x128xf32>
    %290 = arith.maximumf %288, %289 : vector<2x128xf32>
    %c7184 = arith.constant 7184 : index
    %c0_224 = arith.constant 0 : index
    %291 = vector.load %arg1[%c7184, %c0_224] : memref<8256x128xf32, #tpu.memory_space<vmem>>, vector<128x128xf32>
    %cst_225 = arith.constant dense<0.000000e+00> : vector<2x128xf32>
    %292 = tpu.matmul %290, %291, %cst_225 {dimension_numbers = #tpu.dot_dimension_numbers<[1], [0], [0], [1], [0, 0, 1, 1], [], []>} : vector<2x128xf32>, vector<128x128xf32>, vector<2x128xf32> -> vector<2x128xf32>
    %c7312 = arith.constant 7312 : index
    %c0_226 = arith.constant 0 : index
    %293 = vector.load %arg1[%c7312, %c0_226] : memref<8256x128xf32, #tpu.memory_space<vmem>>, vector<1x128xf32>
    %294 = vector.broadcast %293 : vector<1x128xf32> to vector<2x128xf32>
    %295 = arith.addf %292, %294 : vector<2x128xf32>
    %cst_227 = arith.constant dense<0.000000e+00> : vector<128xf32>
    %296 = vector.multi_reduction <add>, %295, %cst_227 [0] : vector<2x128xf32> to vector<128xf32>
    %297 = vector.shape_cast %296 : vector<128xf32> to vector<1x128xf32>
    %cst_228 = arith.constant 2.000000e+00 : f32
    %298 = vector.broadcast %cst_228 : f32 to vector<1x128xf32>
    %299 = arith.divf %297, %298 : vector<1x128xf32>
    %c7320 = arith.constant 7320 : index
    %c0_229 = arith.constant 0 : index
    %300 = vector.load %arg1[%c7320, %c0_229] : memref<8256x128xf32, #tpu.memory_space<vmem>>, vector<128x128xf32>
    %cst_230 = arith.constant dense<0.000000e+00> : vector<1x128xf32>
    %301 = tpu.matmul %299, %300, %cst_230 {dimension_numbers = #tpu.dot_dimension_numbers<[1], [0], [0], [1], [0, 0, 1, 1], [], []>} : vector<1x128xf32>, vector<128x128xf32>, vector<1x128xf32> -> vector<1x128xf32>
    %c7832 = arith.constant 7832 : index
    %c0_231 = arith.constant 0 : index
    %302 = vector.load %arg1[%c7832, %c0_231] : memref<8256x128xf32, #tpu.memory_space<vmem>>, vector<1x128xf32>
    %303 = arith.addf %301, %302 : vector<1x128xf32>
    %c7448 = arith.constant 7448 : index
    %c0_232 = arith.constant 0 : index
    %304 = vector.load %arg1[%c7448, %c0_232] : memref<8256x128xf32, #tpu.memory_space<vmem>>, vector<128x128xf32>
    %cst_233 = arith.constant dense<0.000000e+00> : vector<2x128xf32>
    %305 = tpu.matmul %295, %304, %cst_233 {dimension_numbers = #tpu.dot_dimension_numbers<[1], [0], [0], [1], [0, 0, 1, 1], [], []>} : vector<2x128xf32>, vector<128x128xf32>, vector<2x128xf32> -> vector<2x128xf32>
    %c7840 = arith.constant 7840 : index
    %c0_234 = arith.constant 0 : index
    %306 = vector.load %arg1[%c7840, %c0_234] : memref<8256x128xf32, #tpu.memory_space<vmem>>, vector<1x128xf32>
    %307 = vector.broadcast %306 : vector<1x128xf32> to vector<2x128xf32>
    %308 = arith.addf %305, %307 : vector<2x128xf32>
    %c7576 = arith.constant 7576 : index
    %c0_235 = arith.constant 0 : index
    %309 = vector.load %arg1[%c7576, %c0_235] : memref<8256x128xf32, #tpu.memory_space<vmem>>, vector<128x128xf32>
    %cst_236 = arith.constant dense<0.000000e+00> : vector<2x128xf32>
    %310 = tpu.matmul %295, %309, %cst_236 {dimension_numbers = #tpu.dot_dimension_numbers<[1], [0], [0], [1], [0, 0, 1, 1], [], []>} : vector<2x128xf32>, vector<128x128xf32>, vector<2x128xf32> -> vector<2x128xf32>
    %c7848 = arith.constant 7848 : index
    %c0_237 = arith.constant 0 : index
    %311 = vector.load %arg1[%c7848, %c0_237] : memref<8256x128xf32, #tpu.memory_space<vmem>>, vector<1x128xf32>
    %312 = vector.broadcast %311 : vector<1x128xf32> to vector<2x128xf32>
    %313 = arith.addf %310, %312 : vector<2x128xf32>
    %314 = vector.broadcast %303 : vector<1x128xf32> to vector<2x128xf32>
    %315 = arith.mulf %308, %314 : vector<2x128xf32>
    %c7864 = arith.constant 7864 : index
    %c0_238 = arith.constant 0 : index
    %316 = vector.load %arg1[%c7864, %c0_238] : memref<8256x128xf32, #tpu.memory_space<vmem>>, vector<128x128xf32>
    %cst_239 = arith.constant dense<0.000000e+00> : vector<2x128xf32>
    %317 = tpu.matmul %315, %316, %cst_239 {dimension_numbers = #tpu.dot_dimension_numbers<[1], [0], [0], [1], [0, 0, 1, 1], [], []>} : vector<2x128xf32>, vector<128x128xf32>, vector<2x128xf32> -> vector<2x128xf32>
    %cst_240 = arith.constant 5.000000e-01 : f32
    %318 = vector.broadcast %cst_240 : f32 to vector<2x128xf32>
    %319 = arith.mulf %317, %318 : vector<2x128xf32>
    %cst_241 = arith.constant dense<0xFF800000> : vector<128xf32>
    %320 = vector.multi_reduction <maximumf>, %319, %cst_241 [0] : vector<2x128xf32> to vector<128xf32>
    %321 = vector.shape_cast %320 : vector<128xf32> to vector<1x128xf32>
    %322 = vector.broadcast %321 : vector<1x128xf32> to vector<2x128xf32>
    %323 = arith.subf %319, %322 : vector<2x128xf32>
    %324 = math.exp %323 : vector<2x128xf32>
    %cst_242 = arith.constant dense<0.000000e+00> : vector<128xf32>
    %325 = vector.multi_reduction <add>, %324, %cst_242 [0] : vector<2x128xf32> to vector<128xf32>
    %326 = vector.shape_cast %325 : vector<128xf32> to vector<1x128xf32>
    %327 = vector.broadcast %326 : vector<1x128xf32> to vector<2x128xf32>
    %328 = arith.divf %324, %327 : vector<2x128xf32>
    %c7992 = arith.constant 7992 : index
    %c0_243 = arith.constant 0 : index
    %329 = vector.load %arg1[%c7992, %c0_243] : memref<8256x128xf32, #tpu.memory_space<vmem>>, vector<128x128xf32>
    %cst_244 = arith.constant dense<0.000000e+00> : vector<2x128xf32>
    %330 = tpu.matmul %328, %329, %cst_244 {dimension_numbers = #tpu.dot_dimension_numbers<[1], [0], [0], [1], [0, 0, 1, 1], [], []>} : vector<2x128xf32>, vector<128x128xf32>, vector<2x128xf32> -> vector<2x128xf32>
    %331 = arith.mulf %330, %313 : vector<2x128xf32>
    %cst_245 = arith.constant dense<0.000000e+00> : vector<128xf32>
    %332 = vector.multi_reduction <add>, %331, %cst_245 [0] : vector<2x128xf32> to vector<128xf32>
    %333 = vector.shape_cast %332 : vector<128xf32> to vector<1x128xf32>
    %c7704 = arith.constant 7704 : index
    %c0_246 = arith.constant 0 : index
    %334 = vector.load %arg1[%c7704, %c0_246] : memref<8256x128xf32, #tpu.memory_space<vmem>>, vector<128x128xf32>
    %cst_247 = arith.constant dense<0.000000e+00> : vector<1x128xf32>
    %335 = tpu.matmul %333, %334, %cst_247 {dimension_numbers = #tpu.dot_dimension_numbers<[1], [0], [0], [1], [0, 0, 1, 1], [], []>} : vector<1x128xf32>, vector<128x128xf32>, vector<1x128xf32> -> vector<1x128xf32>
    %c7856 = arith.constant 7856 : index
    %c0_248 = arith.constant 0 : index
    %336 = vector.load %arg1[%c7856, %c0_248] : memref<8256x128xf32, #tpu.memory_space<vmem>>, vector<1x128xf32>
    %337 = arith.addf %335, %336 : vector<1x128xf32>
    %c8120 = arith.constant 8120 : index
    %c0_249 = arith.constant 0 : index
    %338 = vector.load %arg1[%c8120, %c0_249] : memref<8256x128xf32, #tpu.memory_space<vmem>>, vector<128x128xf32>
    %cst_250 = arith.constant dense<0.000000e+00> : vector<1x128xf32>
    %339 = tpu.matmul %337, %338, %cst_250 {dimension_numbers = #tpu.dot_dimension_numbers<[1], [0], [0], [1], [0, 0, 1, 1], [], []>} : vector<1x128xf32>, vector<128x128xf32>, vector<1x128xf32> -> vector<1x128xf32>
    %c8248 = arith.constant 8248 : index
    %c0_251 = arith.constant 0 : index
    %340 = vector.load %arg1[%c8248, %c0_251] : memref<8256x128xf32, #tpu.memory_space<vmem>>, vector<1x128xf32>
    %341 = arith.addf %339, %340 : vector<1x128xf32>
    %342 = vector.extract_strided_slice %341 {offsets = [0, 0], sizes = [1, 1], strides = [1, 1]} : vector<1x128xf32> to vector<1x1xf32>
    %c0_252 = arith.constant 0 : index
    %c0_253 = arith.constant 0 : index
    %343 = vector.load %arg2[%c0_252, %c0_253] : memref<1x1xf32, #tpu.memory_space<vmem>>, vector<1x1xf32>
    tpu.vector_store %arg2[%c0_252, %c0_253], %342 {strides = array<i32>} : memref<1x1xf32, #tpu.memory_space<vmem>>, vector<1x1xf32>,
    return
  }
}

</mosaic_0001>

<llo_original>
// kernel: forward.1
$region0: #{forward.1}
  #allocation0 [shape = 'u32[]', space=smem, size = 0x4, offset = 0x4, fixed_abs, tag = 'smem constant byte address 0x4 - core index']
  #allocation1 [shape = 'u32[144,128]{1,0:T(1,128)}', space=vmem, size = 0x12000, scoped, tag = 'internal scratch']
  %s0 = inlined_call_operand.vmem [shape: f32[64,128], index: 0, kind: input, shape index: {}]
  %s1 = inlined_call_operand.hbm [shape: f32[8256,128], index: 1, kind: input, shape index: {}]
  %s2 = inlined_call_operand.hbm [shape: f32[1,1], index: 2, kind: output, shape index: {}]
  %s3 = sld [smem:[#allocation0]]
  $region22: #{forward.1} parent=0
    _
  %s5 = ssub.s32 1, %s3
  %s6 = scalar_select 0, %s5, %s3
  $region1: #{forward.1} parent=0
    #allocation2 [shape = 'u8[4227072]{0}', space=vmem, size = 0x408000, scoped, tag = 'input window, operand 1, single buffered']
    #allocation3 [shape = 's32[1]{0}', space=sflag, size = 0x4, scoped, tag = 'scoped memory for forward.1']
    #allocation4 [shape = 's32[1]{0}', space=sflag, size = 0x4, scoped, tag = 'scoped memory for forward.1']
    #allocation5 [shape = 'u8[512]{0}', space=vmem, size = 0x400, scoped, tag = 'output window, operand 0, single buffered']
    %7 = vsyncpa [#allocation3], 0
    %8 = vsyncpa [#allocation4], 0
    // Predicated region
    $region2: #{forward.1} parent=1 // pred_check
      _
    $region3: #{forward.1} parent=1 // pred_check_branch
      %10 = sbr.rel (0) target = $region5
    $region4: #{forward.1} parent=1 // pred_region
      _
    $region5: #{forward.1} parent=1 // pred_fallthru
      _
    // Predicated region
    $region6: #{forward.1} parent=1 // pred_check
      _
    $region7: #{forward.1} parent=1 // pred_check_branch
      %12 = sbr.rel (0) target = $region9
    $region8: #{forward.1} parent=1 // pred_region
      %s14 = ssub.s32 132096, 132096
      %15 = vsyncadd [#allocation3], %s14
      %s16 = sshll.u32 [#allocation2], 4
      %s17 = int_to_ptr.vmem [resolvable:$true] %s16
      %22 = dma.hbm_to_vmem [thread:$0]  %s1, 132096, %s17, [#allocation3], 128, 128, 8
    $region9: #{forward.1} parent=1 // pred_fallthru
      _
    // Predicated region
    $region10: #{forward.1} parent=1 // pred_check
      _
    $region11: #{forward.1} parent=1 // pred_check_branch
      %24 = sbr.rel (0) target = $region13
    $region12: #{forward.1} parent=1 // pred_region
      %25 = dma.done [#allocation3], 132096
    $region13: #{forward.1} parent=1 // pred_fallthru
      _
    %v26 = vld [vmem:[%s0] sm:$0xff]
    %v27 = vld [vmem:[%s0 + $0x8] sm:$0xff]
    %v28 = vld [vmem:[%s0 + $0x10] sm:$0xff]
    %v29 = vld [vmem:[%s0 + $0x18] sm:$0xff]
    %v30 = vld [vmem:[%s0 + $0x20] sm:$0xff]
    %v31 = vld [vmem:[%s0 + $0x28] sm:$0xff]
    %v32 = vld [vmem:[%s0 + $0x30] sm:$0xff]
    %v33 = vld [vmem:[%s0 + $0x38] sm:$0xff]
    %v34 = vld [vmem:[#allocation2] sm:$0xff]
    %v35 = vld [vmem:[#allocation2 + $0x8] sm:$0xff]
    %v36 = vld [vmem:[#allocation2 + $0x10] sm:$0xff]
    %v37 = vld [vmem:[#allocation2 + $0x18] sm:$0xff]
    %v38 = vld [vmem:[#allocation2 + $0x20] sm:$0xff]
    %v39 = vld [vmem:[#allocation2 + $0x28] sm:$0xff]
    %v40 = vld [vmem:[#allocation2 + $0x30] sm:$0xff]
    %v41 = vld [vmem:[#allocation2 + $0x38] sm:$0xff]
    %v42 = vld [vmem:[#allocation2 + $0x40] sm:$0xff]
    %v43 = vld [vmem:[#allocation2 + $0x48] sm:$0xff]
    %v44 = vld [vmem:[#allocation2 + $0x50] sm:$0xff]
    %v45 = vld [vmem:[#allocation2 + $0x58] sm:$0xff]
    %v46 = vld [vmem:[#allocation2 + $0x60] sm:$0xff]
    %v47 = vld [vmem:[#allocation2 + $0x68] sm:$0xff]
    %v48 = vld [vmem:[#allocation2 + $0x70] sm:$0xff]
    %v49 = vld [vmem:[#allocation2 + $0x78] sm:$0xff]
    %v50 = vld [vmem:[#allocation2 + $0x80] sm:$0x1]
    %v51 = vlaneseq
    %v52 = vshrl.u32 %v51, 7
    %v53 = vsub.s32 0, %v52
    %v54 = vrot.slane %v50, %v53
    %55 = vmatprep.subr.mxu0 0.0
    %56 = vmatpush1.msra.mxu0 %v34
    %57 = vmatprep.subr.mxu0 0.0
    %58 = vmatpush1.msra.mxu0 %v35
    %59 = vmatprep.subr.mxu0 0.0
    %60 = vmatpush1.msra.mxu0 %v36
    %61 = vmatprep.subr.mxu0 0.0
    %62 = vmatpush1.msra.mxu0 %v37
    %63 = vmatprep.subr.mxu0 0.0
    %64 = vmatpush1.msra.mxu0 %v38
    %65 = vmatprep.subr.mxu0 0.0
    %66 = vmatpush1.msra.mxu0 %v39
    %67 = vmatprep.subr.mxu0 0.0
    %68 = vmatpush1.msra.mxu0 %v40
    %69 = vmatprep.subr.mxu0 0.0
    %70 = vmatpush1.msra.mxu0 %v41
    %71 = vmatprep.subr.mxu0 0.0
    %72 = vmatpush1.msra.mxu0 %v42
    %73 = vmatprep.subr.mxu0 0.0
    %74 = vmatpush1.msra.mxu0 %v43
    %75 = vmatprep.subr.mxu0 0.0
    %76 = vmatpush1.msra.mxu0 %v44
    %77 = vmatprep.subr.mxu0 0.0
    %78 = vmatpush1.msra.mxu0 %v45
    %79 = vmatprep.subr.mxu0 0.0
    %80 = vmatpush1.msra.mxu0 %v46
    %81 = vmatprep.subr.mxu0 0.0
    %82 = vmatpush1.msra.mxu0 %v47
    %83 = vmatprep.subr.mxu0 0.0
    %84 = vmatpush1.msra.mxu0 %v48
    %85 = vmatprep.subr.mxu0 0.0
    %86 = vmatpush1.msra.mxu0 %v49
    %87 = vmatprep.subr.mxu0 0.0
    %88 = vmatpush1.msra.mxu0 0.0
    %89 = vmatprep.subr.mxu0 0.0
    %90 = vmatpush1.msra.mxu0 0.0
    %91 = vmatprep.subr.mxu0 0.0
    %92 = vmatpush1.msra.mxu0 0.0
    %93 = vmatprep.subr.mxu0 0.0
    %94 = vmatpush1.msra.mxu0 0.0
    %95 = vmatprep.subr.mxu0 0.0
    %96 = vmatpush1.msra.mxu0 0.0
    %97 = vmatprep.subr.mxu0 0.0
    %98 = vmatpush1.msra.mxu0 0.0
    %99 = vmatprep.subr.mxu0 0.0
    %100 = vmatpush1.msra.mxu0 0.0
    %101 = vmatprep.subr.mxu0 0.0
    %102 = vmatpush1.msra.mxu0 0.0
    %103 = vmatprep.subr.mxu0 0.0
    %104 = vmatpush1.msra.mxu0 0.0
    %105 = vmatprep.subr.mxu0 0.0
    %106 = vmatpush1.msra.mxu0 0.0
    %107 = vmatprep.subr.mxu0 0.0
    %108 = vmatpush1.msra.mxu0 0.0
    %109 = vmatprep.subr.mxu0 0.0
    %110 = vmatpush1.msra.mxu0 0.0
    %111 = vmatprep.subr.mxu0 0.0
    %112 = vmatpush1.msra.mxu0 0.0
    %113 = vmatprep.subr.mxu0 0.0
    %114 = vmatpush1.msra.mxu0 0.0
    %115 = vmatprep.subr.mxu0 0.0
    %116 = vmatpush1.msra.mxu0 0.0
    %117 = vmatprep.subr.mxu0 0.0
    %118 = vmatpush1.msra.mxu0 0.0
    %119 = vmatprep.mubr.f32.mxu0 0.0
    %120 = vmatmul.mubr.f32.gmra.mrb[0].mxu0 %v26
    %v121 = vpop.f32.mrb[0].mxu0
    %v122 = vadd.f32 %v54, %v121
    %v123 = vpop.f32.mrb[0].mxu0
    %124 = vmatprep.mubr.f32.mxu0 0.0
    %125 = vmatmul.mubr.f32.gmra.mrb[0].mxu0 %v27
    %v126 = vpop.f32.mrb[0].mxu0
    %v127 = vadd.f32 %v54, %v126
    %v128 = vpop.f32.mrb[0].mxu0
    %129 = vmatprep.mubr.f32.mxu0 0.0
    %130 = vmatmul.mubr.f32.gmra.mrb[0].mxu0 %v28
    %v131 = vpop.f32.mrb[0].mxu0
    %v132 = vadd.f32 %v54, %v131
    %v133 = vpop.f32.mrb[0].mxu0
    %134 = vmatprep.mubr.f32.mxu0 0.0
    %135 = vmatmul.mubr.f32.gmra.mrb[0].mxu0 %v29
    %v136 = vpop.f32.mrb[0].mxu0
    %v137 = vadd.f32 %v54, %v136
    %v138 = vpop.f32.mrb[0].mxu0
    %139 = vmatprep.mubr.f32.mxu0 0.0
    %140 = vmatmul.mubr.f32.gmra.mrb[0].mxu0 %v30
    %v141 = vpop.f32.mrb[0].mxu0
    %v142 = vadd.f32 %v54, %v141
    %v143 = vpop.f32.mrb[0].mxu0
    %144 = vmatprep.mubr.f32.mxu0 0.0
    %145 = vmatmul.mubr.f32.gmra.mrb[0].mxu0 %v31
    %v146 = vpop.f32.mrb[0].mxu0
    %v147 = vadd.f32 %v54, %v146
    %v148 = vpop.f32.mrb[0].mxu0
    %149 = vmatprep.mubr.f32.mxu0 0.0
    %150 = vmatmul.mubr.f32.gmra.mrb[0].mxu0 %v32
    %v151 = vpop.f32.mrb[0].mxu0
    %v152 = vadd.f32 %v54, %v151
    %v153 = vpop.f32.mrb[0].mxu0
    %154 = vmatprep.mubr.f32.mxu0 0.0
    %155 = vmatmul.mubr.f32.gmra.mrb[0].mxu0 %v33
    %v156 = vpop.f32.mrb[0].mxu0
    %v157 = vadd.f32 %v54, %v156
    %v158 = vpop.f32.mrb[0].mxu0
    %159 = vdwg.mxu0
    %v160 = vld [vmem:[#allocation2 + $0x88] sm:$0xff]
    %v161 = vld [vmem:[#allocation2 + $0x90] sm:$0xff]
    %v162 = vld [vmem:[#allocation2 + $0x98] sm:$0xff]
    %v163 = vld [vmem:[#allocation2 + $0xa0] sm:$0xff]
    %v164 = vld [vmem:[#allocation2 + $0xa8] sm:$0xff]
    %v165 = vld [vmem:[#allocation2 + $0xb0] sm:$0xff]
    %v166 = vld [vmem:[#allocation2 + $0xb8] sm:$0xff]
    %v167 = vld [vmem:[#allocation2 + $0xc0] sm:$0xff]
    %v168 = vld [vmem:[#allocation2 + $0xc8] sm:$0xff]
    %v169 = vld [vmem:[#allocation2 + $0xd0] sm:$0xff]
    %v170 = vld [vmem:[#allocation2 + $0xd8] sm:$0xff]
    %v171 = vld [vmem:[#allocation2 + $0xe0] sm:$0xff]
    %v172 = vld [vmem:[#allocation2 + $0xe8] sm:$0xff]
    %v173 = vld [vmem:[#allocation2 + $0xf0] sm:$0xff]
    %v174 = vld [vmem:[#allocation2 + $0xf8] sm:$0xff]
    %v175 = vld [vmem:[#allocation2 + $0x100] sm:$0xff]
    %176 = vmatprep.subr.mxu0 0.0
    %177 = vmatpush1.msra.mxu0 %v160
    %178 = vmatprep.subr.mxu0 0.0
    %179 = vmatpush1.msra.mxu0 %v161
    %180 = vmatprep.subr.mxu0 0.0
    %181 = vmatpush1.msra.mxu0 %v162
    %182 = vmatprep.subr.mxu0 0.0
    %183 = vmatpush1.msra.mxu0 %v163
    %184 = vmatprep.subr.mxu0 0.0
    %185 = vmatpush1.msra.mxu0 %v164
    %186 = vmatprep.subr.mxu0 0.0
    %187 = vmatpush1.msra.mxu0 %v165
    %188 = vmatprep.subr.mxu0 0.0
    %189 = vmatpush1.msra.mxu0 %v166
    %190 = vmatprep.subr.mxu0 0.0
    %191 = vmatpush1.msra.mxu0 %v167
    %192 = vmatprep.subr.mxu0 0.0
    %193 = vmatpush1.msra.mxu0 %v168
    %194 = vmatprep.subr.mxu0 0.0
    %195 = vmatpush1.msra.mxu0 %v169
    %196 = vmatprep.subr.mxu0 0.0
    %197 = vmatpush1.msra.mxu0 %v170
    %198 = vmatprep.subr.mxu0 0.0
    %199 = vmatpush1.msra.mxu0 %v171
    %200 = vmatprep.subr.mxu0 0.0
    %201 = vmatpush1.msra.mxu0 %v172
    %202 = vmatprep.subr.mxu0 0.0
    %203 = vmatpush1.msra.mxu0 %v173
    %204 = vmatprep.subr.mxu0 0.0
    %205 = vmatpush1.msra.mxu0 %v174
    %206 = vmatprep.subr.mxu0 0.0
    %207 = vmatpush1.msra.mxu0 %v175
    %208 = vmatprep.subr.mxu0 0.0
    %209 = vmatpush1.msra.mxu0 0.0
    %210 = vmatprep.subr.mxu0 0.0
    %211 = vmatpush1.msra.mxu0 0.0
    %212 = vmatprep.subr.mxu0 0.0
    %213 = vmatpush1.msra.mxu0 0.0
    %214 = vmatprep.subr.mxu0 0.0
    %215 = vmatpush1.msra.mxu0 0.0
    %216 = vmatprep.subr.mxu0 0.0
    %217 = vmatpush1.msra.mxu0 0.0
    %218 = vmatprep.subr.mxu0 0.0
    %219 = vmatpush1.msra.mxu0 0.0
    %220 = vmatprep.subr.mxu0 0.0
    %221 = vmatpush1.msra.mxu0 0.0
    %222 = vmatprep.subr.mxu0 0.0
    %223 = vmatpush1.msra.mxu0 0.0
    %224 = vmatprep.subr.mxu0 0.0
    %225 = vmatpush1.msra.mxu0 0.0
    %226 = vmatprep.subr.mxu0 0.0
    %227 = vmatpush1.msra.mxu0 0.0
    %228 = vmatprep.subr.mxu0 0.0
    %229 = vmatpush1.msra.mxu0 0.0
    %230 = vmatprep.subr.mxu0 0.0
    %231 = vmatpush1.msra.mxu0 0.0
    %232 = vmatprep.subr.mxu0 0.0
    %233 = vmatpush1.msra.mxu0 0.0
    %234 = vmatprep.subr.mxu0 0.0
    %235 = vmatpush1.msra.mxu0 0.0
    %236 = vmatprep.subr.mxu0 0.0
    %237 = vmatpush1.msra.mxu0 0.0
    %238 = vmatprep.subr.mxu0 0.0
    %239 = vmatpush1.msra.mxu0 0.0
    %240 = vmatprep.mubr.f32.mxu0 0.0
    %241 = vmatmul.mubr.f32.gmra.mrb[0].mxu0 %v122
    %v242 = vpop.f32.mrb[0].mxu0
    %v243 = vadd.f32 0.0, %v242
    %v244 = vpop.f32.mrb[0].mxu0
    %245 = vmatprep.mubr.f32.mxu0 0.0
    %246 = vmatmul.mubr.f32.gmra.mrb[0].mxu0 %v127
    %v247 = vpop.f32.mrb[0].mxu0
    %v248 = vadd.f32 0.0, %v247
    %v249 = vpop.f32.mrb[0].mxu0
    %250 = vmatprep.mubr.f32.mxu0 0.0
    %251 = vmatmul.mubr.f32.gmra.mrb[0].mxu0 %v132
    %v252 = vpop.f32.mrb[0].mxu0
    %v253 = vadd.f32 0.0, %v252
    %v254 = vpop.f32.mrb[0].mxu0
    %255 = vmatprep.mubr.f32.mxu0 0.0
    %256 = vmatmul.mubr.f32.gmra.mrb[0].mxu0 %v137
    %v257 = vpop.f32.mrb[0].mxu0
    %v258 = vadd.f32 0.0, %v257
    %v259 = vpop.f32.mrb[0].mxu0
    %260 = vmatprep.mubr.f32.mxu0 0.0
    %261 = vmatmul.mubr.f32.gmra.mrb[0].mxu0 %v142
    %v262 = vpop.f32.mrb[0].mxu0
    %v263 = vadd.f32 0.0, %v262
    %v264 = vpop.f32.mrb[0].mxu0
    %265 = vmatprep.mubr.f32.mxu0 0.0
    %266 = vmatmul.mubr.f32.gmra.mrb[0].mxu0 %v147
    %v267 = vpop.f32.mrb[0].mxu0
    %v268 = vadd.f32 0.0, %v267
    %v269 = vpop.f32.mrb[0].mxu0
    %270 = vmatprep.mubr.f32.mxu0 0.0
    %271 = vmatmul.mubr.f32.gmra.mrb[0].mxu0 %v152
    %v272 = vpop.f32.mrb[0].mxu0
    %v273 = vadd.f32 0.0, %v272
    %v274 = vpop.f32.mrb[0].mxu0
    %275 = vmatprep.mubr.f32.mxu0 0.0
    %276 = vmatmul.mubr.f32.gmra.mrb[0].mxu0 %v157
    %v277 = vpop.f32.mrb[0].mxu0
    %v278 = vadd.f32 0.0, %v277
    %v279 = vpop.f32.mrb[0].mxu0
    %280 = vdwg.mxu0
    %v281 = vld [vmem:[#allocation2 + $0x108] sm:$0xff]
    %v282 = vld [vmem:[#allocation2 + $0x110] sm:$0xff]
    %v283 = vld [vmem:[#allocation2 + $0x118] sm:$0xff]
    %v284 = vld [vmem:[#allocation2 + $0x120] sm:$0xff]
    %v285 = vld [vmem:[#allocation2 + $0x128] sm:$0xff]
    %v286 = vld [vmem:[#allocation2 + $0x130] sm:$0xff]
    %v287 = vld [vmem:[#allocation2 + $0x138] sm:$0xff]
    %v288 = vld [vmem:[#allocation2 + $0x140] sm:$0xff]
    %v289 = vld [vmem:[#allocation2 + $0x148] sm:$0xff]
    %v290 = vld [vmem:[#allocation2 + $0x150] sm:$0xff]
    %v291 = vld [vmem:[#allocation2 + $0x158] sm:$0xff]
    %v292 = vld [vmem:[#allocation2 + $0x160] sm:$0xff]
    %v293 = vld [vmem:[#allocation2 + $0x168] sm:$0xff]
    %v294 = vld [vmem:[#allocation2 + $0x170] sm:$0xff]
    %v295 = vld [vmem:[#allocation2 + $0x178] sm:$0xff]
    %v296 = vld [vmem:[#allocation2 + $0x180] sm:$0xff]
    %v297 = vld [vmem:[#allocation2 + $0x188] sm:$0xff]
    %v298 = vld [vmem:[#allocation2 + $0x190] sm:$0xff]
    %v299 = vld [vmem:[#allocation2 + $0x198] sm:$0xff]
    %v300 = vld [vmem:[#allocation2 + $0x1a0] sm:$0xff]
    %v301 = vld [vmem:[#allocation2 + $0x1a8] sm:$0xff]
    %v302 = vld [vmem:[#allocation2 + $0x1b0] sm:$0xff]
    %v303 = vld [vmem:[#allocation2 + $0x1b8] sm:$0xff]
    %v304 = vld [vmem:[#allocation2 + $0x1c0] sm:$0xff]
    %v305 = vld [vmem:[#allocation2 + $0x1c8] sm:$0xff]
    %v306 = vld [vmem:[#allocation2 + $0x1d0] sm:$0xff]
    %v307 = vld [vmem:[#allocation2 + $0x1d8] sm:$0xff]
    %v308 = vld [vmem:[#allocation2 + $0x1e0] sm:$0xff]
    %v309 = vld [vmem:[#allocation2 + $0x1e8] sm:$0xff]
    %v310 = vld [vmem:[#allocation2 + $0x1f0] sm:$0xff]
    %v311 = vld [vmem:[#allocation2 + $0x1f8] sm:$0xff]
    %v312 = vld [vmem:[#allocation2 + $0x200] sm:$0xff]
    %313 = vmatprep.subr.mxu0 0.0
    %314 = vmatpush1.msra.mxu0 %v297
    %315 = vmatprep.subr.mxu0 0.0
    %316 = vmatpush1.msra.mxu0 %v298
    %317 = vmatprep.subr.mxu0 0.0
    %318 = vmatpush1.msra.mxu0 %v299
    %319 = vmatprep.subr.mxu0 0.0
    %320 = vmatpush1.msra.mxu0 %v300
    %321 = vmatprep.subr.mxu0 0.0
    %322 = vmatpush1.msra.mxu0 %v301
    %323 = vmatprep.subr.mxu0 0.0
    %324 = vmatpush1.msra.mxu0 %v302
    %325 = vmatprep.subr.mxu0 0.0
    %326 = vmatpush1.msra.mxu0 %v303
    %327 = vmatprep.subr.mxu0 0.0
    %328 = vmatpush1.msra.mxu0 %v304
    %329 = vmatprep.subr.mxu0 0.0
    %330 = vmatpush1.msra.mxu0 %v305
    %331 = vmatprep.subr.mxu0 0.0
    %332 = vmatpush1.msra.mxu0 %v306
    %333 = vmatprep.subr.mxu0 0.0
    %334 = vmatpush1.msra.mxu0 %v307
    %335 = vmatprep.subr.mxu0 0.0
    %336 = vmatpush1.msra.mxu0 %v308
    %337 = vmatprep.subr.mxu0 0.0
    %338 = vmatpush1.msra.mxu0 %v309
    %339 = vmatprep.subr.mxu0 0.0
    %340 = vmatpush1.msra.mxu0 %v310
    %341 = vmatprep.subr.mxu0 0.0
    %342 = vmatpush1.msra.mxu0 %v311
    %343 = vmatprep.subr.mxu0 0.0
    %344 = vmatpush1.msra.mxu0 %v312
    %345 = vmatprep.subr.mxu0 0.0
    %346 = vmatpush1.msra.mxu0 0.0
    %347 = vmatprep.subr.mxu0 0.0
    %348 = vmatpush1.msra.mxu0 0.0
    %349 = vmatprep.subr.mxu0 0.0
    %350 = vmatpush1.msra.mxu0 0.0
    %351 = vmatprep.subr.mxu0 0.0
    %352 = vmatpush1.msra.mxu0 0.0
    %353 = vmatprep.subr.mxu0 0.0
    %354 = vmatpush1.msra.mxu0 0.0
    %355 = vmatprep.subr.mxu0 0.0
    %356 = vmatpush1.msra.mxu0 0.0
    %357 = vmatprep.subr.mxu0 0.0
    %358 = vmatpush1.msra.mxu0 0.0
    %359 = vmatprep.subr.mxu0 0.0
    %360 = vmatpush1.msra.mxu0 0.0
    %361 = vmatprep.subr.mxu0 0.0
    %362 = vmatpush1.msra.mxu0 0.0
    %363 = vmatprep.subr.mxu0 0.0
    %364 = vmatpush1.msra.mxu0 0.0
    %365 = vmatprep.subr.mxu0 0.0
    %366 = vmatpush1.msra.mxu0 0.0
    %367 = vmatprep.subr.mxu0 0.0
    %368 = vmatpush1.msra.mxu0 0.0
    %369 = vmatprep.subr.mxu0 0.0
    %370 = vmatpush1.msra.mxu0 0.0
    %371 = vmatprep.subr.mxu0 0.0
    %372 = vmatpush1.msra.mxu0 0.0
    %373 = vmatprep.subr.mxu0 0.0
    %374 = vmatpush1.msra.mxu0 0.0
    %375 = vmatprep.subr.mxu0 0.0
    %376 = vmatpush1.msra.mxu0 0.0
    %377 = vmatprep.mubr.f32.mxu0 0.0
    %378 = vmatmul.mubr.f32.gmra.mrb[0].mxu0 %v122
    %v379 = vpop.f32.mrb[0].mxu0
    %v380 = vadd.f32 0.0, %v379
    %v381 = vpop.f32.mrb[0].mxu0
    %382 = vmatprep.mubr.f32.mxu0 0.0
    %383 = vmatmul.mubr.f32.gmra.mrb[0].mxu0 %v127
    %v384 = vpop.f32.mrb[0].mxu0
    %v385 = vadd.f32 0.0, %v384
    %v386 = vpop.f32.mrb[0].mxu0
    %387 = vmatprep.mubr.f32.mxu0 0.0
    %388 = vmatmul.mubr.f32.gmra.mrb[0].mxu0 %v132
    %v389 = vpop.f32.mrb[0].mxu0
    %v390 = vadd.f32 0.0, %v389
    %v391 = vpop.f32.mrb[0].mxu0
    %392 = vmatprep.mubr.f32.mxu0 0.0
    %393 = vmatmul.mubr.f32.gmra.mrb[0].mxu0 %v137
    %v394 = vpop.f32.mrb[0].mxu0
    %v395 = vadd.f32 0.0, %v394
    %v396 = vpop.f32.mrb[0].mxu0
    %397 = vmatprep.mubr.f32.mxu0 0.0
    %398 = vmatmul.mubr.f32.gmra.mrb[0].mxu0 %v142
    %v399 = vpop.f32.mrb[0].mxu0
    %v400 = vadd.f32 0.0, %v399
    %v401 = vpop.f32.mrb[0].mxu0
    %402 = vmatprep.mubr.f32.mxu0 0.0
    %403 = vmatmul.mubr.f32.gmra.mrb[0].mxu0 %v147
    %v404 = vpop.f32.mrb[0].mxu0
    %v405 = vadd.f32 0.0, %v404
    %v406 = vpop.f32.mrb[0].mxu0
    %407 = vmatprep.mubr.f32.mxu0 0.0
    %408 = vmatmul.mubr.f32.gmra.mrb[0].mxu0 %v152
    %v409 = vpop.f32.mrb[0].mxu0
    %v410 = vadd.f32 0.0, %v409
    %v411 = vpop.f32.mrb[0].mxu0
    %412 = vmatprep.mubr.f32.mxu0 0.0
    %413 = vmatmul.mubr.f32.gmra.mrb[0].mxu0 %v157
    %v414 = vpop.f32.mrb[0].mxu0
    %v415 = vadd.f32 0.0, %v414
    %v416 = vpop.f32.mrb[0].mxu0
    %417 = vdwg.mxu0
    %v418 = vld [vmem:[#allocation2 + $0x210] sm:$0xff]
    %v419 = vld [vmem:[#allocation2 + $0x218] sm:$0xff]
    %v420 = vld [vmem:[#allocation2 + $0x220] sm:$0xff]
    %v421 = vld [vmem:[#allocation2 + $0x228] sm:$0xff]
    %v422 = vld [vmem:[#allocation2 + $0x230] sm:$0xff]
    %v423 = vld [vmem:[#allocation2 + $0x238] sm:$0xff]
    %v424 = vld [vmem:[#allocation2 + $0x240] sm:$0xff]
    %v425 = vld [vmem:[#allocation2 + $0x248] sm:$0xff]
    %vm426 = vcmask 523264
    %v428 = vsel %vm426, %v418, 0
    %v431 = vsel %vm426, %v419, 0
    %v434 = vsel %vm426, %v420, 0
    %v437 = vsel %vm426, %v421, 0
    %v440 = vsel %vm426, %v422, 0
    %v443 = vsel %vm426, %v423, 0
    %v446 = vsel %vm426, %v424, 0
    %v449 = vsel %vm426, %v425, 0
    %451 = vmatprep.subr.mxu0 0.0
    %452 = vmatpush1.msra.mxu0 %v243
    %453 = vmatprep.subr.mxu0 0.0
    %454 = vmatpush1.msra.mxu0 %v248
    %455 = vmatprep.subr.mxu0 0.0
    %456 = vmatpush1.msra.mxu0 %v253
    %457 = vmatprep.subr.mxu0 0.0
    %458 = vmatpush1.msra.mxu0 %v258
    %459 = vmatprep.subr.mxu0 0.0
    %460 = vmatpush1.msra.mxu0 %v263
    %461 = vmatprep.subr.mxu0 0.0
    %462 = vmatpush1.msra.mxu0 %v268
    %463 = vmatprep.subr.mxu0 0.0
    %464 = vmatpush1.msra.mxu0 %v273
    %465 = vmatprep.subr.mxu0 0.0
    %466 = vmatpush1.msra.mxu0 %v278
    %467 = vmatprep.subr.mxu0 0.0
    %468 = vmatpush1.msra.mxu0 0.0
    %469 = vmatprep.subr.mxu0 0.0
    %470 = vmatpush1.msra.mxu0 0.0
    %471 = vmatprep.subr.mxu0 0.0
    %472 = vmatpush1.msra.mxu0 0.0
    %473 = vmatprep.subr.mxu0 0.0
    %474 = vmatpush1.msra.mxu0 0.0
    %475 = vmatprep.subr.mxu0 0.0
    %476 = vmatpush1.msra.mxu0 0.0
    %477 = vmatprep.subr.mxu0 0.0
    %478 = vmatpush1.msra.mxu0 0.0
    %479 = vmatprep.subr.mxu0 0.0
    %480 = vmatpush1.msra.mxu0 0.0
    %481 = vmatprep.subr.mxu0 0.0
    %482 = vmatpush1.msra.mxu0 0.0
    %483 = vmatprep.subr.mxu0 0.0
    %484 = vmatpush1.msra.mxu0 0.0
    %485 = vmatprep.subr.mxu0 0.0
    %486 = vmatpush1.msra.mxu0 0.0
    %487 = vmatprep.subr.mxu0 0.0
    %488 = vmatpush1.msra.mxu0 0.0
    %489 = vmatprep.subr.mxu0 0.0
    %490 = vmatpush1.msra.mxu0 0.0
    %491 = vmatprep.subr.mxu0 0.0
    %492 = vmatpush1.msra.mxu0 0.0
    %493 = vmatprep.subr.mxu0 0.0
    %494 = vmatpush1.msra.mxu0 0.0
    %495 = vmatprep.subr.mxu0 0.0
    %496 = vmatpush1.msra.mxu0 0.0
    %497 = vmatprep.subr.mxu0 0.0
    %498 = vmatpush1.msra.mxu0 0.0
    %499 = vmatprep.subr.mxu0 0.0
    %500 = vmatpush1.msra.mxu0 0.0
    %501 = vmatprep.subr.mxu0 0.0
    %502 = vmatpush1.msra.mxu0 0.0
    %503 = vmatprep.subr.mxu0 0.0
    %504 = vmatpush1.msra.mxu0 0.0
    %505 = vmatprep.subr.mxu0 0.0
    %506 = vmatpush1.msra.mxu0 0.0
    %507 = vmatprep.subr.mxu0 0.0
    %508 = vmatpush1.msra.mxu0 0.0
    %509 = vmatprep.subr.mxu0 0.0
    %510 = vmatpush1.msra.mxu0 0.0
    %511 = vmatprep.subr.mxu0 0.0
    %512 = vmatpush1.msra.mxu0 0.0
    %513 = vmatprep.subr.mxu0 0.0
    %514 = vmatpush1.msra.mxu0 0.0
    %515 = vmatprep.mubr.f32.mxu0 0.0
    %516 = vmatmul.mubr.f32.gmra.mrb[0].mxu0 %v428
    %v517 = vpop.f32.mrb[0].mxu0
    %v518 = vadd.f32 0.0, %v517
    %v519 = vpop.f32.mrb[0].mxu0
    %520 = vmatprep.mubr.f32.mxu0 0.0
    %521 = vmatmul.mubr.f32.gmra.mrb[0].mxu0 %v431
    %v522 = vpop.f32.mrb[0].mxu0
    %v523 = vadd.f32 0.0, %v522
    %v524 = vpop.f32.mrb[0].mxu0
    %525 = vmatprep.mubr.f32.mxu0 0.0
    %526 = vmatmul.mubr.f32.gmra.mrb[0].mxu0 %v434
    %v527 = vpop.f32.mrb[0].mxu0
    %v528 = vadd.f32 0.0, %v527
    %v529 = vpop.f32.mrb[0].mxu0
    %530 = vmatprep.mubr.f32.mxu0 0.0
    %531 = vmatmul.mubr.f32.gmra.mrb[0].mxu0 %v437
    %v532 = vpop.f32.mrb[0].mxu0
    %v533 = vadd.f32 0.0, %v532
    %v534 = vpop.f32.mrb[0].mxu0
    %535 = vmatprep.mubr.f32.mxu0 0.0
    %536 = vmatmul.mubr.f32.gmra.mrb[0].mxu0 %v440
    %v537 = vpop.f32.mrb[0].mxu0
    %v538 = vadd.f32 0.0, %v537
    %v539 = vpop.f32.mrb[0].mxu0
    %540 = vmatprep.mubr.f32.mxu0 0.0
    %541 = vmatmul.mubr.f32.gmra.mrb[0].mxu0 %v443
    %v542 = vpop.f32.mrb[0].mxu0
    %v543 = vadd.f32 0.0, %v542
    %v544 = vpop.f32.mrb[0].mxu0
    %545 = vmatprep.mubr.f32.mxu0 0.0
    %546 = vmatmul.mubr.f32.gmra.mrb[0].mxu0 %v446
    %v547 = vpop.f32.mrb[0].mxu0
    %v548 = vadd.f32 0.0, %v547
    %v549 = vpop.f32.mrb[0].mxu0
    %550 = vmatprep.mubr.f32.mxu0 0.0
    %551 = vmatmul.mubr.f32.gmra.mrb[0].mxu0 %v449
    %v552 = vpop.f32.mrb[0].mxu0
    %v553 = vadd.f32 0.0, %v552
    %v554 = vpop.f32.mrb[0].mxu0
    %555 = vdwg.mxu0
    %556 = vmatprep.subr.mxu0 0.0
    %557 = vmatpush1.msra.mxu0 %v281
    %558 = vmatprep.subr.mxu0 0.0
    %559 = vmatpush1.msra.mxu0 %v282
    %560 = vmatprep.subr.mxu0 0.0
    %561 = vmatpush1.msra.mxu0 %v283
    %562 = vmatprep.subr.mxu0 0.0
    %563 = vmatpush1.msra.mxu0 %v284
    %564 = vmatprep.subr.mxu0 0.0
    %565 = vmatpush1.msra.mxu0 %v285
    %566 = vmatprep.subr.mxu0 0.0
    %567 = vmatpush1.msra.mxu0 %v286
    %568 = vmatprep.subr.mxu0 0.0
    %569 = vmatpush1.msra.mxu0 %v287
    %570 = vmatprep.subr.mxu0 0.0
    %571 = vmatpush1.msra.mxu0 %v288
    %572 = vmatprep.subr.mxu0 0.0
    %573 = vmatpush1.msra.mxu0 %v289
    %574 = vmatprep.subr.mxu0 0.0
    %575 = vmatpush1.msra.mxu0 %v290
    %576 = vmatprep.subr.mxu0 0.0
    %577 = vmatpush1.msra.mxu0 %v291
    %578 = vmatprep.subr.mxu0 0.0
    %579 = vmatpush1.msra.mxu0 %v292
    %580 = vmatprep.subr.mxu0 0.0
    %581 = vmatpush1.msra.mxu0 %v293
    %582 = vmatprep.subr.mxu0 0.0
    %583 = vmatpush1.msra.mxu0 %v294
    %584 = vmatprep.subr.mxu0 0.0
    %585 = vmatpush1.msra.mxu0 %v295
    %586 = vmatprep.subr.mxu0 0.0
    %587 = vmatpush1.msra.mxu0 %v296
    %588 = vmatprep.subr.mxu0 0.0
    %589 = vmatpush1.msra.mxu0 0.0
    %590 = vmatprep.subr.mxu0 0.0
    %591 = vmatpush1.msra.mxu0 0.0
    %592 = vmatprep.subr.mxu0 0.0
    %593 = vmatpush1.msra.mxu0 0.0
    %594 = vmatprep.subr.mxu0 0.0
    %595 = vmatpush1.msra.mxu0 0.0
    %596 = vmatprep.subr.mxu0 0.0
    %597 = vmatpush1.msra.mxu0 0.0
    %598 = vmatprep.subr.mxu0 0.0
    %599 = vmatpush1.msra.mxu0 0.0
    %600 = vmatprep.subr.mxu0 0.0
    %601 = vmatpush1.msra.mxu0 0.0
    %602 = vmatprep.subr.mxu0 0.0
    %603 = vmatpush1.msra.mxu0 0.0
    %604 = vmatprep.subr.mxu0 0.0
    %605 = vmatpush1.msra.mxu0 0.0
    %606 = vmatprep.subr.mxu0 0.0
    %607 = vmatpush1.msra.mxu0 0.0
    %608 = vmatprep.subr.mxu0 0.0
    %609 = vmatpush1.msra.mxu0 0.0
    %610 = vmatprep.subr.mxu0 0.0
    %611 = vmatpush1.msra.mxu0 0.0
    %612 = vmatprep.subr.mxu0 0.0
    %613 = vmatpush1.msra.mxu0 0.0
    %614 = vmatprep.subr.mxu0 0.0
    %615 = vmatpush1.msra.mxu0 0.0
    %616 = vmatprep.subr.mxu0 0.0
    %617 = vmatpush1.msra.mxu0 0.0
    %618 = vmatprep.subr.mxu0 0.0
    %619 = vmatpush1.msra.mxu0 0.0
    %620 = vmatprep.mubr.f32.mxu0 0.0
    %621 = vmatmul.mubr.f32.gmra.mrb[0].mxu0 %v122
    %v622 = vpop.f32.mrb[0].mxu0
    %v623 = vadd.f32 %v518, %v622
    %v624 = vpop.f32.mrb[0].mxu0
    %625 = vmatprep.mubr.f32.mxu0 0.0
    %626 = vmatmul.mubr.f32.gmra.mrb[0].mxu0 %v127
    %v627 = vpop.f32.mrb[0].mxu0
    %v628 = vadd.f32 %v523, %v627
    %v629 = vpop.f32.mrb[0].mxu0
    %630 = vmatprep.mubr.f32.mxu0 0.0
    %631 = vmatmul.mubr.f32.gmra.mrb[0].mxu0 %v132
    %v632 = vpop.f32.mrb[0].mxu0
    %v633 = vadd.f32 %v528, %v632
    %v634 = vpop.f32.mrb[0].mxu0
    %635 = vmatprep.mubr.f32.mxu0 0.0
    %636 = vmatmul.mubr.f32.gmra.mrb[0].mxu0 %v137
    %v637 = vpop.f32.mrb[0].mxu0
    %v638 = vadd.f32 %v533, %v637
    %v639 = vpop.f32.mrb[0].mxu0
    %640 = vmatprep.mubr.f32.mxu0 0.0
    %641 = vmatmul.mubr.f32.gmra.mrb[0].mxu0 %v142
    %v642 = vpop.f32.mrb[0].mxu0
    %v643 = vadd.f32 %v538, %v642
    %v644 = vpop.f32.mrb[0].mxu0
    %645 = vmatprep.mubr.f32.mxu0 0.0
    %646 = vmatmul.mubr.f32.gmra.mrb[0].mxu0 %v147
    %v647 = vpop.f32.mrb[0].mxu0
    %v648 = vadd.f32 %v543, %v647
    %v649 = vpop.f32.mrb[0].mxu0
    %650 = vmatprep.mubr.f32.mxu0 0.0
    %651 = vmatmul.mubr.f32.gmra.mrb[0].mxu0 %v152
    %v652 = vpop.f32.mrb[0].mxu0
    %v653 = vadd.f32 %v548, %v652
    %v654 = vpop.f32.mrb[0].mxu0
    %655 = vmatprep.mubr.f32.mxu0 0.0
    %656 = vmatmul.mubr.f32.gmra.mrb[0].mxu0 %v157
    %v657 = vpop.f32.mrb[0].mxu0
    %v658 = vadd.f32 %v553, %v657
    %v659 = vpop.f32.mrb[0].mxu0
    %660 = vdwg.mxu0
    %v661 = vld [vmem:[#allocation2 + $0x250] sm:$0xff]
    %v662 = vld [vmem:[#allocation2 + $0x258] sm:$0xff]
    %v663 = vld [vmem:[#allocation2 + $0x260] sm:$0xff]
    %v664 = vld [vmem:[#allocation2 + $0x268] sm:$0xff]
    %v665 = vld [vmem:[#allocation2 + $0x270] sm:$0xff]
    %v666 = vld [vmem:[#allocation2 + $0x278] sm:$0xff]
    %v667 = vld [vmem:[#allocation2 + $0x280] sm:$0xff]
    %v668 = vld [vmem:[#allocation2 + $0x288] sm:$0xff]
    %v670 = vsel %vm426, %v661, 0
    %v673 = vsel %vm426, %v662, 0
    %v676 = vsel %vm426, %v663, 0
    %v679 = vsel %vm426, %v664, 0
    %v682 = vsel %vm426, %v665, 0
    %v685 = vsel %vm426, %v666, 0
    %v688 = vsel %vm426, %v667, 0
    %v691 = vsel %vm426, %v668, 0
    %693 = vmatprep.subr.mxu0 0.0
    %694 = vmatpush1.msra.mxu0 %v380
    %695 = vmatprep.subr.mxu0 0.0
    %696 = vmatpush1.msra.mxu0 %v385
    %697 = vmatprep.subr.mxu0 0.0
    %698 = vmatpush1.msra.mxu0 %v390
    %699 = vmatprep.subr.mxu0 0.0
    %700 = vmatpush1.msra.mxu0 %v395
    %701 = vmatprep.subr.mxu0 0.0
    %702 = vmatpush1.msra.mxu0 %v400
    %703 = vmatprep.subr.mxu0 0.0
    %704 = vmatpush1.msra.mxu0 %v405
    %705 = vmatprep.subr.mxu0 0.0
    %706 = vmatpush1.msra.mxu0 %v410
    %707 = vmatprep.subr.mxu0 0.0
    %708 = vmatpush1.msra.mxu0 %v415
    %709 = vmatprep.subr.mxu0 0.0
    %710 = vmatpush1.msra.mxu0 0.0
    %711 = vmatprep.subr.mxu0 0.0
    %712 = vmatpush1.msra.mxu0 0.0
    %713 = vmatprep.subr.mxu0 0.0
    %714 = vmatpush1.msra.mxu0 0.0
    %715 = vmatprep.subr.mxu0 0.0
    %716 = vmatpush1.msra.mxu0 0.0
    %717 = vmatprep.subr.mxu0 0.0
    %718 = vmatpush1.msra.mxu0 0.0
    %719 = vmatprep.subr.mxu0 0.0
    %720 = vmatpush1.msra.mxu0 0.0
    %721 = vmatprep.subr.mxu0 0.0
    %722 = vmatpush1.msra.mxu0 0.0
    %723 = vmatprep.subr.mxu0 0.0
    %724 = vmatpush1.msra.mxu0 0.0
    %725 = vmatprep.subr.mxu0 0.0
    %726 = vmatpush1.msra.mxu0 0.0
    %727 = vmatprep.subr.mxu0 0.0
    %728 = vmatpush1.msra.mxu0 0.0
    %729 = vmatprep.subr.mxu0 0.0
    %730 = vmatpush1.msra.mxu0 0.0
    %731 = vmatprep.subr.mxu0 0.0
    %732 = vmatpush1.msra.mxu0 0.0
    %733 = vmatprep.subr.mxu0 0.0
    %734 = vmatpush1.msra.mxu0 0.0
    %735 = vmatprep.subr.mxu0 0.0
    %736 = vmatpush1.msra.mxu0 0.0
    %737 = vmatprep.subr.mxu0 0.0
    %738 = vmatpush1.msra.mxu0 0.0
    %739 = vmatprep.subr.mxu0 0.0
    %740 = vmatpush1.msra.mxu0 0.0
    %741 = vmatprep.subr.mxu0 0.0
    %742 = vmatpush1.msra.mxu0 0.0
    %743 = vmatprep.subr.mxu0 0.0
    %744 = vmatpush1.msra.mxu0 0.0
    %745 = vmatprep.subr.mxu0 0.0
    %746 = vmatpush1.msra.mxu0 0.0
    %747 = vmatprep.subr.mxu0 0.0
    %748 = vmatpush1.msra.mxu0 0.0
    %749 = vmatprep.subr.mxu0 0.0
    %750 = vmatpush1.msra.mxu0 0.0
    %751 = vmatprep.subr.mxu0 0.0
    %752 = vmatpush1.msra.mxu0 0.0
    %753 = vmatprep.subr.mxu0 0.0
    %754 = vmatpush1.msra.mxu0 0.0
    %755 = vmatprep.subr.mxu0 0.0
    %756 = vmatpush1.msra.mxu0 0.0
    %757 = vmatprep.mubr.f32.mxu0 0.0
    %758 = vmatmul.mubr.f32.gmra.mrb[0].mxu0 %v670
    %v759 = vpop.f32.mrb[0].mxu0
    %v760 = vadd.f32 0.0, %v759
    %v761 = vpop.f32.mrb[0].mxu0
    %762 = vmatprep.mubr.f32.mxu0 0.0
    %763 = vmatmul.mubr.f32.gmra.mrb[0].mxu0 %v673
    %v764 = vpop.f32.mrb[0].mxu0
    %v765 = vadd.f32 0.0, %v764
    %v766 = vpop.f32.mrb[0].mxu0
    %767 = vmatprep.mubr.f32.mxu0 0.0
    %768 = vmatmul.mubr.f32.gmra.mrb[0].mxu0 %v676
    %v769 = vpop.f32.mrb[0].mxu0
    %v770 = vadd.f32 0.0, %v769
    %v771 = vpop.f32.mrb[0].mxu0
    %772 = vmatprep.mubr.f32.mxu0 0.0
    %773 = vmatmul.mubr.f32.gmra.mrb[0].mxu0 %v679
    %v774 = vpop.f32.mrb[0].mxu0
    %v775 = vadd.f32 0.0, %v774
    %v776 = vpop.f32.mrb[0].mxu0
    %777 = vmatprep.mubr.f32.mxu0 0.0
    %778 = vmatmul.mubr.f32.gmra.mrb[0].mxu0 %v682
    %v779 = vpop.f32.mrb[0].mxu0
    %v780 = vadd.f32 0.0, %v779
    %v781 = vpop.f32.mrb[0].mxu0
    %782 = vmatprep.mubr.f32.mxu0 0.0
    %783 = vmatmul.mubr.f32.gmra.mrb[0].mxu0 %v685
    %v784 = vpop.f32.mrb[0].mxu0
    %v785 = vadd.f32 0.0, %v784
    %v786 = vpop.f32.mrb[0].mxu0
    %787 = vmatprep.mubr.f32.mxu0 0.0
    %788 = vmatmul.mubr.f32.gmra.mrb[0].mxu0 %v688
    %v789 = vpop.f32.mrb[0].mxu0
    %v790 = vadd.f32 0.0, %v789
    %v791 = vpop.f32.mrb[0].mxu0
    %792 = vmatprep.mubr.f32.mxu0 0.0
    %793 = vmatmul.mubr.f32.gmra.mrb[0].mxu0 %v691
    %v794 = vpop.f32.mrb[0].mxu0
    %v795 = vadd.f32 0.0, %v794
    %v796 = vpop.f32.mrb[0].mxu0
    %797 = vdwg.mxu0
    %v798 = vadd.f32 %v623, %v760
    %v799 = vadd.f32 %v628, %v765
    %v800 = vadd.f32 %v633, %v770
    %v801 = vadd.f32 %v638, %v775
    %v802 = vadd.f32 %v643, %v780
    %v803 = vadd.f32 %v648, %v785
    %v804 = vadd.f32 %v653, %v790
    %v805 = vadd.f32 %v658, %v795
    %v806 = vld [vmem:[#allocation2 + $0x208] sm:$0x1]
    %v807 = vlaneseq
    %v808 = vshrl.u32 %v807, 7
    %v809 = vsub.s32 0, %v808
    %v810 = vrot.slane %v806, %v809
    %v811 = vadd.f32 %v798, %v810
    %v812 = vadd.f32 %v799, %v810
    %v813 = vadd.f32 %v800, %v810
    %v814 = vadd.f32 %v801, %v810
    %v815 = vadd.f32 %v802, %v810
    %v816 = vadd.f32 %v803, %v810
    %v817 = vadd.f32 %v804, %v810
    %v818 = vadd.f32 %v805, %v810
    %v819 = vmax.f32 %v811, 0.0
    %v820 = vmax.f32 %v812, 0.0
    %v821 = vmax.f32 %v813, 0.0
    %v822 = vmax.f32 %v814, 0.0
    %v823 = vmax.f32 %v815, 0.0
    %v824 = vmax.f32 %v816, 0.0
    %v825 = vmax.f32 %v817, 0.0
    %v826 = vmax.f32 %v818, 0.0
    %v827 = vld [vmem:[#allocation2 + $0x290] sm:$0xff]
    %v828 = vld [vmem:[#allocation2 + $0x298] sm:$0xff]
    %v829 = vld [vmem:[#allocation2 + $0x2a0] sm:$0xff]
    %v830 = vld [vmem:[#allocation2 + $0x2a8] sm:$0xff]
    %v831 = vld [vmem:[#allocation2 + $0x2b0] sm:$0xff]
    %v832 = vld [vmem:[#allocation2 + $0x2b8] sm:$0xff]
    %v833 = vld [vmem:[#allocation2 + $0x2c0] sm:$0xff]
    %v834 = vld [vmem:[#allocation2 + $0x2c8] sm:$0xff]
    %v835 = vld [vmem:[#allocation2 + $0x2d0] sm:$0xff]
    %v836 = vld [vmem:[#allocation2 + $0x2d8] sm:$0xff]
    %v837 = vld [vmem:[#allocation2 + $0x2e0] sm:$0xff]
    %v838 = vld [vmem:[#allocation2 + $0x2e8] sm:$0xff]
    %v839 = vld [vmem:[#allocation2 + $0x2f0] sm:$0xff]
    %v840 = vld [vmem:[#allocation2 + $0x2f8] sm:$0xff]
    %v841 = vld [vmem:[#allocation2 + $0x300] sm:$0xff]
    %v842 = vld [vmem:[#allocation2 + $0x308] sm:$0xff]
    %843 = vmatprep.subr.mxu0 0.0
    %844 = vmatpush1.msra.mxu0 %v827
    %845 = vmatprep.subr.mxu0 0.0
    %846 = vmatpush1.msra.mxu0 %v828
    %847 = vmatprep.subr.mxu0 0.0
    %848 = vmatpush1.msra.mxu0 %v829
    %849 = vmatprep.subr.mxu0 0.0
    %850 = vmatpush1.msra.mxu0 %v830
    %851 = vmatprep.subr.mxu0 0.0
    %852 = vmatpush1.msra.mxu0 %v831
    %853 = vmatprep.subr.mxu0 0.0
    %854 = vmatpush1.msra.mxu0 %v832
    %855 = vmatprep.subr.mxu0 0.0
    %856 = vmatpush1.msra.mxu0 %v833
    %857 = vmatprep.subr.mxu0 0.0
    %858 = vmatpush1.msra.mxu0 %v834
    %859 = vmatprep.subr.mxu0 0.0
    %860 = vmatpush1.msra.mxu0 %v835
    %861 = vmatprep.subr.mxu0 0.0
    %862 = vmatpush1.msra.mxu0 %v836
    %863 = vmatprep.subr.mxu0 0.0
    %864 = vmatpush1.msra.mxu0 %v837
    %865 = vmatprep.subr.mxu0 0.0
    %866 = vmatpush1.msra.mxu0 %v838
    %867 = vmatprep.subr.mxu0 0.0
    %868 = vmatpush1.msra.mxu0 %v839
    %869 = vmatprep.subr.mxu0 0.0
    %870 = vmatpush1.msra.mxu0 %v840
    %871 = vmatprep.subr.mxu0 0.0
    %872 = vmatpush1.msra.mxu0 %v841
    %873 = vmatprep.subr.mxu0 0.0
    %874 = vmatpush1.msra.mxu0 %v842
    %875 = vmatprep.subr.mxu0 0.0
    %876 = vmatpush1.msra.mxu0 0.0
    %877 = vmatprep.subr.mxu0 0.0
    %878 = vmatpush1.msra.mxu0 0.0
    %879 = vmatprep.subr.mxu0 0.0
    %880 = vmatpush1.msra.mxu0 0.0
    %881 = vmatprep.subr.mxu0 0.0
    %882 = vmatpush1.msra.mxu0 0.0
    %883 = vmatprep.subr.mxu0 0.0
    %884 = vmatpush1.msra.mxu0 0.0
    %885 = vmatprep.subr.mxu0 0.0
    %886 = vmatpush1.msra.mxu0 0.0
    %887 = vmatprep.subr.mxu0 0.0
    %888 = vmatpush1.msra.mxu0 0.0
    %889 = vmatprep.subr.mxu0 0.0
    %890 = vmatpush1.msra.mxu0 0.0
    %891 = vmatprep.subr.mxu0 0.0
    %892 = vmatpush1.msra.mxu0 0.0
    %893 = vmatprep.subr.mxu0 0.0
    %894 = vmatpush1.msra.mxu0 0.0
    %895 = vmatprep.subr.mxu0 0.0
    %896 = vmatpush1.msra.mxu0 0.0
    %897 = vmatprep.subr.mxu0 0.0
    %898 = vmatpush1.msra.mxu0 0.0
    %899 = vmatprep.subr.mxu0 0.0
    %900 = vmatpush1.msra.mxu0 0.0
    %901 = vmatprep.subr.mxu0 0.0
    %902 = vmatpush1.msra.mxu0 0.0
    %903 = vmatprep.subr.mxu0 0.0
    %904 = vmatpush1.msra.mxu0 0.0
    %905 = vmatprep.subr.mxu0 0.0
    %906 = vmatpush1.msra.mxu0 0.0
    %907 = vmatprep.mubr.f32.mxu0 0.0
    %908 = vmatmul.mubr.f32.gmra.mrb[0].mxu0 %v819
    %v909 = vpop.f32.mrb[0].mxu0
    %v910 = vadd.f32 0.0, %v909
    %v911 = vpop.f32.mrb[0].mxu0
    %912 = vmatprep.mubr.f32.mxu0 0.0
    %913 = vmatmul.mubr.f32.gmra.mrb[0].mxu0 %v820
    %v914 = vpop.f32.mrb[0].mxu0
    %v915 = vadd.f32 0.0, %v914
    %v916 = vpop.f32.mrb[0].mxu0
    %917 = vmatprep.mubr.f32.mxu0 0.0
    %918 = vmatmul.mubr.f32.gmra.mrb[0].mxu0 %v821
    %v919 = vpop.f32.mrb[0].mxu0
    %v920 = vadd.f32 0.0, %v919
    %v921 = vpop.f32.mrb[0].mxu0
    %922 = vmatprep.mubr.f32.mxu0 0.0
    %923 = vmatmul.mubr.f32.gmra.mrb[0].mxu0 %v822
    %v924 = vpop.f32.mrb[0].mxu0
    %v925 = vadd.f32 0.0, %v924
    %v926 = vpop.f32.mrb[0].mxu0
    %927 = vmatprep.mubr.f32.mxu0 0.0
    %928 = vmatmul.mubr.f32.gmra.mrb[0].mxu0 %v823
    %v929 = vpop.f32.mrb[0].mxu0
    %v930 = vadd.f32 0.0, %v929
    %v931 = vpop.f32.mrb[0].mxu0
    %932 = vmatprep.mubr.f32.mxu0 0.0
    %933 = vmatmul.mubr.f32.gmra.mrb[0].mxu0 %v824
    %v934 = vpop.f32.mrb[0].mxu0
    %v935 = vadd.f32 0.0, %v934
    %v936 = vpop.f32.mrb[0].mxu0
    %937 = vmatprep.mubr.f32.mxu0 0.0
    %938 = vmatmul.mubr.f32.gmra.mrb[0].mxu0 %v825
    %v939 = vpop.f32.mrb[0].mxu0
    %v940 = vadd.f32 0.0, %v939
    %v941 = vpop.f32.mrb[0].mxu0
    %942 = vmatprep.mubr.f32.mxu0 0.0
    %943 = vmatmul.mubr.f32.gmra.mrb[0].mxu0 %v826
    %v944 = vpop.f32.mrb[0].mxu0
    %v945 = vadd.f32 0.0, %v944
    %v946 = vpop.f32.mrb[0].mxu0
    %947 = vdwg.mxu0
    %v948 = vld [vmem:[#allocation2 + $0x310] sm:$0xff]
    %v949 = vld [vmem:[#allocation2 + $0x318] sm:$0xff]
    %v950 = vld [vmem:[#allocation2 + $0x320] sm:$0xff]
    %v951 = vld [vmem:[#allocation2 + $0x328] sm:$0xff]
    %v952 = vld [vmem:[#allocation2 + $0x330] sm:$0xff]
    %v953 = vld [vmem:[#allocation2 + $0x338] sm:$0xff]
    %v954 = vld [vmem:[#allocation2 + $0x340] sm:$0xff]
    %v955 = vld [vmem:[#allocation2 + $0x348] sm:$0xff]
    %v956 = vld [vmem:[#allocation2 + $0x350] sm:$0xff]
    %v957 = vld [vmem:[#allocation2 + $0x358] sm:$0xff]
    %v958 = vld [vmem:[#allocation2 + $0x360] sm:$0xff]
    %v959 = vld [vmem:[#allocation2 + $0x368] sm:$0xff]
    %v960 = vld [vmem:[#allocation2 + $0x370] sm:$0xff]
    %v961 = vld [vmem:[#allocation2 + $0x378] sm:$0xff]
    %v962 = vld [vmem:[#allocation2 + $0x380] sm:$0xff]
    %v963 = vld [vmem:[#allocation2 + $0x388] sm:$0xff]
    %v964 = vld [vmem:[#allocation2 + $0x390] sm:$0xff]
    %v965 = vld [vmem:[#allocation2 + $0x398] sm:$0xff]
    %v966 = vld [vmem:[#allocation2 + $0x3a0] sm:$0xff]
    %v967 = vld [vmem:[#allocation2 + $0x3a8] sm:$0xff]
    %v968 = vld [vmem:[#allocation2 + $0x3b0] sm:$0xff]
    %v969 = vld [vmem:[#allocation2 + $0x3b8] sm:$0xff]
    %v970 = vld [vmem:[#allocation2 + $0x3c0] sm:$0xff]
    %v971 = vld [vmem:[#allocation2 + $0x3c8] sm:$0xff]
    %v972 = vld [vmem:[#allocation2 + $0x3d0] sm:$0xff]
    %v973 = vld [vmem:[#allocation2 + $0x3d8] sm:$0xff]
    %v974 = vld [vmem:[#allocation2 + $0x3e0] sm:$0xff]
    %v975 = vld [vmem:[#allocation2 + $0x3e8] sm:$0xff]
    %v976 = vld [vmem:[#allocation2 + $0x3f0] sm:$0xff]
    %v977 = vld [vmem:[#allocation2 + $0x3f8] sm:$0xff]
    %v978 = vld [vmem:[#allocation2 + $0x400] sm:$0xff]
    %v979 = vld [vmem:[#allocation2 + $0x408] sm:$0xff]
    %980 = vmatprep.subr.mxu0 0.0
    %981 = vmatpush1.msra.mxu0 %v964
    %982 = vmatprep.subr.mxu0 0.0
    %983 = vmatpush1.msra.mxu0 %v965
    %984 = vmatprep.subr.mxu0 0.0
    %985 = vmatpush1.msra.mxu0 %v966
    %986 = vmatprep.subr.mxu0 0.0
    %987 = vmatpush1.msra.mxu0 %v967
    %988 = vmatprep.subr.mxu0 0.0
    %989 = vmatpush1.msra.mxu0 %v968
    %990 = vmatprep.subr.mxu0 0.0
    %991 = vmatpush1.msra.mxu0 %v969
    %992 = vmatprep.subr.mxu0 0.0
    %993 = vmatpush1.msra.mxu0 %v970
    %994 = vmatprep.subr.mxu0 0.0
    %995 = vmatpush1.msra.mxu0 %v971
    %996 = vmatprep.subr.mxu0 0.0
    %997 = vmatpush1.msra.mxu0 %v972
    %998 = vmatprep.subr.mxu0 0.0
    %999 = vmatpush1.msra.mxu0 %v973
    %1000 = vmatprep.subr.mxu0 0.0
    %1001 = vmatpush1.msra.mxu0 %v974
    %1002 = vmatprep.subr.mxu0 0.0
    %1003 = vmatpush1.msra.mxu0 %v975
    %1004 = vmatprep.subr.mxu0 0.0
    %1005 = vmatpush1.msra.mxu0 %v976
    %1006 = vmatprep.subr.mxu0 0.0
    %1007 = vmatpush1.msra.mxu0 %v977
    %1008 = vmatprep.subr.mxu0 0.0
    %1009 = vmatpush1.msra.mxu0 %v978
    %1010 = vmatprep.subr.mxu0 0.0
    %1011 = vmatpush1.msra.mxu0 %v979
    %1012 = vmatprep.subr.mxu0 0.0
    %1013 = vmatpush1.msra.mxu0 0.0
    %1014 = vmatprep.subr.mxu0 0.0
    %1015 = vmatpush1.msra.mxu0 0.0
    %1016 = vmatprep.subr.mxu0 0.0
    %1017 = vmatpush1.msra.mxu0 0.0
    %1018 = vmatprep.subr.mxu0 0.0
    %1019 = vmatpush1.msra.mxu0 0.0
    %1020 = vmatprep.subr.mxu0 0.0
    %1021 = vmatpush1.msra.mxu0 0.0
    %1022 = vmatprep.subr.mxu0 0.0
    %1023 = vmatpush1.msra.mxu0 0.0
    %1024 = vmatprep.subr.mxu0 0.0
    %1025 = vmatpush1.msra.mxu0 0.0
    %1026 = vmatprep.subr.mxu0 0.0
    %1027 = vmatpush1.msra.mxu0 0.0
    %1028 = vmatprep.subr.mxu0 0.0
    %1029 = vmatpush1.msra.mxu0 0.0
    %1030 = vmatprep.subr.mxu0 0.0
    %1031 = vmatpush1.msra.mxu0 0.0
    %1032 = vmatprep.subr.mxu0 0.0
    %1033 = vmatpush1.msra.mxu0 0.0
    %1034 = vmatprep.subr.mxu0 0.0
    %1035 = vmatpush1.msra.mxu0 0.0
    %1036 = vmatprep.subr.mxu0 0.0
    %1037 = vmatpush1.msra.mxu0 0.0
    %1038 = vmatprep.subr.mxu0 0.0
    %1039 = vmatpush1.msra.mxu0 0.0
    %1040 = vmatprep.subr.mxu0 0.0
    %1041 = vmatpush1.msra.mxu0 0.0
    %1042 = vmatprep.subr.mxu0 0.0
    %1043 = vmatpush1.msra.mxu0 0.0
    %1044 = vmatprep.mubr.f32.mxu0 0.0
    %1045 = vmatmul.mubr.f32.gmra.mrb[0].mxu0 %v819
    %v1046 = vpop.f32.mrb[0].mxu0
    %v1047 = vadd.f32 0.0, %v1046
    %v1048 = vpop.f32.mrb[0].mxu0
    %1049 = vmatprep.mubr.f32.mxu0 0.0
    %1050 = vmatmul.mubr.f32.gmra.mrb[0].mxu0 %v820
    %v1051 = vpop.f32.mrb[0].mxu0
    %v1052 = vadd.f32 0.0, %v1051
    %v1053 = vpop.f32.mrb[0].mxu0
    %1054 = vmatprep.mubr.f32.mxu0 0.0
    %1055 = vmatmul.mubr.f32.gmra.mrb[0].mxu0 %v821
    %v1056 = vpop.f32.mrb[0].mxu0
    %v1057 = vadd.f32 0.0, %v1056
    %v1058 = vpop.f32.mrb[0].mxu0
    %1059 = vmatprep.mubr.f32.mxu0 0.0
    %1060 = vmatmul.mubr.f32.gmra.mrb[0].mxu0 %v822
    %v1061 = vpop.f32.mrb[0].mxu0
    %v1062 = vadd.f32 0.0, %v1061
    %v1063 = vpop.f32.mrb[0].mxu0
    %1064 = vmatprep.mubr.f32.mxu0 0.0
    %1065 = vmatmul.mubr.f32.gmra.mrb[0].mxu0 %v823
    %v1066 = vpop.f32.mrb[0].mxu0
    %v1067 = vadd.f32 0.0, %v1066
    %v1068 = vpop.f32.mrb[0].mxu0
    %1069 = vmatprep.mubr.f32.mxu0 0.0
    %1070 = vmatmul.mubr.f32.gmra.mrb[0].mxu0 %v824
    %v1071 = vpop.f32.mrb[0].mxu0
    %v1072 = vadd.f32 0.0, %v1071
    %v1073 = vpop.f32.mrb[0].mxu0
    %1074 = vmatprep.mubr.f32.mxu0 0.0
    %1075 = vmatmul.mubr.f32.gmra.mrb[0].mxu0 %v825
    %v1076 = vpop.f32.mrb[0].mxu0
    %v1077 = vadd.f32 0.0, %v1076
    %v1078 = vpop.f32.mrb[0].mxu0
    %1079 = vmatprep.mubr.f32.mxu0 0.0
    %1080 = vmatmul.mubr.f32.gmra.mrb[0].mxu0 %v826
    %v1081 = vpop.f32.mrb[0].mxu0
    %v1082 = vadd.f32 0.0, %v1081
    %v1083 = vpop.f32.mrb[0].mxu0
    %1084 = vdwg.mxu0
    %1085 = vmatprep.subr.mxu0 0.0
    %1086 = vmatpush1.msra.mxu0 %v910
    %1087 = vmatprep.subr.mxu0 0.0
    %1088 = vmatpush1.msra.mxu0 %v915
    %1089 = vmatprep.subr.mxu0 0.0
    %1090 = vmatpush1.msra.mxu0 %v920
    %1091 = vmatprep.subr.mxu0 0.0
    %1092 = vmatpush1.msra.mxu0 %v925
    %1093 = vmatprep.subr.mxu0 0.0
    %1094 = vmatpush1.msra.mxu0 %v930
    %1095 = vmatprep.subr.mxu0 0.0
    %1096 = vmatpush1.msra.mxu0 %v935
    %1097 = vmatprep.subr.mxu0 0.0
    %1098 = vmatpush1.msra.mxu0 %v940
    %1099 = vmatprep.subr.mxu0 0.0
    %1100 = vmatpush1.msra.mxu0 %v945
    %1101 = vmatprep.subr.mxu0 0.0
    %1102 = vmatpush1.msra.mxu0 0.0
    %1103 = vmatprep.subr.mxu0 0.0
    %1104 = vmatpush1.msra.mxu0 0.0
    %1105 = vmatprep.subr.mxu0 0.0
    %1106 = vmatpush1.msra.mxu0 0.0
    %1107 = vmatprep.subr.mxu0 0.0
    %1108 = vmatpush1.msra.mxu0 0.0
    %1109 = vmatprep.subr.mxu0 0.0
    %1110 = vmatpush1.msra.mxu0 0.0
    %1111 = vmatprep.subr.mxu0 0.0
    %1112 = vmatpush1.msra.mxu0 0.0
    %1113 = vmatprep.subr.mxu0 0.0
    %1114 = vmatpush1.msra.mxu0 0.0
    %1115 = vmatprep.subr.mxu0 0.0
    %1116 = vmatpush1.msra.mxu0 0.0
    %1117 = vmatprep.subr.mxu0 0.0
    %1118 = vmatpush1.msra.mxu0 0.0
    %1119 = vmatprep.subr.mxu0 0.0
    %1120 = vmatpush1.msra.mxu0 0.0
    %1121 = vmatprep.subr.mxu0 0.0
    %1122 = vmatpush1.msra.mxu0 0.0
    %1123 = vmatprep.subr.mxu0 0.0
    %1124 = vmatpush1.msra.mxu0 0.0
    %1125 = vmatprep.subr.mxu0 0.0
    %1126 = vmatpush1.msra.mxu0 0.0
    %1127 = vmatprep.subr.mxu0 0.0
    %1128 = vmatpush1.msra.mxu0 0.0
    %1129 = vmatprep.subr.mxu0 0.0
    %1130 = vmatpush1.msra.mxu0 0.0
    %1131 = vmatprep.subr.mxu0 0.0
    %1132 = vmatpush1.msra.mxu0 0.0
    %1133 = vmatprep.subr.mxu0 0.0
    %1134 = vmatpush1.msra.mxu0 0.0
    %1135 = vmatprep.subr.mxu0 0.0
    %1136 = vmatpush1.msra.mxu0 0.0
    %1137 = vmatprep.subr.mxu0 0.0
    %1138 = vmatpush1.msra.mxu0 0.0
    %1139 = vmatprep.subr.mxu0 0.0
    %1140 = vmatpush1.msra.mxu0 0.0
    %1141 = vmatprep.subr.mxu0 0.0
    %1142 = vmatpush1.msra.mxu0 0.0
    %1143 = vmatprep.subr.mxu0 0.0
    %1144 = vmatpush1.msra.mxu0 0.0
    %1145 = vmatprep.subr.mxu0 0.0
    %1146 = vmatpush1.msra.mxu0 0.0
    %1147 = vmatprep.subr.mxu0 0.0
    %1148 = vmatpush1.msra.mxu0 0.0
    %1149 = vmatprep.mubr.f32.mxu0 0.0
    %1150 = vmatmul.mubr.f32.gmra.mrb[0].mxu0 %v428
    %v1151 = vpop.f32.mrb[0].mxu0
    %v1152 = vadd.f32 0.0, %v1151
    %v1153 = vpop.f32.mrb[0].mxu0
    %1154 = vmatprep.mubr.f32.mxu0 0.0
    %1155 = vmatmul.mubr.f32.gmra.mrb[0].mxu0 %v431
    %v1156 = vpop.f32.mrb[0].mxu0
    %v1157 = vadd.f32 0.0, %v1156
    %v1158 = vpop.f32.mrb[0].mxu0
    %1159 = vmatprep.mubr.f32.mxu0 0.0
    %1160 = vmatmul.mubr.f32.gmra.mrb[0].mxu0 %v434
    %v1161 = vpop.f32.mrb[0].mxu0
    %v1162 = vadd.f32 0.0, %v1161
    %v1163 = vpop.f32.mrb[0].mxu0
    %1164 = vmatprep.mubr.f32.mxu0 0.0
    %1165 = vmatmul.mubr.f32.gmra.mrb[0].mxu0 %v437
    %v1166 = vpop.f32.mrb[0].mxu0
    %v1167 = vadd.f32 0.0, %v1166
    %v1168 = vpop.f32.mrb[0].mxu0
    %1169 = vmatprep.mubr.f32.mxu0 0.0
    %1170 = vmatmul.mubr.f32.gmra.mrb[0].mxu0 %v440
    %v1171 = vpop.f32.mrb[0].mxu0
    %v1172 = vadd.f32 0.0, %v1171
    %v1173 = vpop.f32.mrb[0].mxu0
    %1174 = vmatprep.mubr.f32.mxu0 0.0
    %1175 = vmatmul.mubr.f32.gmra.mrb[0].mxu0 %v443
    %v1176 = vpop.f32.mrb[0].mxu0
    %v1177 = vadd.f32 0.0, %v1176
    %v1178 = vpop.f32.mrb[0].mxu0
    %1179 = vmatprep.mubr.f32.mxu0 0.0
    %1180 = vmatmul.mubr.f32.gmra.mrb[0].mxu0 %v446
    %v1181 = vpop.f32.mrb[0].mxu0
    %v1182 = vadd.f32 0.0, %v1181
    %v1183 = vpop.f32.mrb[0].mxu0
    %1184 = vmatprep.mubr.f32.mxu0 0.0
    %1185 = vmatmul.mubr.f32.gmra.mrb[0].mxu0 %v449
    %v1186 = vpop.f32.mrb[0].mxu0
    %v1187 = vadd.f32 0.0, %v1186
    %v1188 = vpop.f32.mrb[0].mxu0
    %1189 = vdwg.mxu0
    %1190 = vmatprep.subr.mxu0 0.0
    %1191 = vmatpush1.msra.mxu0 %v948
    %1192 = vmatprep.subr.mxu0 0.0
    %1193 = vmatpush1.msra.mxu0 %v949
    %1194 = vmatprep.subr.mxu0 0.0
    %1195 = vmatpush1.msra.mxu0 %v950
    %1196 = vmatprep.subr.mxu0 0.0
    %1197 = vmatpush1.msra.mxu0 %v951
    %1198 = vmatprep.subr.mxu0 0.0
    %1199 = vmatpush1.msra.mxu0 %v952
    %1200 = vmatprep.subr.mxu0 0.0
    %1201 = vmatpush1.msra.mxu0 %v953
    %1202 = vmatprep.subr.mxu0 0.0
    %1203 = vmatpush1.msra.mxu0 %v954
    %1204 = vmatprep.subr.mxu0 0.0
    %1205 = vmatpush1.msra.mxu0 %v955
    %1206 = vmatprep.subr.mxu0 0.0
    %1207 = vmatpush1.msra.mxu0 %v956
    %1208 = vmatprep.subr.mxu0 0.0
    %1209 = vmatpush1.msra.mxu0 %v957
    %1210 = vmatprep.subr.mxu0 0.0
    %1211 = vmatpush1.msra.mxu0 %v958
    %1212 = vmatprep.subr.mxu0 0.0
    %1213 = vmatpush1.msra.mxu0 %v959
    %1214 = vmatprep.subr.mxu0 0.0
    %1215 = vmatpush1.msra.mxu0 %v960
    %1216 = vmatprep.subr.mxu0 0.0
    %1217 = vmatpush1.msra.mxu0 %v961
    %1218 = vmatprep.subr.mxu0 0.0
    %1219 = vmatpush1.msra.mxu0 %v962
    %1220 = vmatprep.subr.mxu0 0.0
    %1221 = vmatpush1.msra.mxu0 %v963
    %1222 = vmatprep.subr.mxu0 0.0
    %1223 = vmatpush1.msra.mxu0 0.0
    %1224 = vmatprep.subr.mxu0 0.0
    %1225 = vmatpush1.msra.mxu0 0.0
    %1226 = vmatprep.subr.mxu0 0.0
    %1227 = vmatpush1.msra.mxu0 0.0
    %1228 = vmatprep.subr.mxu0 0.0
    %1229 = vmatpush1.msra.mxu0 0.0
    %1230 = vmatprep.subr.mxu0 0.0
    %1231 = vmatpush1.msra.mxu0 0.0
    %1232 = vmatprep.subr.mxu0 0.0
    %1233 = vmatpush1.msra.mxu0 0.0
    %1234 = vmatprep.subr.mxu0 0.0
    %1235 = vmatpush1.msra.mxu0 0.0
    %1236 = vmatprep.subr.mxu0 0.0
    %1237 = vmatpush1.msra.mxu0 0.0
    %1238 = vmatprep.subr.mxu0 0.0
    %1239 = vmatpush1.msra.mxu0 0.0
    %1240 = vmatprep.subr.mxu0 0.0
    %1241 = vmatpush1.msra.mxu0 0.0
    %1242 = vmatprep.subr.mxu0 0.0
    %1243 = vmatpush1.msra.mxu0 0.0
    %1244 = vmatprep.subr.mxu0 0.0
    %1245 = vmatpush1.msra.mxu0 0.0
    %1246 = vmatprep.subr.mxu0 0.0
    %1247 = vmatpush1.msra.mxu0 0.0
    %1248 = vmatprep.subr.mxu0 0.0
    %1249 = vmatpush1.msra.mxu0 0.0
    %1250 = vmatprep.subr.mxu0 0.0
    %1251 = vmatpush1.msra.mxu0 0.0
    %1252 = vmatprep.subr.mxu0 0.0
    %1253 = vmatpush1.msra.mxu0 0.0
    %1254 = vmatprep.mubr.f32.mxu0 0.0
    %1255 = vmatmul.mubr.f32.gmra.mrb[0].mxu0 %v819
    %v1256 = vpop.f32.mrb[0].mxu0
    %v1257 = vadd.f32 %v1152, %v1256
    %v1258 = vpop.f32.mrb[0].mxu0
    %1259 = vmatprep.mubr.f32.mxu0 0.0
    %1260 = vmatmul.mubr.f32.gmra.mrb[0].mxu0 %v820
    %v1261 = vpop.f32.mrb[0].mxu0
    %v1262 = vadd.f32 %v1157, %v1261
    %v1263 = vpop.f32.mrb[0].mxu0
    %1264 = vmatprep.mubr.f32.mxu0 0.0
    %1265 = vmatmul.mubr.f32.gmra.mrb[0].mxu0 %v821
    %v1266 = vpop.f32.mrb[0].mxu0
    %v1267 = vadd.f32 %v1162, %v1266
    %v1268 = vpop.f32.mrb[0].mxu0
    %1269 = vmatprep.mubr.f32.mxu0 0.0
    %1270 = vmatmul.mubr.f32.gmra.mrb[0].mxu0 %v822
    %v1271 = vpop.f32.mrb[0].mxu0
    %v1272 = vadd.f32 %v1167, %v1271
    %v1273 = vpop.f32.mrb[0].mxu0
    %1274 = vmatprep.mubr.f32.mxu0 0.0
    %1275 = vmatmul.mubr.f32.gmra.mrb[0].mxu0 %v823
    %v1276 = vpop.f32.mrb[0].mxu0
    %v1277 = vadd.f32 %v1172, %v1276
    %v1278 = vpop.f32.mrb[0].mxu0
    %1279 = vmatprep.mubr.f32.mxu0 0.0
    %1280 = vmatmul.mubr.f32.gmra.mrb[0].mxu0 %v824
    %v1281 = vpop.f32.mrb[0].mxu0
    %v1282 = vadd.f32 %v1177, %v1281
    %v1283 = vpop.f32.mrb[0].mxu0
    %1284 = vmatprep.mubr.f32.mxu0 0.0
    %1285 = vmatmul.mubr.f32.gmra.mrb[0].mxu0 %v825
    %v1286 = vpop.f32.mrb[0].mxu0
    %v1287 = vadd.f32 %v1182, %v1286
    %v1288 = vpop.f32.mrb[0].mxu0
    %1289 = vmatprep.mubr.f32.mxu0 0.0
    %1290 = vmatmul.mubr.f32.gmra.mrb[0].mxu0 %v826
    %v1291 = vpop.f32.mrb[0].mxu0
    %v1292 = vadd.f32 %v1187, %v1291
    %v1293 = vpop.f32.mrb[0].mxu0
    %1294 = vdwg.mxu0
    %1295 = vmatprep.subr.mxu0 0.0
    %1296 = vmatpush1.msra.mxu0 %v1047
    %1297 = vmatprep.subr.mxu0 0.0
    %1298 = vmatpush1.msra.mxu0 %v1052
    %1299 = vmatprep.subr.mxu0 0.0
    %1300 = vmatpush1.msra.mxu0 %v1057
    %1301 = vmatprep.subr.mxu0 0.0
    %1302 = vmatpush1.msra.mxu0 %v1062
    %1303 = vmatprep.subr.mxu0 0.0
    %1304 = vmatpush1.msra.mxu0 %v1067
    %1305 = vmatprep.subr.mxu0 0.0
    %1306 = vmatpush1.msra.mxu0 %v1072
    %1307 = vmatprep.subr.mxu0 0.0
    %1308 = vmatpush1.msra.mxu0 %v1077
    %1309 = vmatprep.subr.mxu0 0.0
    %1310 = vmatpush1.msra.mxu0 %v1082
    %1311 = vmatprep.subr.mxu0 0.0
    %1312 = vmatpush1.msra.mxu0 0.0
    %1313 = vmatprep.subr.mxu0 0.0
    %1314 = vmatpush1.msra.mxu0 0.0
    %1315 = vmatprep.subr.mxu0 0.0
    %1316 = vmatpush1.msra.mxu0 0.0
    %1317 = vmatprep.subr.mxu0 0.0
    %1318 = vmatpush1.msra.mxu0 0.0
    %1319 = vmatprep.subr.mxu0 0.0
    %1320 = vmatpush1.msra.mxu0 0.0
    %1321 = vmatprep.subr.mxu0 0.0
    %1322 = vmatpush1.msra.mxu0 0.0
    %1323 = vmatprep.subr.mxu0 0.0
    %1324 = vmatpush1.msra.mxu0 0.0
    %1325 = vmatprep.subr.mxu0 0.0
    %1326 = vmatpush1.msra.mxu0 0.0
    %1327 = vmatprep.subr.mxu0 0.0
    %1328 = vmatpush1.msra.mxu0 0.0
    %1329 = vmatprep.subr.mxu0 0.0
    %1330 = vmatpush1.msra.mxu0 0.0
    %1331 = vmatprep.subr.mxu0 0.0
    %1332 = vmatpush1.msra.mxu0 0.0
    %1333 = vmatprep.subr.mxu0 0.0
    %1334 = vmatpush1.msra.mxu0 0.0
    %1335 = vmatprep.subr.mxu0 0.0
    %1336 = vmatpush1.msra.mxu0 0.0
    %1337 = vmatprep.subr.mxu0 0.0
    %1338 = vmatpush1.msra.mxu0 0.0
    %1339 = vmatprep.subr.mxu0 0.0
    %1340 = vmatpush1.msra.mxu0 0.0
    %1341 = vmatprep.subr.mxu0 0.0
    %1342 = vmatpush1.msra.mxu0 0.0
    %1343 = vmatprep.subr.mxu0 0.0
    %1344 = vmatpush1.msra.mxu0 0.0
    %1345 = vmatprep.subr.mxu0 0.0
    %1346 = vmatpush1.msra.mxu0 0.0
    %1347 = vmatprep.subr.mxu0 0.0
    %1348 = vmatpush1.msra.mxu0 0.0
    %1349 = vmatprep.subr.mxu0 0.0
    %1350 = vmatpush1.msra.mxu0 0.0
    %1351 = vmatprep.subr.mxu0 0.0
    %1352 = vmatpush1.msra.mxu0 0.0
    %1353 = vmatprep.subr.mxu0 0.0
    %1354 = vmatpush1.msra.mxu0 0.0
    %1355 = vmatprep.subr.mxu0 0.0
    %1356 = vmatpush1.msra.mxu0 0.0
    %1357 = vmatprep.subr.mxu0 0.0
    %1358 = vmatpush1.msra.mxu0 0.0
    %1359 = vmatprep.mubr.f32.mxu0 0.0
    %1360 = vmatmul.mubr.f32.gmra.mrb[0].mxu0 %v670
    %v1361 = vpop.f32.mrb[0].mxu0
    %v1362 = vadd.f32 0.0, %v1361
    %v1363 = vpop.f32.mrb[0].mxu0
    %1364 = vmatprep.mubr.f32.mxu0 0.0
    %1365 = vmatmul.mubr.f32.gmra.mrb[0].mxu0 %v673
    %v1366 = vpop.f32.mrb[0].mxu0
    %v1367 = vadd.f32 0.0, %v1366
    %v1368 = vpop.f32.mrb[0].mxu0
    %1369 = vmatprep.mubr.f32.mxu0 0.0
    %1370 = vmatmul.mubr.f32.gmra.mrb[0].mxu0 %v676
    %v1371 = vpop.f32.mrb[0].mxu0
    %v1372 = vadd.f32 0.0, %v1371
    %v1373 = vpop.f32.mrb[0].mxu0
    %1374 = vmatprep.mubr.f32.mxu0 0.0
    %1375 = vmatmul.mubr.f32.gmra.mrb[0].mxu0 %v679
    %v1376 = vpop.f32.mrb[0].mxu0
    %v1377 = vadd.f32 0.0, %v1376
    %v1378 = vpop.f32.mrb[0].mxu0
    %1379 = vmatprep.mubr.f32.mxu0 0.0
    %1380 = vmatmul.mubr.f32.gmra.mrb[0].mxu0 %v682
    %v1381 = vpop.f32.mrb[0].mxu0
    %v1382 = vadd.f32 0.0, %v1381
    %v1383 = vpop.f32.mrb[0].mxu0
    %1384 = vmatprep.mubr.f32.mxu0 0.0
    %1385 = vmatmul.mubr.f32.gmra.mrb[0].mxu0 %v685
    %v1386 = vpop.f32.mrb[0].mxu0
    %v1387 = vadd.f32 0.0, %v1386
    %v1388 = vpop.f32.mrb[0].mxu0
    %1389 = vmatprep.mubr.f32.mxu0 0.0
    %1390 = vmatmul.mubr.f32.gmra.mrb[0].mxu0 %v688
    %v1391 = vpop.f32.mrb[0].mxu0
    %v1392 = vadd.f32 0.0, %v1391
    %v1393 = vpop.f32.mrb[0].mxu0
    %1394 = vmatprep.mubr.f32.mxu0 0.0
    %1395 = vmatmul.mubr.f32.gmra.mrb[0].mxu0 %v691
    %v1396 = vpop.f32.mrb[0].mxu0
    %v1397 = vadd.f32 0.0, %v1396
    %v1398 = vpop.f32.mrb[0].mxu0
    %1399 = vdwg.mxu0
    %v1400 = vadd.f32 %v1257, %v1362
    %v1401 = vadd.f32 %v1262, %v1367
    %v1402 = vadd.f32 %v1267, %v1372
    %v1403 = vadd.f32 %v1272, %v1377
    %v1404 = vadd.f32 %v1277, %v1382
    %v1405 = vadd.f32 %v1282, %v1387
    %v1406 = vadd.f32 %v1287, %v1392
    %v1407 = vadd.f32 %v1292, %v1397
    %v1408 = vld [vmem:[#allocation2 + $0x410] sm:$0x1]
    %v1409 = vlaneseq
    %v1410 = vshrl.u32 %v1409, 7
    %v1411 = vsub.s32 0, %v1410
    %v1412 = vrot.slane %v1408, %v1411
    %v1413 = vadd.f32 %v1400, %v1412
    %v1414 = vadd.f32 %v1401, %v1412
    %v1415 = vadd.f32 %v1402, %v1412
    %v1416 = vadd.f32 %v1403, %v1412
    %v1417 = vadd.f32 %v1404, %v1412
    %v1418 = vadd.f32 %v1405, %v1412
    %v1419 = vadd.f32 %v1406, %v1412
    %v1420 = vadd.f32 %v1407, %v1412
    %v1421 = vmax.f32 %v1413, 0.0
    %v1422 = vmax.f32 %v1414, 0.0
    %v1423 = vmax.f32 %v1415, 0.0
    %v1424 = vmax.f32 %v1416, 0.0
    %v1425 = vmax.f32 %v1417, 0.0
    %v1426 = vmax.f32 %v1418, 0.0
    %v1427 = vmax.f32 %v1419, 0.0
    %v1428 = vmax.f32 %v1420, 0.0
    %v1429 = vld [vmem:[#allocation2 + $0x418] sm:$0xff]
    %v1430 = vld [vmem:[#allocation2 + $0x420] sm:$0xff]
    %v1431 = vld [vmem:[#allocation2 + $0x428] sm:$0xff]
    %v1432 = vld [vmem:[#allocation2 + $0x430] sm:$0xff]
    %v1434 = vsel %vm426, %v1429, 0
    %v1437 = vsel %vm426, %v1430, 0
    %v1440 = vsel %vm426, %v1431, 0
    %v1443 = vsel %vm426, %v1432, 0
    %1445 = vmatprep.subr.mxu0 0.0
    %1446 = vmatpush1.msra.mxu0 %v1421
    %1447 = vmatprep.subr.mxu0 0.0
    %1448 = vmatpush1.msra.mxu0 %v1422
    %1449 = vmatprep.subr.mxu0 0.0
    %1450 = vmatpush1.msra.mxu0 %v1423
    %1451 = vmatprep.subr.mxu0 0.0
    %1452 = vmatpush1.msra.mxu0 %v1424
    %1453 = vmatprep.subr.mxu0 0.0
    %1454 = vmatpush1.msra.mxu0 %v1425
    %1455 = vmatprep.subr.mxu0 0.0
    %1456 = vmatpush1.msra.mxu0 %v1426
    %1457 = vmatprep.subr.mxu0 0.0
    %1458 = vmatpush1.msra.mxu0 %v1427
    %1459 = vmatprep.subr.mxu0 0.0
    %1460 = vmatpush1.msra.mxu0 %v1428
    %1461 = vmatprep.subr.mxu0 0.0
    %1462 = vmatpush1.msra.mxu0 0.0
    %1463 = vmatprep.subr.mxu0 0.0
    %1464 = vmatpush1.msra.mxu0 0.0
    %1465 = vmatprep.subr.mxu0 0.0
    %1466 = vmatpush1.msra.mxu0 0.0
    %1467 = vmatprep.subr.mxu0 0.0
    %1468 = vmatpush1.msra.mxu0 0.0
    %1469 = vmatprep.subr.mxu0 0.0
    %1470 = vmatpush1.msra.mxu0 0.0
    %1471 = vmatprep.subr.mxu0 0.0
    %1472 = vmatpush1.msra.mxu0 0.0
    %1473 = vmatprep.subr.mxu0 0.0
    %1474 = vmatpush1.msra.mxu0 0.0
    %1475 = vmatprep.subr.mxu0 0.0
    %1476 = vmatpush1.msra.mxu0 0.0
    %1477 = vmatprep.subr.mxu0 0.0
    %1478 = vmatpush1.msra.mxu0 0.0
    %1479 = vmatprep.subr.mxu0 0.0
    %1480 = vmatpush1.msra.mxu0 0.0
    %1481 = vmatprep.subr.mxu0 0.0
    %1482 = vmatpush1.msra.mxu0 0.0
    %1483 = vmatprep.subr.mxu0 0.0
    %1484 = vmatpush1.msra.mxu0 0.0
    %1485 = vmatprep.subr.mxu0 0.0
    %1486 = vmatpush1.msra.mxu0 0.0
    %1487 = vmatprep.subr.mxu0 0.0
    %1488 = vmatpush1.msra.mxu0 0.0
    %1489 = vmatprep.subr.mxu0 0.0
    %1490 = vmatpush1.msra.mxu0 0.0
    %1491 = vmatprep.subr.mxu0 0.0
    %1492 = vmatpush1.msra.mxu0 0.0
    %1493 = vmatprep.subr.mxu0 0.0
    %1494 = vmatpush1.msra.mxu0 0.0
    %1495 = vmatprep.subr.mxu0 0.0
    %1496 = vmatpush1.msra.mxu0 0.0
    %1497 = vmatprep.subr.mxu0 0.0
    %1498 = vmatpush1.msra.mxu0 0.0
    %1499 = vmatprep.subr.mxu0 0.0
    %1500 = vmatpush1.msra.mxu0 0.0
    %1501 = vmatprep.subr.mxu0 0.0
    %1502 = vmatpush1.msra.mxu0 0.0
    %1503 = vmatprep.subr.mxu0 0.0
    %1504 = vmatpush1.msra.mxu0 0.0
    %1505 = vmatprep.subr.mxu0 0.0
    %1506 = vmatpush1.msra.mxu0 0.0
    %1507 = vmatprep.subr.mxu0 0.0
    %1508 = vmatpush1.msra.mxu0 0.0
    %1509 = vmatprep.mubr.f32.mxu0 0.0
    %1510 = vmatmul.mubr.f32.gmra.mrb[0].mxu0 %v1434
    %v1511 = vpop.f32.mrb[0].mxu0
    %v1512 = vadd.f32 0.0, %v1511
    %v1513 = vpop.f32.mrb[0].mxu0
    %1514 = vmatprep.mubr.f32.mxu0 0.0
    %1515 = vmatmul.mubr.f32.gmra.mrb[0].mxu0 %v1437
    %v1516 = vpop.f32.mrb[0].mxu0
    %v1517 = vadd.f32 0.0, %v1516
    %v1518 = vpop.f32.mrb[0].mxu0
    %1519 = vmatprep.mubr.f32.mxu0 0.0
    %1520 = vmatmul.mubr.f32.gmra.mrb[0].mxu0 %v1440
    %v1521 = vpop.f32.mrb[0].mxu0
    %v1522 = vadd.f32 0.0, %v1521
    %v1523 = vpop.f32.mrb[0].mxu0
    %1524 = vmatprep.mubr.f32.mxu0 0.0
    %1525 = vmatmul.mubr.f32.gmra.mrb[0].mxu0 %v1443
    %v1526 = vpop.f32.mrb[0].mxu0
    %v1527 = vadd.f32 0.0, %v1526
    %v1528 = vpop.f32.mrb[0].mxu0
    %1529 = vdwg.mxu0
    %v1530 = vld [vmem:[#allocation2 + $0x438] sm:$0xff]
    %v1531 = vld [vmem:[#allocation2 + $0x440] sm:$0xff]
    %v1532 = vld [vmem:[#allocation2 + $0x448] sm:$0xff]
    %v1533 = vld [vmem:[#allocation2 + $0x450] sm:$0xff]
    %v1535 = vsel %vm426, %v1530, 0
    %v1538 = vsel %vm426, %v1531, 0
    %v1541 = vsel %vm426, %v1532, 0
    %v1544 = vsel %vm426, %v1533, 0
    %1546 = vmatprep.subr.mxu0 0.0
    %1547 = vmatpush1.msra.mxu0 %v1421
    %1548 = vmatprep.subr.mxu0 0.0
    %1549 = vmatpush1.msra.mxu0 %v1422
    %1550 = vmatprep.subr.mxu0 0.0
    %1551 = vmatpush1.msra.mxu0 %v1423
    %1552 = vmatprep.subr.mxu0 0.0
    %1553 = vmatpush1.msra.mxu0 %v1424
    %1554 = vmatprep.subr.mxu0 0.0
    %1555 = vmatpush1.msra.mxu0 %v1425
    %1556 = vmatprep.subr.mxu0 0.0
    %1557 = vmatpush1.msra.mxu0 %v1426
    %1558 = vmatprep.subr.mxu0 0.0
    %1559 = vmatpush1.msra.mxu0 %v1427
    %1560 = vmatprep.subr.mxu0 0.0
    %1561 = vmatpush1.msra.mxu0 %v1428
    %1562 = vmatprep.subr.mxu0 0.0
    %1563 = vmatpush1.msra.mxu0 0.0
    %1564 = vmatprep.subr.mxu0 0.0
    %1565 = vmatpush1.msra.mxu0 0.0
    %1566 = vmatprep.subr.mxu0 0.0
    %1567 = vmatpush1.msra.mxu0 0.0
    %1568 = vmatprep.subr.mxu0 0.0
    %1569 = vmatpush1.msra.mxu0 0.0
    %1570 = vmatprep.subr.mxu0 0.0
    %1571 = vmatpush1.msra.mxu0 0.0
    %1572 = vmatprep.subr.mxu0 0.0
    %1573 = vmatpush1.msra.mxu0 0.0
    %1574 = vmatprep.subr.mxu0 0.0
    %1575 = vmatpush1.msra.mxu0 0.0
    %1576 = vmatprep.subr.mxu0 0.0
    %1577 = vmatpush1.msra.mxu0 0.0
    %1578 = vmatprep.subr.mxu0 0.0
    %1579 = vmatpush1.msra.mxu0 0.0
    %1580 = vmatprep.subr.mxu0 0.0
    %1581 = vmatpush1.msra.mxu0 0.0
    %1582 = vmatprep.subr.mxu0 0.0
    %1583 = vmatpush1.msra.mxu0 0.0
    %1584 = vmatprep.subr.mxu0 0.0
    %1585 = vmatpush1.msra.mxu0 0.0
    %1586 = vmatprep.subr.mxu0 0.0
    %1587 = vmatpush1.msra.mxu0 0.0
    %1588 = vmatprep.subr.mxu0 0.0
    %1589 = vmatpush1.msra.mxu0 0.0
    %1590 = vmatprep.subr.mxu0 0.0
    %1591 = vmatpush1.msra.mxu0 0.0
    %1592 = vmatprep.subr.mxu0 0.0
    %1593 = vmatpush1.msra.mxu0 0.0
    %1594 = vmatprep.subr.mxu0 0.0
    %1595 = vmatpush1.msra.mxu0 0.0
    %1596 = vmatprep.subr.mxu0 0.0
    %1597 = vmatpush1.msra.mxu0 0.0
    %1598 = vmatprep.subr.mxu0 0.0
    %1599 = vmatpush1.msra.mxu0 0.0
    %1600 = vmatprep.subr.mxu0 0.0
    %1601 = vmatpush1.msra.mxu0 0.0
    %1602 = vmatprep.subr.mxu0 0.0
    %1603 = vmatpush1.msra.mxu0 0.0
    %1604 = vmatprep.subr.mxu0 0.0
    %1605 = vmatpush1.msra.mxu0 0.0
    %1606 = vmatprep.subr.mxu0 0.0
    %1607 = vmatpush1.msra.mxu0 0.0
    %1608 = vmatprep.subr.mxu0 0.0
    %1609 = vmatpush1.msra.mxu0 0.0
    %1610 = vmatprep.mubr.f32.mxu0 0.0
    %1611 = vmatmul.mubr.f32.gmra.mrb[0].mxu0 %v1535
    %v1612 = vpop.f32.mrb[0].mxu0
    %v1613 = vadd.f32 0.0, %v1612
    %v1614 = vpop.f32.mrb[0].mxu0
    %1615 = vmatprep.mubr.f32.mxu0 0.0
    %1616 = vmatmul.mubr.f32.gmra.mrb[0].mxu0 %v1538
    %v1617 = vpop.f32.mrb[0].mxu0
    %v1618 = vadd.f32 0.0, %v1617
    %v1619 = vpop.f32.mrb[0].mxu0
    %1620 = vmatprep.mubr.f32.mxu0 0.0
    %1621 = vmatmul.mubr.f32.gmra.mrb[0].mxu0 %v1541
    %v1622 = vpop.f32.mrb[0].mxu0
    %v1623 = vadd.f32 0.0, %v1622
    %v1624 = vpop.f32.mrb[0].mxu0
    %1625 = vmatprep.mubr.f32.mxu0 0.0
    %1626 = vmatmul.mubr.f32.gmra.mrb[0].mxu0 %v1544
    %v1627 = vpop.f32.mrb[0].mxu0
    %v1628 = vadd.f32 0.0, %v1627
    %v1629 = vpop.f32.mrb[0].mxu0
    %1630 = vdwg.mxu0
    %v1631 = vmax.f32 %v1512, %v1613
    %v1632 = vmax.f32 %v1517, %v1618
    %v1633 = vmax.f32 %v1522, %v1623
    %v1634 = vmax.f32 %v1527, %v1628
    %v1635 = vld [vmem:[#allocation2 + $0x458] sm:$0xff]
    %v1636 = vld [vmem:[#allocation2 + $0x460] sm:$0xff]
    %v1637 = vld [vmem:[#allocation2 + $0x468] sm:$0xff]
    %v1638 = vld [vmem:[#allocation2 + $0x470] sm:$0xff]
    %v1639 = vld [vmem:[#allocation2 + $0x478] sm:$0xff]
    %v1640 = vld [vmem:[#allocation2 + $0x480] sm:$0xff]
    %v1641 = vld [vmem:[#allocation2 + $0x488] sm:$0xff]
    %v1642 = vld [vmem:[#allocation2 + $0x490] sm:$0xff]
    %v1643 = vld [vmem:[#allocation2 + $0x498] sm:$0xff]
    %v1644 = vld [vmem:[#allocation2 + $0x4a0] sm:$0xff]
    %v1645 = vld [vmem:[#allocation2 + $0x4a8] sm:$0xff]
    %v1646 = vld [vmem:[#allocation2 + $0x4b0] sm:$0xff]
    %v1647 = vld [vmem:[#allocation2 + $0x4b8] sm:$0xff]
    %v1648 = vld [vmem:[#allocation2 + $0x4c0] sm:$0xff]
    %v1649 = vld [vmem:[#allocation2 + $0x4c8] sm:$0xff]
    %v1650 = vld [vmem:[#allocation2 + $0x4d0] sm:$0xff]
    %1651 = vmatprep.subr.mxu0 0.0
    %1652 = vmatpush1.msra.mxu0 %v1635
    %1653 = vmatprep.subr.mxu0 0.0
    %1654 = vmatpush1.msra.mxu0 %v1636
    %1655 = vmatprep.subr.mxu0 0.0
    %1656 = vmatpush1.msra.mxu0 %v1637
    %1657 = vmatprep.subr.mxu0 0.0
    %1658 = vmatpush1.msra.mxu0 %v1638
    %1659 = vmatprep.subr.mxu0 0.0
    %1660 = vmatpush1.msra.mxu0 %v1639
    %1661 = vmatprep.subr.mxu0 0.0
    %1662 = vmatpush1.msra.mxu0 %v1640
    %1663 = vmatprep.subr.mxu0 0.0
    %1664 = vmatpush1.msra.mxu0 %v1641
    %1665 = vmatprep.subr.mxu0 0.0
    %1666 = vmatpush1.msra.mxu0 %v1642
    %1667 = vmatprep.subr.mxu0 0.0
    %1668 = vmatpush1.msra.mxu0 %v1643
    %1669 = vmatprep.subr.mxu0 0.0
    %1670 = vmatpush1.msra.mxu0 %v1644
    %1671 = vmatprep.subr.mxu0 0.0
    %1672 = vmatpush1.msra.mxu0 %v1645
    %1673 = vmatprep.subr.mxu0 0.0
    %1674 = vmatpush1.msra.mxu0 %v1646
    %1675 = vmatprep.subr.mxu0 0.0
    %1676 = vmatpush1.msra.mxu0 %v1647
    %1677 = vmatprep.subr.mxu0 0.0
    %1678 = vmatpush1.msra.mxu0 %v1648
    %1679 = vmatprep.subr.mxu0 0.0
    %1680 = vmatpush1.msra.mxu0 %v1649
    %1681 = vmatprep.subr.mxu0 0.0
    %1682 = vmatpush1.msra.mxu0 %v1650
    %1683 = vmatprep.subr.mxu0 0.0
    %1684 = vmatpush1.msra.mxu0 0.0
    %1685 = vmatprep.subr.mxu0 0.0
    %1686 = vmatpush1.msra.mxu0 0.0
    %1687 = vmatprep.subr.mxu0 0.0
    %1688 = vmatpush1.msra.mxu0 0.0
    %1689 = vmatprep.subr.mxu0 0.0
    %1690 = vmatpush1.msra.mxu0 0.0
    %1691 = vmatprep.subr.mxu0 0.0
    %1692 = vmatpush1.msra.mxu0 0.0
    %1693 = vmatprep.subr.mxu0 0.0
    %1694 = vmatpush1.msra.mxu0 0.0
    %1695 = vmatprep.subr.mxu0 0.0
    %1696 = vmatpush1.msra.mxu0 0.0
    %1697 = vmatprep.subr.mxu0 0.0
    %1698 = vmatpush1.msra.mxu0 0.0
    %1699 = vmatprep.subr.mxu0 0.0
    %1700 = vmatpush1.msra.mxu0 0.0
    %1701 = vmatprep.subr.mxu0 0.0
    %1702 = vmatpush1.msra.mxu0 0.0
    %1703 = vmatprep.subr.mxu0 0.0
    %1704 = vmatpush1.msra.mxu0 0.0
    %1705 = vmatprep.subr.mxu0 0.0
    %1706 = vmatpush1.msra.mxu0 0.0
    %1707 = vmatprep.subr.mxu0 0.0
    %1708 = vmatpush1.msra.mxu0 0.0
    %1709 = vmatprep.subr.mxu0 0.0
    %1710 = vmatpush1.msra.mxu0 0.0
    %1711 = vmatprep.subr.mxu0 0.0
    %1712 = vmatpush1.msra.mxu0 0.0
    %1713 = vmatprep.subr.mxu0 0.0
    %1714 = vmatpush1.msra.mxu0 0.0
    %1715 = vmatprep.mubr.f32.mxu0 0.0
    %1716 = vmatmul.mubr.f32.gmra.mrb[0].mxu0 %v1631
    %v1717 = vpop.f32.mrb[0].mxu0
    %v1718 = vadd.f32 0.0, %v1717
    %v1719 = vpop.f32.mrb[0].mxu0
    %1720 = vmatprep.mubr.f32.mxu0 0.0
    %1721 = vmatmul.mubr.f32.gmra.mrb[0].mxu0 %v1632
    %v1722 = vpop.f32.mrb[0].mxu0
    %v1723 = vadd.f32 0.0, %v1722
    %v1724 = vpop.f32.mrb[0].mxu0
    %1725 = vmatprep.mubr.f32.mxu0 0.0
    %1726 = vmatmul.mubr.f32.gmra.mrb[0].mxu0 %v1633
    %v1727 = vpop.f32.mrb[0].mxu0
    %v1728 = vadd.f32 0.0, %v1727
    %v1729 = vpop.f32.mrb[0].mxu0
    %1730 = vmatprep.mubr.f32.mxu0 0.0
    %1731 = vmatmul.mubr.f32.gmra.mrb[0].mxu0 %v1634
    %v1732 = vpop.f32.mrb[0].mxu0
    %v1733 = vadd.f32 0.0, %v1732
    %v1734 = vpop.f32.mrb[0].mxu0
    %1735 = vdwg.mxu0
    %v1736 = vld [vmem:[#allocation2 + $0x4d8] sm:$0xff]
    %v1737 = vld [vmem:[#allocation2 + $0x4e0] sm:$0xff]
    %v1738 = vld [vmem:[#allocation2 + $0x4e8] sm:$0xff]
    %v1739 = vld [vmem:[#allocation2 + $0x4f0] sm:$0xff]
    %v1740 = vld [vmem:[#allocation2 + $0x4f8] sm:$0xff]
    %v1741 = vld [vmem:[#allocation2 + $0x500] sm:$0xff]
    %v1742 = vld [vmem:[#allocation2 + $0x508] sm:$0xff]
    %v1743 = vld [vmem:[#allocation2 + $0x510] sm:$0xff]
    %v1744 = vld [vmem:[#allocation2 + $0x518] sm:$0xff]
    %v1745 = vld [vmem:[#allocation2 + $0x520] sm:$0xff]
    %v1746 = vld [vmem:[#allocation2 + $0x528] sm:$0xff]
    %v1747 = vld [vmem:[#allocation2 + $0x530] sm:$0xff]
    %v1748 = vld [vmem:[#allocation2 + $0x538] sm:$0xff]
    %v1749 = vld [vmem:[#allocation2 + $0x540] sm:$0xff]
    %v1750 = vld [vmem:[#allocation2 + $0x548] sm:$0xff]
    %v1751 = vld [vmem:[#allocation2 + $0x550] sm:$0xff]
    %1752 = vmatprep.subr.mxu0 0.0
    %1753 = vmatpush1.msra.mxu0 %v1736
    %1754 = vmatprep.subr.mxu0 0.0
    %1755 = vmatpush1.msra.mxu0 %v1737
    %1756 = vmatprep.subr.mxu0 0.0
    %1757 = vmatpush1.msra.mxu0 %v1738
    %1758 = vmatprep.subr.mxu0 0.0
    %1759 = vmatpush1.msra.mxu0 %v1739
    %1760 = vmatprep.subr.mxu0 0.0
    %1761 = vmatpush1.msra.mxu0 %v1740
    %1762 = vmatprep.subr.mxu0 0.0
    %1763 = vmatpush1.msra.mxu0 %v1741
    %1764 = vmatprep.subr.mxu0 0.0
    %1765 = vmatpush1.msra.mxu0 %v1742
    %1766 = vmatprep.subr.mxu0 0.0
    %1767 = vmatpush1.msra.mxu0 %v1743
    %1768 = vmatprep.subr.mxu0 0.0
    %1769 = vmatpush1.msra.mxu0 %v1744
    %1770 = vmatprep.subr.mxu0 0.0
    %1771 = vmatpush1.msra.mxu0 %v1745
    %1772 = vmatprep.subr.mxu0 0.0
    %1773 = vmatpush1.msra.mxu0 %v1746
    %1774 = vmatprep.subr.mxu0 0.0
    %1775 = vmatpush1.msra.mxu0 %v1747
    %1776 = vmatprep.subr.mxu0 0.0
    %1777 = vmatpush1.msra.mxu0 %v1748
    %1778 = vmatprep.subr.mxu0 0.0
    %1779 = vmatpush1.msra.mxu0 %v1749
    %1780 = vmatprep.subr.mxu0 0.0
    %1781 = vmatpush1.msra.mxu0 %v1750
    %1782 = vmatprep.subr.mxu0 0.0
    %1783 = vmatpush1.msra.mxu0 %v1751
    %1784 = vmatprep.subr.mxu0 0.0
    %1785 = vmatpush1.msra.mxu0 0.0
    %1786 = vmatprep.subr.mxu0 0.0
    %1787 = vmatpush1.msra.mxu0 0.0
    %1788 = vmatprep.subr.mxu0 0.0
    %1789 = vmatpush1.msra.mxu0 0.0
    %1790 = vmatprep.subr.mxu0 0.0
    %1791 = vmatpush1.msra.mxu0 0.0
    %1792 = vmatprep.subr.mxu0 0.0
    %1793 = vmatpush1.msra.mxu0 0.0
    %1794 = vmatprep.subr.mxu0 0.0
    %1795 = vmatpush1.msra.mxu0 0.0
    %1796 = vmatprep.subr.mxu0 0.0
    %1797 = vmatpush1.msra.mxu0 0.0
    %1798 = vmatprep.subr.mxu0 0.0
    %1799 = vmatpush1.msra.mxu0 0.0
    %1800 = vmatprep.subr.mxu0 0.0
    %1801 = vmatpush1.msra.mxu0 0.0
    %1802 = vmatprep.subr.mxu0 0.0
    %1803 = vmatpush1.msra.mxu0 0.0
    %1804 = vmatprep.subr.mxu0 0.0
    %1805 = vmatpush1.msra.mxu0 0.0
    %1806 = vmatprep.subr.mxu0 0.0
    %1807 = vmatpush1.msra.mxu0 0.0
    %1808 = vmatprep.subr.mxu0 0.0
    %1809 = vmatpush1.msra.mxu0 0.0
    %1810 = vmatprep.subr.mxu0 0.0
    %1811 = vmatpush1.msra.mxu0 0.0
    %1812 = vmatprep.subr.mxu0 0.0
    %1813 = vmatpush1.msra.mxu0 0.0
    %1814 = vmatprep.subr.mxu0 0.0
    %1815 = vmatpush1.msra.mxu0 0.0
    %1816 = vmatprep.mubr.f32.mxu0 0.0
    %1817 = vmatmul.mubr.f32.gmra.mrb[0].mxu0 %v1631
    %v1818 = vpop.f32.mrb[0].mxu0
    %v1819 = vadd.f32 0.0, %v1818
    %v1820 = vpop.f32.mrb[0].mxu0
    %1821 = vmatprep.mubr.f32.mxu0 0.0
    %1822 = vmatmul.mubr.f32.gmra.mrb[0].mxu0 %v1632
    %v1823 = vpop.f32.mrb[0].mxu0
    %v1824 = vadd.f32 0.0, %v1823
    %v1825 = vpop.f32.mrb[0].mxu0
    %1826 = vmatprep.mubr.f32.mxu0 0.0
    %1827 = vmatmul.mubr.f32.gmra.mrb[0].mxu0 %v1633
    %v1828 = vpop.f32.mrb[0].mxu0
    %v1829 = vadd.f32 0.0, %v1828
    %v1830 = vpop.f32.mrb[0].mxu0
    %1831 = vmatprep.mubr.f32.mxu0 0.0
    %1832 = vmatmul.mubr.f32.gmra.mrb[0].mxu0 %v1634
    %v1833 = vpop.f32.mrb[0].mxu0
    %v1834 = vadd.f32 0.0, %v1833
    %v1835 = vpop.f32.mrb[0].mxu0
    %1836 = vdwg.mxu0
    %v1837 = vmax.f32 %v1718, %v1819
    %v1838 = vmax.f32 %v1723, %v1824
    %v1839 = vmax.f32 %v1728, %v1829
    %v1840 = vmax.f32 %v1733, %v1834
    %v1841 = vld [vmem:[#allocation2 + $0x558] sm:$0xff]
    %v1842 = vld [vmem:[#allocation2 + $0x560] sm:$0xff]
    %v1843 = vld [vmem:[#allocation2 + $0x568] sm:$0xff]
    %v1844 = vld [vmem:[#allocation2 + $0x570] sm:$0xff]
    %v1845 = vld [vmem:[#allocation2 + $0x578] sm:$0xff]
    %v1846 = vld [vmem:[#allocation2 + $0x580] sm:$0xff]
    %v1847 = vld [vmem:[#allocation2 + $0x588] sm:$0xff]
    %v1848 = vld [vmem:[#allocation2 + $0x590] sm:$0xff]
    %v1849 = vld [vmem:[#allocation2 + $0x598] sm:$0xff]
    %v1850 = vld [vmem:[#allocation2 + $0x5a0] sm:$0xff]
    %v1851 = vld [vmem:[#allocation2 + $0x5a8] sm:$0xff]
    %v1852 = vld [vmem:[#allocation2 + $0x5b0] sm:$0xff]
    %v1853 = vld [vmem:[#allocation2 + $0x5b8] sm:$0xff]
    %v1854 = vld [vmem:[#allocation2 + $0x5c0] sm:$0xff]
    %v1855 = vld [vmem:[#allocation2 + $0x5c8] sm:$0xff]
    %v1856 = vld [vmem:[#allocation2 + $0x5d0] sm:$0xff]
    %1857 = vmatprep.subr.mxu0 0.0
    %1858 = vmatpush1.msra.mxu0 %v1841
    %1859 = vmatprep.subr.mxu0 0.0
    %1860 = vmatpush1.msra.mxu0 %v1842
    %1861 = vmatprep.subr.mxu0 0.0
    %1862 = vmatpush1.msra.mxu0 %v1843
    %1863 = vmatprep.subr.mxu0 0.0
    %1864 = vmatpush1.msra.mxu0 %v1844
    %1865 = vmatprep.subr.mxu0 0.0
    %1866 = vmatpush1.msra.mxu0 %v1845
    %1867 = vmatprep.subr.mxu0 0.0
    %1868 = vmatpush1.msra.mxu0 %v1846
    %1869 = vmatprep.subr.mxu0 0.0
    %1870 = vmatpush1.msra.mxu0 %v1847
    %1871 = vmatprep.subr.mxu0 0.0
    %1872 = vmatpush1.msra.mxu0 %v1848
    %1873 = vmatprep.subr.mxu0 0.0
    %1874 = vmatpush1.msra.mxu0 %v1849
    %1875 = vmatprep.subr.mxu0 0.0
    %1876 = vmatpush1.msra.mxu0 %v1850
    %1877 = vmatprep.subr.mxu0 0.0
    %1878 = vmatpush1.msra.mxu0 %v1851
    %1879 = vmatprep.subr.mxu0 0.0
    %1880 = vmatpush1.msra.mxu0 %v1852
    %1881 = vmatprep.subr.mxu0 0.0
    %1882 = vmatpush1.msra.mxu0 %v1853
    %1883 = vmatprep.subr.mxu0 0.0
    %1884 = vmatpush1.msra.mxu0 %v1854
    %1885 = vmatprep.subr.mxu0 0.0
    %1886 = vmatpush1.msra.mxu0 %v1855
    %1887 = vmatprep.subr.mxu0 0.0
    %1888 = vmatpush1.msra.mxu0 %v1856
    %1889 = vmatprep.subr.mxu0 0.0
    %1890 = vmatpush1.msra.mxu0 0.0
    %1891 = vmatprep.subr.mxu0 0.0
    %1892 = vmatpush1.msra.mxu0 0.0
    %1893 = vmatprep.subr.mxu0 0.0
    %1894 = vmatpush1.msra.mxu0 0.0
    %1895 = vmatprep.subr.mxu0 0.0
    %1896 = vmatpush1.msra.mxu0 0.0
    %1897 = vmatprep.subr.mxu0 0.0
    %1898 = vmatpush1.msra.mxu0 0.0
    %1899 = vmatprep.subr.mxu0 0.0
    %1900 = vmatpush1.msra.mxu0 0.0
    %1901 = vmatprep.subr.mxu0 0.0
    %1902 = vmatpush1.msra.mxu0 0.0
    %1903 = vmatprep.subr.mxu0 0.0
    %1904 = vmatpush1.msra.mxu0 0.0
    %1905 = vmatprep.subr.mxu0 0.0
    %1906 = vmatpush1.msra.mxu0 0.0
    %1907 = vmatprep.subr.mxu0 0.0
    %1908 = vmatpush1.msra.mxu0 0.0
    %1909 = vmatprep.subr.mxu0 0.0
    %1910 = vmatpush1.msra.mxu0 0.0
    %1911 = vmatprep.subr.mxu0 0.0
    %1912 = vmatpush1.msra.mxu0 0.0
    %1913 = vmatprep.subr.mxu0 0.0
    %1914 = vmatpush1.msra.mxu0 0.0
    %1915 = vmatprep.subr.mxu0 0.0
    %1916 = vmatpush1.msra.mxu0 0.0
    %1917 = vmatprep.subr.mxu0 0.0
    %1918 = vmatpush1.msra.mxu0 0.0
    %1919 = vmatprep.subr.mxu0 0.0
    %1920 = vmatpush1.msra.mxu0 0.0
    %1921 = vmatprep.mubr.f32.mxu0 0.0
    %1922 = vmatmul.mubr.f32.gmra.mrb[0].mxu0 %v1837
    %v1923 = vpop.f32.mrb[0].mxu0
    %v1924 = vadd.f32 0.0, %v1923
    %v1925 = vpop.f32.mrb[0].mxu0
    %1926 = vmatprep.mubr.f32.mxu0 0.0
    %1927 = vmatmul.mubr.f32.gmra.mrb[0].mxu0 %v1838
    %v1928 = vpop.f32.mrb[0].mxu0
    %v1929 = vadd.f32 0.0, %v1928
    %v1930 = vpop.f32.mrb[0].mxu0
    %1931 = vmatprep.mubr.f32.mxu0 0.0
    %1932 = vmatmul.mubr.f32.gmra.mrb[0].mxu0 %v1839
    %v1933 = vpop.f32.mrb[0].mxu0
    %v1934 = vadd.f32 0.0, %v1933
    %v1935 = vpop.f32.mrb[0].mxu0
    %1936 = vmatprep.mubr.f32.mxu0 0.0
    %1937 = vmatmul.mubr.f32.gmra.mrb[0].mxu0 %v1840
    %v1938 = vpop.f32.mrb[0].mxu0
    %v1939 = vadd.f32 0.0, %v1938
    %v1940 = vpop.f32.mrb[0].mxu0
    %1941 = vdwg.mxu0
    %v1942 = vld [vmem:[#allocation2 + $0x5d8] sm:$0xff]
    %v1943 = vld [vmem:[#allocation2 + $0x5e0] sm:$0xff]
    %v1944 = vld [vmem:[#allocation2 + $0x5e8] sm:$0xff]
    %v1945 = vld [vmem:[#allocation2 + $0x5f0] sm:$0xff]
    %v1946 = vld [vmem:[#allocation2 + $0x5f8] sm:$0xff]
    %v1947 = vld [vmem:[#allocation2 + $0x600] sm:$0xff]
    %v1948 = vld [vmem:[#allocation2 + $0x608] sm:$0xff]
    %v1949 = vld [vmem:[#allocation2 + $0x610] sm:$0xff]
    %v1950 = vld [vmem:[#allocation2 + $0x618] sm:$0xff]
    %v1951 = vld [vmem:[#allocation2 + $0x620] sm:$0xff]
    %v1952 = vld [vmem:[#allocation2 + $0x628] sm:$0xff]
    %v1953 = vld [vmem:[#allocation2 + $0x630] sm:$0xff]
    %v1954 = vld [vmem:[#allocation2 + $0x638] sm:$0xff]
    %v1955 = vld [vmem:[#allocation2 + $0x640] sm:$0xff]
    %v1956 = vld [vmem:[#allocation2 + $0x648] sm:$0xff]
    %v1957 = vld [vmem:[#allocation2 + $0x650] sm:$0xff]
    %v1958 = vld [vmem:[#allocation2 + $0x658] sm:$0xff]
    %v1959 = vld [vmem:[#allocation2 + $0x660] sm:$0xff]
    %v1960 = vld [vmem:[#allocation2 + $0x668] sm:$0xff]
    %v1961 = vld [vmem:[#allocation2 + $0x670] sm:$0xff]
    %v1962 = vld [vmem:[#allocation2 + $0x678] sm:$0xff]
    %v1963 = vld [vmem:[#allocation2 + $0x680] sm:$0xff]
    %v1964 = vld [vmem:[#allocation2 + $0x688] sm:$0xff]
    %v1965 = vld [vmem:[#allocation2 + $0x690] sm:$0xff]
    %v1966 = vld [vmem:[#allocation2 + $0x698] sm:$0xff]
    %v1967 = vld [vmem:[#allocation2 + $0x6a0] sm:$0xff]
    %v1968 = vld [vmem:[#allocation2 + $0x6a8] sm:$0xff]
    %v1969 = vld [vmem:[#allocation2 + $0x6b0] sm:$0xff]
    %v1970 = vld [vmem:[#allocation2 + $0x6b8] sm:$0xff]
    %v1971 = vld [vmem:[#allocation2 + $0x6c0] sm:$0xff]
    %v1972 = vld [vmem:[#allocation2 + $0x6c8] sm:$0xff]
    %v1973 = vld [vmem:[#allocation2 + $0x6d0] sm:$0xff]
    %1974 = vmatprep.subr.mxu0 0.0
    %1975 = vmatpush1.msra.mxu0 %v1958
    %1976 = vmatprep.subr.mxu0 0.0
    %1977 = vmatpush1.msra.mxu0 %v1959
    %1978 = vmatprep.subr.mxu0 0.0
    %1979 = vmatpush1.msra.mxu0 %v1960
    %1980 = vmatprep.subr.mxu0 0.0
    %1981 = vmatpush1.msra.mxu0 %v1961
    %1982 = vmatprep.subr.mxu0 0.0
    %1983 = vmatpush1.msra.mxu0 %v1962
    %1984 = vmatprep.subr.mxu0 0.0
    %1985 = vmatpush1.msra.mxu0 %v1963
    %1986 = vmatprep.subr.mxu0 0.0
    %1987 = vmatpush1.msra.mxu0 %v1964
    %1988 = vmatprep.subr.mxu0 0.0
    %1989 = vmatpush1.msra.mxu0 %v1965
    %1990 = vmatprep.subr.mxu0 0.0
    %1991 = vmatpush1.msra.mxu0 %v1966
    %1992 = vmatprep.subr.mxu0 0.0
    %1993 = vmatpush1.msra.mxu0 %v1967
    %1994 = vmatprep.subr.mxu0 0.0
    %1995 = vmatpush1.msra.mxu0 %v1968
    %1996 = vmatprep.subr.mxu0 0.0
    %1997 = vmatpush1.msra.mxu0 %v1969
    %1998 = vmatprep.subr.mxu0 0.0
    %1999 = vmatpush1.msra.mxu0 %v1970
    %2000 = vmatprep.subr.mxu0 0.0
    %2001 = vmatpush1.msra.mxu0 %v1971
    %2002 = vmatprep.subr.mxu0 0.0
    %2003 = vmatpush1.msra.mxu0 %v1972
    %2004 = vmatprep.subr.mxu0 0.0
    %2005 = vmatpush1.msra.mxu0 %v1973
    %2006 = vmatprep.subr.mxu0 0.0
    %2007 = vmatpush1.msra.mxu0 0.0
    %2008 = vmatprep.subr.mxu0 0.0
    %2009 = vmatpush1.msra.mxu0 0.0
    %2010 = vmatprep.subr.mxu0 0.0
    %2011 = vmatpush1.msra.mxu0 0.0
    %2012 = vmatprep.subr.mxu0 0.0
    %2013 = vmatpush1.msra.mxu0 0.0
    %2014 = vmatprep.subr.mxu0 0.0
    %2015 = vmatpush1.msra.mxu0 0.0
    %2016 = vmatprep.subr.mxu0 0.0
    %2017 = vmatpush1.msra.mxu0 0.0
    %2018 = vmatprep.subr.mxu0 0.0
    %2019 = vmatpush1.msra.mxu0 0.0
    %2020 = vmatprep.subr.mxu0 0.0
    %2021 = vmatpush1.msra.mxu0 0.0
    %2022 = vmatprep.subr.mxu0 0.0
    %2023 = vmatpush1.msra.mxu0 0.0
    %2024 = vmatprep.subr.mxu0 0.0
    %2025 = vmatpush1.msra.mxu0 0.0
    %2026 = vmatprep.subr.mxu0 0.0
    %2027 = vmatpush1.msra.mxu0 0.0
    %2028 = vmatprep.subr.mxu0 0.0
    %2029 = vmatpush1.msra.mxu0 0.0
    %2030 = vmatprep.subr.mxu0 0.0
    %2031 = vmatpush1.msra.mxu0 0.0
    %2032 = vmatprep.subr.mxu0 0.0
    %2033 = vmatpush1.msra.mxu0 0.0
    %2034 = vmatprep.subr.mxu0 0.0
    %2035 = vmatpush1.msra.mxu0 0.0
    %2036 = vmatprep.subr.mxu0 0.0
    %2037 = vmatpush1.msra.mxu0 0.0
    %2038 = vmatprep.mubr.f32.mxu0 0.0
    %2039 = vmatmul.mubr.f32.gmra.mrb[0].mxu0 %v1837
    %v2040 = vpop.f32.mrb[0].mxu0
    %v2041 = vadd.f32 0.0, %v2040
    %v2042 = vpop.f32.mrb[0].mxu0
    %2043 = vmatprep.mubr.f32.mxu0 0.0
    %2044 = vmatmul.mubr.f32.gmra.mrb[0].mxu0 %v1838
    %v2045 = vpop.f32.mrb[0].mxu0
    %v2046 = vadd.f32 0.0, %v2045
    %v2047 = vpop.f32.mrb[0].mxu0
    %2048 = vmatprep.mubr.f32.mxu0 0.0
    %2049 = vmatmul.mubr.f32.gmra.mrb[0].mxu0 %v1839
    %v2050 = vpop.f32.mrb[0].mxu0
    %v2051 = vadd.f32 0.0, %v2050
    %v2052 = vpop.f32.mrb[0].mxu0
    %2053 = vmatprep.mubr.f32.mxu0 0.0
    %2054 = vmatmul.mubr.f32.gmra.mrb[0].mxu0 %v1840
    %v2055 = vpop.f32.mrb[0].mxu0
    %v2056 = vadd.f32 0.0, %v2055
    %v2057 = vpop.f32.mrb[0].mxu0
    %2058 = vdwg.mxu0
    %v2059 = vld [vmem:[#allocation2 + $0x6e0] sm:$0xff]
    %v2060 = vld [vmem:[#allocation2 + $0x6e8] sm:$0xff]
    %v2061 = vld [vmem:[#allocation2 + $0x6f0] sm:$0xff]
    %v2062 = vld [vmem:[#allocation2 + $0x6f8] sm:$0xff]
    %vm2063 = vcmask 261120
    %v2065 = vsel %vm2063, %v2059, 0
    %v2068 = vsel %vm2063, %v2060, 0
    %v2071 = vsel %vm2063, %v2061, 0
    %v2074 = vsel %vm2063, %v2062, 0
    %2076 = vmatprep.subr.mxu0 0.0
    %2077 = vmatpush1.msra.mxu0 %v1924
    %2078 = vmatprep.subr.mxu0 0.0
    %2079 = vmatpush1.msra.mxu0 %v1929
    %2080 = vmatprep.subr.mxu0 0.0
    %2081 = vmatpush1.msra.mxu0 %v1934
    %2082 = vmatprep.subr.mxu0 0.0
    %2083 = vmatpush1.msra.mxu0 %v1939
    %2084 = vmatprep.subr.mxu0 0.0
    %2085 = vmatpush1.msra.mxu0 0.0
    %2086 = vmatprep.subr.mxu0 0.0
    %2087 = vmatpush1.msra.mxu0 0.0
    %2088 = vmatprep.subr.mxu0 0.0
    %2089 = vmatpush1.msra.mxu0 0.0
    %2090 = vmatprep.subr.mxu0 0.0
    %2091 = vmatpush1.msra.mxu0 0.0
    %2092 = vmatprep.subr.mxu0 0.0
    %2093 = vmatpush1.msra.mxu0 0.0
    %2094 = vmatprep.subr.mxu0 0.0
    %2095 = vmatpush1.msra.mxu0 0.0
    %2096 = vmatprep.subr.mxu0 0.0
    %2097 = vmatpush1.msra.mxu0 0.0
    %2098 = vmatprep.subr.mxu0 0.0
    %2099 = vmatpush1.msra.mxu0 0.0
    %2100 = vmatprep.subr.mxu0 0.0
    %2101 = vmatpush1.msra.mxu0 0.0
    %2102 = vmatprep.subr.mxu0 0.0
    %2103 = vmatpush1.msra.mxu0 0.0
    %2104 = vmatprep.subr.mxu0 0.0
    %2105 = vmatpush1.msra.mxu0 0.0
    %2106 = vmatprep.subr.mxu0 0.0
    %2107 = vmatpush1.msra.mxu0 0.0
    %2108 = vmatprep.subr.mxu0 0.0
    %2109 = vmatpush1.msra.mxu0 0.0
    %2110 = vmatprep.subr.mxu0 0.0
    %2111 = vmatpush1.msra.mxu0 0.0
    %2112 = vmatprep.subr.mxu0 0.0
    %2113 = vmatpush1.msra.mxu0 0.0
    %2114 = vmatprep.subr.mxu0 0.0
    %2115 = vmatpush1.msra.mxu0 0.0
    %2116 = vmatprep.subr.mxu0 0.0
    %2117 = vmatpush1.msra.mxu0 0.0
    %2118 = vmatprep.subr.mxu0 0.0
    %2119 = vmatpush1.msra.mxu0 0.0
    %2120 = vmatprep.subr.mxu0 0.0
    %2121 = vmatpush1.msra.mxu0 0.0
    %2122 = vmatprep.subr.mxu0 0.0
    %2123 = vmatpush1.msra.mxu0 0.0
    %2124 = vmatprep.subr.mxu0 0.0
    %2125 = vmatpush1.msra.mxu0 0.0
    %2126 = vmatprep.subr.mxu0 0.0
    %2127 = vmatpush1.msra.mxu0 0.0
    %2128 = vmatprep.subr.mxu0 0.0
    %2129 = vmatpush1.msra.mxu0 0.0
    %2130 = vmatprep.subr.mxu0 0.0
    %2131 = vmatpush1.msra.mxu0 0.0
    %2132 = vmatprep.subr.mxu0 0.0
    %2133 = vmatpush1.msra.mxu0 0.0
    %2134 = vmatprep.subr.mxu0 0.0
    %2135 = vmatpush1.msra.mxu0 0.0
    %2136 = vmatprep.subr.mxu0 0.0
    %2137 = vmatpush1.msra.mxu0 0.0
    %2138 = vmatprep.subr.mxu0 0.0
    %2139 = vmatpush1.msra.mxu0 0.0
    %2140 = vmatprep.mubr.f32.mxu0 0.0
    %2141 = vmatmul.mubr.f32.gmra.mrb[0].mxu0 %v2065
    %v2142 = vpop.f32.mrb[0].mxu0
    %v2143 = vadd.f32 0.0, %v2142
    %v2144 = vpop.f32.mrb[0].mxu0
    %2145 = vmatprep.mubr.f32.mxu0 0.0
    %2146 = vmatmul.mubr.f32.gmra.mrb[0].mxu0 %v2068
    %v2147 = vpop.f32.mrb[0].mxu0
    %v2148 = vadd.f32 0.0, %v2147
    %v2149 = vpop.f32.mrb[0].mxu0
    %2150 = vmatprep.mubr.f32.mxu0 0.0
    %2151 = vmatmul.mubr.f32.gmra.mrb[0].mxu0 %v2071
    %v2152 = vpop.f32.mrb[0].mxu0
    %v2153 = vadd.f32 0.0, %v2152
    %v2154 = vpop.f32.mrb[0].mxu0
    %2155 = vmatprep.mubr.f32.mxu0 0.0
    %2156 = vmatmul.mubr.f32.gmra.mrb[0].mxu0 %v2074
    %v2157 = vpop.f32.mrb[0].mxu0
    %v2158 = vadd.f32 0.0, %v2157
    %v2159 = vpop.f32.mrb[0].mxu0
    %2160 = vdwg.mxu0
    %2161 = vmatprep.subr.mxu0 0.0
    %2162 = vmatpush1.msra.mxu0 %v1942
    %2163 = vmatprep.subr.mxu0 0.0
    %2164 = vmatpush1.msra.mxu0 %v1943
    %2165 = vmatprep.subr.mxu0 0.0
    %2166 = vmatpush1.msra.mxu0 %v1944
    %2167 = vmatprep.subr.mxu0 0.0
    %2168 = vmatpush1.msra.mxu0 %v1945
    %2169 = vmatprep.subr.mxu0 0.0
    %2170 = vmatpush1.msra.mxu0 %v1946
    %2171 = vmatprep.subr.mxu0 0.0
    %2172 = vmatpush1.msra.mxu0 %v1947
    %2173 = vmatprep.subr.mxu0 0.0
    %2174 = vmatpush1.msra.mxu0 %v1948
    %2175 = vmatprep.subr.mxu0 0.0
    %2176 = vmatpush1.msra.mxu0 %v1949
    %2177 = vmatprep.subr.mxu0 0.0
    %2178 = vmatpush1.msra.mxu0 %v1950
    %2179 = vmatprep.subr.mxu0 0.0
    %2180 = vmatpush1.msra.mxu0 %v1951
    %2181 = vmatprep.subr.mxu0 0.0
    %2182 = vmatpush1.msra.mxu0 %v1952
    %2183 = vmatprep.subr.mxu0 0.0
    %2184 = vmatpush1.msra.mxu0 %v1953
    %2185 = vmatprep.subr.mxu0 0.0
    %2186 = vmatpush1.msra.mxu0 %v1954
    %2187 = vmatprep.subr.mxu0 0.0
    %2188 = vmatpush1.msra.mxu0 %v1955
    %2189 = vmatprep.subr.mxu0 0.0
    %2190 = vmatpush1.msra.mxu0 %v1956
    %2191 = vmatprep.subr.mxu0 0.0
    %2192 = vmatpush1.msra.mxu0 %v1957
    %2193 = vmatprep.subr.mxu0 0.0
    %2194 = vmatpush1.msra.mxu0 0.0
    %2195 = vmatprep.subr.mxu0 0.0
    %2196 = vmatpush1.msra.mxu0 0.0
    %2197 = vmatprep.subr.mxu0 0.0
    %2198 = vmatpush1.msra.mxu0 0.0
    %2199 = vmatprep.subr.mxu0 0.0
    %2200 = vmatpush1.msra.mxu0 0.0
    %2201 = vmatprep.subr.mxu0 0.0
    %2202 = vmatpush1.msra.mxu0 0.0
    %2203 = vmatprep.subr.mxu0 0.0
    %2204 = vmatpush1.msra.mxu0 0.0
    %2205 = vmatprep.subr.mxu0 0.0
    %2206 = vmatpush1.msra.mxu0 0.0
    %2207 = vmatprep.subr.mxu0 0.0
    %2208 = vmatpush1.msra.mxu0 0.0
    %2209 = vmatprep.subr.mxu0 0.0
    %2210 = vmatpush1.msra.mxu0 0.0
    %2211 = vmatprep.subr.mxu0 0.0
    %2212 = vmatpush1.msra.mxu0 0.0
    %2213 = vmatprep.subr.mxu0 0.0
    %2214 = vmatpush1.msra.mxu0 0.0
    %2215 = vmatprep.subr.mxu0 0.0
    %2216 = vmatpush1.msra.mxu0 0.0
    %2217 = vmatprep.subr.mxu0 0.0
    %2218 = vmatpush1.msra.mxu0 0.0
    %2219 = vmatprep.subr.mxu0 0.0
    %2220 = vmatpush1.msra.mxu0 0.0
    %2221 = vmatprep.subr.mxu0 0.0
    %2222 = vmatpush1.msra.mxu0 0.0
    %2223 = vmatprep.subr.mxu0 0.0
    %2224 = vmatpush1.msra.mxu0 0.0
    %2225 = vmatprep.mubr.f32.mxu0 0.0
    %2226 = vmatmul.mubr.f32.gmra.mrb[0].mxu0 %v1837
    %v2227 = vpop.f32.mrb[0].mxu0
    %v2228 = vadd.f32 %v2143, %v2227
    %v2229 = vpop.f32.mrb[0].mxu0
    %2230 = vmatprep.mubr.f32.mxu0 0.0
    %2231 = vmatmul.mubr.f32.gmra.mrb[0].mxu0 %v1838
    %v2232 = vpop.f32.mrb[0].mxu0
    %v2233 = vadd.f32 %v2148, %v2232
    %v2234 = vpop.f32.mrb[0].mxu0
    %2235 = vmatprep.mubr.f32.mxu0 0.0
    %2236 = vmatmul.mubr.f32.gmra.mrb[0].mxu0 %v1839
    %v2237 = vpop.f32.mrb[0].mxu0
    %v2238 = vadd.f32 %v2153, %v2237
    %v2239 = vpop.f32.mrb[0].mxu0
    %2240 = vmatprep.mubr.f32.mxu0 0.0
    %2241 = vmatmul.mubr.f32.gmra.mrb[0].mxu0 %v1840
    %v2242 = vpop.f32.mrb[0].mxu0
    %v2243 = vadd.f32 %v2158, %v2242
    %v2244 = vpop.f32.mrb[0].mxu0
    %2245 = vdwg.mxu0
    %v2246 = vld [vmem:[#allocation2 + $0x700] sm:$0xff]
    %v2247 = vld [vmem:[#allocation2 + $0x708] sm:$0xff]
    %v2248 = vld [vmem:[#allocation2 + $0x710] sm:$0xff]
    %v2249 = vld [vmem:[#allocation2 + $0x718] sm:$0xff]
    %v2251 = vsel %vm2063, %v2246, 0
    %v2254 = vsel %vm2063, %v2247, 0
    %v2257 = vsel %vm2063, %v2248, 0
    %v2260 = vsel %vm2063, %v2249, 0
    %2262 = vmatprep.subr.mxu0 0.0
    %2263 = vmatpush1.msra.mxu0 %v2041
    %2264 = vmatprep.subr.mxu0 0.0
    %2265 = vmatpush1.msra.mxu0 %v2046
    %2266 = vmatprep.subr.mxu0 0.0
    %2267 = vmatpush1.msra.mxu0 %v2051
    %2268 = vmatprep.subr.mxu0 0.0
    %2269 = vmatpush1.msra.mxu0 %v2056
    %2270 = vmatprep.subr.mxu0 0.0
    %2271 = vmatpush1.msra.mxu0 0.0
    %2272 = vmatprep.subr.mxu0 0.0
    %2273 = vmatpush1.msra.mxu0 0.0
    %2274 = vmatprep.subr.mxu0 0.0
    %2275 = vmatpush1.msra.mxu0 0.0
    %2276 = vmatprep.subr.mxu0 0.0
    %2277 = vmatpush1.msra.mxu0 0.0
    %2278 = vmatprep.subr.mxu0 0.0
    %2279 = vmatpush1.msra.mxu0 0.0
    %2280 = vmatprep.subr.mxu0 0.0
    %2281 = vmatpush1.msra.mxu0 0.0
    %2282 = vmatprep.subr.mxu0 0.0
    %2283 = vmatpush1.msra.mxu0 0.0
    %2284 = vmatprep.subr.mxu0 0.0
    %2285 = vmatpush1.msra.mxu0 0.0
    %2286 = vmatprep.subr.mxu0 0.0
    %2287 = vmatpush1.msra.mxu0 0.0
    %2288 = vmatprep.subr.mxu0 0.0
    %2289 = vmatpush1.msra.mxu0 0.0
    %2290 = vmatprep.subr.mxu0 0.0
    %2291 = vmatpush1.msra.mxu0 0.0
    %2292 = vmatprep.subr.mxu0 0.0
    %2293 = vmatpush1.msra.mxu0 0.0
    %2294 = vmatprep.subr.mxu0 0.0
    %2295 = vmatpush1.msra.mxu0 0.0
    %2296 = vmatprep.subr.mxu0 0.0
    %2297 = vmatpush1.msra.mxu0 0.0
    %2298 = vmatprep.subr.mxu0 0.0
    %2299 = vmatpush1.msra.mxu0 0.0
    %2300 = vmatprep.subr.mxu0 0.0
    %2301 = vmatpush1.msra.mxu0 0.0
    %2302 = vmatprep.subr.mxu0 0.0
    %2303 = vmatpush1.msra.mxu0 0.0
    %2304 = vmatprep.subr.mxu0 0.0
    %2305 = vmatpush1.msra.mxu0 0.0
    %2306 = vmatprep.subr.mxu0 0.0
    %2307 = vmatpush1.msra.mxu0 0.0
    %2308 = vmatprep.subr.mxu0 0.0
    %2309 = vmatpush1.msra.mxu0 0.0
    %2310 = vmatprep.subr.mxu0 0.0
    %2311 = vmatpush1.msra.mxu0 0.0
    %2312 = vmatprep.subr.mxu0 0.0
    %2313 = vmatpush1.msra.mxu0 0.0
    %2314 = vmatprep.subr.mxu0 0.0
    %2315 = vmatpush1.msra.mxu0 0.0
    %2316 = vmatprep.subr.mxu0 0.0
    %2317 = vmatpush1.msra.mxu0 0.0
    %2318 = vmatprep.subr.mxu0 0.0
    %2319 = vmatpush1.msra.mxu0 0.0
    %2320 = vmatprep.subr.mxu0 0.0
    %2321 = vmatpush1.msra.mxu0 0.0
    %2322 = vmatprep.subr.mxu0 0.0
    %2323 = vmatpush1.msra.mxu0 0.0
    %2324 = vmatprep.subr.mxu0 0.0
    %2325 = vmatpush1.msra.mxu0 0.0
    %2326 = vmatprep.mubr.f32.mxu0 0.0
    %2327 = vmatmul.mubr.f32.gmra.mrb[0].mxu0 %v2251
    %v2328 = vpop.f32.mrb[0].mxu0
    %v2329 = vadd.f32 0.0, %v2328
    %v2330 = vpop.f32.mrb[0].mxu0
    %2331 = vmatprep.mubr.f32.mxu0 0.0
    %2332 = vmatmul.mubr.f32.gmra.mrb[0].mxu0 %v2254
    %v2333 = vpop.f32.mrb[0].mxu0
    %v2334 = vadd.f32 0.0, %v2333
    %v2335 = vpop.f32.mrb[0].mxu0
    %2336 = vmatprep.mubr.f32.mxu0 0.0
    %2337 = vmatmul.mubr.f32.gmra.mrb[0].mxu0 %v2257
    %v2338 = vpop.f32.mrb[0].mxu0
    %v2339 = vadd.f32 0.0, %v2338
    %v2340 = vpop.f32.mrb[0].mxu0
    %2341 = vmatprep.mubr.f32.mxu0 0.0
    %2342 = vmatmul.mubr.f32.gmra.mrb[0].mxu0 %v2260
    %v2343 = vpop.f32.mrb[0].mxu0
    %v2344 = vadd.f32 0.0, %v2343
    %v2345 = vpop.f32.mrb[0].mxu0
    %2346 = vdwg.mxu0
    %v2347 = vadd.f32 %v2228, %v2329
    %v2348 = vadd.f32 %v2233, %v2334
    %v2349 = vadd.f32 %v2238, %v2339
    %v2350 = vadd.f32 %v2243, %v2344
    %v2351 = vld [vmem:[#allocation2 + $0x6d8] sm:$0x1]
    %v2352 = vlaneseq
    %v2353 = vshrl.u32 %v2352, 7
    %v2354 = vsub.s32 0, %v2353
    %v2355 = vrot.slane %v2351, %v2354
    %v2356 = vadd.f32 %v2347, %v2355
    %v2357 = vadd.f32 %v2348, %v2355
    %v2358 = vadd.f32 %v2349, %v2355
    %v2359 = vadd.f32 %v2350, %v2355
    %v2360 = vmax.f32 %v2356, 0.0
    %v2361 = vmax.f32 %v2357, 0.0
    %v2362 = vmax.f32 %v2358, 0.0
    %v2363 = vmax.f32 %v2359, 0.0
    %v2364 = vld [vmem:[#allocation2 + $0x720] sm:$0xff]
    %v2365 = vld [vmem:[#allocation2 + $0x728] sm:$0xff]
    %v2366 = vld [vmem:[#allocation2 + $0x730] sm:$0xff]
    %v2367 = vld [vmem:[#allocation2 + $0x738] sm:$0xff]
    %v2368 = vld [vmem:[#allocation2 + $0x740] sm:$0xff]
    %v2369 = vld [vmem:[#allocation2 + $0x748] sm:$0xff]
    %v2370 = vld [vmem:[#allocation2 + $0x750] sm:$0xff]
    %v2371 = vld [vmem:[#allocation2 + $0x758] sm:$0xff]
    %v2372 = vld [vmem:[#allocation2 + $0x760] sm:$0xff]
    %v2373 = vld [vmem:[#allocation2 + $0x768] sm:$0xff]
    %v2374 = vld [vmem:[#allocation2 + $0x770] sm:$0xff]
    %v2375 = vld [vmem:[#allocation2 + $0x778] sm:$0xff]
    %v2376 = vld [vmem:[#allocation2 + $0x780] sm:$0xff]
    %v2377 = vld [vmem:[#allocation2 + $0x788] sm:$0xff]
    %v2378 = vld [vmem:[#allocation2 + $0x790] sm:$0xff]
    %v2379 = vld [vmem:[#allocation2 + $0x798] sm:$0xff]
    %2380 = vmatprep.subr.mxu0 0.0
    %2381 = vmatpush1.msra.mxu0 %v2364
    %2382 = vmatprep.subr.mxu0 0.0
    %2383 = vmatpush1.msra.mxu0 %v2365
    %2384 = vmatprep.subr.mxu0 0.0
    %2385 = vmatpush1.msra.mxu0 %v2366
    %2386 = vmatprep.subr.mxu0 0.0
    %2387 = vmatpush1.msra.mxu0 %v2367
    %2388 = vmatprep.subr.mxu0 0.0
    %2389 = vmatpush1.msra.mxu0 %v2368
    %2390 = vmatprep.subr.mxu0 0.0
    %2391 = vmatpush1.msra.mxu0 %v2369
    %2392 = vmatprep.subr.mxu0 0.0
    %2393 = vmatpush1.msra.mxu0 %v2370
    %2394 = vmatprep.subr.mxu0 0.0
    %2395 = vmatpush1.msra.mxu0 %v2371
    %2396 = vmatprep.subr.mxu0 0.0
    %2397 = vmatpush1.msra.mxu0 %v2372
    %2398 = vmatprep.subr.mxu0 0.0
    %2399 = vmatpush1.msra.mxu0 %v2373
    %2400 = vmatprep.subr.mxu0 0.0
    %2401 = vmatpush1.msra.mxu0 %v2374
    %2402 = vmatprep.subr.mxu0 0.0
    %2403 = vmatpush1.msra.mxu0 %v2375
    %2404 = vmatprep.subr.mxu0 0.0
    %2405 = vmatpush1.msra.mxu0 %v2376
    %2406 = vmatprep.subr.mxu0 0.0
    %2407 = vmatpush1.msra.mxu0 %v2377
    %2408 = vmatprep.subr.mxu0 0.0
    %2409 = vmatpush1.msra.mxu0 %v2378
    %2410 = vmatprep.subr.mxu0 0.0
    %2411 = vmatpush1.msra.mxu0 %v2379
    %2412 = vmatprep.subr.mxu0 0.0
    %2413 = vmatpush1.msra.mxu0 0.0
    %2414 = vmatprep.subr.mxu0 0.0
    %2415 = vmatpush1.msra.mxu0 0.0
    %2416 = vmatprep.subr.mxu0 0.0
    %2417 = vmatpush1.msra.mxu0 0.0
    %2418 = vmatprep.subr.mxu0 0.0
    %2419 = vmatpush1.msra.mxu0 0.0
    %2420 = vmatprep.subr.mxu0 0.0
    %2421 = vmatpush1.msra.mxu0 0.0
    %2422 = vmatprep.subr.mxu0 0.0
    %2423 = vmatpush1.msra.mxu0 0.0
    %2424 = vmatprep.subr.mxu0 0.0
    %2425 = vmatpush1.msra.mxu0 0.0
    %2426 = vmatprep.subr.mxu0 0.0
    %2427 = vmatpush1.msra.mxu0 0.0
    %2428 = vmatprep.subr.mxu0 0.0
    %2429 = vmatpush1.msra.mxu0 0.0
    %2430 = vmatprep.subr.mxu0 0.0
    %2431 = vmatpush1.msra.mxu0 0.0
    %2432 = vmatprep.subr.mxu0 0.0
    %2433 = vmatpush1.msra.mxu0 0.0
    %2434 = vmatprep.subr.mxu0 0.0
    %2435 = vmatpush1.msra.mxu0 0.0
    %2436 = vmatprep.subr.mxu0 0.0
    %2437 = vmatpush1.msra.mxu0 0.0
    %2438 = vmatprep.subr.mxu0 0.0
    %2439 = vmatpush1.msra.mxu0 0.0
    %2440 = vmatprep.subr.mxu0 0.0
    %2441 = vmatpush1.msra.mxu0 0.0
    %2442 = vmatprep.subr.mxu0 0.0
    %2443 = vmatpush1.msra.mxu0 0.0
    %2444 = vmatprep.mubr.f32.mxu0 0.0
    %2445 = vmatmul.mubr.f32.gmra.mrb[0].mxu0 %v2360
    %v2446 = vpop.f32.mrb[0].mxu0
    %v2447 = vadd.f32 0.0, %v2446
    %v2448 = vpop.f32.mrb[0].mxu0
    %2449 = vmatprep.mubr.f32.mxu0 0.0
    %2450 = vmatmul.mubr.f32.gmra.mrb[0].mxu0 %v2361
    %v2451 = vpop.f32.mrb[0].mxu0
    %v2452 = vadd.f32 0.0, %v2451
    %v2453 = vpop.f32.mrb[0].mxu0
    %2454 = vmatprep.mubr.f32.mxu0 0.0
    %2455 = vmatmul.mubr.f32.gmra.mrb[0].mxu0 %v2362
    %v2456 = vpop.f32.mrb[0].mxu0
    %v2457 = vadd.f32 0.0, %v2456
    %v2458 = vpop.f32.mrb[0].mxu0
    %2459 = vmatprep.mubr.f32.mxu0 0.0
    %2460 = vmatmul.mubr.f32.gmra.mrb[0].mxu0 %v2363
    %v2461 = vpop.f32.mrb[0].mxu0
    %v2462 = vadd.f32 0.0, %v2461
    %v2463 = vpop.f32.mrb[0].mxu0
    %2464 = vdwg.mxu0
    %v2465 = vld [vmem:[#allocation2 + $0x7a0] sm:$0xff]
    %v2466 = vld [vmem:[#allocation2 + $0x7a8] sm:$0xff]
    %v2467 = vld [vmem:[#allocation2 + $0x7b0] sm:$0xff]
    %v2468 = vld [vmem:[#allocation2 + $0x7b8] sm:$0xff]
    %v2469 = vld [vmem:[#allocation2 + $0x7c0] sm:$0xff]
    %v2470 = vld [vmem:[#allocation2 + $0x7c8] sm:$0xff]
    %v2471 = vld [vmem:[#allocation2 + $0x7d0] sm:$0xff]
    %v2472 = vld [vmem:[#allocation2 + $0x7d8] sm:$0xff]
    %v2473 = vld [vmem:[#allocation2 + $0x7e0] sm:$0xff]
    %v2474 = vld [vmem:[#allocation2 + $0x7e8] sm:$0xff]
    %v2475 = vld [vmem:[#allocation2 + $0x7f0] sm:$0xff]
    %v2476 = vld [vmem:[#allocation2 + $0x7f8] sm:$0xff]
    %v2477 = vld [vmem:[#allocation2 + $0x800] sm:$0xff]
    %v2478 = vld [vmem:[#allocation2 + $0x808] sm:$0xff]
    %v2479 = vld [vmem:[#allocation2 + $0x810] sm:$0xff]
    %v2480 = vld [vmem:[#allocation2 + $0x818] sm:$0xff]
    %v2481 = vld [vmem:[#allocation2 + $0x820] sm:$0xff]
    %v2482 = vld [vmem:[#allocation2 + $0x828] sm:$0xff]
    %v2483 = vld [vmem:[#allocation2 + $0x830] sm:$0xff]
    %v2484 = vld [vmem:[#allocation2 + $0x838] sm:$0xff]
    %v2485 = vld [vmem:[#allocation2 + $0x840] sm:$0xff]
    %v2486 = vld [vmem:[#allocation2 + $0x848] sm:$0xff]
    %v2487 = vld [vmem:[#allocation2 + $0x850] sm:$0xff]
    %v2488 = vld [vmem:[#allocation2 + $0x858] sm:$0xff]
    %v2489 = vld [vmem:[#allocation2 + $0x860] sm:$0xff]
    %v2490 = vld [vmem:[#allocation2 + $0x868] sm:$0xff]
    %v2491 = vld [vmem:[#allocation2 + $0x870] sm:$0xff]
    %v2492 = vld [vmem:[#allocation2 + $0x878] sm:$0xff]
    %v2493 = vld [vmem:[#allocation2 + $0x880] sm:$0xff]
    %v2494 = vld [vmem:[#allocation2 + $0x888] sm:$0xff]
    %v2495 = vld [vmem:[#allocation2 + $0x890] sm:$0xff]
    %v2496 = vld [vmem:[#allocation2 + $0x898] sm:$0xff]
    %2497 = vmatprep.subr.mxu0 0.0
    %2498 = vmatpush1.msra.mxu0 %v2481
    %2499 = vmatprep.subr.mxu0 0.0
    %2500 = vmatpush1.msra.mxu0 %v2482
    %2501 = vmatprep.subr.mxu0 0.0
    %2502 = vmatpush1.msra.mxu0 %v2483
    %2503 = vmatprep.subr.mxu0 0.0
    %2504 = vmatpush1.msra.mxu0 %v2484
    %2505 = vmatprep.subr.mxu0 0.0
    %2506 = vmatpush1.msra.mxu0 %v2485
    %2507 = vmatprep.subr.mxu0 0.0
    %2508 = vmatpush1.msra.mxu0 %v2486
    %2509 = vmatprep.subr.mxu0 0.0
    %2510 = vmatpush1.msra.mxu0 %v2487
    %2511 = vmatprep.subr.mxu0 0.0
    %2512 = vmatpush1.msra.mxu0 %v2488
    %2513 = vmatprep.subr.mxu0 0.0
    %2514 = vmatpush1.msra.mxu0 %v2489
    %2515 = vmatprep.subr.mxu0 0.0
    %2516 = vmatpush1.msra.mxu0 %v2490
    %2517 = vmatprep.subr.mxu0 0.0
    %2518 = vmatpush1.msra.mxu0 %v2491
    %2519 = vmatprep.subr.mxu0 0.0
    %2520 = vmatpush1.msra.mxu0 %v2492
    %2521 = vmatprep.subr.mxu0 0.0
    %2522 = vmatpush1.msra.mxu0 %v2493
    %2523 = vmatprep.subr.mxu0 0.0
    %2524 = vmatpush1.msra.mxu0 %v2494
    %2525 = vmatprep.subr.mxu0 0.0
    %2526 = vmatpush1.msra.mxu0 %v2495
    %2527 = vmatprep.subr.mxu0 0.0
    %2528 = vmatpush1.msra.mxu0 %v2496
    %2529 = vmatprep.subr.mxu0 0.0
    %2530 = vmatpush1.msra.mxu0 0.0
    %2531 = vmatprep.subr.mxu0 0.0
    %2532 = vmatpush1.msra.mxu0 0.0
    %2533 = vmatprep.subr.mxu0 0.0
    %2534 = vmatpush1.msra.mxu0 0.0
    %2535 = vmatprep.subr.mxu0 0.0
    %2536 = vmatpush1.msra.mxu0 0.0
    %2537 = vmatprep.subr.mxu0 0.0
    %2538 = vmatpush1.msra.mxu0 0.0
    %2539 = vmatprep.subr.mxu0 0.0
    %2540 = vmatpush1.msra.mxu0 0.0
    %2541 = vmatprep.subr.mxu0 0.0
    %2542 = vmatpush1.msra.mxu0 0.0
    %2543 = vmatprep.subr.mxu0 0.0
    %2544 = vmatpush1.msra.mxu0 0.0
    %2545 = vmatprep.subr.mxu0 0.0
    %2546 = vmatpush1.msra.mxu0 0.0
    %2547 = vmatprep.subr.mxu0 0.0
    %2548 = vmatpush1.msra.mxu0 0.0
    %2549 = vmatprep.subr.mxu0 0.0
    %2550 = vmatpush1.msra.mxu0 0.0
    %2551 = vmatprep.subr.mxu0 0.0
    %2552 = vmatpush1.msra.mxu0 0.0
    %2553 = vmatprep.subr.mxu0 0.0
    %2554 = vmatpush1.msra.mxu0 0.0
    %2555 = vmatprep.subr.mxu0 0.0
    %2556 = vmatpush1.msra.mxu0 0.0
    %2557 = vmatprep.subr.mxu0 0.0
    %2558 = vmatpush1.msra.mxu0 0.0
    %2559 = vmatprep.subr.mxu0 0.0
    %2560 = vmatpush1.msra.mxu0 0.0
    %2561 = vmatprep.mubr.f32.mxu0 0.0
    %2562 = vmatmul.mubr.f32.gmra.mrb[0].mxu0 %v2360
    %v2563 = vpop.f32.mrb[0].mxu0
    %v2564 = vadd.f32 0.0, %v2563
    %v2565 = vpop.f32.mrb[0].mxu0
    %2566 = vmatprep.mubr.f32.mxu0 0.0
    %2567 = vmatmul.mubr.f32.gmra.mrb[0].mxu0 %v2361
    %v2568 = vpop.f32.mrb[0].mxu0
    %v2569 = vadd.f32 0.0, %v2568
    %v2570 = vpop.f32.mrb[0].mxu0
    %2571 = vmatprep.mubr.f32.mxu0 0.0
    %2572 = vmatmul.mubr.f32.gmra.mrb[0].mxu0 %v2362
    %v2573 = vpop.f32.mrb[0].mxu0
    %v2574 = vadd.f32 0.0, %v2573
    %v2575 = vpop.f32.mrb[0].mxu0
    %2576 = vmatprep.mubr.f32.mxu0 0.0
    %2577 = vmatmul.mubr.f32.gmra.mrb[0].mxu0 %v2363
    %v2578 = vpop.f32.mrb[0].mxu0
    %v2579 = vadd.f32 0.0, %v2578
    %v2580 = vpop.f32.mrb[0].mxu0
    %2581 = vdwg.mxu0
    %2582 = vmatprep.subr.mxu0 0.0
    %2583 = vmatpush1.msra.mxu0 %v2447
    %2584 = vmatprep.subr.mxu0 0.0
    %2585 = vmatpush1.msra.mxu0 %v2452
    %2586 = vmatprep.subr.mxu0 0.0
    %2587 = vmatpush1.msra.mxu0 %v2457
    %2588 = vmatprep.subr.mxu0 0.0
    %2589 = vmatpush1.msra.mxu0 %v2462
    %2590 = vmatprep.subr.mxu0 0.0
    %2591 = vmatpush1.msra.mxu0 0.0
    %2592 = vmatprep.subr.mxu0 0.0
    %2593 = vmatpush1.msra.mxu0 0.0
    %2594 = vmatprep.subr.mxu0 0.0
    %2595 = vmatpush1.msra.mxu0 0.0
    %2596 = vmatprep.subr.mxu0 0.0
    %2597 = vmatpush1.msra.mxu0 0.0
    %2598 = vmatprep.subr.mxu0 0.0
    %2599 = vmatpush1.msra.mxu0 0.0
    %2600 = vmatprep.subr.mxu0 0.0
    %2601 = vmatpush1.msra.mxu0 0.0
    %2602 = vmatprep.subr.mxu0 0.0
    %2603 = vmatpush1.msra.mxu0 0.0
    %2604 = vmatprep.subr.mxu0 0.0
    %2605 = vmatpush1.msra.mxu0 0.0
    %2606 = vmatprep.subr.mxu0 0.0
    %2607 = vmatpush1.msra.mxu0 0.0
    %2608 = vmatprep.subr.mxu0 0.0
    %2609 = vmatpush1.msra.mxu0 0.0
    %2610 = vmatprep.subr.mxu0 0.0
    %2611 = vmatpush1.msra.mxu0 0.0
    %2612 = vmatprep.subr.mxu0 0.0
    %2613 = vmatpush1.msra.mxu0 0.0
    %2614 = vmatprep.subr.mxu0 0.0
    %2615 = vmatpush1.msra.mxu0 0.0
    %2616 = vmatprep.subr.mxu0 0.0
    %2617 = vmatpush1.msra.mxu0 0.0
    %2618 = vmatprep.subr.mxu0 0.0
    %2619 = vmatpush1.msra.mxu0 0.0
    %2620 = vmatprep.subr.mxu0 0.0
    %2621 = vmatpush1.msra.mxu0 0.0
    %2622 = vmatprep.subr.mxu0 0.0
    %2623 = vmatpush1.msra.mxu0 0.0
    %2624 = vmatprep.subr.mxu0 0.0
    %2625 = vmatpush1.msra.mxu0 0.0
    %2626 = vmatprep.subr.mxu0 0.0
    %2627 = vmatpush1.msra.mxu0 0.0
    %2628 = vmatprep.subr.mxu0 0.0
    %2629 = vmatpush1.msra.mxu0 0.0
    %2630 = vmatprep.subr.mxu0 0.0
    %2631 = vmatpush1.msra.mxu0 0.0
    %2632 = vmatprep.subr.mxu0 0.0
    %2633 = vmatpush1.msra.mxu0 0.0
    %2634 = vmatprep.subr.mxu0 0.0
    %2635 = vmatpush1.msra.mxu0 0.0
    %2636 = vmatprep.subr.mxu0 0.0
    %2637 = vmatpush1.msra.mxu0 0.0
    %2638 = vmatprep.subr.mxu0 0.0
    %2639 = vmatpush1.msra.mxu0 0.0
    %2640 = vmatprep.subr.mxu0 0.0
    %2641 = vmatpush1.msra.mxu0 0.0
    %2642 = vmatprep.subr.mxu0 0.0
    %2643 = vmatpush1.msra.mxu0 0.0
    %2644 = vmatprep.subr.mxu0 0.0
    %2645 = vmatpush1.msra.mxu0 0.0
    %2646 = vmatprep.mubr.f32.mxu0 0.0
    %2647 = vmatmul.mubr.f32.gmra.mrb[0].mxu0 %v2065
    %v2648 = vpop.f32.mrb[0].mxu0
    %v2649 = vadd.f32 0.0, %v2648
    %v2650 = vpop.f32.mrb[0].mxu0
    %2651 = vmatprep.mubr.f32.mxu0 0.0
    %2652 = vmatmul.mubr.f32.gmra.mrb[0].mxu0 %v2068
    %v2653 = vpop.f32.mrb[0].mxu0
    %v2654 = vadd.f32 0.0, %v2653
    %v2655 = vpop.f32.mrb[0].mxu0
    %2656 = vmatprep.mubr.f32.mxu0 0.0
    %2657 = vmatmul.mubr.f32.gmra.mrb[0].mxu0 %v2071
    %v2658 = vpop.f32.mrb[0].mxu0
    %v2659 = vadd.f32 0.0, %v2658
    %v2660 = vpop.f32.mrb[0].mxu0
    %2661 = vmatprep.mubr.f32.mxu0 0.0
    %2662 = vmatmul.mubr.f32.gmra.mrb[0].mxu0 %v2074
    %v2663 = vpop.f32.mrb[0].mxu0
    %v2664 = vadd.f32 0.0, %v2663
    %v2665 = vpop.f32.mrb[0].mxu0
    %2666 = vdwg.mxu0
    %2667 = vmatprep.subr.mxu0 0.0
    %2668 = vmatpush1.msra.mxu0 %v2465
    %2669 = vmatprep.subr.mxu0 0.0
    %2670 = vmatpush1.msra.mxu0 %v2466
    %2671 = vmatprep.subr.mxu0 0.0
    %2672 = vmatpush1.msra.mxu0 %v2467
    %2673 = vmatprep.subr.mxu0 0.0
    %2674 = vmatpush1.msra.mxu0 %v2468
    %2675 = vmatprep.subr.mxu0 0.0
    %2676 = vmatpush1.msra.mxu0 %v2469
    %2677 = vmatprep.subr.mxu0 0.0
    %2678 = vmatpush1.msra.mxu0 %v2470
    %2679 = vmatprep.subr.mxu0 0.0
    %2680 = vmatpush1.msra.mxu0 %v2471
    %2681 = vmatprep.subr.mxu0 0.0
    %2682 = vmatpush1.msra.mxu0 %v2472
    %2683 = vmatprep.subr.mxu0 0.0
    %2684 = vmatpush1.msra.mxu0 %v2473
    %2685 = vmatprep.subr.mxu0 0.0
    %2686 = vmatpush1.msra.mxu0 %v2474
    %2687 = vmatprep.subr.mxu0 0.0
    %2688 = vmatpush1.msra.mxu0 %v2475
    %2689 = vmatprep.subr.mxu0 0.0
    %2690 = vmatpush1.msra.mxu0 %v2476
    %2691 = vmatprep.subr.mxu0 0.0
    %2692 = vmatpush1.msra.mxu0 %v2477
    %2693 = vmatprep.subr.mxu0 0.0
    %2694 = vmatpush1.msra.mxu0 %v2478
    %2695 = vmatprep.subr.mxu0 0.0
    %2696 = vmatpush1.msra.mxu0 %v2479
    %2697 = vmatprep.subr.mxu0 0.0
    %2698 = vmatpush1.msra.mxu0 %v2480
    %2699 = vmatprep.subr.mxu0 0.0
    %2700 = vmatpush1.msra.mxu0 0.0
    %2701 = vmatprep.subr.mxu0 0.0
    %2702 = vmatpush1.msra.mxu0 0.0
    %2703 = vmatprep.subr.mxu0 0.0
    %2704 = vmatpush1.msra.mxu0 0.0
    %2705 = vmatprep.subr.mxu0 0.0
    %2706 = vmatpush1.msra.mxu0 0.0
    %2707 = vmatprep.subr.mxu0 0.0
    %2708 = vmatpush1.msra.mxu0 0.0
    %2709 = vmatprep.subr.mxu0 0.0
    %2710 = vmatpush1.msra.mxu0 0.0
    %2711 = vmatprep.subr.mxu0 0.0
    %2712 = vmatpush1.msra.mxu0 0.0
    %2713 = vmatprep.subr.mxu0 0.0
    %2714 = vmatpush1.msra.mxu0 0.0
    %2715 = vmatprep.subr.mxu0 0.0
    %2716 = vmatpush1.msra.mxu0 0.0
    %2717 = vmatprep.subr.mxu0 0.0
    %2718 = vmatpush1.msra.mxu0 0.0
    %2719 = vmatprep.subr.mxu0 0.0
    %2720 = vmatpush1.msra.mxu0 0.0
    %2721 = vmatprep.subr.mxu0 0.0
    %2722 = vmatpush1.msra.mxu0 0.0
    %2723 = vmatprep.subr.mxu0 0.0
    %2724 = vmatpush1.msra.mxu0 0.0
    %2725 = vmatprep.subr.mxu0 0.0
    %2726 = vmatpush1.msra.mxu0 0.0
    %2727 = vmatprep.subr.mxu0 0.0
    %2728 = vmatpush1.msra.mxu0 0.0
    %2729 = vmatprep.subr.mxu0 0.0
    %2730 = vmatpush1.msra.mxu0 0.0
    %2731 = vmatprep.mubr.f32.mxu0 0.0
    %2732 = vmatmul.mubr.f32.gmra.mrb[0].mxu0 %v2360
    %v2733 = vpop.f32.mrb[0].mxu0
    %v2734 = vadd.f32 %v2649, %v2733
    %v2735 = vpop.f32.mrb[0].mxu0
    %2736 = vmatprep.mubr.f32.mxu0 0.0
    %2737 = vmatmul.mubr.f32.gmra.mrb[0].mxu0 %v2361
    %v2738 = vpop.f32.mrb[0].mxu0
    %v2739 = vadd.f32 %v2654, %v2738
    %v2740 = vpop.f32.mrb[0].mxu0
    %2741 = vmatprep.mubr.f32.mxu0 0.0
    %2742 = vmatmul.mubr.f32.gmra.mrb[0].mxu0 %v2362
    %v2743 = vpop.f32.mrb[0].mxu0
    %v2744 = vadd.f32 %v2659, %v2743
    %v2745 = vpop.f32.mrb[0].mxu0
    %2746 = vmatprep.mubr.f32.mxu0 0.0
    %2747 = vmatmul.mubr.f32.gmra.mrb[0].mxu0 %v2363
    %v2748 = vpop.f32.mrb[0].mxu0
    %v2749 = vadd.f32 %v2664, %v2748
    %v2750 = vpop.f32.mrb[0].mxu0
    %2751 = vdwg.mxu0
    %2752 = vmatprep.subr.mxu0 0.0
    %2753 = vmatpush1.msra.mxu0 %v2564
    %2754 = vmatprep.subr.mxu0 0.0
    %2755 = vmatpush1.msra.mxu0 %v2569
    %2756 = vmatprep.subr.mxu0 0.0
    %2757 = vmatpush1.msra.mxu0 %v2574
    %2758 = vmatprep.subr.mxu0 0.0
    %2759 = vmatpush1.msra.mxu0 %v2579
    %2760 = vmatprep.subr.mxu0 0.0
    %2761 = vmatpush1.msra.mxu0 0.0
    %2762 = vmatprep.subr.mxu0 0.0
    %2763 = vmatpush1.msra.mxu0 0.0
    %2764 = vmatprep.subr.mxu0 0.0
    %2765 = vmatpush1.msra.mxu0 0.0
    %2766 = vmatprep.subr.mxu0 0.0
    %2767 = vmatpush1.msra.mxu0 0.0
    %2768 = vmatprep.subr.mxu0 0.0
    %2769 = vmatpush1.msra.mxu0 0.0
    %2770 = vmatprep.subr.mxu0 0.0
    %2771 = vmatpush1.msra.mxu0 0.0
    %2772 = vmatprep.subr.mxu0 0.0
    %2773 = vmatpush1.msra.mxu0 0.0
    %2774 = vmatprep.subr.mxu0 0.0
    %2775 = vmatpush1.msra.mxu0 0.0
    %2776 = vmatprep.subr.mxu0 0.0
    %2777 = vmatpush1.msra.mxu0 0.0
    %2778 = vmatprep.subr.mxu0 0.0
    %2779 = vmatpush1.msra.mxu0 0.0
    %2780 = vmatprep.subr.mxu0 0.0
    %2781 = vmatpush1.msra.mxu0 0.0
    %2782 = vmatprep.subr.mxu0 0.0
    %2783 = vmatpush1.msra.mxu0 0.0
    %2784 = vmatprep.subr.mxu0 0.0
    %2785 = vmatpush1.msra.mxu0 0.0
    %2786 = vmatprep.subr.mxu0 0.0
    %2787 = vmatpush1.msra.mxu0 0.0
    %2788 = vmatprep.subr.mxu0 0.0
    %2789 = vmatpush1.msra.mxu0 0.0
    %2790 = vmatprep.subr.mxu0 0.0
    %2791 = vmatpush1.msra.mxu0 0.0
    %2792 = vmatprep.subr.mxu0 0.0
    %2793 = vmatpush1.msra.mxu0 0.0
    %2794 = vmatprep.subr.mxu0 0.0
    %2795 = vmatpush1.msra.mxu0 0.0
    %2796 = vmatprep.subr.mxu0 0.0
    %2797 = vmatpush1.msra.mxu0 0.0
    %2798 = vmatprep.subr.mxu0 0.0
    %2799 = vmatpush1.msra.mxu0 0.0
    %2800 = vmatprep.subr.mxu0 0.0
    %2801 = vmatpush1.msra.mxu0 0.0
    %2802 = vmatprep.subr.mxu0 0.0
    %2803 = vmatpush1.msra.mxu0 0.0
    %2804 = vmatprep.subr.mxu0 0.0
    %2805 = vmatpush1.msra.mxu0 0.0
    %2806 = vmatprep.subr.mxu0 0.0
    %2807 = vmatpush1.msra.mxu0 0.0
    %2808 = vmatprep.subr.mxu0 0.0
    %2809 = vmatpush1.msra.mxu0 0.0
    %2810 = vmatprep.subr.mxu0 0.0
    %2811 = vmatpush1.msra.mxu0 0.0
    %2812 = vmatprep.subr.mxu0 0.0
    %2813 = vmatpush1.msra.mxu0 0.0
    %2814 = vmatprep.subr.mxu0 0.0
    %2815 = vmatpush1.msra.mxu0 0.0
    %2816 = vmatprep.mubr.f32.mxu0 0.0
    %2817 = vmatmul.mubr.f32.gmra.mrb[0].mxu0 %v2251
    %v2818 = vpop.f32.mrb[0].mxu0
    %v2819 = vadd.f32 0.0, %v2818
    %v2820 = vpop.f32.mrb[0].mxu0
    %2821 = vmatprep.mubr.f32.mxu0 0.0
    %2822 = vmatmul.mubr.f32.gmra.mrb[0].mxu0 %v2254
    %v2823 = vpop.f32.mrb[0].mxu0
    %v2824 = vadd.f32 0.0, %v2823
    %v2825 = vpop.f32.mrb[0].mxu0
    %2826 = vmatprep.mubr.f32.mxu0 0.0
    %2827 = vmatmul.mubr.f32.gmra.mrb[0].mxu0 %v2257
    %v2828 = vpop.f32.mrb[0].mxu0
    %v2829 = vadd.f32 0.0, %v2828
    %v2830 = vpop.f32.mrb[0].mxu0
    %2831 = vmatprep.mubr.f32.mxu0 0.0
    %2832 = vmatmul.mubr.f32.gmra.mrb[0].mxu0 %v2260
    %v2833 = vpop.f32.mrb[0].mxu0
    %v2834 = vadd.f32 0.0, %v2833
    %v2835 = vpop.f32.mrb[0].mxu0
    %2836 = vdwg.mxu0
    %v2837 = vadd.f32 %v2734, %v2819
    %v2838 = vadd.f32 %v2739, %v2824
    %v2839 = vadd.f32 %v2744, %v2829
    %v2840 = vadd.f32 %v2749, %v2834
    %v2841 = vld [vmem:[#allocation2 + $0x8a0] sm:$0x1]
    %v2842 = vlaneseq
    %v2843 = vshrl.u32 %v2842, 7
    %v2844 = vsub.s32 0, %v2843
    %v2845 = vrot.slane %v2841, %v2844
    %v2846 = vadd.f32 %v2837, %v2845
    %v2847 = vadd.f32 %v2838, %v2845
    %v2848 = vadd.f32 %v2839, %v2845
    %v2849 = vadd.f32 %v2840, %v2845
    %v2850 = vmax.f32 %v2846, 0.0
    %v2851 = vmax.f32 %v2847, 0.0
    %v2852 = vmax.f32 %v2848, 0.0
    %v2853 = vmax.f32 %v2849, 0.0
    %v2854 = vld [vmem:[#allocation2 + $0x8a8] sm:$0xff]
    %v2855 = vld [vmem:[#allocation2 + $0x8b0] sm:$0xff]
    %v2857 = vsel %vm2063, %v2854, 0
    %v2860 = vsel %vm2063, %v2855, 0
    %2862 = vmatprep.subr.mxu0 0.0
    %2863 = vmatpush1.msra.mxu0 %v2850
    %2864 = vmatprep.subr.mxu0 0.0
    %2865 = vmatpush1.msra.mxu0 %v2851
    %2866 = vmatprep.subr.mxu0 0.0
    %2867 = vmatpush1.msra.mxu0 %v2852
    %2868 = vmatprep.subr.mxu0 0.0
    %2869 = vmatpush1.msra.mxu0 %v2853
    %2870 = vmatprep.subr.mxu0 0.0
    %2871 = vmatpush1.msra.mxu0 0.0
    %2872 = vmatprep.subr.mxu0 0.0
    %2873 = vmatpush1.msra.mxu0 0.0
    %2874 = vmatprep.subr.mxu0 0.0
    %2875 = vmatpush1.msra.mxu0 0.0
    %2876 = vmatprep.subr.mxu0 0.0
    %2877 = vmatpush1.msra.mxu0 0.0
    %2878 = vmatprep.subr.mxu0 0.0
    %2879 = vmatpush1.msra.mxu0 0.0
    %2880 = vmatprep.subr.mxu0 0.0
    %2881 = vmatpush1.msra.mxu0 0.0
    %2882 = vmatprep.subr.mxu0 0.0
    %2883 = vmatpush1.msra.mxu0 0.0
    %2884 = vmatprep.subr.mxu0 0.0
    %2885 = vmatpush1.msra.mxu0 0.0
    %2886 = vmatprep.subr.mxu0 0.0
    %2887 = vmatpush1.msra.mxu0 0.0
    %2888 = vmatprep.subr.mxu0 0.0
    %2889 = vmatpush1.msra.mxu0 0.0
    %2890 = vmatprep.subr.mxu0 0.0
    %2891 = vmatpush1.msra.mxu0 0.0
    %2892 = vmatprep.subr.mxu0 0.0
    %2893 = vmatpush1.msra.mxu0 0.0
    %2894 = vmatprep.subr.mxu0 0.0
    %2895 = vmatpush1.msra.mxu0 0.0
    %2896 = vmatprep.subr.mxu0 0.0
    %2897 = vmatpush1.msra.mxu0 0.0
    %2898 = vmatprep.subr.mxu0 0.0
    %2899 = vmatpush1.msra.mxu0 0.0
    %2900 = vmatprep.subr.mxu0 0.0
    %2901 = vmatpush1.msra.mxu0 0.0
    %2902 = vmatprep.subr.mxu0 0.0
    %2903 = vmatpush1.msra.mxu0 0.0
    %2904 = vmatprep.subr.mxu0 0.0
    %2905 = vmatpush1.msra.mxu0 0.0
    %2906 = vmatprep.subr.mxu0 0.0
    %2907 = vmatpush1.msra.mxu0 0.0
    %2908 = vmatprep.subr.mxu0 0.0
    %2909 = vmatpush1.msra.mxu0 0.0
    %2910 = vmatprep.subr.mxu0 0.0
    %2911 = vmatpush1.msra.mxu0 0.0
    %2912 = vmatprep.subr.mxu0 0.0
    %2913 = vmatpush1.msra.mxu0 0.0
    %2914 = vmatprep.subr.mxu0 0.0
    %2915 = vmatpush1.msra.mxu0 0.0
    %2916 = vmatprep.subr.mxu0 0.0
    %2917 = vmatpush1.msra.mxu0 0.0
    %2918 = vmatprep.subr.mxu0 0.0
    %2919 = vmatpush1.msra.mxu0 0.0
    %2920 = vmatprep.subr.mxu0 0.0
    %2921 = vmatpush1.msra.mxu0 0.0
    %2922 = vmatprep.subr.mxu0 0.0
    %2923 = vmatpush1.msra.mxu0 0.0
    %2924 = vmatprep.subr.mxu0 0.0
    %2925 = vmatpush1.msra.mxu0 0.0
    %2926 = vmatprep.mubr.f32.mxu0 0.0
    %2927 = vmatmul.mubr.f32.gmra.mrb[0].mxu0 %v2857
    %v2928 = vpop.f32.mrb[0].mxu0
    %v2929 = vadd.f32 0.0, %v2928
    %v2930 = vpop.f32.mrb[0].mxu0
    %2931 = vmatprep.mubr.f32.mxu0 0.0
    %2932 = vmatmul.mubr.f32.gmra.mrb[0].mxu0 %v2860
    %v2933 = vpop.f32.mrb[0].mxu0
    %v2934 = vadd.f32 0.0, %v2933
    %v2935 = vpop.f32.mrb[0].mxu0
    %2936 = vdwg.mxu0
    %v2937 = vld [vmem:[#allocation2 + $0x8b8] sm:$0xff]
    %v2938 = vld [vmem:[#allocation2 + $0x8c0] sm:$0xff]
    %v2940 = vsel %vm2063, %v2937, 0
    %v2943 = vsel %vm2063, %v2938, 0
    %2945 = vmatprep.subr.mxu0 0.0
    %2946 = vmatpush1.msra.mxu0 %v2850
    %2947 = vmatprep.subr.mxu0 0.0
    %2948 = vmatpush1.msra.mxu0 %v2851
    %2949 = vmatprep.subr.mxu0 0.0
    %2950 = vmatpush1.msra.mxu0 %v2852
    %2951 = vmatprep.subr.mxu0 0.0
    %2952 = vmatpush1.msra.mxu0 %v2853
    %2953 = vmatprep.subr.mxu0 0.0
    %2954 = vmatpush1.msra.mxu0 0.0
    %2955 = vmatprep.subr.mxu0 0.0
    %2956 = vmatpush1.msra.mxu0 0.0
    %2957 = vmatprep.subr.mxu0 0.0
    %2958 = vmatpush1.msra.mxu0 0.0
    %2959 = vmatprep.subr.mxu0 0.0
    %2960 = vmatpush1.msra.mxu0 0.0
    %2961 = vmatprep.subr.mxu0 0.0
    %2962 = vmatpush1.msra.mxu0 0.0
    %2963 = vmatprep.subr.mxu0 0.0
    %2964 = vmatpush1.msra.mxu0 0.0
    %2965 = vmatprep.subr.mxu0 0.0
    %2966 = vmatpush1.msra.mxu0 0.0
    %2967 = vmatprep.subr.mxu0 0.0
    %2968 = vmatpush1.msra.mxu0 0.0
    %2969 = vmatprep.subr.mxu0 0.0
    %2970 = vmatpush1.msra.mxu0 0.0
    %2971 = vmatprep.subr.mxu0 0.0
    %2972 = vmatpush1.msra.mxu0 0.0
    %2973 = vmatprep.subr.mxu0 0.0
    %2974 = vmatpush1.msra.mxu0 0.0
    %2975 = vmatprep.subr.mxu0 0.0
    %2976 = vmatpush1.msra.mxu0 0.0
    %2977 = vmatprep.subr.mxu0 0.0
    %2978 = vmatpush1.msra.mxu0 0.0
    %2979 = vmatprep.subr.mxu0 0.0
    %2980 = vmatpush1.msra.mxu0 0.0
    %2981 = vmatprep.subr.mxu0 0.0
    %2982 = vmatpush1.msra.mxu0 0.0
    %2983 = vmatprep.subr.mxu0 0.0
    %2984 = vmatpush1.msra.mxu0 0.0
    %2985 = vmatprep.subr.mxu0 0.0
    %2986 = vmatpush1.msra.mxu0 0.0
    %2987 = vmatprep.subr.mxu0 0.0
    %2988 = vmatpush1.msra.mxu0 0.0
    %2989 = vmatprep.subr.mxu0 0.0
    %2990 = vmatpush1.msra.mxu0 0.0
    %2991 = vmatprep.subr.mxu0 0.0
    %2992 = vmatpush1.msra.mxu0 0.0
    %2993 = vmatprep.subr.mxu0 0.0
    %2994 = vmatpush1.msra.mxu0 0.0
    %2995 = vmatprep.subr.mxu0 0.0
    %2996 = vmatpush1.msra.mxu0 0.0
    %2997 = vmatprep.subr.mxu0 0.0
    %2998 = vmatpush1.msra.mxu0 0.0
    %2999 = vmatprep.subr.mxu0 0.0
    %3000 = vmatpush1.msra.mxu0 0.0
    %3001 = vmatprep.subr.mxu0 0.0
    %3002 = vmatpush1.msra.mxu0 0.0
    %3003 = vmatprep.subr.mxu0 0.0
    %3004 = vmatpush1.msra.mxu0 0.0
    %3005 = vmatprep.subr.mxu0 0.0
    %3006 = vmatpush1.msra.mxu0 0.0
    %3007 = vmatprep.subr.mxu0 0.0
    %3008 = vmatpush1.msra.mxu0 0.0
    %3009 = vmatprep.mubr.f32.mxu0 0.0
    %3010 = vmatmul.mubr.f32.gmra.mrb[0].mxu0 %v2940
    %v3011 = vpop.f32.mrb[0].mxu0
    %v3012 = vadd.f32 0.0, %v3011
    %v3013 = vpop.f32.mrb[0].mxu0
    %3014 = vmatprep.mubr.f32.mxu0 0.0
    %3015 = vmatmul.mubr.f32.gmra.mrb[0].mxu0 %v2943
    %v3016 = vpop.f32.mrb[0].mxu0
    %v3017 = vadd.f32 0.0, %v3016
    %v3018 = vpop.f32.mrb[0].mxu0
    %3019 = vdwg.mxu0
    %v3020 = vmax.f32 %v2929, %v3012
    %v3021 = vmax.f32 %v2934, %v3017
    %v3022 = vld [vmem:[#allocation2 + $0x8c8] sm:$0xff]
    %v3023 = vld [vmem:[#allocation2 + $0x8d0] sm:$0xff]
    %v3024 = vld [vmem:[#allocation2 + $0x8d8] sm:$0xff]
    %v3025 = vld [vmem:[#allocation2 + $0x8e0] sm:$0xff]
    %v3026 = vld [vmem:[#allocation2 + $0x8e8] sm:$0xff]
    %v3027 = vld [vmem:[#allocation2 + $0x8f0] sm:$0xff]
    %v3028 = vld [vmem:[#allocation2 + $0x8f8] sm:$0xff]
    %v3029 = vld [vmem:[#allocation2 + $0x900] sm:$0xff]
    %v3030 = vld [vmem:[#allocation2 + $0x908] sm:$0xff]
    %v3031 = vld [vmem:[#allocation2 + $0x910] sm:$0xff]
    %v3032 = vld [vmem:[#allocation2 + $0x918] sm:$0xff]
    %v3033 = vld [vmem:[#allocation2 + $0x920] sm:$0xff]
    %v3034 = vld [vmem:[#allocation2 + $0x928] sm:$0xff]
    %v3035 = vld [vmem:[#allocation2 + $0x930] sm:$0xff]
    %v3036 = vld [vmem:[#allocation2 + $0x938] sm:$0xff]
    %v3037 = vld [vmem:[#allocation2 + $0x940] sm:$0xff]
    %3038 = vmatprep.subr.mxu0 0.0
    %3039 = vmatpush1.msra.mxu0 %v3022
    %3040 = vmatprep.subr.mxu0 0.0
    %3041 = vmatpush1.msra.mxu0 %v3023
    %3042 = vmatprep.subr.mxu0 0.0
    %3043 = vmatpush1.msra.mxu0 %v3024
    %3044 = vmatprep.subr.mxu0 0.0
    %3045 = vmatpush1.msra.mxu0 %v3025
    %3046 = vmatprep.subr.mxu0 0.0
    %3047 = vmatpush1.msra.mxu0 %v3026
    %3048 = vmatprep.subr.mxu0 0.0
    %3049 = vmatpush1.msra.mxu0 %v3027
    %3050 = vmatprep.subr.mxu0 0.0
    %3051 = vmatpush1.msra.mxu0 %v3028
    %3052 = vmatprep.subr.mxu0 0.0
    %3053 = vmatpush1.msra.mxu0 %v3029
    %3054 = vmatprep.subr.mxu0 0.0
    %3055 = vmatpush1.msra.mxu0 %v3030
    %3056 = vmatprep.subr.mxu0 0.0
    %3057 = vmatpush1.msra.mxu0 %v3031
    %3058 = vmatprep.subr.mxu0 0.0
    %3059 = vmatpush1.msra.mxu0 %v3032
    %3060 = vmatprep.subr.mxu0 0.0
    %3061 = vmatpush1.msra.mxu0 %v3033
    %3062 = vmatprep.subr.mxu0 0.0
    %3063 = vmatpush1.msra.mxu0 %v3034
    %3064 = vmatprep.subr.mxu0 0.0
    %3065 = vmatpush1.msra.mxu0 %v3035
    %3066 = vmatprep.subr.mxu0 0.0
    %3067 = vmatpush1.msra.mxu0 %v3036
    %3068 = vmatprep.subr.mxu0 0.0
    %3069 = vmatpush1.msra.mxu0 %v3037
    %3070 = vmatprep.subr.mxu0 0.0
    %3071 = vmatpush1.msra.mxu0 0.0
    %3072 = vmatprep.subr.mxu0 0.0
    %3073 = vmatpush1.msra.mxu0 0.0
    %3074 = vmatprep.subr.mxu0 0.0
    %3075 = vmatpush1.msra.mxu0 0.0
    %3076 = vmatprep.subr.mxu0 0.0
    %3077 = vmatpush1.msra.mxu0 0.0
    %3078 = vmatprep.subr.mxu0 0.0
    %3079 = vmatpush1.msra.mxu0 0.0
    %3080 = vmatprep.subr.mxu0 0.0
    %3081 = vmatpush1.msra.mxu0 0.0
    %3082 = vmatprep.subr.mxu0 0.0
    %3083 = vmatpush1.msra.mxu0 0.0
    %3084 = vmatprep.subr.mxu0 0.0
    %3085 = vmatpush1.msra.mxu0 0.0
    %3086 = vmatprep.subr.mxu0 0.0
    %3087 = vmatpush1.msra.mxu0 0.0
    %3088 = vmatprep.subr.mxu0 0.0
    %3089 = vmatpush1.msra.mxu0 0.0
    %3090 = vmatprep.subr.mxu0 0.0
    %3091 = vmatpush1.msra.mxu0 0.0
    %3092 = vmatprep.subr.mxu0 0.0
    %3093 = vmatpush1.msra.mxu0 0.0
    %3094 = vmatprep.subr.mxu0 0.0
    %3095 = vmatpush1.msra.mxu0 0.0
    %3096 = vmatprep.subr.mxu0 0.0
    %3097 = vmatpush1.msra.mxu0 0.0
    %3098 = vmatprep.subr.mxu0 0.0
    %3099 = vmatpush1.msra.mxu0 0.0
    %3100 = vmatprep.subr.mxu0 0.0
    %3101 = vmatpush1.msra.mxu0 0.0
    %3102 = vmatprep.mubr.f32.mxu0 0.0
    %3103 = vmatmul.mubr.f32.gmra.mrb[0].mxu0 %v3020
    %v3104 = vpop.f32.mrb[0].mxu0
    %v3105 = vadd.f32 0.0, %v3104
    %v3106 = vpop.f32.mrb[0].mxu0
    %3107 = vmatprep.mubr.f32.mxu0 0.0
    %3108 = vmatmul.mubr.f32.gmra.mrb[0].mxu0 %v3021
    %v3109 = vpop.f32.mrb[0].mxu0
    %v3110 = vadd.f32 0.0, %v3109
    %v3111 = vpop.f32.mrb[0].mxu0
    %3112 = vdwg.mxu0
    %v3113 = vld [vmem:[#allocation2 + $0x948] sm:$0xff]
    %v3114 = vld [vmem:[#allocation2 + $0x950] sm:$0xff]
    %v3115 = vld [vmem:[#allocation2 + $0x958] sm:$0xff]
    %v3116 = vld [vmem:[#allocation2 + $0x960] sm:$0xff]
    %v3117 = vld [vmem:[#allocation2 + $0x968] sm:$0xff]
    %v3118 = vld [vmem:[#allocation2 + $0x970] sm:$0xff]
    %v3119 = vld [vmem:[#allocation2 + $0x978] sm:$0xff]
    %v3120 = vld [vmem:[#allocation2 + $0x980] sm:$0xff]
    %v3121 = vld [vmem:[#allocation2 + $0x988] sm:$0xff]
    %v3122 = vld [vmem:[#allocation2 + $0x990] sm:$0xff]
    %v3123 = vld [vmem:[#allocation2 + $0x998] sm:$0xff]
    %v3124 = vld [vmem:[#allocation2 + $0x9a0] sm:$0xff]
    %v3125 = vld [vmem:[#allocation2 + $0x9a8] sm:$0xff]
    %v3126 = vld [vmem:[#allocation2 + $0x9b0] sm:$0xff]
    %v3127 = vld [vmem:[#allocation2 + $0x9b8] sm:$0xff]
    %v3128 = vld [vmem:[#allocation2 + $0x9c0] sm:$0xff]
    %3129 = vmatprep.subr.mxu0 0.0
    %3130 = vmatpush1.msra.mxu0 %v3113
    %3131 = vmatprep.subr.mxu0 0.0
    %3132 = vmatpush1.msra.mxu0 %v3114
    %3133 = vmatprep.subr.mxu0 0.0
    %3134 = vmatpush1.msra.mxu0 %v3115
    %3135 = vmatprep.subr.mxu0 0.0
    %3136 = vmatpush1.msra.mxu0 %v3116
    %3137 = vmatprep.subr.mxu0 0.0
    %3138 = vmatpush1.msra.mxu0 %v3117
    %3139 = vmatprep.subr.mxu0 0.0
    %3140 = vmatpush1.msra.mxu0 %v3118
    %3141 = vmatprep.subr.mxu0 0.0
    %3142 = vmatpush1.msra.mxu0 %v3119
    %3143 = vmatprep.subr.mxu0 0.0
    %3144 = vmatpush1.msra.mxu0 %v3120
    %3145 = vmatprep.subr.mxu0 0.0
    %3146 = vmatpush1.msra.mxu0 %v3121
    %3147 = vmatprep.subr.mxu0 0.0
    %3148 = vmatpush1.msra.mxu0 %v3122
    %3149 = vmatprep.subr.mxu0 0.0
    %3150 = vmatpush1.msra.mxu0 %v3123
    %3151 = vmatprep.subr.mxu0 0.0
    %3152 = vmatpush1.msra.mxu0 %v3124
    %3153 = vmatprep.subr.mxu0 0.0
    %3154 = vmatpush1.msra.mxu0 %v3125
    %3155 = vmatprep.subr.mxu0 0.0
    %3156 = vmatpush1.msra.mxu0 %v3126
    %3157 = vmatprep.subr.mxu0 0.0
    %3158 = vmatpush1.msra.mxu0 %v3127
    %3159 = vmatprep.subr.mxu0 0.0
    %3160 = vmatpush1.msra.mxu0 %v3128
    %3161 = vmatprep.subr.mxu0 0.0
    %3162 = vmatpush1.msra.mxu0 0.0
    %3163 = vmatprep.subr.mxu0 0.0
    %3164 = vmatpush1.msra.mxu0 0.0
    %3165 = vmatprep.subr.mxu0 0.0
    %3166 = vmatpush1.msra.mxu0 0.0
    %3167 = vmatprep.subr.mxu0 0.0
    %3168 = vmatpush1.msra.mxu0 0.0
    %3169 = vmatprep.subr.mxu0 0.0
    %3170 = vmatpush1.msra.mxu0 0.0
    %3171 = vmatprep.subr.mxu0 0.0
    %3172 = vmatpush1.msra.mxu0 0.0
    %3173 = vmatprep.subr.mxu0 0.0
    %3174 = vmatpush1.msra.mxu0 0.0
    %3175 = vmatprep.subr.mxu0 0.0
    %3176 = vmatpush1.msra.mxu0 0.0
    %3177 = vmatprep.subr.mxu0 0.0
    %3178 = vmatpush1.msra.mxu0 0.0
    %3179 = vmatprep.subr.mxu0 0.0
    %3180 = vmatpush1.msra.mxu0 0.0
    %3181 = vmatprep.subr.mxu0 0.0
    %3182 = vmatpush1.msra.mxu0 0.0
    %3183 = vmatprep.subr.mxu0 0.0
    %3184 = vmatpush1.msra.mxu0 0.0
    %3185 = vmatprep.subr.mxu0 0.0
    %3186 = vmatpush1.msra.mxu0 0.0
    %3187 = vmatprep.subr.mxu0 0.0
    %3188 = vmatpush1.msra.mxu0 0.0
    %3189 = vmatprep.subr.mxu0 0.0
    %3190 = vmatpush1.msra.mxu0 0.0
    %3191 = vmatprep.subr.mxu0 0.0
    %3192 = vmatpush1.msra.mxu0 0.0
    %3193 = vmatprep.mubr.f32.mxu0 0.0
    %3194 = vmatmul.mubr.f32.gmra.mrb[0].mxu0 %v3020
    %v3195 = vpop.f32.mrb[0].mxu0
    %v3196 = vadd.f32 0.0, %v3195
    %v3197 = vpop.f32.mrb[0].mxu0
    %3198 = vmatprep.mubr.f32.mxu0 0.0
    %3199 = vmatmul.mubr.f32.gmra.mrb[0].mxu0 %v3021
    %v3200 = vpop.f32.mrb[0].mxu0
    %v3201 = vadd.f32 0.0, %v3200
    %v3202 = vpop.f32.mrb[0].mxu0
    %3203 = vdwg.mxu0
    %v3204 = vmax.f32 %v3105, %v3196
    %v3205 = vmax.f32 %v3110, %v3201
    %v3206 = vld [vmem:[#allocation2 + $0x9c8] sm:$0xff]
    %v3207 = vld [vmem:[#allocation2 + $0x9d0] sm:$0xff]
    %v3208 = vld [vmem:[#allocation2 + $0x9d8] sm:$0xff]
    %v3209 = vld [vmem:[#allocation2 + $0x9e0] sm:$0xff]
    %v3210 = vld [vmem:[#allocation2 + $0x9e8] sm:$0xff]
    %v3211 = vld [vmem:[#allocation2 + $0x9f0] sm:$0xff]
    %v3212 = vld [vmem:[#allocation2 + $0x9f8] sm:$0xff]
    %v3213 = vld [vmem:[#allocation2 + $0xa00] sm:$0xff]
    %v3214 = vld [vmem:[#allocation2 + $0xa08] sm:$0xff]
    %v3215 = vld [vmem:[#allocation2 + $0xa10] sm:$0xff]
    %v3216 = vld [vmem:[#allocation2 + $0xa18] sm:$0xff]
    %v3217 = vld [vmem:[#allocation2 + $0xa20] sm:$0xff]
    %v3218 = vld [vmem:[#allocation2 + $0xa28] sm:$0xff]
    %v3219 = vld [vmem:[#allocation2 + $0xa30] sm:$0xff]
    %v3220 = vld [vmem:[#allocation2 + $0xa38] sm:$0xff]
    %v3221 = vld [vmem:[#allocation2 + $0xa40] sm:$0xff]
    %3222 = vmatprep.subr.mxu0 0.0
    %3223 = vmatpush1.msra.mxu0 %v3206
    %3224 = vmatprep.subr.mxu0 0.0
    %3225 = vmatpush1.msra.mxu0 %v3207
    %3226 = vmatprep.subr.mxu0 0.0
    %3227 = vmatpush1.msra.mxu0 %v3208
    %3228 = vmatprep.subr.mxu0 0.0
    %3229 = vmatpush1.msra.mxu0 %v3209
    %3230 = vmatprep.subr.mxu0 0.0
    %3231 = vmatpush1.msra.mxu0 %v3210
    %3232 = vmatprep.subr.mxu0 0.0
    %3233 = vmatpush1.msra.mxu0 %v3211
    %3234 = vmatprep.subr.mxu0 0.0
    %3235 = vmatpush1.msra.mxu0 %v3212
    %3236 = vmatprep.subr.mxu0 0.0
    %3237 = vmatpush1.msra.mxu0 %v3213
    %3238 = vmatprep.subr.mxu0 0.0
    %3239 = vmatpush1.msra.mxu0 %v3214
    %3240 = vmatprep.subr.mxu0 0.0
    %3241 = vmatpush1.msra.mxu0 %v3215
    %3242 = vmatprep.subr.mxu0 0.0
    %3243 = vmatpush1.msra.mxu0 %v3216
    %3244 = vmatprep.subr.mxu0 0.0
    %3245 = vmatpush1.msra.mxu0 %v3217
    %3246 = vmatprep.subr.mxu0 0.0
    %3247 = vmatpush1.msra.mxu0 %v3218
    %3248 = vmatprep.subr.mxu0 0.0
    %3249 = vmatpush1.msra.mxu0 %v3219
    %3250 = vmatprep.subr.mxu0 0.0
    %3251 = vmatpush1.msra.mxu0 %v3220
    %3252 = vmatprep.subr.mxu0 0.0
    %3253 = vmatpush1.msra.mxu0 %v3221
    %3254 = vmatprep.subr.mxu0 0.0
    %3255 = vmatpush1.msra.mxu0 0.0
    %3256 = vmatprep.subr.mxu0 0.0
    %3257 = vmatpush1.msra.mxu0 0.0
    %3258 = vmatprep.subr.mxu0 0.0
    %3259 = vmatpush1.msra.mxu0 0.0
    %3260 = vmatprep.subr.mxu0 0.0
    %3261 = vmatpush1.msra.mxu0 0.0
    %3262 = vmatprep.subr.mxu0 0.0
    %3263 = vmatpush1.msra.mxu0 0.0
    %3264 = vmatprep.subr.mxu0 0.0
    %3265 = vmatpush1.msra.mxu0 0.0
    %3266 = vmatprep.subr.mxu0 0.0
    %3267 = vmatpush1.msra.mxu0 0.0
    %3268 = vmatprep.subr.mxu0 0.0
    %3269 = vmatpush1.msra.mxu0 0.0
    %3270 = vmatprep.subr.mxu0 0.0
    %3271 = vmatpush1.msra.mxu0 0.0
    %3272 = vmatprep.subr.mxu0 0.0
    %3273 = vmatpush1.msra.mxu0 0.0
    %3274 = vmatprep.subr.mxu0 0.0
    %3275 = vmatpush1.msra.mxu0 0.0
    %3276 = vmatprep.subr.mxu0 0.0
    %3277 = vmatpush1.msra.mxu0 0.0
    %3278 = vmatprep.subr.mxu0 0.0
    %3279 = vmatpush1.msra.mxu0 0.0
    %3280 = vmatprep.subr.mxu0 0.0
    %3281 = vmatpush1.msra.mxu0 0.0
    %3282 = vmatprep.subr.mxu0 0.0
    %3283 = vmatpush1.msra.mxu0 0.0
    %3284 = vmatprep.subr.mxu0 0.0
    %3285 = vmatpush1.msra.mxu0 0.0
    %3286 = vmatprep.mubr.f32.mxu0 0.0
    %3287 = vmatmul.mubr.f32.gmra.mrb[0].mxu0 %v3204
    %v3288 = vpop.f32.mrb[0].mxu0
    %v3289 = vadd.f32 0.0, %v3288
    %v3290 = vpop.f32.mrb[0].mxu0
    %3291 = vmatprep.mubr.f32.mxu0 0.0
    %3292 = vmatmul.mubr.f32.gmra.mrb[0].mxu0 %v3205
    %v3293 = vpop.f32.mrb[0].mxu0
    %v3294 = vadd.f32 0.0, %v3293
    %v3295 = vpop.f32.mrb[0].mxu0
    %3296 = vdwg.mxu0
    %v3297 = vld [vmem:[#allocation2 + $0xa48] sm:$0xff]
    %v3298 = vld [vmem:[#allocation2 + $0xa50] sm:$0xff]
    %v3299 = vld [vmem:[#allocation2 + $0xa58] sm:$0xff]
    %v3300 = vld [vmem:[#allocation2 + $0xa60] sm:$0xff]
    %v3301 = vld [vmem:[#allocation2 + $0xa68] sm:$0xff]
    %v3302 = vld [vmem:[#allocation2 + $0xa70] sm:$0xff]
    %v3303 = vld [vmem:[#allocation2 + $0xa78] sm:$0xff]
    %v3304 = vld [vmem:[#allocation2 + $0xa80] sm:$0xff]
    %v3305 = vld [vmem:[#allocation2 + $0xa88] sm:$0xff]
    %v3306 = vld [vmem:[#allocation2 + $0xa90] sm:$0xff]
    %v3307 = vld [vmem:[#allocation2 + $0xa98] sm:$0xff]
    %v3308 = vld [vmem:[#allocation2 + $0xaa0] sm:$0xff]
    %v3309 = vld [vmem:[#allocation2 + $0xaa8] sm:$0xff]
    %v3310 = vld [vmem:[#allocation2 + $0xab0] sm:$0xff]
    %v3311 = vld [vmem:[#allocation2 + $0xab8] sm:$0xff]
    %v3312 = vld [vmem:[#allocation2 + $0xac0] sm:$0xff]
    %v3313 = vld [vmem:[#allocation2 + $0xac8] sm:$0xff]
    %v3314 = vld [vmem:[#allocation2 + $0xad0] sm:$0xff]
    %v3315 = vld [vmem:[#allocation2 + $0xad8] sm:$0xff]
    %v3316 = vld [vmem:[#allocation2 + $0xae0] sm:$0xff]
    %v3317 = vld [vmem:[#allocation2 + $0xae8] sm:$0xff]
    %v3318 = vld [vmem:[#allocation2 + $0xaf0] sm:$0xff]
    %v3319 = vld [vmem:[#allocation2 + $0xaf8] sm:$0xff]
    %v3320 = vld [vmem:[#allocation2 + $0xb00] sm:$0xff]
    %v3321 = vld [vmem:[#allocation2 + $0xb08] sm:$0xff]
    %v3322 = vld [vmem:[#allocation2 + $0xb10] sm:$0xff]
    %v3323 = vld [vmem:[#allocation2 + $0xb18] sm:$0xff]
    %v3324 = vld [vmem:[#allocation2 + $0xb20] sm:$0xff]
    %v3325 = vld [vmem:[#allocation2 + $0xb28] sm:$0xff]
    %v3326 = vld [vmem:[#allocation2 + $0xb30] sm:$0xff]
    %v3327 = vld [vmem:[#allocation2 + $0xb38] sm:$0xff]
    %v3328 = vld [vmem:[#allocation2 + $0xb40] sm:$0xff]
    %3329 = vmatprep.subr.mxu0 0.0
    %3330 = vmatpush1.msra.mxu0 %v3313
    %3331 = vmatprep.subr.mxu0 0.0
    %3332 = vmatpush1.msra.mxu0 %v3314
    %3333 = vmatprep.subr.mxu0 0.0
    %3334 = vmatpush1.msra.mxu0 %v3315
    %3335 = vmatprep.subr.mxu0 0.0
    %3336 = vmatpush1.msra.mxu0 %v3316
    %3337 = vmatprep.subr.mxu0 0.0
    %3338 = vmatpush1.msra.mxu0 %v3317
    %3339 = vmatprep.subr.mxu0 0.0
    %3340 = vmatpush1.msra.mxu0 %v3318
    %3341 = vmatprep.subr.mxu0 0.0
    %3342 = vmatpush1.msra.mxu0 %v3319
    %3343 = vmatprep.subr.mxu0 0.0
    %3344 = vmatpush1.msra.mxu0 %v3320
    %3345 = vmatprep.subr.mxu0 0.0
    %3346 = vmatpush1.msra.mxu0 %v3321
    %3347 = vmatprep.subr.mxu0 0.0
    %3348 = vmatpush1.msra.mxu0 %v3322
    %3349 = vmatprep.subr.mxu0 0.0
    %3350 = vmatpush1.msra.mxu0 %v3323
    %3351 = vmatprep.subr.mxu0 0.0
    %3352 = vmatpush1.msra.mxu0 %v3324
    %3353 = vmatprep.subr.mxu0 0.0
    %3354 = vmatpush1.msra.mxu0 %v3325
    %3355 = vmatprep.subr.mxu0 0.0
    %3356 = vmatpush1.msra.mxu0 %v3326
    %3357 = vmatprep.subr.mxu0 0.0
    %3358 = vmatpush1.msra.mxu0 %v3327
    %3359 = vmatprep.subr.mxu0 0.0
    %3360 = vmatpush1.msra.mxu0 %v3328
    %3361 = vmatprep.subr.mxu0 0.0
    %3362 = vmatpush1.msra.mxu0 0.0
    %3363 = vmatprep.subr.mxu0 0.0
    %3364 = vmatpush1.msra.mxu0 0.0
    %3365 = vmatprep.subr.mxu0 0.0
    %3366 = vmatpush1.msra.mxu0 0.0
    %3367 = vmatprep.subr.mxu0 0.0
    %3368 = vmatpush1.msra.mxu0 0.0
    %3369 = vmatprep.subr.mxu0 0.0
    %3370 = vmatpush1.msra.mxu0 0.0
    %3371 = vmatprep.subr.mxu0 0.0
    %3372 = vmatpush1.msra.mxu0 0.0
    %3373 = vmatprep.subr.mxu0 0.0
    %3374 = vmatpush1.msra.mxu0 0.0
    %3375 = vmatprep.subr.mxu0 0.0
    %3376 = vmatpush1.msra.mxu0 0.0
    %3377 = vmatprep.subr.mxu0 0.0
    %3378 = vmatpush1.msra.mxu0 0.0
    %3379 = vmatprep.subr.mxu0 0.0
    %3380 = vmatpush1.msra.mxu0 0.0
    %3381 = vmatprep.subr.mxu0 0.0
    %3382 = vmatpush1.msra.mxu0 0.0
    %3383 = vmatprep.subr.mxu0 0.0
    %3384 = vmatpush1.msra.mxu0 0.0
    %3385 = vmatprep.subr.mxu0 0.0
    %3386 = vmatpush1.msra.mxu0 0.0
    %3387 = vmatprep.subr.mxu0 0.0
    %3388 = vmatpush1.msra.mxu0 0.0
    %3389 = vmatprep.subr.mxu0 0.0
    %3390 = vmatpush1.msra.mxu0 0.0
    %3391 = vmatprep.subr.mxu0 0.0
    %3392 = vmatpush1.msra.mxu0 0.0
    %3393 = vmatprep.mubr.f32.mxu0 0.0
    %3394 = vmatmul.mubr.f32.gmra.mrb[0].mxu0 %v3204
    %v3395 = vpop.f32.mrb[0].mxu0
    %v3396 = vadd.f32 0.0, %v3395
    %v3397 = vpop.f32.mrb[0].mxu0
    %3398 = vmatprep.mubr.f32.mxu0 0.0
    %3399 = vmatmul.mubr.f32.gmra.mrb[0].mxu0 %v3205
    %v3400 = vpop.f32.mrb[0].mxu0
    %v3401 = vadd.f32 0.0, %v3400
    %v3402 = vpop.f32.mrb[0].mxu0
    %3403 = vdwg.mxu0
    %v3404 = vld [vmem:[#allocation2 + $0xb50] sm:$0xff]
    %v3405 = vld [vmem:[#allocation2 + $0xb58] sm:$0xff]
    %vm3406 = vcmask 130048
    %v3408 = vsel %vm3406, %v3404, 0
    %v3411 = vsel %vm3406, %v3405, 0
    %3413 = vmatprep.subr.mxu0 0.0
    %3414 = vmatpush1.msra.mxu0 %v3289
    %3415 = vmatprep.subr.mxu0 0.0
    %3416 = vmatpush1.msra.mxu0 %v3294
    %3417 = vmatprep.subr.mxu0 0.0
    %3418 = vmatpush1.msra.mxu0 0.0
    %3419 = vmatprep.subr.mxu0 0.0
    %3420 = vmatpush1.msra.mxu0 0.0
    %3421 = vmatprep.subr.mxu0 0.0
    %3422 = vmatpush1.msra.mxu0 0.0
    %3423 = vmatprep.subr.mxu0 0.0
    %3424 = vmatpush1.msra.mxu0 0.0
    %3425 = vmatprep.subr.mxu0 0.0
    %3426 = vmatpush1.msra.mxu0 0.0
    %3427 = vmatprep.subr.mxu0 0.0
    %3428 = vmatpush1.msra.mxu0 0.0
    %3429 = vmatprep.subr.mxu0 0.0
    %3430 = vmatpush1.msra.mxu0 0.0
    %3431 = vmatprep.subr.mxu0 0.0
    %3432 = vmatpush1.msra.mxu0 0.0
    %3433 = vmatprep.subr.mxu0 0.0
    %3434 = vmatpush1.msra.mxu0 0.0
    %3435 = vmatprep.subr.mxu0 0.0
    %3436 = vmatpush1.msra.mxu0 0.0
    %3437 = vmatprep.subr.mxu0 0.0
    %3438 = vmatpush1.msra.mxu0 0.0
    %3439 = vmatprep.subr.mxu0 0.0
    %3440 = vmatpush1.msra.mxu0 0.0
    %3441 = vmatprep.subr.mxu0 0.0
    %3442 = vmatpush1.msra.mxu0 0.0
    %3443 = vmatprep.subr.mxu0 0.0
    %3444 = vmatpush1.msra.mxu0 0.0
    %3445 = vmatprep.subr.mxu0 0.0
    %3446 = vmatpush1.msra.mxu0 0.0
    %3447 = vmatprep.subr.mxu0 0.0
    %3448 = vmatpush1.msra.mxu0 0.0
    %3449 = vmatprep.subr.mxu0 0.0
    %3450 = vmatpush1.msra.mxu0 0.0
    %3451 = vmatprep.subr.mxu0 0.0
    %3452 = vmatpush1.msra.mxu0 0.0
    %3453 = vmatprep.subr.mxu0 0.0
    %3454 = vmatpush1.msra.mxu0 0.0
    %3455 = vmatprep.subr.mxu0 0.0
    %3456 = vmatpush1.msra.mxu0 0.0
    %3457 = vmatprep.subr.mxu0 0.0
    %3458 = vmatpush1.msra.mxu0 0.0
    %3459 = vmatprep.subr.mxu0 0.0
    %3460 = vmatpush1.msra.mxu0 0.0
    %3461 = vmatprep.subr.mxu0 0.0
    %3462 = vmatpush1.msra.mxu0 0.0
    %3463 = vmatprep.subr.mxu0 0.0
    %3464 = vmatpush1.msra.mxu0 0.0
    %3465 = vmatprep.subr.mxu0 0.0
    %3466 = vmatpush1.msra.mxu0 0.0
    %3467 = vmatprep.subr.mxu0 0.0
    %3468 = vmatpush1.msra.mxu0 0.0
    %3469 = vmatprep.subr.mxu0 0.0
    %3470 = vmatpush1.msra.mxu0 0.0
    %3471 = vmatprep.subr.mxu0 0.0
    %3472 = vmatpush1.msra.mxu0 0.0
    %3473 = vmatprep.subr.mxu0 0.0
    %3474 = vmatpush1.msra.mxu0 0.0
    %3475 = vmatprep.subr.mxu0 0.0
    %3476 = vmatpush1.msra.mxu0 0.0
    %3477 = vmatprep.mubr.f32.mxu0 0.0
    %3478 = vmatmul.mubr.f32.gmra.mrb[0].mxu0 %v3408
    %v3479 = vpop.f32.mrb[0].mxu0
    %v3480 = vadd.f32 0.0, %v3479
    %v3481 = vpop.f32.mrb[0].mxu0
    %3482 = vmatprep.mubr.f32.mxu0 0.0
    %3483 = vmatmul.mubr.f32.gmra.mrb[0].mxu0 %v3411
    %v3484 = vpop.f32.mrb[0].mxu0
    %v3485 = vadd.f32 0.0, %v3484
    %v3486 = vpop.f32.mrb[0].mxu0
    %3487 = vdwg.mxu0
    %3488 = vmatprep.subr.mxu0 0.0
    %3489 = vmatpush1.msra.mxu0 %v3297
    %3490 = vmatprep.subr.mxu0 0.0
    %3491 = vmatpush1.msra.mxu0 %v3298
    %3492 = vmatprep.subr.mxu0 0.0
    %3493 = vmatpush1.msra.mxu0 %v3299
    %3494 = vmatprep.subr.mxu0 0.0
    %3495 = vmatpush1.msra.mxu0 %v3300
    %3496 = vmatprep.subr.mxu0 0.0
    %3497 = vmatpush1.msra.mxu0 %v3301
    %3498 = vmatprep.subr.mxu0 0.0
    %3499 = vmatpush1.msra.mxu0 %v3302
    %3500 = vmatprep.subr.mxu0 0.0
    %3501 = vmatpush1.msra.mxu0 %v3303
    %3502 = vmatprep.subr.mxu0 0.0
    %3503 = vmatpush1.msra.mxu0 %v3304
    %3504 = vmatprep.subr.mxu0 0.0
    %3505 = vmatpush1.msra.mxu0 %v3305
    %3506 = vmatprep.subr.mxu0 0.0
    %3507 = vmatpush1.msra.mxu0 %v3306
    %3508 = vmatprep.subr.mxu0 0.0
    %3509 = vmatpush1.msra.mxu0 %v3307
    %3510 = vmatprep.subr.mxu0 0.0
    %3511 = vmatpush1.msra.mxu0 %v3308
    %3512 = vmatprep.subr.mxu0 0.0
    %3513 = vmatpush1.msra.mxu0 %v3309
    %3514 = vmatprep.subr.mxu0 0.0
    %3515 = vmatpush1.msra.mxu0 %v3310
    %3516 = vmatprep.subr.mxu0 0.0
    %3517 = vmatpush1.msra.mxu0 %v3311
    %3518 = vmatprep.subr.mxu0 0.0
    %3519 = vmatpush1.msra.mxu0 %v3312
    %3520 = vmatprep.subr.mxu0 0.0
    %3521 = vmatpush1.msra.mxu0 0.0
    %3522 = vmatprep.subr.mxu0 0.0
    %3523 = vmatpush1.msra.mxu0 0.0
    %3524 = vmatprep.subr.mxu0 0.0
    %3525 = vmatpush1.msra.mxu0 0.0
    %3526 = vmatprep.subr.mxu0 0.0
    %3527 = vmatpush1.msra.mxu0 0.0
    %3528 = vmatprep.subr.mxu0 0.0
    %3529 = vmatpush1.msra.mxu0 0.0
    %3530 = vmatprep.subr.mxu0 0.0
    %3531 = vmatpush1.msra.mxu0 0.0
    %3532 = vmatprep.subr.mxu0 0.0
    %3533 = vmatpush1.msra.mxu0 0.0
    %3534 = vmatprep.subr.mxu0 0.0
    %3535 = vmatpush1.msra.mxu0 0.0
    %3536 = vmatprep.subr.mxu0 0.0
    %3537 = vmatpush1.msra.mxu0 0.0
    %3538 = vmatprep.subr.mxu0 0.0
    %3539 = vmatpush1.msra.mxu0 0.0
    %3540 = vmatprep.subr.mxu0 0.0
    %3541 = vmatpush1.msra.mxu0 0.0
    %3542 = vmatprep.subr.mxu0 0.0
    %3543 = vmatpush1.msra.mxu0 0.0
    %3544 = vmatprep.subr.mxu0 0.0
    %3545 = vmatpush1.msra.mxu0 0.0
    %3546 = vmatprep.subr.mxu0 0.0
    %3547 = vmatpush1.msra.mxu0 0.0
    %3548 = vmatprep.subr.mxu0 0.0
    %3549 = vmatpush1.msra.mxu0 0.0
    %3550 = vmatprep.subr.mxu0 0.0
    %3551 = vmatpush1.msra.mxu0 0.0
    %3552 = vmatprep.mubr.f32.mxu0 0.0
    %3553 = vmatmul.mubr.f32.gmra.mrb[0].mxu0 %v3204
    %v3554 = vpop.f32.mrb[0].mxu0
    %v3555 = vadd.f32 %v3480, %v3554
    %v3556 = vpop.f32.mrb[0].mxu0
    %3557 = vmatprep.mubr.f32.mxu0 0.0
    %3558 = vmatmul.mubr.f32.gmra.mrb[0].mxu0 %v3205
    %v3559 = vpop.f32.mrb[0].mxu0
    %v3560 = vadd.f32 %v3485, %v3559
    %v3561 = vpop.f32.mrb[0].mxu0
    %3562 = vdwg.mxu0
    %v3563 = vld [vmem:[#allocation2 + $0xb60] sm:$0xff]
    %v3564 = vld [vmem:[#allocation2 + $0xb68] sm:$0xff]
    %v3566 = vsel %vm3406, %v3563, 0
    %v3569 = vsel %vm3406, %v3564, 0
    %3571 = vmatprep.subr.mxu0 0.0
    %3572 = vmatpush1.msra.mxu0 %v3396
    %3573 = vmatprep.subr.mxu0 0.0
    %3574 = vmatpush1.msra.mxu0 %v3401
    %3575 = vmatprep.subr.mxu0 0.0
    %3576 = vmatpush1.msra.mxu0 0.0
    %3577 = vmatprep.subr.mxu0 0.0
    %3578 = vmatpush1.msra.mxu0 0.0
    %3579 = vmatprep.subr.mxu0 0.0
    %3580 = vmatpush1.msra.mxu0 0.0
    %3581 = vmatprep.subr.mxu0 0.0
    %3582 = vmatpush1.msra.mxu0 0.0
    %3583 = vmatprep.subr.mxu0 0.0
    %3584 = vmatpush1.msra.mxu0 0.0
    %3585 = vmatprep.subr.mxu0 0.0
    %3586 = vmatpush1.msra.mxu0 0.0
    %3587 = vmatprep.subr.mxu0 0.0
    %3588 = vmatpush1.msra.mxu0 0.0
    %3589 = vmatprep.subr.mxu0 0.0
    %3590 = vmatpush1.msra.mxu0 0.0
    %3591 = vmatprep.subr.mxu0 0.0
    %3592 = vmatpush1.msra.mxu0 0.0
    %3593 = vmatprep.subr.mxu0 0.0
    %3594 = vmatpush1.msra.mxu0 0.0
    %3595 = vmatprep.subr.mxu0 0.0
    %3596 = vmatpush1.msra.mxu0 0.0
    %3597 = vmatprep.subr.mxu0 0.0
    %3598 = vmatpush1.msra.mxu0 0.0
    %3599 = vmatprep.subr.mxu0 0.0
    %3600 = vmatpush1.msra.mxu0 0.0
    %3601 = vmatprep.subr.mxu0 0.0
    %3602 = vmatpush1.msra.mxu0 0.0
    %3603 = vmatprep.subr.mxu0 0.0
    %3604 = vmatpush1.msra.mxu0 0.0
    %3605 = vmatprep.subr.mxu0 0.0
    %3606 = vmatpush1.msra.mxu0 0.0
    %3607 = vmatprep.subr.mxu0 0.0
    %3608 = vmatpush1.msra.mxu0 0.0
    %3609 = vmatprep.subr.mxu0 0.0
    %3610 = vmatpush1.msra.mxu0 0.0
    %3611 = vmatprep.subr.mxu0 0.0
    %3612 = vmatpush1.msra.mxu0 0.0
    %3613 = vmatprep.subr.mxu0 0.0
    %3614 = vmatpush1.msra.mxu0 0.0
    %3615 = vmatprep.subr.mxu0 0.0
    %3616 = vmatpush1.msra.mxu0 0.0
    %3617 = vmatprep.subr.mxu0 0.0
    %3618 = vmatpush1.msra.mxu0 0.0
    %3619 = vmatprep.subr.mxu0 0.0
    %3620 = vmatpush1.msra.mxu0 0.0
    %3621 = vmatprep.subr.mxu0 0.0
    %3622 = vmatpush1.msra.mxu0 0.0
    %3623 = vmatprep.subr.mxu0 0.0
    %3624 = vmatpush1.msra.mxu0 0.0
    %3625 = vmatprep.subr.mxu0 0.0
    %3626 = vmatpush1.msra.mxu0 0.0
    %3627 = vmatprep.subr.mxu0 0.0
    %3628 = vmatpush1.msra.mxu0 0.0
    %3629 = vmatprep.subr.mxu0 0.0
    %3630 = vmatpush1.msra.mxu0 0.0
    %3631 = vmatprep.subr.mxu0 0.0
    %3632 = vmatpush1.msra.mxu0 0.0
    %3633 = vmatprep.subr.mxu0 0.0
    %3634 = vmatpush1.msra.mxu0 0.0
    %3635 = vmatprep.mubr.f32.mxu0 0.0
    %3636 = vmatmul.mubr.f32.gmra.mrb[0].mxu0 %v3566
    %v3637 = vpop.f32.mrb[0].mxu0
    %v3638 = vadd.f32 0.0, %v3637
    %v3639 = vpop.f32.mrb[0].mxu0
    %3640 = vmatprep.mubr.f32.mxu0 0.0
    %3641 = vmatmul.mubr.f32.gmra.mrb[0].mxu0 %v3569
    %v3642 = vpop.f32.mrb[0].mxu0
    %v3643 = vadd.f32 0.0, %v3642
    %v3644 = vpop.f32.mrb[0].mxu0
    %3645 = vdwg.mxu0
    %v3646 = vadd.f32 %v3555, %v3638
    %v3647 = vadd.f32 %v3560, %v3643
    %v3648 = vld [vmem:[#allocation2 + $0xb48] sm:$0x1]
    %v3649 = vlaneseq
    %v3650 = vshrl.u32 %v3649, 7
    %v3651 = vsub.s32 0, %v3650
    %v3652 = vrot.slane %v3648, %v3651
    %v3653 = vadd.f32 %v3646, %v3652
    %v3654 = vadd.f32 %v3647, %v3652
    %v3655 = vmax.f32 %v3653, 0.0
    %v3656 = vmax.f32 %v3654, 0.0
    %v3657 = vld [vmem:[#allocation2 + $0xb70] sm:$0xff]
    %v3658 = vld [vmem:[#allocation2 + $0xb78] sm:$0xff]
    %v3659 = vld [vmem:[#allocation2 + $0xb80] sm:$0xff]
    %v3660 = vld [vmem:[#allocation2 + $0xb88] sm:$0xff]
    %v3661 = vld [vmem:[#allocation2 + $0xb90] sm:$0xff]
    %v3662 = vld [vmem:[#allocation2 + $0xb98] sm:$0xff]
    %v3663 = vld [vmem:[#allocation2 + $0xba0] sm:$0xff]
    %v3664 = vld [vmem:[#allocation2 + $0xba8] sm:$0xff]
    %v3665 = vld [vmem:[#allocation2 + $0xbb0] sm:$0xff]
    %v3666 = vld [vmem:[#allocation2 + $0xbb8] sm:$0xff]
    %v3667 = vld [vmem:[#allocation2 + $0xbc0] sm:$0xff]
    %v3668 = vld [vmem:[#allocation2 + $0xbc8] sm:$0xff]
    %v3669 = vld [vmem:[#allocation2 + $0xbd0] sm:$0xff]
    %v3670 = vld [vmem:[#allocation2 + $0xbd8] sm:$0xff]
    %v3671 = vld [vmem:[#allocation2 + $0xbe0] sm:$0xff]
    %v3672 = vld [vmem:[#allocation2 + $0xbe8] sm:$0xff]
    %3673 = vmatprep.subr.mxu0 0.0
    %3674 = vmatpush1.msra.mxu0 %v3657
    %3675 = vmatprep.subr.mxu0 0.0
    %3676 = vmatpush1.msra.mxu0 %v3658
    %3677 = vmatprep.subr.mxu0 0.0
    %3678 = vmatpush1.msra.mxu0 %v3659
    %3679 = vmatprep.subr.mxu0 0.0
    %3680 = vmatpush1.msra.mxu0 %v3660
    %3681 = vmatprep.subr.mxu0 0.0
    %3682 = vmatpush1.msra.mxu0 %v3661
    %3683 = vmatprep.subr.mxu0 0.0
    %3684 = vmatpush1.msra.mxu0 %v3662
    %3685 = vmatprep.subr.mxu0 0.0
    %3686 = vmatpush1.msra.mxu0 %v3663
    %3687 = vmatprep.subr.mxu0 0.0
    %3688 = vmatpush1.msra.mxu0 %v3664
    %3689 = vmatprep.subr.mxu0 0.0
    %3690 = vmatpush1.msra.mxu0 %v3665
    %3691 = vmatprep.subr.mxu0 0.0
    %3692 = vmatpush1.msra.mxu0 %v3666
    %3693 = vmatprep.subr.mxu0 0.0
    %3694 = vmatpush1.msra.mxu0 %v3667
    %3695 = vmatprep.subr.mxu0 0.0
    %3696 = vmatpush1.msra.mxu0 %v3668
    %3697 = vmatprep.subr.mxu0 0.0
    %3698 = vmatpush1.msra.mxu0 %v3669
    %3699 = vmatprep.subr.mxu0 0.0
    %3700 = vmatpush1.msra.mxu0 %v3670
    %3701 = vmatprep.subr.mxu0 0.0
    %3702 = vmatpush1.msra.mxu0 %v3671
    %3703 = vmatprep.subr.mxu0 0.0
    %3704 = vmatpush1.msra.mxu0 %v3672
    %3705 = vmatprep.subr.mxu0 0.0
    %3706 = vmatpush1.msra.mxu0 0.0
    %3707 = vmatprep.subr.mxu0 0.0
    %3708 = vmatpush1.msra.mxu0 0.0
    %3709 = vmatprep.subr.mxu0 0.0
    %3710 = vmatpush1.msra.mxu0 0.0
    %3711 = vmatprep.subr.mxu0 0.0
    %3712 = vmatpush1.msra.mxu0 0.0
    %3713 = vmatprep.subr.mxu0 0.0
    %3714 = vmatpush1.msra.mxu0 0.0
    %3715 = vmatprep.subr.mxu0 0.0
    %3716 = vmatpush1.msra.mxu0 0.0
    %3717 = vmatprep.subr.mxu0 0.0
    %3718 = vmatpush1.msra.mxu0 0.0
    %3719 = vmatprep.subr.mxu0 0.0
    %3720 = vmatpush1.msra.mxu0 0.0
    %3721 = vmatprep.subr.mxu0 0.0
    %3722 = vmatpush1.msra.mxu0 0.0
    %3723 = vmatprep.subr.mxu0 0.0
    %3724 = vmatpush1.msra.mxu0 0.0
    %3725 = vmatprep.subr.mxu0 0.0
    %3726 = vmatpush1.msra.mxu0 0.0
    %3727 = vmatprep.subr.mxu0 0.0
    %3728 = vmatpush1.msra.mxu0 0.0
    %3729 = vmatprep.subr.mxu0 0.0
    %3730 = vmatpush1.msra.mxu0 0.0
    %3731 = vmatprep.subr.mxu0 0.0
    %3732 = vmatpush1.msra.mxu0 0.0
    %3733 = vmatprep.subr.mxu0 0.0
    %3734 = vmatpush1.msra.mxu0 0.0
    %3735 = vmatprep.subr.mxu0 0.0
    %3736 = vmatpush1.msra.mxu0 0.0
    %3737 = vmatprep.mubr.f32.mxu0 0.0
    %3738 = vmatmul.mubr.f32.gmra.mrb[0].mxu0 %v3655
    %v3739 = vpop.f32.mrb[0].mxu0
    %v3740 = vadd.f32 0.0, %v3739
    %v3741 = vpop.f32.mrb[0].mxu0
    %3742 = vmatprep.mubr.f32.mxu0 0.0
    %3743 = vmatmul.mubr.f32.gmra.mrb[0].mxu0 %v3656
    %v3744 = vpop.f32.mrb[0].mxu0
    %v3745 = vadd.f32 0.0, %v3744
    %v3746 = vpop.f32.mrb[0].mxu0
    %3747 = vdwg.mxu0
    %v3748 = vld [vmem:[#allocation2 + $0xbf0] sm:$0xff]
    %v3749 = vld [vmem:[#allocation2 + $0xbf8] sm:$0xff]
    %v3750 = vld [vmem:[#allocation2 + $0xc00] sm:$0xff]
    %v3751 = vld [vmem:[#allocation2 + $0xc08] sm:$0xff]
    %v3752 = vld [vmem:[#allocation2 + $0xc10] sm:$0xff]
    %v3753 = vld [vmem:[#allocation2 + $0xc18] sm:$0xff]
    %v3754 = vld [vmem:[#allocation2 + $0xc20] sm:$0xff]
    %v3755 = vld [vmem:[#allocation2 + $0xc28] sm:$0xff]
    %v3756 = vld [vmem:[#allocation2 + $0xc30] sm:$0xff]
    %v3757 = vld [vmem:[#allocation2 + $0xc38] sm:$0xff]
    %v3758 = vld [vmem:[#allocation2 + $0xc40] sm:$0xff]
    %v3759 = vld [vmem:[#allocation2 + $0xc48] sm:$0xff]
    %v3760 = vld [vmem:[#allocation2 + $0xc50] sm:$0xff]
    %v3761 = vld [vmem:[#allocation2 + $0xc58] sm:$0xff]
    %v3762 = vld [vmem:[#allocation2 + $0xc60] sm:$0xff]
    %v3763 = vld [vmem:[#allocation2 + $0xc68] sm:$0xff]
    %v3764 = vld [vmem:[#allocation2 + $0xc70] sm:$0xff]
    %v3765 = vld [vmem:[#allocation2 + $0xc78] sm:$0xff]
    %v3766 = vld [vmem:[#allocation2 + $0xc80] sm:$0xff]
    %v3767 = vld [vmem:[#allocation2 + $0xc88] sm:$0xff]
    %v3768 = vld [vmem:[#allocation2 + $0xc90] sm:$0xff]
    %v3769 = vld [vmem:[#allocation2 + $0xc98] sm:$0xff]
    %v3770 = vld [vmem:[#allocation2 + $0xca0] sm:$0xff]
    %v3771 = vld [vmem:[#allocation2 + $0xca8] sm:$0xff]
    %v3772 = vld [vmem:[#allocation2 + $0xcb0] sm:$0xff]
    %v3773 = vld [vmem:[#allocation2 + $0xcb8] sm:$0xff]
    %v3774 = vld [vmem:[#allocation2 + $0xcc0] sm:$0xff]
    %v3775 = vld [vmem:[#allocation2 + $0xcc8] sm:$0xff]
    %v3776 = vld [vmem:[#allocation2 + $0xcd0] sm:$0xff]
    %v3777 = vld [vmem:[#allocation2 + $0xcd8] sm:$0xff]
    %v3778 = vld [vmem:[#allocation2 + $0xce0] sm:$0xff]
    %v3779 = vld [vmem:[#allocation2 + $0xce8] sm:$0xff]
    %3780 = vmatprep.subr.mxu0 0.0
    %3781 = vmatpush1.msra.mxu0 %v3764
    %3782 = vmatprep.subr.mxu0 0.0
    %3783 = vmatpush1.msra.mxu0 %v3765
    %3784 = vmatprep.subr.mxu0 0.0
    %3785 = vmatpush1.msra.mxu0 %v3766
    %3786 = vmatprep.subr.mxu0 0.0
    %3787 = vmatpush1.msra.mxu0 %v3767
    %3788 = vmatprep.subr.mxu0 0.0
    %3789 = vmatpush1.msra.mxu0 %v3768
    %3790 = vmatprep.subr.mxu0 0.0
    %3791 = vmatpush1.msra.mxu0 %v3769
    %3792 = vmatprep.subr.mxu0 0.0
    %3793 = vmatpush1.msra.mxu0 %v3770
    %3794 = vmatprep.subr.mxu0 0.0
    %3795 = vmatpush1.msra.mxu0 %v3771
    %3796 = vmatprep.subr.mxu0 0.0
    %3797 = vmatpush1.msra.mxu0 %v3772
    %3798 = vmatprep.subr.mxu0 0.0
    %3799 = vmatpush1.msra.mxu0 %v3773
    %3800 = vmatprep.subr.mxu0 0.0
    %3801 = vmatpush1.msra.mxu0 %v3774
    %3802 = vmatprep.subr.mxu0 0.0
    %3803 = vmatpush1.msra.mxu0 %v3775
    %3804 = vmatprep.subr.mxu0 0.0
    %3805 = vmatpush1.msra.mxu0 %v3776
    %3806 = vmatprep.subr.mxu0 0.0
    %3807 = vmatpush1.msra.mxu0 %v3777
    %3808 = vmatprep.subr.mxu0 0.0
    %3809 = vmatpush1.msra.mxu0 %v3778
    %3810 = vmatprep.subr.mxu0 0.0
    %3811 = vmatpush1.msra.mxu0 %v3779
    %3812 = vmatprep.subr.mxu0 0.0
    %3813 = vmatpush1.msra.mxu0 0.0
    %3814 = vmatprep.subr.mxu0 0.0
    %3815 = vmatpush1.msra.mxu0 0.0
    %3816 = vmatprep.subr.mxu0 0.0
    %3817 = vmatpush1.msra.mxu0 0.0
    %3818 = vmatprep.subr.mxu0 0.0
    %3819 = vmatpush1.msra.mxu0 0.0
    %3820 = vmatprep.subr.mxu0 0.0
    %3821 = vmatpush1.msra.mxu0 0.0
    %3822 = vmatprep.subr.mxu0 0.0
    %3823 = vmatpush1.msra.mxu0 0.0
    %3824 = vmatprep.subr.mxu0 0.0
    %3825 = vmatpush1.msra.mxu0 0.0
    %3826 = vmatprep.subr.mxu0 0.0
    %3827 = vmatpush1.msra.mxu0 0.0
    %3828 = vmatprep.subr.mxu0 0.0
    %3829 = vmatpush1.msra.mxu0 0.0
    %3830 = vmatprep.subr.mxu0 0.0
    %3831 = vmatpush1.msra.mxu0 0.0
    %3832 = vmatprep.subr.mxu0 0.0
    %3833 = vmatpush1.msra.mxu0 0.0
    %3834 = vmatprep.subr.mxu0 0.0
    %3835 = vmatpush1.msra.mxu0 0.0
    %3836 = vmatprep.subr.mxu0 0.0
    %3837 = vmatpush1.msra.mxu0 0.0
    %3838 = vmatprep.subr.mxu0 0.0
    %3839 = vmatpush1.msra.mxu0 0.0
    %3840 = vmatprep.subr.mxu0 0.0
    %3841 = vmatpush1.msra.mxu0 0.0
    %3842 = vmatprep.subr.mxu0 0.0
    %3843 = vmatpush1.msra.mxu0 0.0
    %3844 = vmatprep.mubr.f32.mxu0 0.0
    %3845 = vmatmul.mubr.f32.gmra.mrb[0].mxu0 %v3655
    %v3846 = vpop.f32.mrb[0].mxu0
    %v3847 = vadd.f32 0.0, %v3846
    %v3848 = vpop.f32.mrb[0].mxu0
    %3849 = vmatprep.mubr.f32.mxu0 0.0
    %3850 = vmatmul.mubr.f32.gmra.mrb[0].mxu0 %v3656
    %v3851 = vpop.f32.mrb[0].mxu0
    %v3852 = vadd.f32 0.0, %v3851
    %v3853 = vpop.f32.mrb[0].mxu0
    %3854 = vdwg.mxu0
    %3855 = vmatprep.subr.mxu0 0.0
    %3856 = vmatpush1.msra.mxu0 %v3740
    %3857 = vmatprep.subr.mxu0 0.0
    %3858 = vmatpush1.msra.mxu0 %v3745
    %3859 = vmatprep.subr.mxu0 0.0
    %3860 = vmatpush1.msra.mxu0 0.0
    %3861 = vmatprep.subr.mxu0 0.0
    %3862 = vmatpush1.msra.mxu0 0.0
    %3863 = vmatprep.subr.mxu0 0.0
    %3864 = vmatpush1.msra.mxu0 0.0
    %3865 = vmatprep.subr.mxu0 0.0
    %3866 = vmatpush1.msra.mxu0 0.0
    %3867 = vmatprep.subr.mxu0 0.0
    %3868 = vmatpush1.msra.mxu0 0.0
    %3869 = vmatprep.subr.mxu0 0.0
    %3870 = vmatpush1.msra.mxu0 0.0
    %3871 = vmatprep.subr.mxu0 0.0
    %3872 = vmatpush1.msra.mxu0 0.0
    %3873 = vmatprep.subr.mxu0 0.0
    %3874 = vmatpush1.msra.mxu0 0.0
    %3875 = vmatprep.subr.mxu0 0.0
    %3876 = vmatpush1.msra.mxu0 0.0
    %3877 = vmatprep.subr.mxu0 0.0
    %3878 = vmatpush1.msra.mxu0 0.0
    %3879 = vmatprep.subr.mxu0 0.0
    %3880 = vmatpush1.msra.mxu0 0.0
    %3881 = vmatprep.subr.mxu0 0.0
    %3882 = vmatpush1.msra.mxu0 0.0
    %3883 = vmatprep.subr.mxu0 0.0
    %3884 = vmatpush1.msra.mxu0 0.0
    %3885 = vmatprep.subr.mxu0 0.0
    %3886 = vmatpush1.msra.mxu0 0.0
    %3887 = vmatprep.subr.mxu0 0.0
    %3888 = vmatpush1.msra.mxu0 0.0
    %3889 = vmatprep.subr.mxu0 0.0
    %3890 = vmatpush1.msra.mxu0 0.0
    %3891 = vmatprep.subr.mxu0 0.0
    %3892 = vmatpush1.msra.mxu0 0.0
    %3893 = vmatprep.subr.mxu0 0.0
    %3894 = vmatpush1.msra.mxu0 0.0
    %3895 = vmatprep.subr.mxu0 0.0
    %3896 = vmatpush1.msra.mxu0 0.0
    %3897 = vmatprep.subr.mxu0 0.0
    %3898 = vmatpush1.msra.mxu0 0.0
    %3899 = vmatprep.subr.mxu0 0.0
    %3900 = vmatpush1.msra.mxu0 0.0
    %3901 = vmatprep.subr.mxu0 0.0
    %3902 = vmatpush1.msra.mxu0 0.0
    %3903 = vmatprep.subr.mxu0 0.0
    %3904 = vmatpush1.msra.mxu0 0.0
    %3905 = vmatprep.subr.mxu0 0.0
    %3906 = vmatpush1.msra.mxu0 0.0
    %3907 = vmatprep.subr.mxu0 0.0
    %3908 = vmatpush1.msra.mxu0 0.0
    %3909 = vmatprep.subr.mxu0 0.0
    %3910 = vmatpush1.msra.mxu0 0.0
    %3911 = vmatprep.subr.mxu0 0.0
    %3912 = vmatpush1.msra.mxu0 0.0
    %3913 = vmatprep.subr.mxu0 0.0
    %3914 = vmatpush1.msra.mxu0 0.0
    %3915 = vmatprep.subr.mxu0 0.0
    %3916 = vmatpush1.msra.mxu0 0.0
    %3917 = vmatprep.subr.mxu0 0.0
    %3918 = vmatpush1.msra.mxu0 0.0
    %3919 = vmatprep.mubr.f32.mxu0 0.0
    %3920 = vmatmul.mubr.f32.gmra.mrb[0].mxu0 %v3408
    %v3921 = vpop.f32.mrb[0].mxu0
    %v3922 = vadd.f32 0.0, %v3921
    %v3923 = vpop.f32.mrb[0].mxu0
    %3924 = vmatprep.mubr.f32.mxu0 0.0
    %3925 = vmatmul.mubr.f32.gmra.mrb[0].mxu0 %v3411
    %v3926 = vpop.f32.mrb[0].mxu0
    %v3927 = vadd.f32 0.0, %v3926
    %v3928 = vpop.f32.mrb[0].mxu0
    %3929 = vdwg.mxu0
    %3930 = vmatprep.subr.mxu0 0.0
    %3931 = vmatpush1.msra.mxu0 %v3748
    %3932 = vmatprep.subr.mxu0 0.0
    %3933 = vmatpush1.msra.mxu0 %v3749
    %3934 = vmatprep.subr.mxu0 0.0
    %3935 = vmatpush1.msra.mxu0 %v3750
    %3936 = vmatprep.subr.mxu0 0.0
    %3937 = vmatpush1.msra.mxu0 %v3751
    %3938 = vmatprep.subr.mxu0 0.0
    %3939 = vmatpush1.msra.mxu0 %v3752
    %3940 = vmatprep.subr.mxu0 0.0
    %3941 = vmatpush1.msra.mxu0 %v3753
    %3942 = vmatprep.subr.mxu0 0.0
    %3943 = vmatpush1.msra.mxu0 %v3754
    %3944 = vmatprep.subr.mxu0 0.0
    %3945 = vmatpush1.msra.mxu0 %v3755
    %3946 = vmatprep.subr.mxu0 0.0
    %3947 = vmatpush1.msra.mxu0 %v3756
    %3948 = vmatprep.subr.mxu0 0.0
    %3949 = vmatpush1.msra.mxu0 %v3757
    %3950 = vmatprep.subr.mxu0 0.0
    %3951 = vmatpush1.msra.mxu0 %v3758
    %3952 = vmatprep.subr.mxu0 0.0
    %3953 = vmatpush1.msra.mxu0 %v3759
    %3954 = vmatprep.subr.mxu0 0.0
    %3955 = vmatpush1.msra.mxu0 %v3760
    %3956 = vmatprep.subr.mxu0 0.0
    %3957 = vmatpush1.msra.mxu0 %v3761
    %3958 = vmatprep.subr.mxu0 0.0
    %3959 = vmatpush1.msra.mxu0 %v3762
    %3960 = vmatprep.subr.mxu0 0.0
    %3961 = vmatpush1.msra.mxu0 %v3763
    %3962 = vmatprep.subr.mxu0 0.0
    %3963 = vmatpush1.msra.mxu0 0.0
    %3964 = vmatprep.subr.mxu0 0.0
    %3965 = vmatpush1.msra.mxu0 0.0
    %3966 = vmatprep.subr.mxu0 0.0
    %3967 = vmatpush1.msra.mxu0 0.0
    %3968 = vmatprep.subr.mxu0 0.0
    %3969 = vmatpush1.msra.mxu0 0.0
    %3970 = vmatprep.subr.mxu0 0.0
    %3971 = vmatpush1.msra.mxu0 0.0
    %3972 = vmatprep.subr.mxu0 0.0
    %3973 = vmatpush1.msra.mxu0 0.0
    %3974 = vmatprep.subr.mxu0 0.0
    %3975 = vmatpush1.msra.mxu0 0.0
    %3976 = vmatprep.subr.mxu0 0.0
    %3977 = vmatpush1.msra.mxu0 0.0
    %3978 = vmatprep.subr.mxu0 0.0
    %3979 = vmatpush1.msra.mxu0 0.0
    %3980 = vmatprep.subr.mxu0 0.0
    %3981 = vmatpush1.msra.mxu0 0.0
    %3982 = vmatprep.subr.mxu0 0.0
    %3983 = vmatpush1.msra.mxu0 0.0
    %3984 = vmatprep.subr.mxu0 0.0
    %3985 = vmatpush1.msra.mxu0 0.0
    %3986 = vmatprep.subr.mxu0 0.0
    %3987 = vmatpush1.msra.mxu0 0.0
    %3988 = vmatprep.subr.mxu0 0.0
    %3989 = vmatpush1.msra.mxu0 0.0
    %3990 = vmatprep.subr.mxu0 0.0
    %3991 = vmatpush1.msra.mxu0 0.0
    %3992 = vmatprep.subr.mxu0 0.0
    %3993 = vmatpush1.msra.mxu0 0.0
    %3994 = vmatprep.mubr.f32.mxu0 0.0
    %3995 = vmatmul.mubr.f32.gmra.mrb[0].mxu0 %v3655
    %v3996 = vpop.f32.mrb[0].mxu0
    %v3997 = vadd.f32 %v3922, %v3996
    %v3998 = vpop.f32.mrb[0].mxu0
    %3999 = vmatprep.mubr.f32.mxu0 0.0
    %4000 = vmatmul.mubr.f32.gmra.mrb[0].mxu0 %v3656
    %v4001 = vpop.f32.mrb[0].mxu0
    %v4002 = vadd.f32 %v3927, %v4001
    %v4003 = vpop.f32.mrb[0].mxu0
    %4004 = vdwg.mxu0
    %4005 = vmatprep.subr.mxu0 0.0
    %4006 = vmatpush1.msra.mxu0 %v3847
    %4007 = vmatprep.subr.mxu0 0.0
    %4008 = vmatpush1.msra.mxu0 %v3852
    %4009 = vmatprep.subr.mxu0 0.0
    %4010 = vmatpush1.msra.mxu0 0.0
    %4011 = vmatprep.subr.mxu0 0.0
    %4012 = vmatpush1.msra.mxu0 0.0
    %4013 = vmatprep.subr.mxu0 0.0
    %4014 = vmatpush1.msra.mxu0 0.0
    %4015 = vmatprep.subr.mxu0 0.0
    %4016 = vmatpush1.msra.mxu0 0.0
    %4017 = vmatprep.subr.mxu0 0.0
    %4018 = vmatpush1.msra.mxu0 0.0
    %4019 = vmatprep.subr.mxu0 0.0
    %4020 = vmatpush1.msra.mxu0 0.0
    %4021 = vmatprep.subr.mxu0 0.0
    %4022 = vmatpush1.msra.mxu0 0.0
    %4023 = vmatprep.subr.mxu0 0.0
    %4024 = vmatpush1.msra.mxu0 0.0
    %4025 = vmatprep.subr.mxu0 0.0
    %4026 = vmatpush1.msra.mxu0 0.0
    %4027 = vmatprep.subr.mxu0 0.0
    %4028 = vmatpush1.msra.mxu0 0.0
    %4029 = vmatprep.subr.mxu0 0.0
    %4030 = vmatpush1.msra.mxu0 0.0
    %4031 = vmatprep.subr.mxu0 0.0
    %4032 = vmatpush1.msra.mxu0 0.0
    %4033 = vmatprep.subr.mxu0 0.0
    %4034 = vmatpush1.msra.mxu0 0.0
    %4035 = vmatprep.subr.mxu0 0.0
    %4036 = vmatpush1.msra.mxu0 0.0
    %4037 = vmatprep.subr.mxu0 0.0
    %4038 = vmatpush1.msra.mxu0 0.0
    %4039 = vmatprep.subr.mxu0 0.0
    %4040 = vmatpush1.msra.mxu0 0.0
    %4041 = vmatprep.subr.mxu0 0.0
    %4042 = vmatpush1.msra.mxu0 0.0
    %4043 = vmatprep.subr.mxu0 0.0
    %4044 = vmatpush1.msra.mxu0 0.0
    %4045 = vmatprep.subr.mxu0 0.0
    %4046 = vmatpush1.msra.mxu0 0.0
    %4047 = vmatprep.subr.mxu0 0.0
    %4048 = vmatpush1.msra.mxu0 0.0
    %4049 = vmatprep.subr.mxu0 0.0
    %4050 = vmatpush1.msra.mxu0 0.0
    %4051 = vmatprep.subr.mxu0 0.0
    %4052 = vmatpush1.msra.mxu0 0.0
    %4053 = vmatprep.subr.mxu0 0.0
    %4054 = vmatpush1.msra.mxu0 0.0
    %4055 = vmatprep.subr.mxu0 0.0
    %4056 = vmatpush1.msra.mxu0 0.0
    %4057 = vmatprep.subr.mxu0 0.0
    %4058 = vmatpush1.msra.mxu0 0.0
    %4059 = vmatprep.subr.mxu0 0.0
    %4060 = vmatpush1.msra.mxu0 0.0
    %4061 = vmatprep.subr.mxu0 0.0
    %4062 = vmatpush1.msra.mxu0 0.0
    %4063 = vmatprep.subr.mxu0 0.0
    %4064 = vmatpush1.msra.mxu0 0.0
    %4065 = vmatprep.subr.mxu0 0.0
    %4066 = vmatpush1.msra.mxu0 0.0
    %4067 = vmatprep.subr.mxu0 0.0
    %4068 = vmatpush1.msra.mxu0 0.0
    %4069 = vmatprep.mubr.f32.mxu0 0.0
    %4070 = vmatmul.mubr.f32.gmra.mrb[0].mxu0 %v3566
    %v4071 = vpop.f32.mrb[0].mxu0
    %v4072 = vadd.f32 0.0, %v4071
    %v4073 = vpop.f32.mrb[0].mxu0
    %4074 = vmatprep.mubr.f32.mxu0 0.0
    %4075 = vmatmul.mubr.f32.gmra.mrb[0].mxu0 %v3569
    %v4076 = vpop.f32.mrb[0].mxu0
    %v4077 = vadd.f32 0.0, %v4076
    %v4078 = vpop.f32.mrb[0].mxu0
    %4079 = vdwg.mxu0
    %v4080 = vadd.f32 %v3997, %v4072
    %v4081 = vadd.f32 %v4002, %v4077
    %v4082 = vld [vmem:[#allocation2 + $0xcf0] sm:$0x1]
    %v4083 = vlaneseq
    %v4084 = vshrl.u32 %v4083, 7
    %v4085 = vsub.s32 0, %v4084
    %v4086 = vrot.slane %v4082, %v4085
    %v4087 = vadd.f32 %v4080, %v4086
    %v4088 = vadd.f32 %v4081, %v4086
    %v4089 = vmax.f32 %v4087, 0.0
    %v4090 = vmax.f32 %v4088, 0.0
    %v4091 = vld [vmem:[#allocation2 + $0xcf8] sm:$0xff]
    %v4092 = vld [vmem:[#allocation2 + $0xd00] sm:$0xff]
    %v4093 = vld [vmem:[#allocation2 + $0xd08] sm:$0xff]
    %v4094 = vld [vmem:[#allocation2 + $0xd10] sm:$0xff]
    %v4095 = vld [vmem:[#allocation2 + $0xd18] sm:$0xff]
    %v4096 = vld [vmem:[#allocation2 + $0xd20] sm:$0xff]
    %v4097 = vld [vmem:[#allocation2 + $0xd28] sm:$0xff]
    %v4098 = vld [vmem:[#allocation2 + $0xd30] sm:$0xff]
    %v4099 = vld [vmem:[#allocation2 + $0xd38] sm:$0xff]
    %v4100 = vld [vmem:[#allocation2 + $0xd40] sm:$0xff]
    %v4101 = vld [vmem:[#allocation2 + $0xd48] sm:$0xff]
    %v4102 = vld [vmem:[#allocation2 + $0xd50] sm:$0xff]
    %v4103 = vld [vmem:[#allocation2 + $0xd58] sm:$0xff]
    %v4104 = vld [vmem:[#allocation2 + $0xd60] sm:$0xff]
    %v4105 = vld [vmem:[#allocation2 + $0xd68] sm:$0xff]
    %v4106 = vld [vmem:[#allocation2 + $0xd70] sm:$0xff]
    %4107 = vmatprep.subr.mxu0 0.0
    %4108 = vmatpush1.msra.mxu0 %v4091
    %4109 = vmatprep.subr.mxu0 0.0
    %4110 = vmatpush1.msra.mxu0 %v4092
    %4111 = vmatprep.subr.mxu0 0.0
    %4112 = vmatpush1.msra.mxu0 %v4093
    %4113 = vmatprep.subr.mxu0 0.0
    %4114 = vmatpush1.msra.mxu0 %v4094
    %4115 = vmatprep.subr.mxu0 0.0
    %4116 = vmatpush1.msra.mxu0 %v4095
    %4117 = vmatprep.subr.mxu0 0.0
    %4118 = vmatpush1.msra.mxu0 %v4096
    %4119 = vmatprep.subr.mxu0 0.0
    %4120 = vmatpush1.msra.mxu0 %v4097
    %4121 = vmatprep.subr.mxu0 0.0
    %4122 = vmatpush1.msra.mxu0 %v4098
    %4123 = vmatprep.subr.mxu0 0.0
    %4124 = vmatpush1.msra.mxu0 %v4099
    %4125 = vmatprep.subr.mxu0 0.0
    %4126 = vmatpush1.msra.mxu0 %v4100
    %4127 = vmatprep.subr.mxu0 0.0
    %4128 = vmatpush1.msra.mxu0 %v4101
    %4129 = vmatprep.subr.mxu0 0.0
    %4130 = vmatpush1.msra.mxu0 %v4102
    %4131 = vmatprep.subr.mxu0 0.0
    %4132 = vmatpush1.msra.mxu0 %v4103
    %4133 = vmatprep.subr.mxu0 0.0
    %4134 = vmatpush1.msra.mxu0 %v4104
    %4135 = vmatprep.subr.mxu0 0.0
    %4136 = vmatpush1.msra.mxu0 %v4105
    %4137 = vmatprep.subr.mxu0 0.0
    %4138 = vmatpush1.msra.mxu0 %v4106
    %4139 = vmatprep.subr.mxu0 0.0
    %4140 = vmatpush1.msra.mxu0 0.0
    %4141 = vmatprep.subr.mxu0 0.0
    %4142 = vmatpush1.msra.mxu0 0.0
    %4143 = vmatprep.subr.mxu0 0.0
    %4144 = vmatpush1.msra.mxu0 0.0
    %4145 = vmatprep.subr.mxu0 0.0
    %4146 = vmatpush1.msra.mxu0 0.0
    %4147 = vmatprep.subr.mxu0 0.0
    %4148 = vmatpush1.msra.mxu0 0.0
    %4149 = vmatprep.subr.mxu0 0.0
    %4150 = vmatpush1.msra.mxu0 0.0
    %4151 = vmatprep.subr.mxu0 0.0
    %4152 = vmatpush1.msra.mxu0 0.0
    %4153 = vmatprep.subr.mxu0 0.0
    %4154 = vmatpush1.msra.mxu0 0.0
    %4155 = vmatprep.subr.mxu0 0.0
    %4156 = vmatpush1.msra.mxu0 0.0
    %4157 = vmatprep.subr.mxu0 0.0
    %4158 = vmatpush1.msra.mxu0 0.0
    %4159 = vmatprep.subr.mxu0 0.0
    %4160 = vmatpush1.msra.mxu0 0.0
    %4161 = vmatprep.subr.mxu0 0.0
    %4162 = vmatpush1.msra.mxu0 0.0
    %4163 = vmatprep.subr.mxu0 0.0
    %4164 = vmatpush1.msra.mxu0 0.0
    %4165 = vmatprep.subr.mxu0 0.0
    %4166 = vmatpush1.msra.mxu0 0.0
    %4167 = vmatprep.subr.mxu0 0.0
    %4168 = vmatpush1.msra.mxu0 0.0
    %4169 = vmatprep.subr.mxu0 0.0
    %4170 = vmatpush1.msra.mxu0 0.0
    %4171 = vmatprep.mubr.f32.mxu0 0.0
    %4172 = vmatmul.mubr.f32.gmra.mrb[0].mxu0 %v4089
    %v4173 = vpop.f32.mrb[0].mxu0
    %v4174 = vadd.f32 0.0, %v4173
    %v4175 = vpop.f32.mrb[0].mxu0
    %4176 = vmatprep.mubr.f32.mxu0 0.0
    %4177 = vmatmul.mubr.f32.gmra.mrb[0].mxu0 %v4090
    %v4178 = vpop.f32.mrb[0].mxu0
    %v4179 = vadd.f32 0.0, %v4178
    %v4180 = vpop.f32.mrb[0].mxu0
    %4181 = vdwg.mxu0
    %v4182 = vld [vmem:[#allocation2 + $0xd78] sm:$0xff]
    %v4183 = vld [vmem:[#allocation2 + $0xd80] sm:$0xff]
    %v4184 = vld [vmem:[#allocation2 + $0xd88] sm:$0xff]
    %v4185 = vld [vmem:[#allocation2 + $0xd90] sm:$0xff]
    %v4186 = vld [vmem:[#allocation2 + $0xd98] sm:$0xff]
    %v4187 = vld [vmem:[#allocation2 + $0xda0] sm:$0xff]
    %v4188 = vld [vmem:[#allocation2 + $0xda8] sm:$0xff]
    %v4189 = vld [vmem:[#allocation2 + $0xdb0] sm:$0xff]
    %v4190 = vld [vmem:[#allocation2 + $0xdb8] sm:$0xff]
    %v4191 = vld [vmem:[#allocation2 + $0xdc0] sm:$0xff]
    %v4192 = vld [vmem:[#allocation2 + $0xdc8] sm:$0xff]
    %v4193 = vld [vmem:[#allocation2 + $0xdd0] sm:$0xff]
    %v4194 = vld [vmem:[#allocation2 + $0xdd8] sm:$0xff]
    %v4195 = vld [vmem:[#allocation2 + $0xde0] sm:$0xff]
    %v4196 = vld [vmem:[#allocation2 + $0xde8] sm:$0xff]
    %v4197 = vld [vmem:[#allocation2 + $0xdf0] sm:$0xff]
    %v4198 = vld [vmem:[#allocation2 + $0xdf8] sm:$0xff]
    %v4199 = vld [vmem:[#allocation2 + $0xe00] sm:$0xff]
    %v4200 = vld [vmem:[#allocation2 + $0xe08] sm:$0xff]
    %v4201 = vld [vmem:[#allocation2 + $0xe10] sm:$0xff]
    %v4202 = vld [vmem:[#allocation2 + $0xe18] sm:$0xff]
    %v4203 = vld [vmem:[#allocation2 + $0xe20] sm:$0xff]
    %v4204 = vld [vmem:[#allocation2 + $0xe28] sm:$0xff]
    %v4205 = vld [vmem:[#allocation2 + $0xe30] sm:$0xff]
    %v4206 = vld [vmem:[#allocation2 + $0xe38] sm:$0xff]
    %v4207 = vld [vmem:[#allocation2 + $0xe40] sm:$0xff]
    %v4208 = vld [vmem:[#allocation2 + $0xe48] sm:$0xff]
    %v4209 = vld [vmem:[#allocation2 + $0xe50] sm:$0xff]
    %v4210 = vld [vmem:[#allocation2 + $0xe58] sm:$0xff]
    %v4211 = vld [vmem:[#allocation2 + $0xe60] sm:$0xff]
    %v4212 = vld [vmem:[#allocation2 + $0xe68] sm:$0xff]
    %v4213 = vld [vmem:[#allocation2 + $0xe70] sm:$0xff]
    %4214 = vmatprep.subr.mxu0 0.0
    %4215 = vmatpush1.msra.mxu0 %v4198
    %4216 = vmatprep.subr.mxu0 0.0
    %4217 = vmatpush1.msra.mxu0 %v4199
    %4218 = vmatprep.subr.mxu0 0.0
    %4219 = vmatpush1.msra.mxu0 %v4200
    %4220 = vmatprep.subr.mxu0 0.0
    %4221 = vmatpush1.msra.mxu0 %v4201
    %4222 = vmatprep.subr.mxu0 0.0
    %4223 = vmatpush1.msra.mxu0 %v4202
    %4224 = vmatprep.subr.mxu0 0.0
    %4225 = vmatpush1.msra.mxu0 %v4203
    %4226 = vmatprep.subr.mxu0 0.0
    %4227 = vmatpush1.msra.mxu0 %v4204
    %4228 = vmatprep.subr.mxu0 0.0
    %4229 = vmatpush1.msra.mxu0 %v4205
    %4230 = vmatprep.subr.mxu0 0.0
    %4231 = vmatpush1.msra.mxu0 %v4206
    %4232 = vmatprep.subr.mxu0 0.0
    %4233 = vmatpush1.msra.mxu0 %v4207
    %4234 = vmatprep.subr.mxu0 0.0
    %4235 = vmatpush1.msra.mxu0 %v4208
    %4236 = vmatprep.subr.mxu0 0.0
    %4237 = vmatpush1.msra.mxu0 %v4209
    %4238 = vmatprep.subr.mxu0 0.0
    %4239 = vmatpush1.msra.mxu0 %v4210
    %4240 = vmatprep.subr.mxu0 0.0
    %4241 = vmatpush1.msra.mxu0 %v4211
    %4242 = vmatprep.subr.mxu0 0.0
    %4243 = vmatpush1.msra.mxu0 %v4212
    %4244 = vmatprep.subr.mxu0 0.0
    %4245 = vmatpush1.msra.mxu0 %v4213
    %4246 = vmatprep.subr.mxu0 0.0
    %4247 = vmatpush1.msra.mxu0 0.0
    %4248 = vmatprep.subr.mxu0 0.0
    %4249 = vmatpush1.msra.mxu0 0.0
    %4250 = vmatprep.subr.mxu0 0.0
    %4251 = vmatpush1.msra.mxu0 0.0
    %4252 = vmatprep.subr.mxu0 0.0
    %4253 = vmatpush1.msra.mxu0 0.0
    %4254 = vmatprep.subr.mxu0 0.0
    %4255 = vmatpush1.msra.mxu0 0.0
    %4256 = vmatprep.subr.mxu0 0.0
    %4257 = vmatpush1.msra.mxu0 0.0
    %4258 = vmatprep.subr.mxu0 0.0
    %4259 = vmatpush1.msra.mxu0 0.0
    %4260 = vmatprep.subr.mxu0 0.0
    %4261 = vmatpush1.msra.mxu0 0.0
    %4262 = vmatprep.subr.mxu0 0.0
    %4263 = vmatpush1.msra.mxu0 0.0
    %4264 = vmatprep.subr.mxu0 0.0
    %4265 = vmatpush1.msra.mxu0 0.0
    %4266 = vmatprep.subr.mxu0 0.0
    %4267 = vmatpush1.msra.mxu0 0.0
    %4268 = vmatprep.subr.mxu0 0.0
    %4269 = vmatpush1.msra.mxu0 0.0
    %4270 = vmatprep.subr.mxu0 0.0
    %4271 = vmatpush1.msra.mxu0 0.0
    %4272 = vmatprep.subr.mxu0 0.0
    %4273 = vmatpush1.msra.mxu0 0.0
    %4274 = vmatprep.subr.mxu0 0.0
    %4275 = vmatpush1.msra.mxu0 0.0
    %4276 = vmatprep.subr.mxu0 0.0
    %4277 = vmatpush1.msra.mxu0 0.0
    %4278 = vmatprep.mubr.f32.mxu0 0.0
    %4279 = vmatmul.mubr.f32.gmra.mrb[0].mxu0 %v4089
    %v4280 = vpop.f32.mrb[0].mxu0
    %v4281 = vadd.f32 0.0, %v4280
    %v4282 = vpop.f32.mrb[0].mxu0
    %4283 = vmatprep.mubr.f32.mxu0 0.0
    %4284 = vmatmul.mubr.f32.gmra.mrb[0].mxu0 %v4090
    %v4285 = vpop.f32.mrb[0].mxu0
    %v4286 = vadd.f32 0.0, %v4285
    %v4287 = vpop.f32.mrb[0].mxu0
    %4288 = vdwg.mxu0
    %4289 = vmatprep.subr.mxu0 0.0
    %4290 = vmatpush1.msra.mxu0 %v4174
    %4291 = vmatprep.subr.mxu0 0.0
    %4292 = vmatpush1.msra.mxu0 %v4179
    %4293 = vmatprep.subr.mxu0 0.0
    %4294 = vmatpush1.msra.mxu0 0.0
    %4295 = vmatprep.subr.mxu0 0.0
    %4296 = vmatpush1.msra.mxu0 0.0
    %4297 = vmatprep.subr.mxu0 0.0
    %4298 = vmatpush1.msra.mxu0 0.0
    %4299 = vmatprep.subr.mxu0 0.0
    %4300 = vmatpush1.msra.mxu0 0.0
    %4301 = vmatprep.subr.mxu0 0.0
    %4302 = vmatpush1.msra.mxu0 0.0
    %4303 = vmatprep.subr.mxu0 0.0
    %4304 = vmatpush1.msra.mxu0 0.0
    %4305 = vmatprep.subr.mxu0 0.0
    %4306 = vmatpush1.msra.mxu0 0.0
    %4307 = vmatprep.subr.mxu0 0.0
    %4308 = vmatpush1.msra.mxu0 0.0
    %4309 = vmatprep.subr.mxu0 0.0
    %4310 = vmatpush1.msra.mxu0 0.0
    %4311 = vmatprep.subr.mxu0 0.0
    %4312 = vmatpush1.msra.mxu0 0.0
    %4313 = vmatprep.subr.mxu0 0.0
    %4314 = vmatpush1.msra.mxu0 0.0
    %4315 = vmatprep.subr.mxu0 0.0
    %4316 = vmatpush1.msra.mxu0 0.0
    %4317 = vmatprep.subr.mxu0 0.0
    %4318 = vmatpush1.msra.mxu0 0.0
    %4319 = vmatprep.subr.mxu0 0.0
    %4320 = vmatpush1.msra.mxu0 0.0
    %4321 = vmatprep.subr.mxu0 0.0
    %4322 = vmatpush1.msra.mxu0 0.0
    %4323 = vmatprep.subr.mxu0 0.0
    %4324 = vmatpush1.msra.mxu0 0.0
    %4325 = vmatprep.subr.mxu0 0.0
    %4326 = vmatpush1.msra.mxu0 0.0
    %4327 = vmatprep.subr.mxu0 0.0
    %4328 = vmatpush1.msra.mxu0 0.0
    %4329 = vmatprep.subr.mxu0 0.0
    %4330 = vmatpush1.msra.mxu0 0.0
    %4331 = vmatprep.subr.mxu0 0.0
    %4332 = vmatpush1.msra.mxu0 0.0
    %4333 = vmatprep.subr.mxu0 0.0
    %4334 = vmatpush1.msra.mxu0 0.0
    %4335 = vmatprep.subr.mxu0 0.0
    %4336 = vmatpush1.msra.mxu0 0.0
    %4337 = vmatprep.subr.mxu0 0.0
    %4338 = vmatpush1.msra.mxu0 0.0
    %4339 = vmatprep.subr.mxu0 0.0
    %4340 = vmatpush1.msra.mxu0 0.0
    %4341 = vmatprep.subr.mxu0 0.0
    %4342 = vmatpush1.msra.mxu0 0.0
    %4343 = vmatprep.subr.mxu0 0.0
    %4344 = vmatpush1.msra.mxu0 0.0
    %4345 = vmatprep.subr.mxu0 0.0
    %4346 = vmatpush1.msra.mxu0 0.0
    %4347 = vmatprep.subr.mxu0 0.0
    %4348 = vmatpush1.msra.mxu0 0.0
    %4349 = vmatprep.subr.mxu0 0.0
    %4350 = vmatpush1.msra.mxu0 0.0
    %4351 = vmatprep.subr.mxu0 0.0
    %4352 = vmatpush1.msra.mxu0 0.0
    %4353 = vmatprep.mubr.f32.mxu0 0.0
    %4354 = vmatmul.mubr.f32.gmra.mrb[0].mxu0 %v3408
    %v4355 = vpop.f32.mrb[0].mxu0
    %v4356 = vadd.f32 0.0, %v4355
    %v4357 = vpop.f32.mrb[0].mxu0
    %4358 = vmatprep.mubr.f32.mxu0 0.0
    %4359 = vmatmul.mubr.f32.gmra.mrb[0].mxu0 %v3411
    %v4360 = vpop.f32.mrb[0].mxu0
    %v4361 = vadd.f32 0.0, %v4360
    %v4362 = vpop.f32.mrb[0].mxu0
    %4363 = vdwg.mxu0
    %4364 = vmatprep.subr.mxu0 0.0
    %4365 = vmatpush1.msra.mxu0 %v4182
    %4366 = vmatprep.subr.mxu0 0.0
    %4367 = vmatpush1.msra.mxu0 %v4183
    %4368 = vmatprep.subr.mxu0 0.0
    %4369 = vmatpush1.msra.mxu0 %v4184
    %4370 = vmatprep.subr.mxu0 0.0
    %4371 = vmatpush1.msra.mxu0 %v4185
    %4372 = vmatprep.subr.mxu0 0.0
    %4373 = vmatpush1.msra.mxu0 %v4186
    %4374 = vmatprep.subr.mxu0 0.0
    %4375 = vmatpush1.msra.mxu0 %v4187
    %4376 = vmatprep.subr.mxu0 0.0
    %4377 = vmatpush1.msra.mxu0 %v4188
    %4378 = vmatprep.subr.mxu0 0.0
    %4379 = vmatpush1.msra.mxu0 %v4189
    %4380 = vmatprep.subr.mxu0 0.0
    %4381 = vmatpush1.msra.mxu0 %v4190
    %4382 = vmatprep.subr.mxu0 0.0
    %4383 = vmatpush1.msra.mxu0 %v4191
    %4384 = vmatprep.subr.mxu0 0.0
    %4385 = vmatpush1.msra.mxu0 %v4192
    %4386 = vmatprep.subr.mxu0 0.0
    %4387 = vmatpush1.msra.mxu0 %v4193
    %4388 = vmatprep.subr.mxu0 0.0
    %4389 = vmatpush1.msra.mxu0 %v4194
    %4390 = vmatprep.subr.mxu0 0.0
    %4391 = vmatpush1.msra.mxu0 %v4195
    %4392 = vmatprep.subr.mxu0 0.0
    %4393 = vmatpush1.msra.mxu0 %v4196
    %4394 = vmatprep.subr.mxu0 0.0
    %4395 = vmatpush1.msra.mxu0 %v4197
    %4396 = vmatprep.subr.mxu0 0.0
    %4397 = vmatpush1.msra.mxu0 0.0
    %4398 = vmatprep.subr.mxu0 0.0
    %4399 = vmatpush1.msra.mxu0 0.0
    %4400 = vmatprep.subr.mxu0 0.0
    %4401 = vmatpush1.msra.mxu0 0.0
    %4402 = vmatprep.subr.mxu0 0.0
    %4403 = vmatpush1.msra.mxu0 0.0
    %4404 = vmatprep.subr.mxu0 0.0
    %4405 = vmatpush1.msra.mxu0 0.0
    %4406 = vmatprep.subr.mxu0 0.0
    %4407 = vmatpush1.msra.mxu0 0.0
    %4408 = vmatprep.subr.mxu0 0.0
    %4409 = vmatpush1.msra.mxu0 0.0
    %4410 = vmatprep.subr.mxu0 0.0
    %4411 = vmatpush1.msra.mxu0 0.0
    %4412 = vmatprep.subr.mxu0 0.0
    %4413 = vmatpush1.msra.mxu0 0.0
    %4414 = vmatprep.subr.mxu0 0.0
    %4415 = vmatpush1.msra.mxu0 0.0
    %4416 = vmatprep.subr.mxu0 0.0
    %4417 = vmatpush1.msra.mxu0 0.0
    %4418 = vmatprep.subr.mxu0 0.0
    %4419 = vmatpush1.msra.mxu0 0.0
    %4420 = vmatprep.subr.mxu0 0.0
    %4421 = vmatpush1.msra.mxu0 0.0
    %4422 = vmatprep.subr.mxu0 0.0
    %4423 = vmatpush1.msra.mxu0 0.0
    %4424 = vmatprep.subr.mxu0 0.0
    %4425 = vmatpush1.msra.mxu0 0.0
    %4426 = vmatprep.subr.mxu0 0.0
    %4427 = vmatpush1.msra.mxu0 0.0
    %4428 = vmatprep.mubr.f32.mxu0 0.0
    %4429 = vmatmul.mubr.f32.gmra.mrb[0].mxu0 %v4089
    %v4430 = vpop.f32.mrb[0].mxu0
    %v4431 = vadd.f32 %v4356, %v4430
    %v4432 = vpop.f32.mrb[0].mxu0
    %4433 = vmatprep.mubr.f32.mxu0 0.0
    %4434 = vmatmul.mubr.f32.gmra.mrb[0].mxu0 %v4090
    %v4435 = vpop.f32.mrb[0].mxu0
    %v4436 = vadd.f32 %v4361, %v4435
    %v4437 = vpop.f32.mrb[0].mxu0
    %4438 = vdwg.mxu0
    %4439 = vmatprep.subr.mxu0 0.0
    %4440 = vmatpush1.msra.mxu0 %v4281
    %4441 = vmatprep.subr.mxu0 0.0
    %4442 = vmatpush1.msra.mxu0 %v4286
    %4443 = vmatprep.subr.mxu0 0.0
    %4444 = vmatpush1.msra.mxu0 0.0
    %4445 = vmatprep.subr.mxu0 0.0
    %4446 = vmatpush1.msra.mxu0 0.0
    %4447 = vmatprep.subr.mxu0 0.0
    %4448 = vmatpush1.msra.mxu0 0.0
    %4449 = vmatprep.subr.mxu0 0.0
    %4450 = vmatpush1.msra.mxu0 0.0
    %4451 = vmatprep.subr.mxu0 0.0
    %4452 = vmatpush1.msra.mxu0 0.0
    %4453 = vmatprep.subr.mxu0 0.0
    %4454 = vmatpush1.msra.mxu0 0.0
    %4455 = vmatprep.subr.mxu0 0.0
    %4456 = vmatpush1.msra.mxu0 0.0
    %4457 = vmatprep.subr.mxu0 0.0
    %4458 = vmatpush1.msra.mxu0 0.0
    %4459 = vmatprep.subr.mxu0 0.0
    %4460 = vmatpush1.msra.mxu0 0.0
    %4461 = vmatprep.subr.mxu0 0.0
    %4462 = vmatpush1.msra.mxu0 0.0
    %4463 = vmatprep.subr.mxu0 0.0
    %4464 = vmatpush1.msra.mxu0 0.0
    %4465 = vmatprep.subr.mxu0 0.0
    %4466 = vmatpush1.msra.mxu0 0.0
    %4467 = vmatprep.subr.mxu0 0.0
    %4468 = vmatpush1.msra.mxu0 0.0
    %4469 = vmatprep.subr.mxu0 0.0
    %4470 = vmatpush1.msra.mxu0 0.0
    %4471 = vmatprep.subr.mxu0 0.0
    %4472 = vmatpush1.msra.mxu0 0.0
    %4473 = vmatprep.subr.mxu0 0.0
    %4474 = vmatpush1.msra.mxu0 0.0
    %4475 = vmatprep.subr.mxu0 0.0
    %4476 = vmatpush1.msra.mxu0 0.0
    %4477 = vmatprep.subr.mxu0 0.0
    %4478 = vmatpush1.msra.mxu0 0.0
    %4479 = vmatprep.subr.mxu0 0.0
    %4480 = vmatpush1.msra.mxu0 0.0
    %4481 = vmatprep.subr.mxu0 0.0
    %4482 = vmatpush1.msra.mxu0 0.0
    %4483 = vmatprep.subr.mxu0 0.0
    %4484 = vmatpush1.msra.mxu0 0.0
    %4485 = vmatprep.subr.mxu0 0.0
    %4486 = vmatpush1.msra.mxu0 0.0
    %4487 = vmatprep.subr.mxu0 0.0
    %4488 = vmatpush1.msra.mxu0 0.0
    %4489 = vmatprep.subr.mxu0 0.0
    %4490 = vmatpush1.msra.mxu0 0.0
    %4491 = vmatprep.subr.mxu0 0.0
    %4492 = vmatpush1.msra.mxu0 0.0
    %4493 = vmatprep.subr.mxu0 0.0
    %4494 = vmatpush1.msra.mxu0 0.0
    %4495 = vmatprep.subr.mxu0 0.0
    %4496 = vmatpush1.msra.mxu0 0.0
    %4497 = vmatprep.subr.mxu0 0.0
    %4498 = vmatpush1.msra.mxu0 0.0
    %4499 = vmatprep.subr.mxu0 0.0
    %4500 = vmatpush1.msra.mxu0 0.0
    %4501 = vmatprep.subr.mxu0 0.0
    %4502 = vmatpush1.msra.mxu0 0.0
    %4503 = vmatprep.mubr.f32.mxu0 0.0
    %4504 = vmatmul.mubr.f32.gmra.mrb[0].mxu0 %v3566
    %v4505 = vpop.f32.mrb[0].mxu0
    %v4506 = vadd.f32 0.0, %v4505
    %v4507 = vpop.f32.mrb[0].mxu0
    %4508 = vmatprep.mubr.f32.mxu0 0.0
    %4509 = vmatmul.mubr.f32.gmra.mrb[0].mxu0 %v3569
    %v4510 = vpop.f32.mrb[0].mxu0
    %v4511 = vadd.f32 0.0, %v4510
    %v4512 = vpop.f32.mrb[0].mxu0
    %4513 = vdwg.mxu0
    %v4514 = vadd.f32 %v4431, %v4506
    %v4515 = vadd.f32 %v4436, %v4511
    %v4516 = vld [vmem:[#allocation2 + $0xe78] sm:$0x1]
    %v4517 = vlaneseq
    %v4518 = vshrl.u32 %v4517, 7
    %v4519 = vsub.s32 0, %v4518
    %v4520 = vrot.slane %v4516, %v4519
    %v4521 = vadd.f32 %v4514, %v4520
    %v4522 = vadd.f32 %v4515, %v4520
    %v4523 = vmax.f32 %v4521, 0.0
    %v4524 = vmax.f32 %v4522, 0.0
    %v4525 = vld [vmem:[#allocation2 + $0xe80] sm:$0xff]
    %v4527 = vsel %vm3406, %v4525, 0
    %4529 = vmatprep.subr.mxu0 0.0
    %4530 = vmatpush1.msra.mxu0 %v4523
    %4531 = vmatprep.subr.mxu0 0.0
    %4532 = vmatpush1.msra.mxu0 %v4524
    %4533 = vmatprep.subr.mxu0 0.0
    %4534 = vmatpush1.msra.mxu0 0.0
    %4535 = vmatprep.subr.mxu0 0.0
    %4536 = vmatpush1.msra.mxu0 0.0
    %4537 = vmatprep.subr.mxu0 0.0
    %4538 = vmatpush1.msra.mxu0 0.0
    %4539 = vmatprep.subr.mxu0 0.0
    %4540 = vmatpush1.msra.mxu0 0.0
    %4541 = vmatprep.subr.mxu0 0.0
    %4542 = vmatpush1.msra.mxu0 0.0
    %4543 = vmatprep.subr.mxu0 0.0
    %4544 = vmatpush1.msra.mxu0 0.0
    %4545 = vmatprep.subr.mxu0 0.0
    %4546 = vmatpush1.msra.mxu0 0.0
    %4547 = vmatprep.subr.mxu0 0.0
    %4548 = vmatpush1.msra.mxu0 0.0
    %4549 = vmatprep.subr.mxu0 0.0
    %4550 = vmatpush1.msra.mxu0 0.0
    %4551 = vmatprep.subr.mxu0 0.0
    %4552 = vmatpush1.msra.mxu0 0.0
    %4553 = vmatprep.subr.mxu0 0.0
    %4554 = vmatpush1.msra.mxu0 0.0
    %4555 = vmatprep.subr.mxu0 0.0
    %4556 = vmatpush1.msra.mxu0 0.0
    %4557 = vmatprep.subr.mxu0 0.0
    %4558 = vmatpush1.msra.mxu0 0.0
    %4559 = vmatprep.subr.mxu0 0.0
    %4560 = vmatpush1.msra.mxu0 0.0
    %4561 = vmatprep.subr.mxu0 0.0
    %4562 = vmatpush1.msra.mxu0 0.0
    %4563 = vmatprep.subr.mxu0 0.0
    %4564 = vmatpush1.msra.mxu0 0.0
    %4565 = vmatprep.subr.mxu0 0.0
    %4566 = vmatpush1.msra.mxu0 0.0
    %4567 = vmatprep.subr.mxu0 0.0
    %4568 = vmatpush1.msra.mxu0 0.0
    %4569 = vmatprep.subr.mxu0 0.0
    %4570 = vmatpush1.msra.mxu0 0.0
    %4571 = vmatprep.subr.mxu0 0.0
    %4572 = vmatpush1.msra.mxu0 0.0
    %4573 = vmatprep.subr.mxu0 0.0
    %4574 = vmatpush1.msra.mxu0 0.0
    %4575 = vmatprep.subr.mxu0 0.0
    %4576 = vmatpush1.msra.mxu0 0.0
    %4577 = vmatprep.subr.mxu0 0.0
    %4578 = vmatpush1.msra.mxu0 0.0
    %4579 = vmatprep.subr.mxu0 0.0
    %4580 = vmatpush1.msra.mxu0 0.0
    %4581 = vmatprep.subr.mxu0 0.0
    %4582 = vmatpush1.msra.mxu0 0.0
    %4583 = vmatprep.subr.mxu0 0.0
    %4584 = vmatpush1.msra.mxu0 0.0
    %4585 = vmatprep.subr.mxu0 0.0
    %4586 = vmatpush1.msra.mxu0 0.0
    %4587 = vmatprep.subr.mxu0 0.0
    %4588 = vmatpush1.msra.mxu0 0.0
    %4589 = vmatprep.subr.mxu0 0.0
    %4590 = vmatpush1.msra.mxu0 0.0
    %4591 = vmatprep.subr.mxu0 0.0
    %4592 = vmatpush1.msra.mxu0 0.0
    %4593 = vmatprep.mubr.f32.mxu0 0.0
    %4594 = vmatmul.mubr.f32.gmra.mrb[0].mxu0 %v4527
    %v4595 = vpop.f32.mrb[0].mxu0
    %v4596 = vadd.f32 0.0, %v4595
    %v4597 = vpop.f32.mrb[0].mxu0
    %4598 = vdwg.mxu0
    %v4599 = vld [vmem:[#allocation2 + $0xe88] sm:$0xff]
    %v4601 = vsel %vm3406, %v4599, 0
    %4603 = vmatprep.subr.mxu0 0.0
    %4604 = vmatpush1.msra.mxu0 %v4523
    %4605 = vmatprep.subr.mxu0 0.0
    %4606 = vmatpush1.msra.mxu0 %v4524
    %4607 = vmatprep.subr.mxu0 0.0
    %4608 = vmatpush1.msra.mxu0 0.0
    %4609 = vmatprep.subr.mxu0 0.0
    %4610 = vmatpush1.msra.mxu0 0.0
    %4611 = vmatprep.subr.mxu0 0.0
    %4612 = vmatpush1.msra.mxu0 0.0
    %4613 = vmatprep.subr.mxu0 0.0
    %4614 = vmatpush1.msra.mxu0 0.0
    %4615 = vmatprep.subr.mxu0 0.0
    %4616 = vmatpush1.msra.mxu0 0.0
    %4617 = vmatprep.subr.mxu0 0.0
    %4618 = vmatpush1.msra.mxu0 0.0
    %4619 = vmatprep.subr.mxu0 0.0
    %4620 = vmatpush1.msra.mxu0 0.0
    %4621 = vmatprep.subr.mxu0 0.0
    %4622 = vmatpush1.msra.mxu0 0.0
    %4623 = vmatprep.subr.mxu0 0.0
    %4624 = vmatpush1.msra.mxu0 0.0
    %4625 = vmatprep.subr.mxu0 0.0
    %4626 = vmatpush1.msra.mxu0 0.0
    %4627 = vmatprep.subr.mxu0 0.0
    %4628 = vmatpush1.msra.mxu0 0.0
    %4629 = vmatprep.subr.mxu0 0.0
    %4630 = vmatpush1.msra.mxu0 0.0
    %4631 = vmatprep.subr.mxu0 0.0
    %4632 = vmatpush1.msra.mxu0 0.0
    %4633 = vmatprep.subr.mxu0 0.0
    %4634 = vmatpush1.msra.mxu0 0.0
    %4635 = vmatprep.subr.mxu0 0.0
    %4636 = vmatpush1.msra.mxu0 0.0
    %4637 = vmatprep.subr.mxu0 0.0
    %4638 = vmatpush1.msra.mxu0 0.0
    %4639 = vmatprep.subr.mxu0 0.0
    %4640 = vmatpush1.msra.mxu0 0.0
    %4641 = vmatprep.subr.mxu0 0.0
    %4642 = vmatpush1.msra.mxu0 0.0
    %4643 = vmatprep.subr.mxu0 0.0
    %4644 = vmatpush1.msra.mxu0 0.0
    %4645 = vmatprep.subr.mxu0 0.0
    %4646 = vmatpush1.msra.mxu0 0.0
    %4647 = vmatprep.subr.mxu0 0.0
    %4648 = vmatpush1.msra.mxu0 0.0
    %4649 = vmatprep.subr.mxu0 0.0
    %4650 = vmatpush1.msra.mxu0 0.0
    %4651 = vmatprep.subr.mxu0 0.0
    %4652 = vmatpush1.msra.mxu0 0.0
    %4653 = vmatprep.subr.mxu0 0.0
    %4654 = vmatpush1.msra.mxu0 0.0
    %4655 = vmatprep.subr.mxu0 0.0
    %4656 = vmatpush1.msra.mxu0 0.0
    %4657 = vmatprep.subr.mxu0 0.0
    %4658 = vmatpush1.msra.mxu0 0.0
    %4659 = vmatprep.subr.mxu0 0.0
    %4660 = vmatpush1.msra.mxu0 0.0
    %4661 = vmatprep.subr.mxu0 0.0
    %4662 = vmatpush1.msra.mxu0 0.0
    %4663 = vmatprep.subr.mxu0 0.0
    %4664 = vmatpush1.msra.mxu0 0.0
    %4665 = vmatprep.subr.mxu0 0.0
    %4666 = vmatpush1.msra.mxu0 0.0
    %4667 = vmatprep.mubr.f32.mxu0 0.0
    %4668 = vmatmul.mubr.f32.gmra.mrb[0].mxu0 %v4601
    %v4669 = vpop.f32.mrb[0].mxu0
    %v4670 = vadd.f32 0.0, %v4669
    %v4671 = vpop.f32.mrb[0].mxu0
    %4672 = vdwg.mxu0
    %v4673 = vmax.f32 %v4596, %v4670
    %v4674 = vld [vmem:[#allocation2 + $0xe90] sm:$0xff]
    %v4675 = vld [vmem:[#allocation2 + $0xe98] sm:$0xff]
    %v4676 = vld [vmem:[#allocation2 + $0xea0] sm:$0xff]
    %v4677 = vld [vmem:[#allocation2 + $0xea8] sm:$0xff]
    %v4678 = vld [vmem:[#allocation2 + $0xeb0] sm:$0xff]
    %v4679 = vld [vmem:[#allocation2 + $0xeb8] sm:$0xff]
    %v4680 = vld [vmem:[#allocation2 + $0xec0] sm:$0xff]
    %v4681 = vld [vmem:[#allocation2 + $0xec8] sm:$0xff]
    %v4682 = vld [vmem:[#allocation2 + $0xed0] sm:$0xff]
    %v4683 = vld [vmem:[#allocation2 + $0xed8] sm:$0xff]
    %v4684 = vld [vmem:[#allocation2 + $0xee0] sm:$0xff]
    %v4685 = vld [vmem:[#allocation2 + $0xee8] sm:$0xff]
    %v4686 = vld [vmem:[#allocation2 + $0xef0] sm:$0xff]
    %v4687 = vld [vmem:[#allocation2 + $0xef8] sm:$0xff]
    %v4688 = vld [vmem:[#allocation2 + $0xf00] sm:$0xff]
    %v4689 = vld [vmem:[#allocation2 + $0xf08] sm:$0xff]
    %4690 = vmatprep.subr.mxu0 0.0
    %4691 = vmatpush1.msra.mxu0 %v4674
    %4692 = vmatprep.subr.mxu0 0.0
    %4693 = vmatpush1.msra.mxu0 %v4675
    %4694 = vmatprep.subr.mxu0 0.0
    %4695 = vmatpush1.msra.mxu0 %v4676
    %4696 = vmatprep.subr.mxu0 0.0
    %4697 = vmatpush1.msra.mxu0 %v4677
    %4698 = vmatprep.subr.mxu0 0.0
    %4699 = vmatpush1.msra.mxu0 %v4678
    %4700 = vmatprep.subr.mxu0 0.0
    %4701 = vmatpush1.msra.mxu0 %v4679
    %4702 = vmatprep.subr.mxu0 0.0
    %4703 = vmatpush1.msra.mxu0 %v4680
    %4704 = vmatprep.subr.mxu0 0.0
    %4705 = vmatpush1.msra.mxu0 %v4681
    %4706 = vmatprep.subr.mxu0 0.0
    %4707 = vmatpush1.msra.mxu0 %v4682
    %4708 = vmatprep.subr.mxu0 0.0
    %4709 = vmatpush1.msra.mxu0 %v4683
    %4710 = vmatprep.subr.mxu0 0.0
    %4711 = vmatpush1.msra.mxu0 %v4684
    %4712 = vmatprep.subr.mxu0 0.0
    %4713 = vmatpush1.msra.mxu0 %v4685
    %4714 = vmatprep.subr.mxu0 0.0
    %4715 = vmatpush1.msra.mxu0 %v4686
    %4716 = vmatprep.subr.mxu0 0.0
    %4717 = vmatpush1.msra.mxu0 %v4687
    %4718 = vmatprep.subr.mxu0 0.0
    %4719 = vmatpush1.msra.mxu0 %v4688
    %4720 = vmatprep.subr.mxu0 0.0
    %4721 = vmatpush1.msra.mxu0 %v4689
    %4722 = vmatprep.subr.mxu0 0.0
    %4723 = vmatpush1.msra.mxu0 0.0
    %4724 = vmatprep.subr.mxu0 0.0
    %4725 = vmatpush1.msra.mxu0 0.0
    %4726 = vmatprep.subr.mxu0 0.0
    %4727 = vmatpush1.msra.mxu0 0.0
    %4728 = vmatprep.subr.mxu0 0.0
    %4729 = vmatpush1.msra.mxu0 0.0
    %4730 = vmatprep.subr.mxu0 0.0
    %4731 = vmatpush1.msra.mxu0 0.0
    %4732 = vmatprep.subr.mxu0 0.0
    %4733 = vmatpush1.msra.mxu0 0.0
    %4734 = vmatprep.subr.mxu0 0.0
    %4735 = vmatpush1.msra.mxu0 0.0
    %4736 = vmatprep.subr.mxu0 0.0
    %4737 = vmatpush1.msra.mxu0 0.0
    %4738 = vmatprep.subr.mxu0 0.0
    %4739 = vmatpush1.msra.mxu0 0.0
    %4740 = vmatprep.subr.mxu0 0.0
    %4741 = vmatpush1.msra.mxu0 0.0
    %4742 = vmatprep.subr.mxu0 0.0
    %4743 = vmatpush1.msra.mxu0 0.0
    %4744 = vmatprep.subr.mxu0 0.0
    %4745 = vmatpush1.msra.mxu0 0.0
    %4746 = vmatprep.subr.mxu0 0.0
    %4747 = vmatpush1.msra.mxu0 0.0
    %4748 = vmatprep.subr.mxu0 0.0
    %4749 = vmatpush1.msra.mxu0 0.0
    %4750 = vmatprep.subr.mxu0 0.0
    %4751 = vmatpush1.msra.mxu0 0.0
    %4752 = vmatprep.subr.mxu0 0.0
    %4753 = vmatpush1.msra.mxu0 0.0
    %4754 = vmatprep.mubr.f32.mxu0 0.0
    %4755 = vmatmul.mubr.f32.gmra.mrb[0].mxu0 %v4673
    %v4756 = vpop.f32.mrb[0].mxu0
    %v4757 = vadd.f32 0.0, %v4756
    %v4758 = vpop.f32.mrb[0].mxu0
    %4759 = vdwg.mxu0
    %v4760 = vld [vmem:[#allocation2 + $0xf10] sm:$0xff]
    %v4761 = vld [vmem:[#allocation2 + $0xf18] sm:$0xff]
    %v4762 = vld [vmem:[#allocation2 + $0xf20] sm:$0xff]
    %v4763 = vld [vmem:[#allocation2 + $0xf28] sm:$0xff]
    %v4764 = vld [vmem:[#allocation2 + $0xf30] sm:$0xff]
    %v4765 = vld [vmem:[#allocation2 + $0xf38] sm:$0xff]
    %v4766 = vld [vmem:[#allocation2 + $0xf40] sm:$0xff]
    %v4767 = vld [vmem:[#allocation2 + $0xf48] sm:$0xff]
    %v4768 = vld [vmem:[#allocation2 + $0xf50] sm:$0xff]
    %v4769 = vld [vmem:[#allocation2 + $0xf58] sm:$0xff]
    %v4770 = vld [vmem:[#allocation2 + $0xf60] sm:$0xff]
    %v4771 = vld [vmem:[#allocation2 + $0xf68] sm:$0xff]
    %v4772 = vld [vmem:[#allocation2 + $0xf70] sm:$0xff]
    %v4773 = vld [vmem:[#allocation2 + $0xf78] sm:$0xff]
    %v4774 = vld [vmem:[#allocation2 + $0xf80] sm:$0xff]
    %v4775 = vld [vmem:[#allocation2 + $0xf88] sm:$0xff]
    %4776 = vmatprep.subr.mxu0 0.0
    %4777 = vmatpush1.msra.mxu0 %v4760
    %4778 = vmatprep.subr.mxu0 0.0
    %4779 = vmatpush1.msra.mxu0 %v4761
    %4780 = vmatprep.subr.mxu0 0.0
    %4781 = vmatpush1.msra.mxu0 %v4762
    %4782 = vmatprep.subr.mxu0 0.0
    %4783 = vmatpush1.msra.mxu0 %v4763
    %4784 = vmatprep.subr.mxu0 0.0
    %4785 = vmatpush1.msra.mxu0 %v4764
    %4786 = vmatprep.subr.mxu0 0.0
    %4787 = vmatpush1.msra.mxu0 %v4765
    %4788 = vmatprep.subr.mxu0 0.0
    %4789 = vmatpush1.msra.mxu0 %v4766
    %4790 = vmatprep.subr.mxu0 0.0
    %4791 = vmatpush1.msra.mxu0 %v4767
    %4792 = vmatprep.subr.mxu0 0.0
    %4793 = vmatpush1.msra.mxu0 %v4768
    %4794 = vmatprep.subr.mxu0 0.0
    %4795 = vmatpush1.msra.mxu0 %v4769
    %4796 = vmatprep.subr.mxu0 0.0
    %4797 = vmatpush1.msra.mxu0 %v4770
    %4798 = vmatprep.subr.mxu0 0.0
    %4799 = vmatpush1.msra.mxu0 %v4771
    %4800 = vmatprep.subr.mxu0 0.0
    %4801 = vmatpush1.msra.mxu0 %v4772
    %4802 = vmatprep.subr.mxu0 0.0
    %4803 = vmatpush1.msra.mxu0 %v4773
    %4804 = vmatprep.subr.mxu0 0.0
    %4805 = vmatpush1.msra.mxu0 %v4774
    %4806 = vmatprep.subr.mxu0 0.0
    %4807 = vmatpush1.msra.mxu0 %v4775
    %4808 = vmatprep.subr.mxu0 0.0
    %4809 = vmatpush1.msra.mxu0 0.0
    %4810 = vmatprep.subr.mxu0 0.0
    %4811 = vmatpush1.msra.mxu0 0.0
    %4812 = vmatprep.subr.mxu0 0.0
    %4813 = vmatpush1.msra.mxu0 0.0
    %4814 = vmatprep.subr.mxu0 0.0
    %4815 = vmatpush1.msra.mxu0 0.0
    %4816 = vmatprep.subr.mxu0 0.0
    %4817 = vmatpush1.msra.mxu0 0.0
    %4818 = vmatprep.subr.mxu0 0.0
    %4819 = vmatpush1.msra.mxu0 0.0
    %4820 = vmatprep.subr.mxu0 0.0
    %4821 = vmatpush1.msra.mxu0 0.0
    %4822 = vmatprep.subr.mxu0 0.0
    %4823 = vmatpush1.msra.mxu0 0.0
    %4824 = vmatprep.subr.mxu0 0.0
    %4825 = vmatpush1.msra.mxu0 0.0
    %4826 = vmatprep.subr.mxu0 0.0
    %4827 = vmatpush1.msra.mxu0 0.0
    %4828 = vmatprep.subr.mxu0 0.0
    %4829 = vmatpush1.msra.mxu0 0.0
    %4830 = vmatprep.subr.mxu0 0.0
    %4831 = vmatpush1.msra.mxu0 0.0
    %4832 = vmatprep.subr.mxu0 0.0
    %4833 = vmatpush1.msra.mxu0 0.0
    %4834 = vmatprep.subr.mxu0 0.0
    %4835 = vmatpush1.msra.mxu0 0.0
    %4836 = vmatprep.subr.mxu0 0.0
    %4837 = vmatpush1.msra.mxu0 0.0
    %4838 = vmatprep.subr.mxu0 0.0
    %4839 = vmatpush1.msra.mxu0 0.0
    %4840 = vmatprep.mubr.f32.mxu0 0.0
    %4841 = vmatmul.mubr.f32.gmra.mrb[0].mxu0 %v4673
    %v4842 = vpop.f32.mrb[0].mxu0
    %v4843 = vadd.f32 0.0, %v4842
    %v4844 = vpop.f32.mrb[0].mxu0
    %4845 = vdwg.mxu0
    %v4846 = vmax.f32 %v4757, %v4843
    %v4847 = vld [vmem:[#allocation2 + $0xf90] sm:$0xff]
    %v4848 = vld [vmem:[#allocation2 + $0xf98] sm:$0xff]
    %v4849 = vld [vmem:[#allocation2 + $0xfa0] sm:$0xff]
    %v4850 = vld [vmem:[#allocation2 + $0xfa8] sm:$0xff]
    %v4851 = vld [vmem:[#allocation2 + $0xfb0] sm:$0xff]
    %v4852 = vld [vmem:[#allocation2 + $0xfb8] sm:$0xff]
    %v4853 = vld [vmem:[#allocation2 + $0xfc0] sm:$0xff]
    %v4854 = vld [vmem:[#allocation2 + $0xfc8] sm:$0xff]
    %v4855 = vld [vmem:[#allocation2 + $0xfd0] sm:$0xff]
    %v4856 = vld [vmem:[#allocation2 + $0xfd8] sm:$0xff]
    %v4857 = vld [vmem:[#allocation2 + $0xfe0] sm:$0xff]
    %v4858 = vld [vmem:[#allocation2 + $0xfe8] sm:$0xff]
    %v4859 = vld [vmem:[#allocation2 + $0xff0] sm:$0xff]
    %v4860 = vld [vmem:[#allocation2 + $0xff8] sm:$0xff]
    %v4861 = vld [vmem:[#allocation2 + $0x1000] sm:$0xff]
    %v4862 = vld [vmem:[#allocation2 + $0x1008] sm:$0xff]
    %4863 = vmatprep.subr.mxu0 0.0
    %4864 = vmatpush1.msra.mxu0 %v4847
    %4865 = vmatprep.subr.mxu0 0.0
    %4866 = vmatpush1.msra.mxu0 %v4848
    %4867 = vmatprep.subr.mxu0 0.0
    %4868 = vmatpush1.msra.mxu0 %v4849
    %4869 = vmatprep.subr.mxu0 0.0
    %4870 = vmatpush1.msra.mxu0 %v4850
    %4871 = vmatprep.subr.mxu0 0.0
    %4872 = vmatpush1.msra.mxu0 %v4851
    %4873 = vmatprep.subr.mxu0 0.0
    %4874 = vmatpush1.msra.mxu0 %v4852
    %4875 = vmatprep.subr.mxu0 0.0
    %4876 = vmatpush1.msra.mxu0 %v4853
    %4877 = vmatprep.subr.mxu0 0.0
    %4878 = vmatpush1.msra.mxu0 %v4854
    %4879 = vmatprep.subr.mxu0 0.0
    %4880 = vmatpush1.msra.mxu0 %v4855
    %4881 = vmatprep.subr.mxu0 0.0
    %4882 = vmatpush1.msra.mxu0 %v4856
    %4883 = vmatprep.subr.mxu0 0.0
    %4884 = vmatpush1.msra.mxu0 %v4857
    %4885 = vmatprep.subr.mxu0 0.0
    %4886 = vmatpush1.msra.mxu0 %v4858
    %4887 = vmatprep.subr.mxu0 0.0
    %4888 = vmatpush1.msra.mxu0 %v4859
    %4889 = vmatprep.subr.mxu0 0.0
    %4890 = vmatpush1.msra.mxu0 %v4860
    %4891 = vmatprep.subr.mxu0 0.0
    %4892 = vmatpush1.msra.mxu0 %v4861
    %4893 = vmatprep.subr.mxu0 0.0
    %4894 = vmatpush1.msra.mxu0 %v4862
    %4895 = vmatprep.subr.mxu0 0.0
    %4896 = vmatpush1.msra.mxu0 0.0
    %4897 = vmatprep.subr.mxu0 0.0
    %4898 = vmatpush1.msra.mxu0 0.0
    %4899 = vmatprep.subr.mxu0 0.0
    %4900 = vmatpush1.msra.mxu0 0.0
    %4901 = vmatprep.subr.mxu0 0.0
    %4902 = vmatpush1.msra.mxu0 0.0
    %4903 = vmatprep.subr.mxu0 0.0
    %4904 = vmatpush1.msra.mxu0 0.0
    %4905 = vmatprep.subr.mxu0 0.0
    %4906 = vmatpush1.msra.mxu0 0.0
    %4907 = vmatprep.subr.mxu0 0.0
    %4908 = vmatpush1.msra.mxu0 0.0
    %4909 = vmatprep.subr.mxu0 0.0
    %4910 = vmatpush1.msra.mxu0 0.0
    %4911 = vmatprep.subr.mxu0 0.0
    %4912 = vmatpush1.msra.mxu0 0.0
    %4913 = vmatprep.subr.mxu0 0.0
    %4914 = vmatpush1.msra.mxu0 0.0
    %4915 = vmatprep.subr.mxu0 0.0
    %4916 = vmatpush1.msra.mxu0 0.0
    %4917 = vmatprep.subr.mxu0 0.0
    %4918 = vmatpush1.msra.mxu0 0.0
    %4919 = vmatprep.subr.mxu0 0.0
    %4920 = vmatpush1.msra.mxu0 0.0
    %4921 = vmatprep.subr.mxu0 0.0
    %4922 = vmatpush1.msra.mxu0 0.0
    %4923 = vmatprep.subr.mxu0 0.0
    %4924 = vmatpush1.msra.mxu0 0.0
    %4925 = vmatprep.subr.mxu0 0.0
    %4926 = vmatpush1.msra.mxu0 0.0
    %4927 = vmatprep.mubr.f32.mxu0 0.0
    %4928 = vmatmul.mubr.f32.gmra.mrb[0].mxu0 %v4846
    %v4929 = vpop.f32.mrb[0].mxu0
    %v4930 = vadd.f32 0.0, %v4929
    %v4931 = vpop.f32.mrb[0].mxu0
    %4932 = vdwg.mxu0
    %v4933 = vld [vmem:[#allocation2 + $0x1010] sm:$0xff]
    %v4934 = vld [vmem:[#allocation2 + $0x1018] sm:$0xff]
    %v4935 = vld [vmem:[#allocation2 + $0x1020] sm:$0xff]
    %v4936 = vld [vmem:[#allocation2 + $0x1028] sm:$0xff]
    %v4937 = vld [vmem:[#allocation2 + $0x1030] sm:$0xff]
    %v4938 = vld [vmem:[#allocation2 + $0x1038] sm:$0xff]
    %v4939 = vld [vmem:[#allocation2 + $0x1040] sm:$0xff]
    %v4940 = vld [vmem:[#allocation2 + $0x1048] sm:$0xff]
    %v4941 = vld [vmem:[#allocation2 + $0x1050] sm:$0xff]
    %v4942 = vld [vmem:[#allocation2 + $0x1058] sm:$0xff]
    %v4943 = vld [vmem:[#allocation2 + $0x1060] sm:$0xff]
    %v4944 = vld [vmem:[#allocation2 + $0x1068] sm:$0xff]
    %v4945 = vld [vmem:[#allocation2 + $0x1070] sm:$0xff]
    %v4946 = vld [vmem:[#allocation2 + $0x1078] sm:$0xff]
    %v4947 = vld [vmem:[#allocation2 + $0x1080] sm:$0xff]
    %v4948 = vld [vmem:[#allocation2 + $0x1088] sm:$0xff]
    %v4949 = vld [vmem:[#allocation2 + $0x1090] sm:$0xff]
    %v4950 = vld [vmem:[#allocation2 + $0x1098] sm:$0xff]
    %v4951 = vld [vmem:[#allocation2 + $0x10a0] sm:$0xff]
    %v4952 = vld [vmem:[#allocation2 + $0x10a8] sm:$0xff]
    %v4953 = vld [vmem:[#allocation2 + $0x10b0] sm:$0xff]
    %v4954 = vld [vmem:[#allocation2 + $0x10b8] sm:$0xff]
    %v4955 = vld [vmem:[#allocation2 + $0x10c0] sm:$0xff]
    %v4956 = vld [vmem:[#allocation2 + $0x10c8] sm:$0xff]
    %v4957 = vld [vmem:[#allocation2 + $0x10d0] sm:$0xff]
    %v4958 = vld [vmem:[#allocation2 + $0x10d8] sm:$0xff]
    %v4959 = vld [vmem:[#allocation2 + $0x10e0] sm:$0xff]
    %v4960 = vld [vmem:[#allocation2 + $0x10e8] sm:$0xff]
    %v4961 = vld [vmem:[#allocation2 + $0x10f0] sm:$0xff]
    %v4962 = vld [vmem:[#allocation2 + $0x10f8] sm:$0xff]
    %v4963 = vld [vmem:[#allocation2 + $0x1100] sm:$0xff]
    %v4964 = vld [vmem:[#allocation2 + $0x1108] sm:$0xff]
    %4965 = vmatprep.subr.mxu0 0.0
    %4966 = vmatpush1.msra.mxu0 %v4949
    %4967 = vmatprep.subr.mxu0 0.0
    %4968 = vmatpush1.msra.mxu0 %v4950
    %4969 = vmatprep.subr.mxu0 0.0
    %4970 = vmatpush1.msra.mxu0 %v4951
    %4971 = vmatprep.subr.mxu0 0.0
    %4972 = vmatpush1.msra.mxu0 %v4952
    %4973 = vmatprep.subr.mxu0 0.0
    %4974 = vmatpush1.msra.mxu0 %v4953
    %4975 = vmatprep.subr.mxu0 0.0
    %4976 = vmatpush1.msra.mxu0 %v4954
    %4977 = vmatprep.subr.mxu0 0.0
    %4978 = vmatpush1.msra.mxu0 %v4955
    %4979 = vmatprep.subr.mxu0 0.0
    %4980 = vmatpush1.msra.mxu0 %v4956
    %4981 = vmatprep.subr.mxu0 0.0
    %4982 = vmatpush1.msra.mxu0 %v4957
    %4983 = vmatprep.subr.mxu0 0.0
    %4984 = vmatpush1.msra.mxu0 %v4958
    %4985 = vmatprep.subr.mxu0 0.0
    %4986 = vmatpush1.msra.mxu0 %v4959
    %4987 = vmatprep.subr.mxu0 0.0
    %4988 = vmatpush1.msra.mxu0 %v4960
    %4989 = vmatprep.subr.mxu0 0.0
    %4990 = vmatpush1.msra.mxu0 %v4961
    %4991 = vmatprep.subr.mxu0 0.0
    %4992 = vmatpush1.msra.mxu0 %v4962
    %4993 = vmatprep.subr.mxu0 0.0
    %4994 = vmatpush1.msra.mxu0 %v4963
    %4995 = vmatprep.subr.mxu0 0.0
    %4996 = vmatpush1.msra.mxu0 %v4964
    %4997 = vmatprep.subr.mxu0 0.0
    %4998 = vmatpush1.msra.mxu0 0.0
    %4999 = vmatprep.subr.mxu0 0.0
    %5000 = vmatpush1.msra.mxu0 0.0
    %5001 = vmatprep.subr.mxu0 0.0
    %5002 = vmatpush1.msra.mxu0 0.0
    %5003 = vmatprep.subr.mxu0 0.0
    %5004 = vmatpush1.msra.mxu0 0.0
    %5005 = vmatprep.subr.mxu0 0.0
    %5006 = vmatpush1.msra.mxu0 0.0
    %5007 = vmatprep.subr.mxu0 0.0
    %5008 = vmatpush1.msra.mxu0 0.0
    %5009 = vmatprep.subr.mxu0 0.0
    %5010 = vmatpush1.msra.mxu0 0.0
    %5011 = vmatprep.subr.mxu0 0.0
    %5012 = vmatpush1.msra.mxu0 0.0
    %5013 = vmatprep.subr.mxu0 0.0
    %5014 = vmatpush1.msra.mxu0 0.0
    %5015 = vmatprep.subr.mxu0 0.0
    %5016 = vmatpush1.msra.mxu0 0.0
    %5017 = vmatprep.subr.mxu0 0.0
    %5018 = vmatpush1.msra.mxu0 0.0
    %5019 = vmatprep.subr.mxu0 0.0
    %5020 = vmatpush1.msra.mxu0 0.0
    %5021 = vmatprep.subr.mxu0 0.0
    %5022 = vmatpush1.msra.mxu0 0.0
    %5023 = vmatprep.subr.mxu0 0.0
    %5024 = vmatpush1.msra.mxu0 0.0
    %5025 = vmatprep.subr.mxu0 0.0
    %5026 = vmatpush1.msra.mxu0 0.0
    %5027 = vmatprep.subr.mxu0 0.0
    %5028 = vmatpush1.msra.mxu0 0.0
    %5029 = vmatprep.mubr.f32.mxu0 0.0
    %5030 = vmatmul.mubr.f32.gmra.mrb[0].mxu0 %v4846
    %v5031 = vpop.f32.mrb[0].mxu0
    %v5032 = vadd.f32 0.0, %v5031
    %v5033 = vpop.f32.mrb[0].mxu0
    %5034 = vdwg.mxu0
    %v5035 = vld [vmem:[#allocation2 + $0x1118] sm:$0xff]
    %vm5036 = vcmask 64512
    %v5038 = vsel %vm5036, %v5035, 0
    %5040 = vmatprep.subr.mxu0 0.0
    %5041 = vmatpush1.msra.mxu0 %v4930
    %5042 = vmatprep.subr.mxu0 0.0
    %5043 = vmatpush1.msra.mxu0 0.0
    %5044 = vmatprep.subr.mxu0 0.0
    %5045 = vmatpush1.msra.mxu0 0.0
    %5046 = vmatprep.subr.mxu0 0.0
    %5047 = vmatpush1.msra.mxu0 0.0
    %5048 = vmatprep.subr.mxu0 0.0
    %5049 = vmatpush1.msra.mxu0 0.0
    %5050 = vmatprep.subr.mxu0 0.0
    %5051 = vmatpush1.msra.mxu0 0.0
    %5052 = vmatprep.subr.mxu0 0.0
    %5053 = vmatpush1.msra.mxu0 0.0
    %5054 = vmatprep.subr.mxu0 0.0
    %5055 = vmatpush1.msra.mxu0 0.0
    %5056 = vmatprep.subr.mxu0 0.0
    %5057 = vmatpush1.msra.mxu0 0.0
    %5058 = vmatprep.subr.mxu0 0.0
    %5059 = vmatpush1.msra.mxu0 0.0
    %5060 = vmatprep.subr.mxu0 0.0
    %5061 = vmatpush1.msra.mxu0 0.0
    %5062 = vmatprep.subr.mxu0 0.0
    %5063 = vmatpush1.msra.mxu0 0.0
    %5064 = vmatprep.subr.mxu0 0.0
    %5065 = vmatpush1.msra.mxu0 0.0
    %5066 = vmatprep.subr.mxu0 0.0
    %5067 = vmatpush1.msra.mxu0 0.0
    %5068 = vmatprep.subr.mxu0 0.0
    %5069 = vmatpush1.msra.mxu0 0.0
    %5070 = vmatprep.subr.mxu0 0.0
    %5071 = vmatpush1.msra.mxu0 0.0
    %5072 = vmatprep.subr.mxu0 0.0
    %5073 = vmatpush1.msra.mxu0 0.0
    %5074 = vmatprep.subr.mxu0 0.0
    %5075 = vmatpush1.msra.mxu0 0.0
    %5076 = vmatprep.subr.mxu0 0.0
    %5077 = vmatpush1.msra.mxu0 0.0
    %5078 = vmatprep.subr.mxu0 0.0
    %5079 = vmatpush1.msra.mxu0 0.0
    %5080 = vmatprep.subr.mxu0 0.0
    %5081 = vmatpush1.msra.mxu0 0.0
    %5082 = vmatprep.subr.mxu0 0.0
    %5083 = vmatpush1.msra.mxu0 0.0
    %5084 = vmatprep.subr.mxu0 0.0
    %5085 = vmatpush1.msra.mxu0 0.0
    %5086 = vmatprep.subr.mxu0 0.0
    %5087 = vmatpush1.msra.mxu0 0.0
    %5088 = vmatprep.subr.mxu0 0.0
    %5089 = vmatpush1.msra.mxu0 0.0
    %5090 = vmatprep.subr.mxu0 0.0
    %5091 = vmatpush1.msra.mxu0 0.0
    %5092 = vmatprep.subr.mxu0 0.0
    %5093 = vmatpush1.msra.mxu0 0.0
    %5094 = vmatprep.subr.mxu0 0.0
    %5095 = vmatpush1.msra.mxu0 0.0
    %5096 = vmatprep.subr.mxu0 0.0
    %5097 = vmatpush1.msra.mxu0 0.0
    %5098 = vmatprep.subr.mxu0 0.0
    %5099 = vmatpush1.msra.mxu0 0.0
    %5100 = vmatprep.subr.mxu0 0.0
    %5101 = vmatpush1.msra.mxu0 0.0
    %5102 = vmatprep.subr.mxu0 0.0
    %5103 = vmatpush1.msra.mxu0 0.0
    %5104 = vmatprep.mubr.f32.mxu0 0.0
    %5105 = vmatmul.mubr.f32.gmra.mrb[0].mxu0 %v5038
    %v5106 = vpop.f32.mrb[0].mxu0
    %v5107 = vadd.f32 0.0, %v5106
    %v5108 = vpop.f32.mrb[0].mxu0
    %5109 = vdwg.mxu0
    %5110 = vmatprep.subr.mxu0 0.0
    %5111 = vmatpush1.msra.mxu0 %v4933
    %5112 = vmatprep.subr.mxu0 0.0
    %5113 = vmatpush1.msra.mxu0 %v4934
    %5114 = vmatprep.subr.mxu0 0.0
    %5115 = vmatpush1.msra.mxu0 %v4935
    %5116 = vmatprep.subr.mxu0 0.0
    %5117 = vmatpush1.msra.mxu0 %v4936
    %5118 = vmatprep.subr.mxu0 0.0
    %5119 = vmatpush1.msra.mxu0 %v4937
    %5120 = vmatprep.subr.mxu0 0.0
    %5121 = vmatpush1.msra.mxu0 %v4938
    %5122 = vmatprep.subr.mxu0 0.0
    %5123 = vmatpush1.msra.mxu0 %v4939
    %5124 = vmatprep.subr.mxu0 0.0
    %5125 = vmatpush1.msra.mxu0 %v4940
    %5126 = vmatprep.subr.mxu0 0.0
    %5127 = vmatpush1.msra.mxu0 %v4941
    %5128 = vmatprep.subr.mxu0 0.0
    %5129 = vmatpush1.msra.mxu0 %v4942
    %5130 = vmatprep.subr.mxu0 0.0
    %5131 = vmatpush1.msra.mxu0 %v4943
    %5132 = vmatprep.subr.mxu0 0.0
    %5133 = vmatpush1.msra.mxu0 %v4944
    %5134 = vmatprep.subr.mxu0 0.0
    %5135 = vmatpush1.msra.mxu0 %v4945
    %5136 = vmatprep.subr.mxu0 0.0
    %5137 = vmatpush1.msra.mxu0 %v4946
    %5138 = vmatprep.subr.mxu0 0.0
    %5139 = vmatpush1.msra.mxu0 %v4947
    %5140 = vmatprep.subr.mxu0 0.0
    %5141 = vmatpush1.msra.mxu0 %v4948
    %5142 = vmatprep.subr.mxu0 0.0
    %5143 = vmatpush1.msra.mxu0 0.0
    %5144 = vmatprep.subr.mxu0 0.0
    %5145 = vmatpush1.msra.mxu0 0.0
    %5146 = vmatprep.subr.mxu0 0.0
    %5147 = vmatpush1.msra.mxu0 0.0
    %5148 = vmatprep.subr.mxu0 0.0
    %5149 = vmatpush1.msra.mxu0 0.0
    %5150 = vmatprep.subr.mxu0 0.0
    %5151 = vmatpush1.msra.mxu0 0.0
    %5152 = vmatprep.subr.mxu0 0.0
    %5153 = vmatpush1.msra.mxu0 0.0
    %5154 = vmatprep.subr.mxu0 0.0
    %5155 = vmatpush1.msra.mxu0 0.0
    %5156 = vmatprep.subr.mxu0 0.0
    %5157 = vmatpush1.msra.mxu0 0.0
    %5158 = vmatprep.subr.mxu0 0.0
    %5159 = vmatpush1.msra.mxu0 0.0
    %5160 = vmatprep.subr.mxu0 0.0
    %5161 = vmatpush1.msra.mxu0 0.0
    %5162 = vmatprep.subr.mxu0 0.0
    %5163 = vmatpush1.msra.mxu0 0.0
    %5164 = vmatprep.subr.mxu0 0.0
    %5165 = vmatpush1.msra.mxu0 0.0
    %5166 = vmatprep.subr.mxu0 0.0
    %5167 = vmatpush1.msra.mxu0 0.0
    %5168 = vmatprep.subr.mxu0 0.0
    %5169 = vmatpush1.msra.mxu0 0.0
    %5170 = vmatprep.subr.mxu0 0.0
    %5171 = vmatpush1.msra.mxu0 0.0
    %5172 = vmatprep.subr.mxu0 0.0
    %5173 = vmatpush1.msra.mxu0 0.0
    %5174 = vmatprep.mubr.f32.mxu0 0.0
    %5175 = vmatmul.mubr.f32.gmra.mrb[0].mxu0 %v4846
    %v5176 = vpop.f32.mrb[0].mxu0
    %v5177 = vadd.f32 %v5107, %v5176
    %v5178 = vpop.f32.mrb[0].mxu0
    %5179 = vdwg.mxu0
    %v5180 = vld [vmem:[#allocation2 + $0x1120] sm:$0xff]
    %v5182 = vsel %vm5036, %v5180, 0
    %5184 = vmatprep.subr.mxu0 0.0
    %5185 = vmatpush1.msra.mxu0 %v5032
    %5186 = vmatprep.subr.mxu0 0.0
    %5187 = vmatpush1.msra.mxu0 0.0
    %5188 = vmatprep.subr.mxu0 0.0
    %5189 = vmatpush1.msra.mxu0 0.0
    %5190 = vmatprep.subr.mxu0 0.0
    %5191 = vmatpush1.msra.mxu0 0.0
    %5192 = vmatprep.subr.mxu0 0.0
    %5193 = vmatpush1.msra.mxu0 0.0
    %5194 = vmatprep.subr.mxu0 0.0
    %5195 = vmatpush1.msra.mxu0 0.0
    %5196 = vmatprep.subr.mxu0 0.0
    %5197 = vmatpush1.msra.mxu0 0.0
    %5198 = vmatprep.subr.mxu0 0.0
    %5199 = vmatpush1.msra.mxu0 0.0
    %5200 = vmatprep.subr.mxu0 0.0
    %5201 = vmatpush1.msra.mxu0 0.0
    %5202 = vmatprep.subr.mxu0 0.0
    %5203 = vmatpush1.msra.mxu0 0.0
    %5204 = vmatprep.subr.mxu0 0.0
    %5205 = vmatpush1.msra.mxu0 0.0
    %5206 = vmatprep.subr.mxu0 0.0
    %5207 = vmatpush1.msra.mxu0 0.0
    %5208 = vmatprep.subr.mxu0 0.0
    %5209 = vmatpush1.msra.mxu0 0.0
    %5210 = vmatprep.subr.mxu0 0.0
    %5211 = vmatpush1.msra.mxu0 0.0
    %5212 = vmatprep.subr.mxu0 0.0
    %5213 = vmatpush1.msra.mxu0 0.0
    %5214 = vmatprep.subr.mxu0 0.0
    %5215 = vmatpush1.msra.mxu0 0.0
    %5216 = vmatprep.subr.mxu0 0.0
    %5217 = vmatpush1.msra.mxu0 0.0
    %5218 = vmatprep.subr.mxu0 0.0
    %5219 = vmatpush1.msra.mxu0 0.0
    %5220 = vmatprep.subr.mxu0 0.0
    %5221 = vmatpush1.msra.mxu0 0.0
    %5222 = vmatprep.subr.mxu0 0.0
    %5223 = vmatpush1.msra.mxu0 0.0
    %5224 = vmatprep.subr.mxu0 0.0
    %5225 = vmatpush1.msra.mxu0 0.0
    %5226 = vmatprep.subr.mxu0 0.0
    %5227 = vmatpush1.msra.mxu0 0.0
    %5228 = vmatprep.subr.mxu0 0.0
    %5229 = vmatpush1.msra.mxu0 0.0
    %5230 = vmatprep.subr.mxu0 0.0
    %5231 = vmatpush1.msra.mxu0 0.0
    %5232 = vmatprep.subr.mxu0 0.0
    %5233 = vmatpush1.msra.mxu0 0.0
    %5234 = vmatprep.subr.mxu0 0.0
    %5235 = vmatpush1.msra.mxu0 0.0
    %5236 = vmatprep.subr.mxu0 0.0
    %5237 = vmatpush1.msra.mxu0 0.0
    %5238 = vmatprep.subr.mxu0 0.0
    %5239 = vmatpush1.msra.mxu0 0.0
    %5240 = vmatprep.subr.mxu0 0.0
    %5241 = vmatpush1.msra.mxu0 0.0
    %5242 = vmatprep.subr.mxu0 0.0
    %5243 = vmatpush1.msra.mxu0 0.0
    %5244 = vmatprep.subr.mxu0 0.0
    %5245 = vmatpush1.msra.mxu0 0.0
    %5246 = vmatprep.subr.mxu0 0.0
    %5247 = vmatpush1.msra.mxu0 0.0
    %5248 = vmatprep.mubr.f32.mxu0 0.0
    %5249 = vmatmul.mubr.f32.gmra.mrb[0].mxu0 %v5182
    %v5250 = vpop.f32.mrb[0].mxu0
    %v5251 = vadd.f32 0.0, %v5250
    %v5252 = vpop.f32.mrb[0].mxu0
    %5253 = vdwg.mxu0
    %v5254 = vadd.f32 %v5177, %v5251
    %v5255 = vld [vmem:[#allocation2 + $0x1110] sm:$0x1]
    %v5256 = vlaneseq
    %v5257 = vshrl.u32 %v5256, 7
    %v5258 = vsub.s32 0, %v5257
    %v5259 = vrot.slane %v5255, %v5258
    %v5260 = vadd.f32 %v5254, %v5259
    %v5261 = vmax.f32 %v5260, 0.0
    %v5262 = vld [vmem:[#allocation2 + $0x1128] sm:$0xff]
    %v5263 = vld [vmem:[#allocation2 + $0x1130] sm:$0xff]
    %v5264 = vld [vmem:[#allocation2 + $0x1138] sm:$0xff]
    %v5265 = vld [vmem:[#allocation2 + $0x1140] sm:$0xff]
    %v5266 = vld [vmem:[#allocation2 + $0x1148] sm:$0xff]
    %v5267 = vld [vmem:[#allocation2 + $0x1150] sm:$0xff]
    %v5268 = vld [vmem:[#allocation2 + $0x1158] sm:$0xff]
    %v5269 = vld [vmem:[#allocation2 + $0x1160] sm:$0xff]
    %v5270 = vld [vmem:[#allocation2 + $0x1168] sm:$0xff]
    %v5271 = vld [vmem:[#allocation2 + $0x1170] sm:$0xff]
    %v5272 = vld [vmem:[#allocation2 + $0x1178] sm:$0xff]
    %v5273 = vld [vmem:[#allocation2 + $0x1180] sm:$0xff]
    %v5274 = vld [vmem:[#allocation2 + $0x1188] sm:$0xff]
    %v5275 = vld [vmem:[#allocation2 + $0x1190] sm:$0xff]
    %v5276 = vld [vmem:[#allocation2 + $0x1198] sm:$0xff]
    %v5277 = vld [vmem:[#allocation2 + $0x11a0] sm:$0xff]
    %5278 = vmatprep.subr.mxu0 0.0
    %5279 = vmatpush1.msra.mxu0 %v5262
    %5280 = vmatprep.subr.mxu0 0.0
    %5281 = vmatpush1.msra.mxu0 %v5263
    %5282 = vmatprep.subr.mxu0 0.0
    %5283 = vmatpush1.msra.mxu0 %v5264
    %5284 = vmatprep.subr.mxu0 0.0
    %5285 = vmatpush1.msra.mxu0 %v5265
    %5286 = vmatprep.subr.mxu0 0.0
    %5287 = vmatpush1.msra.mxu0 %v5266
    %5288 = vmatprep.subr.mxu0 0.0
    %5289 = vmatpush1.msra.mxu0 %v5267
    %5290 = vmatprep.subr.mxu0 0.0
    %5291 = vmatpush1.msra.mxu0 %v5268
    %5292 = vmatprep.subr.mxu0 0.0
    %5293 = vmatpush1.msra.mxu0 %v5269
    %5294 = vmatprep.subr.mxu0 0.0
    %5295 = vmatpush1.msra.mxu0 %v5270
    %5296 = vmatprep.subr.mxu0 0.0
    %5297 = vmatpush1.msra.mxu0 %v5271
    %5298 = vmatprep.subr.mxu0 0.0
    %5299 = vmatpush1.msra.mxu0 %v5272
    %5300 = vmatprep.subr.mxu0 0.0
    %5301 = vmatpush1.msra.mxu0 %v5273
    %5302 = vmatprep.subr.mxu0 0.0
    %5303 = vmatpush1.msra.mxu0 %v5274
    %5304 = vmatprep.subr.mxu0 0.0
    %5305 = vmatpush1.msra.mxu0 %v5275
    %5306 = vmatprep.subr.mxu0 0.0
    %5307 = vmatpush1.msra.mxu0 %v5276
    %5308 = vmatprep.subr.mxu0 0.0
    %5309 = vmatpush1.msra.mxu0 %v5277
    %5310 = vmatprep.subr.mxu0 0.0
    %5311 = vmatpush1.msra.mxu0 0.0
    %5312 = vmatprep.subr.mxu0 0.0
    %5313 = vmatpush1.msra.mxu0 0.0
    %5314 = vmatprep.subr.mxu0 0.0
    %5315 = vmatpush1.msra.mxu0 0.0
    %5316 = vmatprep.subr.mxu0 0.0
    %5317 = vmatpush1.msra.mxu0 0.0
    %5318 = vmatprep.subr.mxu0 0.0
    %5319 = vmatpush1.msra.mxu0 0.0
    %5320 = vmatprep.subr.mxu0 0.0
    %5321 = vmatpush1.msra.mxu0 0.0
    %5322 = vmatprep.subr.mxu0 0.0
    %5323 = vmatpush1.msra.mxu0 0.0
    %5324 = vmatprep.subr.mxu0 0.0
    %5325 = vmatpush1.msra.mxu0 0.0
    %5326 = vmatprep.subr.mxu0 0.0
    %5327 = vmatpush1.msra.mxu0 0.0
    %5328 = vmatprep.subr.mxu0 0.0
    %5329 = vmatpush1.msra.mxu0 0.0
    %5330 = vmatprep.subr.mxu0 0.0
    %5331 = vmatpush1.msra.mxu0 0.0
    %5332 = vmatprep.subr.mxu0 0.0
    %5333 = vmatpush1.msra.mxu0 0.0
    %5334 = vmatprep.subr.mxu0 0.0
    %5335 = vmatpush1.msra.mxu0 0.0
    %5336 = vmatprep.subr.mxu0 0.0
    %5337 = vmatpush1.msra.mxu0 0.0
    %5338 = vmatprep.subr.mxu0 0.0
    %5339 = vmatpush1.msra.mxu0 0.0
    %5340 = vmatprep.subr.mxu0 0.0
    %5341 = vmatpush1.msra.mxu0 0.0
    %5342 = vmatprep.mubr.f32.mxu0 0.0
    %5343 = vmatmul.mubr.f32.gmra.mrb[0].mxu0 %v5261
    %v5344 = vpop.f32.mrb[0].mxu0
    %v5345 = vadd.f32 0.0, %v5344
    %v5346 = vpop.f32.mrb[0].mxu0
    %5347 = vdwg.mxu0
    %v5348 = vld [vmem:[#allocation2 + $0x11a8] sm:$0xff]
    %v5349 = vld [vmem:[#allocation2 + $0x11b0] sm:$0xff]
    %v5350 = vld [vmem:[#allocation2 + $0x11b8] sm:$0xff]
    %v5351 = vld [vmem:[#allocation2 + $0x11c0] sm:$0xff]
    %v5352 = vld [vmem:[#allocation2 + $0x11c8] sm:$0xff]
    %v5353 = vld [vmem:[#allocation2 + $0x11d0] sm:$0xff]
    %v5354 = vld [vmem:[#allocation2 + $0x11d8] sm:$0xff]
    %v5355 = vld [vmem:[#allocation2 + $0x11e0] sm:$0xff]
    %v5356 = vld [vmem:[#allocation2 + $0x11e8] sm:$0xff]
    %v5357 = vld [vmem:[#allocation2 + $0x11f0] sm:$0xff]
    %v5358 = vld [vmem:[#allocation2 + $0x11f8] sm:$0xff]
    %v5359 = vld [vmem:[#allocation2 + $0x1200] sm:$0xff]
    %v5360 = vld [vmem:[#allocation2 + $0x1208] sm:$0xff]
    %v5361 = vld [vmem:[#allocation2 + $0x1210] sm:$0xff]
    %v5362 = vld [vmem:[#allocation2 + $0x1218] sm:$0xff]
    %v5363 = vld [vmem:[#allocation2 + $0x1220] sm:$0xff]
    %v5364 = vld [vmem:[#allocation2 + $0x1228] sm:$0xff]
    %v5365 = vld [vmem:[#allocation2 + $0x1230] sm:$0xff]
    %v5366 = vld [vmem:[#allocation2 + $0x1238] sm:$0xff]
    %v5367 = vld [vmem:[#allocation2 + $0x1240] sm:$0xff]
    %v5368 = vld [vmem:[#allocation2 + $0x1248] sm:$0xff]
    %v5369 = vld [vmem:[#allocation2 + $0x1250] sm:$0xff]
    %v5370 = vld [vmem:[#allocation2 + $0x1258] sm:$0xff]
    %v5371 = vld [vmem:[#allocation2 + $0x1260] sm:$0xff]
    %v5372 = vld [vmem:[#allocation2 + $0x1268] sm:$0xff]
    %v5373 = vld [vmem:[#allocation2 + $0x1270] sm:$0xff]
    %v5374 = vld [vmem:[#allocation2 + $0x1278] sm:$0xff]
    %v5375 = vld [vmem:[#allocation2 + $0x1280] sm:$0xff]
    %v5376 = vld [vmem:[#allocation2 + $0x1288] sm:$0xff]
    %v5377 = vld [vmem:[#allocation2 + $0x1290] sm:$0xff]
    %v5378 = vld [vmem:[#allocation2 + $0x1298] sm:$0xff]
    %v5379 = vld [vmem:[#allocation2 + $0x12a0] sm:$0xff]
    %5380 = vmatprep.subr.mxu0 0.0
    %5381 = vmatpush1.msra.mxu0 %v5364
    %5382 = vmatprep.subr.mxu0 0.0
    %5383 = vmatpush1.msra.mxu0 %v5365
    %5384 = vmatprep.subr.mxu0 0.0
    %5385 = vmatpush1.msra.mxu0 %v5366
    %5386 = vmatprep.subr.mxu0 0.0
    %5387 = vmatpush1.msra.mxu0 %v5367
    %5388 = vmatprep.subr.mxu0 0.0
    %5389 = vmatpush1.msra.mxu0 %v5368
    %5390 = vmatprep.subr.mxu0 0.0
    %5391 = vmatpush1.msra.mxu0 %v5369
    %5392 = vmatprep.subr.mxu0 0.0
    %5393 = vmatpush1.msra.mxu0 %v5370
    %5394 = vmatprep.subr.mxu0 0.0
    %5395 = vmatpush1.msra.mxu0 %v5371
    %5396 = vmatprep.subr.mxu0 0.0
    %5397 = vmatpush1.msra.mxu0 %v5372
    %5398 = vmatprep.subr.mxu0 0.0
    %5399 = vmatpush1.msra.mxu0 %v5373
    %5400 = vmatprep.subr.mxu0 0.0
    %5401 = vmatpush1.msra.mxu0 %v5374
    %5402 = vmatprep.subr.mxu0 0.0
    %5403 = vmatpush1.msra.mxu0 %v5375
    %5404 = vmatprep.subr.mxu0 0.0
    %5405 = vmatpush1.msra.mxu0 %v5376
    %5406 = vmatprep.subr.mxu0 0.0
    %5407 = vmatpush1.msra.mxu0 %v5377
    %5408 = vmatprep.subr.mxu0 0.0
    %5409 = vmatpush1.msra.mxu0 %v5378
    %5410 = vmatprep.subr.mxu0 0.0
    %5411 = vmatpush1.msra.mxu0 %v5379
    %5412 = vmatprep.subr.mxu0 0.0
    %5413 = vmatpush1.msra.mxu0 0.0
    %5414 = vmatprep.subr.mxu0 0.0
    %5415 = vmatpush1.msra.mxu0 0.0
    %5416 = vmatprep.subr.mxu0 0.0
    %5417 = vmatpush1.msra.mxu0 0.0
    %5418 = vmatprep.subr.mxu0 0.0
    %5419 = vmatpush1.msra.mxu0 0.0
    %5420 = vmatprep.subr.mxu0 0.0
    %5421 = vmatpush1.msra.mxu0 0.0
    %5422 = vmatprep.subr.mxu0 0.0
    %5423 = vmatpush1.msra.mxu0 0.0
    %5424 = vmatprep.subr.mxu0 0.0
    %5425 = vmatpush1.msra.mxu0 0.0
    %5426 = vmatprep.subr.mxu0 0.0
    %5427 = vmatpush1.msra.mxu0 0.0
    %5428 = vmatprep.subr.mxu0 0.0
    %5429 = vmatpush1.msra.mxu0 0.0
    %5430 = vmatprep.subr.mxu0 0.0
    %5431 = vmatpush1.msra.mxu0 0.0
    %5432 = vmatprep.subr.mxu0 0.0
    %5433 = vmatpush1.msra.mxu0 0.0
    %5434 = vmatprep.subr.mxu0 0.0
    %5435 = vmatpush1.msra.mxu0 0.0
    %5436 = vmatprep.subr.mxu0 0.0
    %5437 = vmatpush1.msra.mxu0 0.0
    %5438 = vmatprep.subr.mxu0 0.0
    %5439 = vmatpush1.msra.mxu0 0.0
    %5440 = vmatprep.subr.mxu0 0.0
    %5441 = vmatpush1.msra.mxu0 0.0
    %5442 = vmatprep.subr.mxu0 0.0
    %5443 = vmatpush1.msra.mxu0 0.0
    %5444 = vmatprep.mubr.f32.mxu0 0.0
    %5445 = vmatmul.mubr.f32.gmra.mrb[0].mxu0 %v5261
    %v5446 = vpop.f32.mrb[0].mxu0
    %v5447 = vadd.f32 0.0, %v5446
    %v5448 = vpop.f32.mrb[0].mxu0
    %5449 = vdwg.mxu0
    %5450 = vmatprep.subr.mxu0 0.0
    %5451 = vmatpush1.msra.mxu0 %v5345
    %5452 = vmatprep.subr.mxu0 0.0
    %5453 = vmatpush1.msra.mxu0 0.0
    %5454 = vmatprep.subr.mxu0 0.0
    %5455 = vmatpush1.msra.mxu0 0.0
    %5456 = vmatprep.subr.mxu0 0.0
    %5457 = vmatpush1.msra.mxu0 0.0
    %5458 = vmatprep.subr.mxu0 0.0
    %5459 = vmatpush1.msra.mxu0 0.0
    %5460 = vmatprep.subr.mxu0 0.0
    %5461 = vmatpush1.msra.mxu0 0.0
    %5462 = vmatprep.subr.mxu0 0.0
    %5463 = vmatpush1.msra.mxu0 0.0
    %5464 = vmatprep.subr.mxu0 0.0
    %5465 = vmatpush1.msra.mxu0 0.0
    %5466 = vmatprep.subr.mxu0 0.0
    %5467 = vmatpush1.msra.mxu0 0.0
    %5468 = vmatprep.subr.mxu0 0.0
    %5469 = vmatpush1.msra.mxu0 0.0
    %5470 = vmatprep.subr.mxu0 0.0
    %5471 = vmatpush1.msra.mxu0 0.0
    %5472 = vmatprep.subr.mxu0 0.0
    %5473 = vmatpush1.msra.mxu0 0.0
    %5474 = vmatprep.subr.mxu0 0.0
    %5475 = vmatpush1.msra.mxu0 0.0
    %5476 = vmatprep.subr.mxu0 0.0
    %5477 = vmatpush1.msra.mxu0 0.0
    %5478 = vmatprep.subr.mxu0 0.0
    %5479 = vmatpush1.msra.mxu0 0.0
    %5480 = vmatprep.subr.mxu0 0.0
    %5481 = vmatpush1.msra.mxu0 0.0
    %5482 = vmatprep.subr.mxu0 0.0
    %5483 = vmatpush1.msra.mxu0 0.0
    %5484 = vmatprep.subr.mxu0 0.0
    %5485 = vmatpush1.msra.mxu0 0.0
    %5486 = vmatprep.subr.mxu0 0.0
    %5487 = vmatpush1.msra.mxu0 0.0
    %5488 = vmatprep.subr.mxu0 0.0
    %5489 = vmatpush1.msra.mxu0 0.0
    %5490 = vmatprep.subr.mxu0 0.0
    %5491 = vmatpush1.msra.mxu0 0.0
    %5492 = vmatprep.subr.mxu0 0.0
    %5493 = vmatpush1.msra.mxu0 0.0
    %5494 = vmatprep.subr.mxu0 0.0
    %5495 = vmatpush1.msra.mxu0 0.0
    %5496 = vmatprep.subr.mxu0 0.0
    %5497 = vmatpush1.msra.mxu0 0.0
    %5498 = vmatprep.subr.mxu0 0.0
    %5499 = vmatpush1.msra.mxu0 0.0
    %5500 = vmatprep.subr.mxu0 0.0
    %5501 = vmatpush1.msra.mxu0 0.0
    %5502 = vmatprep.subr.mxu0 0.0
    %5503 = vmatpush1.msra.mxu0 0.0
    %5504 = vmatprep.subr.mxu0 0.0
    %5505 = vmatpush1.msra.mxu0 0.0
    %5506 = vmatprep.subr.mxu0 0.0
    %5507 = vmatpush1.msra.mxu0 0.0
    %5508 = vmatprep.subr.mxu0 0.0
    %5509 = vmatpush1.msra.mxu0 0.0
    %5510 = vmatprep.subr.mxu0 0.0
    %5511 = vmatpush1.msra.mxu0 0.0
    %5512 = vmatprep.subr.mxu0 0.0
    %5513 = vmatpush1.msra.mxu0 0.0
    %5514 = vmatprep.mubr.f32.mxu0 0.0
    %5515 = vmatmul.mubr.f32.gmra.mrb[0].mxu0 %v5038
    %v5516 = vpop.f32.mrb[0].mxu0
    %v5517 = vadd.f32 0.0, %v5516
    %v5518 = vpop.f32.mrb[0].mxu0
    %5519 = vdwg.mxu0
    %5520 = vmatprep.subr.mxu0 0.0
    %5521 = vmatpush1.msra.mxu0 %v5348
    %5522 = vmatprep.subr.mxu0 0.0
    %5523 = vmatpush1.msra.mxu0 %v5349
    %5524 = vmatprep.subr.mxu0 0.0
    %5525 = vmatpush1.msra.mxu0 %v5350
    %5526 = vmatprep.subr.mxu0 0.0
    %5527 = vmatpush1.msra.mxu0 %v5351
    %5528 = vmatprep.subr.mxu0 0.0
    %5529 = vmatpush1.msra.mxu0 %v5352
    %5530 = vmatprep.subr.mxu0 0.0
    %5531 = vmatpush1.msra.mxu0 %v5353
    %5532 = vmatprep.subr.mxu0 0.0
    %5533 = vmatpush1.msra.mxu0 %v5354
    %5534 = vmatprep.subr.mxu0 0.0
    %5535 = vmatpush1.msra.mxu0 %v5355
    %5536 = vmatprep.subr.mxu0 0.0
    %5537 = vmatpush1.msra.mxu0 %v5356
    %5538 = vmatprep.subr.mxu0 0.0
    %5539 = vmatpush1.msra.mxu0 %v5357
    %5540 = vmatprep.subr.mxu0 0.0
    %5541 = vmatpush1.msra.mxu0 %v5358
    %5542 = vmatprep.subr.mxu0 0.0
    %5543 = vmatpush1.msra.mxu0 %v5359
    %5544 = vmatprep.subr.mxu0 0.0
    %5545 = vmatpush1.msra.mxu0 %v5360
    %5546 = vmatprep.subr.mxu0 0.0
    %5547 = vmatpush1.msra.mxu0 %v5361
    %5548 = vmatprep.subr.mxu0 0.0
    %5549 = vmatpush1.msra.mxu0 %v5362
    %5550 = vmatprep.subr.mxu0 0.0
    %5551 = vmatpush1.msra.mxu0 %v5363
    %5552 = vmatprep.subr.mxu0 0.0
    %5553 = vmatpush1.msra.mxu0 0.0
    %5554 = vmatprep.subr.mxu0 0.0
    %5555 = vmatpush1.msra.mxu0 0.0
    %5556 = vmatprep.subr.mxu0 0.0
    %5557 = vmatpush1.msra.mxu0 0.0
    %5558 = vmatprep.subr.mxu0 0.0
    %5559 = vmatpush1.msra.mxu0 0.0
    %5560 = vmatprep.subr.mxu0 0.0
    %5561 = vmatpush1.msra.mxu0 0.0
    %5562 = vmatprep.subr.mxu0 0.0
    %5563 = vmatpush1.msra.mxu0 0.0
    %5564 = vmatprep.subr.mxu0 0.0
    %5565 = vmatpush1.msra.mxu0 0.0
    %5566 = vmatprep.subr.mxu0 0.0
    %5567 = vmatpush1.msra.mxu0 0.0
    %5568 = vmatprep.subr.mxu0 0.0
    %5569 = vmatpush1.msra.mxu0 0.0
    %5570 = vmatprep.subr.mxu0 0.0
    %5571 = vmatpush1.msra.mxu0 0.0
    %5572 = vmatprep.subr.mxu0 0.0
    %5573 = vmatpush1.msra.mxu0 0.0
    %5574 = vmatprep.subr.mxu0 0.0
    %5575 = vmatpush1.msra.mxu0 0.0
    %5576 = vmatprep.subr.mxu0 0.0
    %5577 = vmatpush1.msra.mxu0 0.0
    %5578 = vmatprep.subr.mxu0 0.0
    %5579 = vmatpush1.msra.mxu0 0.0
    %5580 = vmatprep.subr.mxu0 0.0
    %5581 = vmatpush1.msra.mxu0 0.0
    %5582 = vmatprep.subr.mxu0 0.0
    %5583 = vmatpush1.msra.mxu0 0.0
    %5584 = vmatprep.mubr.f32.mxu0 0.0
    %5585 = vmatmul.mubr.f32.gmra.mrb[0].mxu0 %v5261
    %v5586 = vpop.f32.mrb[0].mxu0
    %v5587 = vadd.f32 %v5517, %v5586
    %v5588 = vpop.f32.mrb[0].mxu0
    %5589 = vdwg.mxu0
    %5590 = vmatprep.subr.mxu0 0.0
    %5591 = vmatpush1.msra.mxu0 %v5447
    %5592 = vmatprep.subr.mxu0 0.0
    %5593 = vmatpush1.msra.mxu0 0.0
    %5594 = vmatprep.subr.mxu0 0.0
    %5595 = vmatpush1.msra.mxu0 0.0
    %5596 = vmatprep.subr.mxu0 0.0
    %5597 = vmatpush1.msra.mxu0 0.0
    %5598 = vmatprep.subr.mxu0 0.0
    %5599 = vmatpush1.msra.mxu0 0.0
    %5600 = vmatprep.subr.mxu0 0.0
    %5601 = vmatpush1.msra.mxu0 0.0
    %5602 = vmatprep.subr.mxu0 0.0
    %5603 = vmatpush1.msra.mxu0 0.0
    %5604 = vmatprep.subr.mxu0 0.0
    %5605 = vmatpush1.msra.mxu0 0.0
    %5606 = vmatprep.subr.mxu0 0.0
    %5607 = vmatpush1.msra.mxu0 0.0
    %5608 = vmatprep.subr.mxu0 0.0
    %5609 = vmatpush1.msra.mxu0 0.0
    %5610 = vmatprep.subr.mxu0 0.0
    %5611 = vmatpush1.msra.mxu0 0.0
    %5612 = vmatprep.subr.mxu0 0.0
    %5613 = vmatpush1.msra.mxu0 0.0
    %5614 = vmatprep.subr.mxu0 0.0
    %5615 = vmatpush1.msra.mxu0 0.0
    %5616 = vmatprep.subr.mxu0 0.0
    %5617 = vmatpush1.msra.mxu0 0.0
    %5618 = vmatprep.subr.mxu0 0.0
    %5619 = vmatpush1.msra.mxu0 0.0
    %5620 = vmatprep.subr.mxu0 0.0
    %5621 = vmatpush1.msra.mxu0 0.0
    %5622 = vmatprep.subr.mxu0 0.0
    %5623 = vmatpush1.msra.mxu0 0.0
    %5624 = vmatprep.subr.mxu0 0.0
    %5625 = vmatpush1.msra.mxu0 0.0
    %5626 = vmatprep.subr.mxu0 0.0
    %5627 = vmatpush1.msra.mxu0 0.0
    %5628 = vmatprep.subr.mxu0 0.0
    %5629 = vmatpush1.msra.mxu0 0.0
    %5630 = vmatprep.subr.mxu0 0.0
    %5631 = vmatpush1.msra.mxu0 0.0
    %5632 = vmatprep.subr.mxu0 0.0
    %5633 = vmatpush1.msra.mxu0 0.0
    %5634 = vmatprep.subr.mxu0 0.0
    %5635 = vmatpush1.msra.mxu0 0.0
    %5636 = vmatprep.subr.mxu0 0.0
    %5637 = vmatpush1.msra.mxu0 0.0
    %5638 = vmatprep.subr.mxu0 0.0
    %5639 = vmatpush1.msra.mxu0 0.0
    %5640 = vmatprep.subr.mxu0 0.0
    %5641 = vmatpush1.msra.mxu0 0.0
    %5642 = vmatprep.subr.mxu0 0.0
    %5643 = vmatpush1.msra.mxu0 0.0
    %5644 = vmatprep.subr.mxu0 0.0
    %5645 = vmatpush1.msra.mxu0 0.0
    %5646 = vmatprep.subr.mxu0 0.0
    %5647 = vmatpush1.msra.mxu0 0.0
    %5648 = vmatprep.subr.mxu0 0.0
    %5649 = vmatpush1.msra.mxu0 0.0
    %5650 = vmatprep.subr.mxu0 0.0
    %5651 = vmatpush1.msra.mxu0 0.0
    %5652 = vmatprep.subr.mxu0 0.0
    %5653 = vmatpush1.msra.mxu0 0.0
    %5654 = vmatprep.mubr.f32.mxu0 0.0
    %5655 = vmatmul.mubr.f32.gmra.mrb[0].mxu0 %v5182
    %v5656 = vpop.f32.mrb[0].mxu0
    %v5657 = vadd.f32 0.0, %v5656
    %v5658 = vpop.f32.mrb[0].mxu0
    %5659 = vdwg.mxu0
    %v5660 = vadd.f32 %v5587, %v5657
    %v5661 = vld [vmem:[#allocation2 + $0x12a8] sm:$0x1]
    %v5662 = vlaneseq
    %v5663 = vshrl.u32 %v5662, 7
    %v5664 = vsub.s32 0, %v5663
    %v5665 = vrot.slane %v5661, %v5664
    %v5666 = vadd.f32 %v5660, %v5665
    %v5667 = vmax.f32 %v5666, 0.0
    %v5668 = vld [vmem:[#allocation2 + $0x12b0] sm:$0xff]
    %v5669 = vld [vmem:[#allocation2 + $0x12b8] sm:$0xff]
    %v5670 = vld [vmem:[#allocation2 + $0x12c0] sm:$0xff]
    %v5671 = vld [vmem:[#allocation2 + $0x12c8] sm:$0xff]
    %v5672 = vld [vmem:[#allocation2 + $0x12d0] sm:$0xff]
    %v5673 = vld [vmem:[#allocation2 + $0x12d8] sm:$0xff]
    %v5674 = vld [vmem:[#allocation2 + $0x12e0] sm:$0xff]
    %v5675 = vld [vmem:[#allocation2 + $0x12e8] sm:$0xff]
    %v5676 = vld [vmem:[#allocation2 + $0x12f0] sm:$0xff]
    %v5677 = vld [vmem:[#allocation2 + $0x12f8] sm:$0xff]
    %v5678 = vld [vmem:[#allocation2 + $0x1300] sm:$0xff]
    %v5679 = vld [vmem:[#allocation2 + $0x1308] sm:$0xff]
    %v5680 = vld [vmem:[#allocation2 + $0x1310] sm:$0xff]
    %v5681 = vld [vmem:[#allocation2 + $0x1318] sm:$0xff]
    %v5682 = vld [vmem:[#allocation2 + $0x1320] sm:$0xff]
    %v5683 = vld [vmem:[#allocation2 + $0x1328] sm:$0xff]
    %5684 = vmatprep.subr.mxu0 0.0
    %5685 = vmatpush1.msra.mxu0 %v5668
    %5686 = vmatprep.subr.mxu0 0.0
    %5687 = vmatpush1.msra.mxu0 %v5669
    %5688 = vmatprep.subr.mxu0 0.0
    %5689 = vmatpush1.msra.mxu0 %v5670
    %5690 = vmatprep.subr.mxu0 0.0
    %5691 = vmatpush1.msra.mxu0 %v5671
    %5692 = vmatprep.subr.mxu0 0.0
    %5693 = vmatpush1.msra.mxu0 %v5672
    %5694 = vmatprep.subr.mxu0 0.0
    %5695 = vmatpush1.msra.mxu0 %v5673
    %5696 = vmatprep.subr.mxu0 0.0
    %5697 = vmatpush1.msra.mxu0 %v5674
    %5698 = vmatprep.subr.mxu0 0.0
    %5699 = vmatpush1.msra.mxu0 %v5675
    %5700 = vmatprep.subr.mxu0 0.0
    %5701 = vmatpush1.msra.mxu0 %v5676
    %5702 = vmatprep.subr.mxu0 0.0
    %5703 = vmatpush1.msra.mxu0 %v5677
    %5704 = vmatprep.subr.mxu0 0.0
    %5705 = vmatpush1.msra.mxu0 %v5678
    %5706 = vmatprep.subr.mxu0 0.0
    %5707 = vmatpush1.msra.mxu0 %v5679
    %5708 = vmatprep.subr.mxu0 0.0
    %5709 = vmatpush1.msra.mxu0 %v5680
    %5710 = vmatprep.subr.mxu0 0.0
    %5711 = vmatpush1.msra.mxu0 %v5681
    %5712 = vmatprep.subr.mxu0 0.0
    %5713 = vmatpush1.msra.mxu0 %v5682
    %5714 = vmatprep.subr.mxu0 0.0
    %5715 = vmatpush1.msra.mxu0 %v5683
    %5716 = vmatprep.subr.mxu0 0.0
    %5717 = vmatpush1.msra.mxu0 0.0
    %5718 = vmatprep.subr.mxu0 0.0
    %5719 = vmatpush1.msra.mxu0 0.0
    %5720 = vmatprep.subr.mxu0 0.0
    %5721 = vmatpush1.msra.mxu0 0.0
    %5722 = vmatprep.subr.mxu0 0.0
    %5723 = vmatpush1.msra.mxu0 0.0
    %5724 = vmatprep.subr.mxu0 0.0
    %5725 = vmatpush1.msra.mxu0 0.0
    %5726 = vmatprep.subr.mxu0 0.0
    %5727 = vmatpush1.msra.mxu0 0.0
    %5728 = vmatprep.subr.mxu0 0.0
    %5729 = vmatpush1.msra.mxu0 0.0
    %5730 = vmatprep.subr.mxu0 0.0
    %5731 = vmatpush1.msra.mxu0 0.0
    %5732 = vmatprep.subr.mxu0 0.0
    %5733 = vmatpush1.msra.mxu0 0.0
    %5734 = vmatprep.subr.mxu0 0.0
    %5735 = vmatpush1.msra.mxu0 0.0
    %5736 = vmatprep.subr.mxu0 0.0
    %5737 = vmatpush1.msra.mxu0 0.0
    %5738 = vmatprep.subr.mxu0 0.0
    %5739 = vmatpush1.msra.mxu0 0.0
    %5740 = vmatprep.subr.mxu0 0.0
    %5741 = vmatpush1.msra.mxu0 0.0
    %5742 = vmatprep.subr.mxu0 0.0
    %5743 = vmatpush1.msra.mxu0 0.0
    %5744 = vmatprep.subr.mxu0 0.0
    %5745 = vmatpush1.msra.mxu0 0.0
    %5746 = vmatprep.subr.mxu0 0.0
    %5747 = vmatpush1.msra.mxu0 0.0
    %5748 = vmatprep.mubr.f32.mxu0 0.0
    %5749 = vmatmul.mubr.f32.gmra.mrb[0].mxu0 %v5667
    %v5750 = vpop.f32.mrb[0].mxu0
    %v5751 = vadd.f32 0.0, %v5750
    %v5752 = vpop.f32.mrb[0].mxu0
    %5753 = vdwg.mxu0
    %v5754 = vld [vmem:[#allocation2 + $0x1330] sm:$0xff]
    %v5755 = vld [vmem:[#allocation2 + $0x1338] sm:$0xff]
    %v5756 = vld [vmem:[#allocation2 + $0x1340] sm:$0xff]
    %v5757 = vld [vmem:[#allocation2 + $0x1348] sm:$0xff]
    %v5758 = vld [vmem:[#allocation2 + $0x1350] sm:$0xff]
    %v5759 = vld [vmem:[#allocation2 + $0x1358] sm:$0xff]
    %v5760 = vld [vmem:[#allocation2 + $0x1360] sm:$0xff]
    %v5761 = vld [vmem:[#allocation2 + $0x1368] sm:$0xff]
    %v5762 = vld [vmem:[#allocation2 + $0x1370] sm:$0xff]
    %v5763 = vld [vmem:[#allocation2 + $0x1378] sm:$0xff]
    %v5764 = vld [vmem:[#allocation2 + $0x1380] sm:$0xff]
    %v5765 = vld [vmem:[#allocation2 + $0x1388] sm:$0xff]
    %v5766 = vld [vmem:[#allocation2 + $0x1390] sm:$0xff]
    %v5767 = vld [vmem:[#allocation2 + $0x1398] sm:$0xff]
    %v5768 = vld [vmem:[#allocation2 + $0x13a0] sm:$0xff]
    %v5769 = vld [vmem:[#allocation2 + $0x13a8] sm:$0xff]
    %v5770 = vld [vmem:[#allocation2 + $0x13b0] sm:$0xff]
    %v5771 = vld [vmem:[#allocation2 + $0x13b8] sm:$0xff]
    %v5772 = vld [vmem:[#allocation2 + $0x13c0] sm:$0xff]
    %v5773 = vld [vmem:[#allocation2 + $0x13c8] sm:$0xff]
    %v5774 = vld [vmem:[#allocation2 + $0x13d0] sm:$0xff]
    %v5775 = vld [vmem:[#allocation2 + $0x13d8] sm:$0xff]
    %v5776 = vld [vmem:[#allocation2 + $0x13e0] sm:$0xff]
    %v5777 = vld [vmem:[#allocation2 + $0x13e8] sm:$0xff]
    %v5778 = vld [vmem:[#allocation2 + $0x13f0] sm:$0xff]
    %v5779 = vld [vmem:[#allocation2 + $0x13f8] sm:$0xff]
    %v5780 = vld [vmem:[#allocation2 + $0x1400] sm:$0xff]
    %v5781 = vld [vmem:[#allocation2 + $0x1408] sm:$0xff]
    %v5782 = vld [vmem:[#allocation2 + $0x1410] sm:$0xff]
    %v5783 = vld [vmem:[#allocation2 + $0x1418] sm:$0xff]
    %v5784 = vld [vmem:[#allocation2 + $0x1420] sm:$0xff]
    %v5785 = vld [vmem:[#allocation2 + $0x1428] sm:$0xff]
    %5786 = vmatprep.subr.mxu0 0.0
    %5787 = vmatpush1.msra.mxu0 %v5770
    %5788 = vmatprep.subr.mxu0 0.0
    %5789 = vmatpush1.msra.mxu0 %v5771
    %5790 = vmatprep.subr.mxu0 0.0
    %5791 = vmatpush1.msra.mxu0 %v5772
    %5792 = vmatprep.subr.mxu0 0.0
    %5793 = vmatpush1.msra.mxu0 %v5773
    %5794 = vmatprep.subr.mxu0 0.0
    %5795 = vmatpush1.msra.mxu0 %v5774
    %5796 = vmatprep.subr.mxu0 0.0
    %5797 = vmatpush1.msra.mxu0 %v5775
    %5798 = vmatprep.subr.mxu0 0.0
    %5799 = vmatpush1.msra.mxu0 %v5776
    %5800 = vmatprep.subr.mxu0 0.0
    %5801 = vmatpush1.msra.mxu0 %v5777
    %5802 = vmatprep.subr.mxu0 0.0
    %5803 = vmatpush1.msra.mxu0 %v5778
    %5804 = vmatprep.subr.mxu0 0.0
    %5805 = vmatpush1.msra.mxu0 %v5779
    %5806 = vmatprep.subr.mxu0 0.0
    %5807 = vmatpush1.msra.mxu0 %v5780
    %5808 = vmatprep.subr.mxu0 0.0
    %5809 = vmatpush1.msra.mxu0 %v5781
    %5810 = vmatprep.subr.mxu0 0.0
    %5811 = vmatpush1.msra.mxu0 %v5782
    %5812 = vmatprep.subr.mxu0 0.0
    %5813 = vmatpush1.msra.mxu0 %v5783
    %5814 = vmatprep.subr.mxu0 0.0
    %5815 = vmatpush1.msra.mxu0 %v5784
    %5816 = vmatprep.subr.mxu0 0.0
    %5817 = vmatpush1.msra.mxu0 %v5785
    %5818 = vmatprep.subr.mxu0 0.0
    %5819 = vmatpush1.msra.mxu0 0.0
    %5820 = vmatprep.subr.mxu0 0.0
    %5821 = vmatpush1.msra.mxu0 0.0
    %5822 = vmatprep.subr.mxu0 0.0
    %5823 = vmatpush1.msra.mxu0 0.0
    %5824 = vmatprep.subr.mxu0 0.0
    %5825 = vmatpush1.msra.mxu0 0.0
    %5826 = vmatprep.subr.mxu0 0.0
    %5827 = vmatpush1.msra.mxu0 0.0
    %5828 = vmatprep.subr.mxu0 0.0
    %5829 = vmatpush1.msra.mxu0 0.0
    %5830 = vmatprep.subr.mxu0 0.0
    %5831 = vmatpush1.msra.mxu0 0.0
    %5832 = vmatprep.subr.mxu0 0.0
    %5833 = vmatpush1.msra.mxu0 0.0
    %5834 = vmatprep.subr.mxu0 0.0
    %5835 = vmatpush1.msra.mxu0 0.0
    %5836 = vmatprep.subr.mxu0 0.0
    %5837 = vmatpush1.msra.mxu0 0.0
    %5838 = vmatprep.subr.mxu0 0.0
    %5839 = vmatpush1.msra.mxu0 0.0
    %5840 = vmatprep.subr.mxu0 0.0
    %5841 = vmatpush1.msra.mxu0 0.0
    %5842 = vmatprep.subr.mxu0 0.0
    %5843 = vmatpush1.msra.mxu0 0.0
    %5844 = vmatprep.subr.mxu0 0.0
    %5845 = vmatpush1.msra.mxu0 0.0
    %5846 = vmatprep.subr.mxu0 0.0
    %5847 = vmatpush1.msra.mxu0 0.0
    %5848 = vmatprep.subr.mxu0 0.0
    %5849 = vmatpush1.msra.mxu0 0.0
    %5850 = vmatprep.mubr.f32.mxu0 0.0
    %5851 = vmatmul.mubr.f32.gmra.mrb[0].mxu0 %v5667
    %v5852 = vpop.f32.mrb[0].mxu0
    %v5853 = vadd.f32 0.0, %v5852
    %v5854 = vpop.f32.mrb[0].mxu0
    %5855 = vdwg.mxu0
    %5856 = vmatprep.subr.mxu0 0.0
    %5857 = vmatpush1.msra.mxu0 %v5751
    %5858 = vmatprep.subr.mxu0 0.0
    %5859 = vmatpush1.msra.mxu0 0.0
    %5860 = vmatprep.subr.mxu0 0.0
    %5861 = vmatpush1.msra.mxu0 0.0
    %5862 = vmatprep.subr.mxu0 0.0
    %5863 = vmatpush1.msra.mxu0 0.0
    %5864 = vmatprep.subr.mxu0 0.0
    %5865 = vmatpush1.msra.mxu0 0.0
    %5866 = vmatprep.subr.mxu0 0.0
    %5867 = vmatpush1.msra.mxu0 0.0
    %5868 = vmatprep.subr.mxu0 0.0
    %5869 = vmatpush1.msra.mxu0 0.0
    %5870 = vmatprep.subr.mxu0 0.0
    %5871 = vmatpush1.msra.mxu0 0.0
    %5872 = vmatprep.subr.mxu0 0.0
    %5873 = vmatpush1.msra.mxu0 0.0
    %5874 = vmatprep.subr.mxu0 0.0
    %5875 = vmatpush1.msra.mxu0 0.0
    %5876 = vmatprep.subr.mxu0 0.0
    %5877 = vmatpush1.msra.mxu0 0.0
    %5878 = vmatprep.subr.mxu0 0.0
    %5879 = vmatpush1.msra.mxu0 0.0
    %5880 = vmatprep.subr.mxu0 0.0
    %5881 = vmatpush1.msra.mxu0 0.0
    %5882 = vmatprep.subr.mxu0 0.0
    %5883 = vmatpush1.msra.mxu0 0.0
    %5884 = vmatprep.subr.mxu0 0.0
    %5885 = vmatpush1.msra.mxu0 0.0
    %5886 = vmatprep.subr.mxu0 0.0
    %5887 = vmatpush1.msra.mxu0 0.0
    %5888 = vmatprep.subr.mxu0 0.0
    %5889 = vmatpush1.msra.mxu0 0.0
    %5890 = vmatprep.subr.mxu0 0.0
    %5891 = vmatpush1.msra.mxu0 0.0
    %5892 = vmatprep.subr.mxu0 0.0
    %5893 = vmatpush1.msra.mxu0 0.0
    %5894 = vmatprep.subr.mxu0 0.0
    %5895 = vmatpush1.msra.mxu0 0.0
    %5896 = vmatprep.subr.mxu0 0.0
    %5897 = vmatpush1.msra.mxu0 0.0
    %5898 = vmatprep.subr.mxu0 0.0
    %5899 = vmatpush1.msra.mxu0 0.0
    %5900 = vmatprep.subr.mxu0 0.0
    %5901 = vmatpush1.msra.mxu0 0.0
    %5902 = vmatprep.subr.mxu0 0.0
    %5903 = vmatpush1.msra.mxu0 0.0
    %5904 = vmatprep.subr.mxu0 0.0
    %5905 = vmatpush1.msra.mxu0 0.0
    %5906 = vmatprep.subr.mxu0 0.0
    %5907 = vmatpush1.msra.mxu0 0.0
    %5908 = vmatprep.subr.mxu0 0.0
    %5909 = vmatpush1.msra.mxu0 0.0
    %5910 = vmatprep.subr.mxu0 0.0
    %5911 = vmatpush1.msra.mxu0 0.0
    %5912 = vmatprep.subr.mxu0 0.0
    %5913 = vmatpush1.msra.mxu0 0.0
    %5914 = vmatprep.subr.mxu0 0.0
    %5915 = vmatpush1.msra.mxu0 0.0
    %5916 = vmatprep.subr.mxu0 0.0
    %5917 = vmatpush1.msra.mxu0 0.0
    %5918 = vmatprep.subr.mxu0 0.0
    %5919 = vmatpush1.msra.mxu0 0.0
    %5920 = vmatprep.mubr.f32.mxu0 0.0
    %5921 = vmatmul.mubr.f32.gmra.mrb[0].mxu0 %v5038
    %v5922 = vpop.f32.mrb[0].mxu0
    %v5923 = vadd.f32 0.0, %v5922
    %v5924 = vpop.f32.mrb[0].mxu0
    %5925 = vdwg.mxu0
    %5926 = vmatprep.subr.mxu0 0.0
    %5927 = vmatpush1.msra.mxu0 %v5754
    %5928 = vmatprep.subr.mxu0 0.0
    %5929 = vmatpush1.msra.mxu0 %v5755
    %5930 = vmatprep.subr.mxu0 0.0
    %5931 = vmatpush1.msra.mxu0 %v5756
    %5932 = vmatprep.subr.mxu0 0.0
    %5933 = vmatpush1.msra.mxu0 %v5757
    %5934 = vmatprep.subr.mxu0 0.0
    %5935 = vmatpush1.msra.mxu0 %v5758
    %5936 = vmatprep.subr.mxu0 0.0
    %5937 = vmatpush1.msra.mxu0 %v5759
    %5938 = vmatprep.subr.mxu0 0.0
    %5939 = vmatpush1.msra.mxu0 %v5760
    %5940 = vmatprep.subr.mxu0 0.0
    %5941 = vmatpush1.msra.mxu0 %v5761
    %5942 = vmatprep.subr.mxu0 0.0
    %5943 = vmatpush1.msra.mxu0 %v5762
    %5944 = vmatprep.subr.mxu0 0.0
    %5945 = vmatpush1.msra.mxu0 %v5763
    %5946 = vmatprep.subr.mxu0 0.0
    %5947 = vmatpush1.msra.mxu0 %v5764
    %5948 = vmatprep.subr.mxu0 0.0
    %5949 = vmatpush1.msra.mxu0 %v5765
    %5950 = vmatprep.subr.mxu0 0.0
    %5951 = vmatpush1.msra.mxu0 %v5766
    %5952 = vmatprep.subr.mxu0 0.0
    %5953 = vmatpush1.msra.mxu0 %v5767
    %5954 = vmatprep.subr.mxu0 0.0
    %5955 = vmatpush1.msra.mxu0 %v5768
    %5956 = vmatprep.subr.mxu0 0.0
    %5957 = vmatpush1.msra.mxu0 %v5769
    %5958 = vmatprep.subr.mxu0 0.0
    %5959 = vmatpush1.msra.mxu0 0.0
    %5960 = vmatprep.subr.mxu0 0.0
    %5961 = vmatpush1.msra.mxu0 0.0
    %5962 = vmatprep.subr.mxu0 0.0
    %5963 = vmatpush1.msra.mxu0 0.0
    %5964 = vmatprep.subr.mxu0 0.0
    %5965 = vmatpush1.msra.mxu0 0.0
    %5966 = vmatprep.subr.mxu0 0.0
    %5967 = vmatpush1.msra.mxu0 0.0
    %5968 = vmatprep.subr.mxu0 0.0
    %5969 = vmatpush1.msra.mxu0 0.0
    %5970 = vmatprep.subr.mxu0 0.0
    %5971 = vmatpush1.msra.mxu0 0.0
    %5972 = vmatprep.subr.mxu0 0.0
    %5973 = vmatpush1.msra.mxu0 0.0
    %5974 = vmatprep.subr.mxu0 0.0
    %5975 = vmatpush1.msra.mxu0 0.0
    %5976 = vmatprep.subr.mxu0 0.0
    %5977 = vmatpush1.msra.mxu0 0.0
    %5978 = vmatprep.subr.mxu0 0.0
    %5979 = vmatpush1.msra.mxu0 0.0
    %5980 = vmatprep.subr.mxu0 0.0
    %5981 = vmatpush1.msra.mxu0 0.0
    %5982 = vmatprep.subr.mxu0 0.0
    %5983 = vmatpush1.msra.mxu0 0.0
    %5984 = vmatprep.subr.mxu0 0.0
    %5985 = vmatpush1.msra.mxu0 0.0
    %5986 = vmatprep.subr.mxu0 0.0
    %5987 = vmatpush1.msra.mxu0 0.0
    %5988 = vmatprep.subr.mxu0 0.0
    %5989 = vmatpush1.msra.mxu0 0.0
    %5990 = vmatprep.mubr.f32.mxu0 0.0
    %5991 = vmatmul.mubr.f32.gmra.mrb[0].mxu0 %v5667
    %v5992 = vpop.f32.mrb[0].mxu0
    %v5993 = vadd.f32 %v5923, %v5992
    %v5994 = vpop.f32.mrb[0].mxu0
    %5995 = vdwg.mxu0
    %5996 = vmatprep.subr.mxu0 0.0
    %5997 = vmatpush1.msra.mxu0 %v5853
    %5998 = vmatprep.subr.mxu0 0.0
    %5999 = vmatpush1.msra.mxu0 0.0
    %6000 = vmatprep.subr.mxu0 0.0
    %6001 = vmatpush1.msra.mxu0 0.0
    %6002 = vmatprep.subr.mxu0 0.0
    %6003 = vmatpush1.msra.mxu0 0.0
    %6004 = vmatprep.subr.mxu0 0.0
    %6005 = vmatpush1.msra.mxu0 0.0
    %6006 = vmatprep.subr.mxu0 0.0
    %6007 = vmatpush1.msra.mxu0 0.0
    %6008 = vmatprep.subr.mxu0 0.0
    %6009 = vmatpush1.msra.mxu0 0.0
    %6010 = vmatprep.subr.mxu0 0.0
    %6011 = vmatpush1.msra.mxu0 0.0
    %6012 = vmatprep.subr.mxu0 0.0
    %6013 = vmatpush1.msra.mxu0 0.0
    %6014 = vmatprep.subr.mxu0 0.0
    %6015 = vmatpush1.msra.mxu0 0.0
    %6016 = vmatprep.subr.mxu0 0.0
    %6017 = vmatpush1.msra.mxu0 0.0
    %6018 = vmatprep.subr.mxu0 0.0
    %6019 = vmatpush1.msra.mxu0 0.0
    %6020 = vmatprep.subr.mxu0 0.0
    %6021 = vmatpush1.msra.mxu0 0.0
    %6022 = vmatprep.subr.mxu0 0.0
    %6023 = vmatpush1.msra.mxu0 0.0
    %6024 = vmatprep.subr.mxu0 0.0
    %6025 = vmatpush1.msra.mxu0 0.0
    %6026 = vmatprep.subr.mxu0 0.0
    %6027 = vmatpush1.msra.mxu0 0.0
    %6028 = vmatprep.subr.mxu0 0.0
    %6029 = vmatpush1.msra.mxu0 0.0
    %6030 = vmatprep.subr.mxu0 0.0
    %6031 = vmatpush1.msra.mxu0 0.0
    %6032 = vmatprep.subr.mxu0 0.0
    %6033 = vmatpush1.msra.mxu0 0.0
    %6034 = vmatprep.subr.mxu0 0.0
    %6035 = vmatpush1.msra.mxu0 0.0
    %6036 = vmatprep.subr.mxu0 0.0
    %6037 = vmatpush1.msra.mxu0 0.0
    %6038 = vmatprep.subr.mxu0 0.0
    %6039 = vmatpush1.msra.mxu0 0.0
    %6040 = vmatprep.subr.mxu0 0.0
    %6041 = vmatpush1.msra.mxu0 0.0
    %6042 = vmatprep.subr.mxu0 0.0
    %6043 = vmatpush1.msra.mxu0 0.0
    %6044 = vmatprep.subr.mxu0 0.0
    %6045 = vmatpush1.msra.mxu0 0.0
    %6046 = vmatprep.subr.mxu0 0.0
    %6047 = vmatpush1.msra.mxu0 0.0
    %6048 = vmatprep.subr.mxu0 0.0
    %6049 = vmatpush1.msra.mxu0 0.0
    %6050 = vmatprep.subr.mxu0 0.0
    %6051 = vmatpush1.msra.mxu0 0.0
    %6052 = vmatprep.subr.mxu0 0.0
    %6053 = vmatpush1.msra.mxu0 0.0
    %6054 = vmatprep.subr.mxu0 0.0
    %6055 = vmatpush1.msra.mxu0 0.0
    %6056 = vmatprep.subr.mxu0 0.0
    %6057 = vmatpush1.msra.mxu0 0.0
    %6058 = vmatprep.subr.mxu0 0.0
    %6059 = vmatpush1.msra.mxu0 0.0
    %6060 = vmatprep.mubr.f32.mxu0 0.0
    %6061 = vmatmul.mubr.f32.gmra.mrb[0].mxu0 %v5182
    %v6062 = vpop.f32.mrb[0].mxu0
    %v6063 = vadd.f32 0.0, %v6062
    %v6064 = vpop.f32.mrb[0].mxu0
    %6065 = vdwg.mxu0
    %v6066 = vadd.f32 %v5993, %v6063
    %v6067 = vld [vmem:[#allocation2 + $0x1430] sm:$0x1]
    %v6068 = vlaneseq
    %v6069 = vshrl.u32 %v6068, 7
    %v6070 = vsub.s32 0, %v6069
    %v6071 = vrot.slane %v6067, %v6070
    %v6072 = vadd.f32 %v6066, %v6071
    %v6073 = vmax.f32 %v6072, 0.0
    %v6074 = vld [vmem:[#allocation2 + $0x1438] sm:$0xf]
    %v6076 = vsel %vm5036, %v6074, 0
    %6078 = vmatprep.subr.mxu0 0.0
    %6079 = vmatpush1.msra.mxu0 %v6073
    %6080 = vmatprep.subr.mxu0 0.0
    %6081 = vmatpush1.msra.mxu0 0.0
    %6082 = vmatprep.subr.mxu0 0.0
    %6083 = vmatpush1.msra.mxu0 0.0
    %6084 = vmatprep.subr.mxu0 0.0
    %6085 = vmatpush1.msra.mxu0 0.0
    %6086 = vmatprep.subr.mxu0 0.0
    %6087 = vmatpush1.msra.mxu0 0.0
    %6088 = vmatprep.subr.mxu0 0.0
    %6089 = vmatpush1.msra.mxu0 0.0
    %6090 = vmatprep.subr.mxu0 0.0
    %6091 = vmatpush1.msra.mxu0 0.0
    %6092 = vmatprep.subr.mxu0 0.0
    %6093 = vmatpush1.msra.mxu0 0.0
    %6094 = vmatprep.subr.mxu0 0.0
    %6095 = vmatpush1.msra.mxu0 0.0
    %6096 = vmatprep.subr.mxu0 0.0
    %6097 = vmatpush1.msra.mxu0 0.0
    %6098 = vmatprep.subr.mxu0 0.0
    %6099 = vmatpush1.msra.mxu0 0.0
    %6100 = vmatprep.subr.mxu0 0.0
    %6101 = vmatpush1.msra.mxu0 0.0
    %6102 = vmatprep.subr.mxu0 0.0
    %6103 = vmatpush1.msra.mxu0 0.0
    %6104 = vmatprep.subr.mxu0 0.0
    %6105 = vmatpush1.msra.mxu0 0.0
    %6106 = vmatprep.subr.mxu0 0.0
    %6107 = vmatpush1.msra.mxu0 0.0
    %6108 = vmatprep.subr.mxu0 0.0
    %6109 = vmatpush1.msra.mxu0 0.0
    %6110 = vmatprep.subr.mxu0 0.0
    %6111 = vmatpush1.msra.mxu0 0.0
    %6112 = vmatprep.subr.mxu0 0.0
    %6113 = vmatpush1.msra.mxu0 0.0
    %6114 = vmatprep.subr.mxu0 0.0
    %6115 = vmatpush1.msra.mxu0 0.0
    %6116 = vmatprep.subr.mxu0 0.0
    %6117 = vmatpush1.msra.mxu0 0.0
    %6118 = vmatprep.subr.mxu0 0.0
    %6119 = vmatpush1.msra.mxu0 0.0
    %6120 = vmatprep.subr.mxu0 0.0
    %6121 = vmatpush1.msra.mxu0 0.0
    %6122 = vmatprep.subr.mxu0 0.0
    %6123 = vmatpush1.msra.mxu0 0.0
    %6124 = vmatprep.subr.mxu0 0.0
    %6125 = vmatpush1.msra.mxu0 0.0
    %6126 = vmatprep.subr.mxu0 0.0
    %6127 = vmatpush1.msra.mxu0 0.0
    %6128 = vmatprep.subr.mxu0 0.0
    %6129 = vmatpush1.msra.mxu0 0.0
    %6130 = vmatprep.subr.mxu0 0.0
    %6131 = vmatpush1.msra.mxu0 0.0
    %6132 = vmatprep.subr.mxu0 0.0
    %6133 = vmatpush1.msra.mxu0 0.0
    %6134 = vmatprep.subr.mxu0 0.0
    %6135 = vmatpush1.msra.mxu0 0.0
    %6136 = vmatprep.subr.mxu0 0.0
    %6137 = vmatpush1.msra.mxu0 0.0
    %6138 = vmatprep.subr.mxu0 0.0
    %6139 = vmatpush1.msra.mxu0 0.0
    %6140 = vmatprep.subr.mxu0 0.0
    %6141 = vmatpush1.msra.mxu0 0.0
    %6142 = vmatprep.mubr.f32.mxu0 0.0
    %6143 = vmatmul.mubr.f32.gmra.mrb[0].mxu0 %v6076
    %v6144 = vpop.f32.mrb[0].mxu0
    %v6145 = vadd.f32 0.0, %v6144
    %v6146 = vpop.f32.mrb[0].mxu0
    %6147 = vdwg.mxu0
    %v6148 = vld [vmem:[#allocation2 + $0x1440] sm:$0xf]
    %v6150 = vsel %vm5036, %v6148, 0
    %6152 = vmatprep.subr.mxu0 0.0
    %6153 = vmatpush1.msra.mxu0 %v6073
    %6154 = vmatprep.subr.mxu0 0.0
    %6155 = vmatpush1.msra.mxu0 0.0
    %6156 = vmatprep.subr.mxu0 0.0
    %6157 = vmatpush1.msra.mxu0 0.0
    %6158 = vmatprep.subr.mxu0 0.0
    %6159 = vmatpush1.msra.mxu0 0.0
    %6160 = vmatprep.subr.mxu0 0.0
    %6161 = vmatpush1.msra.mxu0 0.0
    %6162 = vmatprep.subr.mxu0 0.0
    %6163 = vmatpush1.msra.mxu0 0.0
    %6164 = vmatprep.subr.mxu0 0.0
    %6165 = vmatpush1.msra.mxu0 0.0
    %6166 = vmatprep.subr.mxu0 0.0
    %6167 = vmatpush1.msra.mxu0 0.0
    %6168 = vmatprep.subr.mxu0 0.0
    %6169 = vmatpush1.msra.mxu0 0.0
    %6170 = vmatprep.subr.mxu0 0.0
    %6171 = vmatpush1.msra.mxu0 0.0
    %6172 = vmatprep.subr.mxu0 0.0
    %6173 = vmatpush1.msra.mxu0 0.0
    %6174 = vmatprep.subr.mxu0 0.0
    %6175 = vmatpush1.msra.mxu0 0.0
    %6176 = vmatprep.subr.mxu0 0.0
    %6177 = vmatpush1.msra.mxu0 0.0
    %6178 = vmatprep.subr.mxu0 0.0
    %6179 = vmatpush1.msra.mxu0 0.0
    %6180 = vmatprep.subr.mxu0 0.0
    %6181 = vmatpush1.msra.mxu0 0.0
    %6182 = vmatprep.subr.mxu0 0.0
    %6183 = vmatpush1.msra.mxu0 0.0
    %6184 = vmatprep.subr.mxu0 0.0
    %6185 = vmatpush1.msra.mxu0 0.0
    %6186 = vmatprep.subr.mxu0 0.0
    %6187 = vmatpush1.msra.mxu0 0.0
    %6188 = vmatprep.subr.mxu0 0.0
    %6189 = vmatpush1.msra.mxu0 0.0
    %6190 = vmatprep.subr.mxu0 0.0
    %6191 = vmatpush1.msra.mxu0 0.0
    %6192 = vmatprep.subr.mxu0 0.0
    %6193 = vmatpush1.msra.mxu0 0.0
    %6194 = vmatprep.subr.mxu0 0.0
    %6195 = vmatpush1.msra.mxu0 0.0
    %6196 = vmatprep.subr.mxu0 0.0
    %6197 = vmatpush1.msra.mxu0 0.0
    %6198 = vmatprep.subr.mxu0 0.0
    %6199 = vmatpush1.msra.mxu0 0.0
    %6200 = vmatprep.subr.mxu0 0.0
    %6201 = vmatpush1.msra.mxu0 0.0
    %6202 = vmatprep.subr.mxu0 0.0
    %6203 = vmatpush1.msra.mxu0 0.0
    %6204 = vmatprep.subr.mxu0 0.0
    %6205 = vmatpush1.msra.mxu0 0.0
    %6206 = vmatprep.subr.mxu0 0.0
    %6207 = vmatpush1.msra.mxu0 0.0
    %6208 = vmatprep.subr.mxu0 0.0
    %6209 = vmatpush1.msra.mxu0 0.0
    %6210 = vmatprep.subr.mxu0 0.0
    %6211 = vmatpush1.msra.mxu0 0.0
    %6212 = vmatprep.subr.mxu0 0.0
    %6213 = vmatpush1.msra.mxu0 0.0
    %6214 = vmatprep.subr.mxu0 0.0
    %6215 = vmatpush1.msra.mxu0 0.0
    %6216 = vmatprep.mubr.f32.mxu0 0.0
    %6217 = vmatmul.mubr.f32.gmra.mrb[0].mxu0 %v6150
    %v6218 = vpop.f32.mrb[0].mxu0
    %v6219 = vadd.f32 0.0, %v6218
    %v6220 = vpop.f32.mrb[0].mxu0
    %6221 = vdwg.mxu0
    %v6222 = vmax.f32 %v6145, %v6219
    %v6223 = vld [vmem:[#allocation2 + $0x1448] sm:$0xff]
    %v6224 = vld [vmem:[#allocation2 + $0x1450] sm:$0xff]
    %v6225 = vld [vmem:[#allocation2 + $0x1458] sm:$0xff]
    %v6226 = vld [vmem:[#allocation2 + $0x1460] sm:$0xff]
    %v6227 = vld [vmem:[#allocation2 + $0x1468] sm:$0xff]
    %v6228 = vld [vmem:[#allocation2 + $0x1470] sm:$0xff]
    %v6229 = vld [vmem:[#allocation2 + $0x1478] sm:$0xff]
    %v6230 = vld [vmem:[#allocation2 + $0x1480] sm:$0xff]
    %v6231 = vld [vmem:[#allocation2 + $0x1488] sm:$0xff]
    %v6232 = vld [vmem:[#allocation2 + $0x1490] sm:$0xff]
    %v6233 = vld [vmem:[#allocation2 + $0x1498] sm:$0xff]
    %v6234 = vld [vmem:[#allocation2 + $0x14a0] sm:$0xff]
    %v6235 = vld [vmem:[#allocation2 + $0x14a8] sm:$0xff]
    %v6236 = vld [vmem:[#allocation2 + $0x14b0] sm:$0xff]
    %v6237 = vld [vmem:[#allocation2 + $0x14b8] sm:$0xff]
    %v6238 = vld [vmem:[#allocation2 + $0x14c0] sm:$0xff]
    %6239 = vmatprep.subr.mxu0 0.0
    %6240 = vmatpush1.msra.mxu0 %v6223
    %6241 = vmatprep.subr.mxu0 0.0
    %6242 = vmatpush1.msra.mxu0 %v6224
    %6243 = vmatprep.subr.mxu0 0.0
    %6244 = vmatpush1.msra.mxu0 %v6225
    %6245 = vmatprep.subr.mxu0 0.0
    %6246 = vmatpush1.msra.mxu0 %v6226
    %6247 = vmatprep.subr.mxu0 0.0
    %6248 = vmatpush1.msra.mxu0 %v6227
    %6249 = vmatprep.subr.mxu0 0.0
    %6250 = vmatpush1.msra.mxu0 %v6228
    %6251 = vmatprep.subr.mxu0 0.0
    %6252 = vmatpush1.msra.mxu0 %v6229
    %6253 = vmatprep.subr.mxu0 0.0
    %6254 = vmatpush1.msra.mxu0 %v6230
    %6255 = vmatprep.subr.mxu0 0.0
    %6256 = vmatpush1.msra.mxu0 %v6231
    %6257 = vmatprep.subr.mxu0 0.0
    %6258 = vmatpush1.msra.mxu0 %v6232
    %6259 = vmatprep.subr.mxu0 0.0
    %6260 = vmatpush1.msra.mxu0 %v6233
    %6261 = vmatprep.subr.mxu0 0.0
    %6262 = vmatpush1.msra.mxu0 %v6234
    %6263 = vmatprep.subr.mxu0 0.0
    %6264 = vmatpush1.msra.mxu0 %v6235
    %6265 = vmatprep.subr.mxu0 0.0
    %6266 = vmatpush1.msra.mxu0 %v6236
    %6267 = vmatprep.subr.mxu0 0.0
    %6268 = vmatpush1.msra.mxu0 %v6237
    %6269 = vmatprep.subr.mxu0 0.0
    %6270 = vmatpush1.msra.mxu0 %v6238
    %6271 = vmatprep.subr.mxu0 0.0
    %6272 = vmatpush1.msra.mxu0 0.0
    %6273 = vmatprep.subr.mxu0 0.0
    %6274 = vmatpush1.msra.mxu0 0.0
    %6275 = vmatprep.subr.mxu0 0.0
    %6276 = vmatpush1.msra.mxu0 0.0
    %6277 = vmatprep.subr.mxu0 0.0
    %6278 = vmatpush1.msra.mxu0 0.0
    %6279 = vmatprep.subr.mxu0 0.0
    %6280 = vmatpush1.msra.mxu0 0.0
    %6281 = vmatprep.subr.mxu0 0.0
    %6282 = vmatpush1.msra.mxu0 0.0
    %6283 = vmatprep.subr.mxu0 0.0
    %6284 = vmatpush1.msra.mxu0 0.0
    %6285 = vmatprep.subr.mxu0 0.0
    %6286 = vmatpush1.msra.mxu0 0.0
    %6287 = vmatprep.subr.mxu0 0.0
    %6288 = vmatpush1.msra.mxu0 0.0
    %6289 = vmatprep.subr.mxu0 0.0
    %6290 = vmatpush1.msra.mxu0 0.0
    %6291 = vmatprep.subr.mxu0 0.0
    %6292 = vmatpush1.msra.mxu0 0.0
    %6293 = vmatprep.subr.mxu0 0.0
    %6294 = vmatpush1.msra.mxu0 0.0
    %6295 = vmatprep.subr.mxu0 0.0
    %6296 = vmatpush1.msra.mxu0 0.0
    %6297 = vmatprep.subr.mxu0 0.0
    %6298 = vmatpush1.msra.mxu0 0.0
    %6299 = vmatprep.subr.mxu0 0.0
    %6300 = vmatpush1.msra.mxu0 0.0
    %6301 = vmatprep.subr.mxu0 0.0
    %6302 = vmatpush1.msra.mxu0 0.0
    %6303 = vmatprep.mubr.f32.mxu0 0.0
    %6304 = vmatmul.mubr.f32.gmra.mrb[0].mxu0 %v6222
    %v6305 = vpop.f32.mrb[0].mxu0
    %v6306 = vadd.f32 0.0, %v6305
    %v6307 = vpop.f32.mrb[0].mxu0
    %6308 = vdwg.mxu0
    %v6309 = vld [vmem:[#allocation2 + $0x14c8] sm:$0xff]
    %v6310 = vld [vmem:[#allocation2 + $0x14d0] sm:$0xff]
    %v6311 = vld [vmem:[#allocation2 + $0x14d8] sm:$0xff]
    %v6312 = vld [vmem:[#allocation2 + $0x14e0] sm:$0xff]
    %v6313 = vld [vmem:[#allocation2 + $0x14e8] sm:$0xff]
    %v6314 = vld [vmem:[#allocation2 + $0x14f0] sm:$0xff]
    %v6315 = vld [vmem:[#allocation2 + $0x14f8] sm:$0xff]
    %v6316 = vld [vmem:[#allocation2 + $0x1500] sm:$0xff]
    %v6317 = vld [vmem:[#allocation2 + $0x1508] sm:$0xff]
    %v6318 = vld [vmem:[#allocation2 + $0x1510] sm:$0xff]
    %v6319 = vld [vmem:[#allocation2 + $0x1518] sm:$0xff]
    %v6320 = vld [vmem:[#allocation2 + $0x1520] sm:$0xff]
    %v6321 = vld [vmem:[#allocation2 + $0x1528] sm:$0xff]
    %v6322 = vld [vmem:[#allocation2 + $0x1530] sm:$0xff]
    %v6323 = vld [vmem:[#allocation2 + $0x1538] sm:$0xff]
    %v6324 = vld [vmem:[#allocation2 + $0x1540] sm:$0xff]
    %6325 = vmatprep.subr.mxu0 0.0
    %6326 = vmatpush1.msra.mxu0 %v6309
    %6327 = vmatprep.subr.mxu0 0.0
    %6328 = vmatpush1.msra.mxu0 %v6310
    %6329 = vmatprep.subr.mxu0 0.0
    %6330 = vmatpush1.msra.mxu0 %v6311
    %6331 = vmatprep.subr.mxu0 0.0
    %6332 = vmatpush1.msra.mxu0 %v6312
    %6333 = vmatprep.subr.mxu0 0.0
    %6334 = vmatpush1.msra.mxu0 %v6313
    %6335 = vmatprep.subr.mxu0 0.0
    %6336 = vmatpush1.msra.mxu0 %v6314
    %6337 = vmatprep.subr.mxu0 0.0
    %6338 = vmatpush1.msra.mxu0 %v6315
    %6339 = vmatprep.subr.mxu0 0.0
    %6340 = vmatpush1.msra.mxu0 %v6316
    %6341 = vmatprep.subr.mxu0 0.0
    %6342 = vmatpush1.msra.mxu0 %v6317
    %6343 = vmatprep.subr.mxu0 0.0
    %6344 = vmatpush1.msra.mxu0 %v6318
    %6345 = vmatprep.subr.mxu0 0.0
    %6346 = vmatpush1.msra.mxu0 %v6319
    %6347 = vmatprep.subr.mxu0 0.0
    %6348 = vmatpush1.msra.mxu0 %v6320
    %6349 = vmatprep.subr.mxu0 0.0
    %6350 = vmatpush1.msra.mxu0 %v6321
    %6351 = vmatprep.subr.mxu0 0.0
    %6352 = vmatpush1.msra.mxu0 %v6322
    %6353 = vmatprep.subr.mxu0 0.0
    %6354 = vmatpush1.msra.mxu0 %v6323
    %6355 = vmatprep.subr.mxu0 0.0
    %6356 = vmatpush1.msra.mxu0 %v6324
    %6357 = vmatprep.subr.mxu0 0.0
    %6358 = vmatpush1.msra.mxu0 0.0
    %6359 = vmatprep.subr.mxu0 0.0
    %6360 = vmatpush1.msra.mxu0 0.0
    %6361 = vmatprep.subr.mxu0 0.0
    %6362 = vmatpush1.msra.mxu0 0.0
    %6363 = vmatprep.subr.mxu0 0.0
    %6364 = vmatpush1.msra.mxu0 0.0
    %6365 = vmatprep.subr.mxu0 0.0
    %6366 = vmatpush1.msra.mxu0 0.0
    %6367 = vmatprep.subr.mxu0 0.0
    %6368 = vmatpush1.msra.mxu0 0.0
    %6369 = vmatprep.subr.mxu0 0.0
    %6370 = vmatpush1.msra.mxu0 0.0
    %6371 = vmatprep.subr.mxu0 0.0
    %6372 = vmatpush1.msra.mxu0 0.0
    %6373 = vmatprep.subr.mxu0 0.0
    %6374 = vmatpush1.msra.mxu0 0.0
    %6375 = vmatprep.subr.mxu0 0.0
    %6376 = vmatpush1.msra.mxu0 0.0
    %6377 = vmatprep.subr.mxu0 0.0
    %6378 = vmatpush1.msra.mxu0 0.0
    %6379 = vmatprep.subr.mxu0 0.0
    %6380 = vmatpush1.msra.mxu0 0.0
    %6381 = vmatprep.subr.mxu0 0.0
    %6382 = vmatpush1.msra.mxu0 0.0
    %6383 = vmatprep.subr.mxu0 0.0
    %6384 = vmatpush1.msra.mxu0 0.0
    %6385 = vmatprep.subr.mxu0 0.0
    %6386 = vmatpush1.msra.mxu0 0.0
    %6387 = vmatprep.subr.mxu0 0.0
    %6388 = vmatpush1.msra.mxu0 0.0
    %6389 = vmatprep.mubr.f32.mxu0 0.0
    %6390 = vmatmul.mubr.f32.gmra.mrb[0].mxu0 %v6222
    %v6391 = vpop.f32.mrb[0].mxu0
    %v6392 = vadd.f32 0.0, %v6391
    %v6393 = vpop.f32.mrb[0].mxu0
    %6394 = vdwg.mxu0
    %v6395 = vmax.f32 %v6306, %v6392
    %v6396 = vld [vmem:[#allocation2 + $0x1548] sm:$0xff]
    %v6397 = vld [vmem:[#allocation2 + $0x1550] sm:$0xff]
    %v6398 = vld [vmem:[#allocation2 + $0x1558] sm:$0xff]
    %v6399 = vld [vmem:[#allocation2 + $0x1560] sm:$0xff]
    %v6400 = vld [vmem:[#allocation2 + $0x1568] sm:$0xff]
    %v6401 = vld [vmem:[#allocation2 + $0x1570] sm:$0xff]
    %v6402 = vld [vmem:[#allocation2 + $0x1578] sm:$0xff]
    %v6403 = vld [vmem:[#allocation2 + $0x1580] sm:$0xff]
    %v6404 = vld [vmem:[#allocation2 + $0x1588] sm:$0xff]
    %v6405 = vld [vmem:[#allocation2 + $0x1590] sm:$0xff]
    %v6406 = vld [vmem:[#allocation2 + $0x1598] sm:$0xff]
    %v6407 = vld [vmem:[#allocation2 + $0x15a0] sm:$0xff]
    %v6408 = vld [vmem:[#allocation2 + $0x15a8] sm:$0xff]
    %v6409 = vld [vmem:[#allocation2 + $0x15b0] sm:$0xff]
    %v6410 = vld [vmem:[#allocation2 + $0x15b8] sm:$0xff]
    %v6411 = vld [vmem:[#allocation2 + $0x15c0] sm:$0xff]
    %6412 = vmatprep.subr.mxu0 0.0
    %6413 = vmatpush1.msra.mxu0 %v6396
    %6414 = vmatprep.subr.mxu0 0.0
    %6415 = vmatpush1.msra.mxu0 %v6397
    %6416 = vmatprep.subr.mxu0 0.0
    %6417 = vmatpush1.msra.mxu0 %v6398
    %6418 = vmatprep.subr.mxu0 0.0
    %6419 = vmatpush1.msra.mxu0 %v6399
    %6420 = vmatprep.subr.mxu0 0.0
    %6421 = vmatpush1.msra.mxu0 %v6400
    %6422 = vmatprep.subr.mxu0 0.0
    %6423 = vmatpush1.msra.mxu0 %v6401
    %6424 = vmatprep.subr.mxu0 0.0
    %6425 = vmatpush1.msra.mxu0 %v6402
    %6426 = vmatprep.subr.mxu0 0.0
    %6427 = vmatpush1.msra.mxu0 %v6403
    %6428 = vmatprep.subr.mxu0 0.0
    %6429 = vmatpush1.msra.mxu0 %v6404
    %6430 = vmatprep.subr.mxu0 0.0
    %6431 = vmatpush1.msra.mxu0 %v6405
    %6432 = vmatprep.subr.mxu0 0.0
    %6433 = vmatpush1.msra.mxu0 %v6406
    %6434 = vmatprep.subr.mxu0 0.0
    %6435 = vmatpush1.msra.mxu0 %v6407
    %6436 = vmatprep.subr.mxu0 0.0
    %6437 = vmatpush1.msra.mxu0 %v6408
    %6438 = vmatprep.subr.mxu0 0.0
    %6439 = vmatpush1.msra.mxu0 %v6409
    %6440 = vmatprep.subr.mxu0 0.0
    %6441 = vmatpush1.msra.mxu0 %v6410
    %6442 = vmatprep.subr.mxu0 0.0
    %6443 = vmatpush1.msra.mxu0 %v6411
    %6444 = vmatprep.subr.mxu0 0.0
    %6445 = vmatpush1.msra.mxu0 0.0
    %6446 = vmatprep.subr.mxu0 0.0
    %6447 = vmatpush1.msra.mxu0 0.0
    %6448 = vmatprep.subr.mxu0 0.0
    %6449 = vmatpush1.msra.mxu0 0.0
    %6450 = vmatprep.subr.mxu0 0.0
    %6451 = vmatpush1.msra.mxu0 0.0
    %6452 = vmatprep.subr.mxu0 0.0
    %6453 = vmatpush1.msra.mxu0 0.0
    %6454 = vmatprep.subr.mxu0 0.0
    %6455 = vmatpush1.msra.mxu0 0.0
    %6456 = vmatprep.subr.mxu0 0.0
    %6457 = vmatpush1.msra.mxu0 0.0
    %6458 = vmatprep.subr.mxu0 0.0
    %6459 = vmatpush1.msra.mxu0 0.0
    %6460 = vmatprep.subr.mxu0 0.0
    %6461 = vmatpush1.msra.mxu0 0.0
    %6462 = vmatprep.subr.mxu0 0.0
    %6463 = vmatpush1.msra.mxu0 0.0
    %6464 = vmatprep.subr.mxu0 0.0
    %6465 = vmatpush1.msra.mxu0 0.0
    %6466 = vmatprep.subr.mxu0 0.0
    %6467 = vmatpush1.msra.mxu0 0.0
    %6468 = vmatprep.subr.mxu0 0.0
    %6469 = vmatpush1.msra.mxu0 0.0
    %6470 = vmatprep.subr.mxu0 0.0
    %6471 = vmatpush1.msra.mxu0 0.0
    %6472 = vmatprep.subr.mxu0 0.0
    %6473 = vmatpush1.msra.mxu0 0.0
    %6474 = vmatprep.subr.mxu0 0.0
    %6475 = vmatpush1.msra.mxu0 0.0
    %6476 = vmatprep.mubr.f32.mxu0 0.0
    %6477 = vmatmul.mubr.f32.gmra.mrb[0].mxu0 %v6395
    %v6478 = vpop.f32.mrb[0].mxu0
    %v6479 = vadd.f32 0.0, %v6478
    %v6480 = vpop.f32.mrb[0].mxu0
    %6481 = vdwg.mxu0
    %v6482 = vld [vmem:[#allocation2 + $0x15c8] sm:$0xff]
    %v6483 = vld [vmem:[#allocation2 + $0x15d0] sm:$0xff]
    %v6484 = vld [vmem:[#allocation2 + $0x15d8] sm:$0xff]
    %v6485 = vld [vmem:[#allocation2 + $0x15e0] sm:$0xff]
    %v6486 = vld [vmem:[#allocation2 + $0x15e8] sm:$0xff]
    %v6487 = vld [vmem:[#allocation2 + $0x15f0] sm:$0xff]
    %v6488 = vld [vmem:[#allocation2 + $0x15f8] sm:$0xff]
    %v6489 = vld [vmem:[#allocation2 + $0x1600] sm:$0xff]
    %v6490 = vld [vmem:[#allocation2 + $0x1608] sm:$0xff]
    %v6491 = vld [vmem:[#allocation2 + $0x1610] sm:$0xff]
    %v6492 = vld [vmem:[#allocation2 + $0x1618] sm:$0xff]
    %v6493 = vld [vmem:[#allocation2 + $0x1620] sm:$0xff]
    %v6494 = vld [vmem:[#allocation2 + $0x1628] sm:$0xff]
    %v6495 = vld [vmem:[#allocation2 + $0x1630] sm:$0xff]
    %v6496 = vld [vmem:[#allocation2 + $0x1638] sm:$0xff]
    %v6497 = vld [vmem:[#allocation2 + $0x1640] sm:$0xff]
    %v6498 = vld [vmem:[#allocation2 + $0x1648] sm:$0xff]
    %v6499 = vld [vmem:[#allocation2 + $0x1650] sm:$0xff]
    %v6500 = vld [vmem:[#allocation2 + $0x1658] sm:$0xff]
    %v6501 = vld [vmem:[#allocation2 + $0x1660] sm:$0xff]
    %v6502 = vld [vmem:[#allocation2 + $0x1668] sm:$0xff]
    %v6503 = vld [vmem:[#allocation2 + $0x1670] sm:$0xff]
    %v6504 = vld [vmem:[#allocation2 + $0x1678] sm:$0xff]
    %v6505 = vld [vmem:[#allocation2 + $0x1680] sm:$0xff]
    %v6506 = vld [vmem:[#allocation2 + $0x1688] sm:$0xff]
    %v6507 = vld [vmem:[#allocation2 + $0x1690] sm:$0xff]
    %v6508 = vld [vmem:[#allocation2 + $0x1698] sm:$0xff]
    %v6509 = vld [vmem:[#allocation2 + $0x16a0] sm:$0xff]
    %v6510 = vld [vmem:[#allocation2 + $0x16a8] sm:$0xff]
    %v6511 = vld [vmem:[#allocation2 + $0x16b0] sm:$0xff]
    %v6512 = vld [vmem:[#allocation2 + $0x16b8] sm:$0xff]
    %v6513 = vld [vmem:[#allocation2 + $0x16c0] sm:$0xff]
    %6514 = vmatprep.subr.mxu0 0.0
    %6515 = vmatpush1.msra.mxu0 %v6498
    %6516 = vmatprep.subr.mxu0 0.0
    %6517 = vmatpush1.msra.mxu0 %v6499
    %6518 = vmatprep.subr.mxu0 0.0
    %6519 = vmatpush1.msra.mxu0 %v6500
    %6520 = vmatprep.subr.mxu0 0.0
    %6521 = vmatpush1.msra.mxu0 %v6501
    %6522 = vmatprep.subr.mxu0 0.0
    %6523 = vmatpush1.msra.mxu0 %v6502
    %6524 = vmatprep.subr.mxu0 0.0
    %6525 = vmatpush1.msra.mxu0 %v6503
    %6526 = vmatprep.subr.mxu0 0.0
    %6527 = vmatpush1.msra.mxu0 %v6504
    %6528 = vmatprep.subr.mxu0 0.0
    %6529 = vmatpush1.msra.mxu0 %v6505
    %6530 = vmatprep.subr.mxu0 0.0
    %6531 = vmatpush1.msra.mxu0 %v6506
    %6532 = vmatprep.subr.mxu0 0.0
    %6533 = vmatpush1.msra.mxu0 %v6507
    %6534 = vmatprep.subr.mxu0 0.0
    %6535 = vmatpush1.msra.mxu0 %v6508
    %6536 = vmatprep.subr.mxu0 0.0
    %6537 = vmatpush1.msra.mxu0 %v6509
    %6538 = vmatprep.subr.mxu0 0.0
    %6539 = vmatpush1.msra.mxu0 %v6510
    %6540 = vmatprep.subr.mxu0 0.0
    %6541 = vmatpush1.msra.mxu0 %v6511
    %6542 = vmatprep.subr.mxu0 0.0
    %6543 = vmatpush1.msra.mxu0 %v6512
    %6544 = vmatprep.subr.mxu0 0.0
    %6545 = vmatpush1.msra.mxu0 %v6513
    %6546 = vmatprep.subr.mxu0 0.0
    %6547 = vmatpush1.msra.mxu0 0.0
    %6548 = vmatprep.subr.mxu0 0.0
    %6549 = vmatpush1.msra.mxu0 0.0
    %6550 = vmatprep.subr.mxu0 0.0
    %6551 = vmatpush1.msra.mxu0 0.0
    %6552 = vmatprep.subr.mxu0 0.0
    %6553 = vmatpush1.msra.mxu0 0.0
    %6554 = vmatprep.subr.mxu0 0.0
    %6555 = vmatpush1.msra.mxu0 0.0
    %6556 = vmatprep.subr.mxu0 0.0
    %6557 = vmatpush1.msra.mxu0 0.0
    %6558 = vmatprep.subr.mxu0 0.0
    %6559 = vmatpush1.msra.mxu0 0.0
    %6560 = vmatprep.subr.mxu0 0.0
    %6561 = vmatpush1.msra.mxu0 0.0
    %6562 = vmatprep.subr.mxu0 0.0
    %6563 = vmatpush1.msra.mxu0 0.0
    %6564 = vmatprep.subr.mxu0 0.0
    %6565 = vmatpush1.msra.mxu0 0.0
    %6566 = vmatprep.subr.mxu0 0.0
    %6567 = vmatpush1.msra.mxu0 0.0
    %6568 = vmatprep.subr.mxu0 0.0
    %6569 = vmatpush1.msra.mxu0 0.0
    %6570 = vmatprep.subr.mxu0 0.0
    %6571 = vmatpush1.msra.mxu0 0.0
    %6572 = vmatprep.subr.mxu0 0.0
    %6573 = vmatpush1.msra.mxu0 0.0
    %6574 = vmatprep.subr.mxu0 0.0
    %6575 = vmatpush1.msra.mxu0 0.0
    %6576 = vmatprep.subr.mxu0 0.0
    %6577 = vmatpush1.msra.mxu0 0.0
    %6578 = vmatprep.mubr.f32.mxu0 0.0
    %6579 = vmatmul.mubr.f32.gmra.mrb[0].mxu0 %v6395
    %v6580 = vpop.f32.mrb[0].mxu0
    %v6581 = vadd.f32 0.0, %v6580
    %v6582 = vpop.f32.mrb[0].mxu0
    %6583 = vdwg.mxu0
    %v6584 = vld [vmem:[#allocation2 + $0x16d0] sm:$0xf]
    %vm6585 = vcmask 31744
    %v6587 = vsel %vm6585, %v6584, 0
    %vm6589 = vcmask 1043456
    %v6591 = vsel %vm6589, %v6479, 0
    %6593 = vmatprep.subr.mxu0 0.0
    %6594 = vmatpush1.msra.mxu0 %v6591
    %6595 = vmatprep.subr.mxu0 0.0
    %6596 = vmatpush1.msra.mxu0 0.0
    %6597 = vmatprep.subr.mxu0 0.0
    %6598 = vmatpush1.msra.mxu0 0.0
    %6599 = vmatprep.subr.mxu0 0.0
    %6600 = vmatpush1.msra.mxu0 0.0
    %6601 = vmatprep.subr.mxu0 0.0
    %6602 = vmatpush1.msra.mxu0 0.0
    %6603 = vmatprep.subr.mxu0 0.0
    %6604 = vmatpush1.msra.mxu0 0.0
    %6605 = vmatprep.subr.mxu0 0.0
    %6606 = vmatpush1.msra.mxu0 0.0
    %6607 = vmatprep.subr.mxu0 0.0
    %6608 = vmatpush1.msra.mxu0 0.0
    %6609 = vmatprep.subr.mxu0 0.0
    %6610 = vmatpush1.msra.mxu0 0.0
    %6611 = vmatprep.subr.mxu0 0.0
    %6612 = vmatpush1.msra.mxu0 0.0
    %6613 = vmatprep.subr.mxu0 0.0
    %6614 = vmatpush1.msra.mxu0 0.0
    %6615 = vmatprep.subr.mxu0 0.0
    %6616 = vmatpush1.msra.mxu0 0.0
    %6617 = vmatprep.subr.mxu0 0.0
    %6618 = vmatpush1.msra.mxu0 0.0
    %6619 = vmatprep.subr.mxu0 0.0
    %6620 = vmatpush1.msra.mxu0 0.0
    %6621 = vmatprep.subr.mxu0 0.0
    %6622 = vmatpush1.msra.mxu0 0.0
    %6623 = vmatprep.subr.mxu0 0.0
    %6624 = vmatpush1.msra.mxu0 0.0
    %6625 = vmatprep.subr.mxu0 0.0
    %6626 = vmatpush1.msra.mxu0 0.0
    %6627 = vmatprep.subr.mxu0 0.0
    %6628 = vmatpush1.msra.mxu0 0.0
    %6629 = vmatprep.subr.mxu0 0.0
    %6630 = vmatpush1.msra.mxu0 0.0
    %6631 = vmatprep.subr.mxu0 0.0
    %6632 = vmatpush1.msra.mxu0 0.0
    %6633 = vmatprep.subr.mxu0 0.0
    %6634 = vmatpush1.msra.mxu0 0.0
    %6635 = vmatprep.subr.mxu0 0.0
    %6636 = vmatpush1.msra.mxu0 0.0
    %6637 = vmatprep.subr.mxu0 0.0
    %6638 = vmatpush1.msra.mxu0 0.0
    %6639 = vmatprep.subr.mxu0 0.0
    %6640 = vmatpush1.msra.mxu0 0.0
    %6641 = vmatprep.subr.mxu0 0.0
    %6642 = vmatpush1.msra.mxu0 0.0
    %6643 = vmatprep.subr.mxu0 0.0
    %6644 = vmatpush1.msra.mxu0 0.0
    %6645 = vmatprep.subr.mxu0 0.0
    %6646 = vmatpush1.msra.mxu0 0.0
    %6647 = vmatprep.subr.mxu0 0.0
    %6648 = vmatpush1.msra.mxu0 0.0
    %6649 = vmatprep.subr.mxu0 0.0
    %6650 = vmatpush1.msra.mxu0 0.0
    %6651 = vmatprep.subr.mxu0 0.0
    %6652 = vmatpush1.msra.mxu0 0.0
    %6653 = vmatprep.subr.mxu0 0.0
    %6654 = vmatpush1.msra.mxu0 0.0
    %6655 = vmatprep.subr.mxu0 0.0
    %6656 = vmatpush1.msra.mxu0 0.0
    %6657 = vmatprep.mubr.f32.mxu0 0.0
    %6658 = vmatmul.mubr.f32.gmra.mrb[0].mxu0 %v6587
    %v6659 = vpop.f32.mrb[0].mxu0
    %v6660 = vadd.f32 0.0, %v6659
    %v6661 = vpop.f32.mrb[0].mxu0
    %6662 = vdwg.mxu0
    %6663 = vmatprep.subr.mxu0 0.0
    %6664 = vmatpush1.msra.mxu0 %v6482
    %6665 = vmatprep.subr.mxu0 0.0
    %6666 = vmatpush1.msra.mxu0 %v6483
    %6667 = vmatprep.subr.mxu0 0.0
    %6668 = vmatpush1.msra.mxu0 %v6484
    %6669 = vmatprep.subr.mxu0 0.0
    %6670 = vmatpush1.msra.mxu0 %v6485
    %6671 = vmatprep.subr.mxu0 0.0
    %6672 = vmatpush1.msra.mxu0 %v6486
    %6673 = vmatprep.subr.mxu0 0.0
    %6674 = vmatpush1.msra.mxu0 %v6487
    %6675 = vmatprep.subr.mxu0 0.0
    %6676 = vmatpush1.msra.mxu0 %v6488
    %6677 = vmatprep.subr.mxu0 0.0
    %6678 = vmatpush1.msra.mxu0 %v6489
    %6679 = vmatprep.subr.mxu0 0.0
    %6680 = vmatpush1.msra.mxu0 %v6490
    %6681 = vmatprep.subr.mxu0 0.0
    %6682 = vmatpush1.msra.mxu0 %v6491
    %6683 = vmatprep.subr.mxu0 0.0
    %6684 = vmatpush1.msra.mxu0 %v6492
    %6685 = vmatprep.subr.mxu0 0.0
    %6686 = vmatpush1.msra.mxu0 %v6493
    %6687 = vmatprep.subr.mxu0 0.0
    %6688 = vmatpush1.msra.mxu0 %v6494
    %6689 = vmatprep.subr.mxu0 0.0
    %6690 = vmatpush1.msra.mxu0 %v6495
    %6691 = vmatprep.subr.mxu0 0.0
    %6692 = vmatpush1.msra.mxu0 %v6496
    %6693 = vmatprep.subr.mxu0 0.0
    %6694 = vmatpush1.msra.mxu0 %v6497
    %6695 = vmatprep.subr.mxu0 0.0
    %6696 = vmatpush1.msra.mxu0 0.0
    %6697 = vmatprep.subr.mxu0 0.0
    %6698 = vmatpush1.msra.mxu0 0.0
    %6699 = vmatprep.subr.mxu0 0.0
    %6700 = vmatpush1.msra.mxu0 0.0
    %6701 = vmatprep.subr.mxu0 0.0
    %6702 = vmatpush1.msra.mxu0 0.0
    %6703 = vmatprep.subr.mxu0 0.0
    %6704 = vmatpush1.msra.mxu0 0.0
    %6705 = vmatprep.subr.mxu0 0.0
    %6706 = vmatpush1.msra.mxu0 0.0
    %6707 = vmatprep.subr.mxu0 0.0
    %6708 = vmatpush1.msra.mxu0 0.0
    %6709 = vmatprep.subr.mxu0 0.0
    %6710 = vmatpush1.msra.mxu0 0.0
    %6711 = vmatprep.subr.mxu0 0.0
    %6712 = vmatpush1.msra.mxu0 0.0
    %6713 = vmatprep.subr.mxu0 0.0
    %6714 = vmatpush1.msra.mxu0 0.0
    %6715 = vmatprep.subr.mxu0 0.0
    %6716 = vmatpush1.msra.mxu0 0.0
    %6717 = vmatprep.subr.mxu0 0.0
    %6718 = vmatpush1.msra.mxu0 0.0
    %6719 = vmatprep.subr.mxu0 0.0
    %6720 = vmatpush1.msra.mxu0 0.0
    %6721 = vmatprep.subr.mxu0 0.0
    %6722 = vmatpush1.msra.mxu0 0.0
    %6723 = vmatprep.subr.mxu0 0.0
    %6724 = vmatpush1.msra.mxu0 0.0
    %6725 = vmatprep.subr.mxu0 0.0
    %6726 = vmatpush1.msra.mxu0 0.0
    %6727 = vmatprep.mubr.f32.mxu0 0.0
    %6728 = vmatmul.mubr.f32.gmra.mrb[0].mxu0 %v6395
    %v6729 = vpop.f32.mrb[0].mxu0
    %v6730 = vadd.f32 %v6660, %v6729
    %v6731 = vpop.f32.mrb[0].mxu0
    %6732 = vdwg.mxu0
    %v6733 = vld [vmem:[#allocation2 + $0x16d8] sm:$0xf]
    %v6735 = vsel %vm6585, %v6733, 0
    %v6738 = vsel %vm6589, %v6581, 0
    %6740 = vmatprep.subr.mxu0 0.0
    %6741 = vmatpush1.msra.mxu0 %v6738
    %6742 = vmatprep.subr.mxu0 0.0
    %6743 = vmatpush1.msra.mxu0 0.0
    %6744 = vmatprep.subr.mxu0 0.0
    %6745 = vmatpush1.msra.mxu0 0.0
    %6746 = vmatprep.subr.mxu0 0.0
    %6747 = vmatpush1.msra.mxu0 0.0
    %6748 = vmatprep.subr.mxu0 0.0
    %6749 = vmatpush1.msra.mxu0 0.0
    %6750 = vmatprep.subr.mxu0 0.0
    %6751 = vmatpush1.msra.mxu0 0.0
    %6752 = vmatprep.subr.mxu0 0.0
    %6753 = vmatpush1.msra.mxu0 0.0
    %6754 = vmatprep.subr.mxu0 0.0
    %6755 = vmatpush1.msra.mxu0 0.0
    %6756 = vmatprep.subr.mxu0 0.0
    %6757 = vmatpush1.msra.mxu0 0.0
    %6758 = vmatprep.subr.mxu0 0.0
    %6759 = vmatpush1.msra.mxu0 0.0
    %6760 = vmatprep.subr.mxu0 0.0
    %6761 = vmatpush1.msra.mxu0 0.0
    %6762 = vmatprep.subr.mxu0 0.0
    %6763 = vmatpush1.msra.mxu0 0.0
    %6764 = vmatprep.subr.mxu0 0.0
    %6765 = vmatpush1.msra.mxu0 0.0
    %6766 = vmatprep.subr.mxu0 0.0
    %6767 = vmatpush1.msra.mxu0 0.0
    %6768 = vmatprep.subr.mxu0 0.0
    %6769 = vmatpush1.msra.mxu0 0.0
    %6770 = vmatprep.subr.mxu0 0.0
    %6771 = vmatpush1.msra.mxu0 0.0
    %6772 = vmatprep.subr.mxu0 0.0
    %6773 = vmatpush1.msra.mxu0 0.0
    %6774 = vmatprep.subr.mxu0 0.0
    %6775 = vmatpush1.msra.mxu0 0.0
    %6776 = vmatprep.subr.mxu0 0.0
    %6777 = vmatpush1.msra.mxu0 0.0
    %6778 = vmatprep.subr.mxu0 0.0
    %6779 = vmatpush1.msra.mxu0 0.0
    %6780 = vmatprep.subr.mxu0 0.0
    %6781 = vmatpush1.msra.mxu0 0.0
    %6782 = vmatprep.subr.mxu0 0.0
    %6783 = vmatpush1.msra.mxu0 0.0
    %6784 = vmatprep.subr.mxu0 0.0
    %6785 = vmatpush1.msra.mxu0 0.0
    %6786 = vmatprep.subr.mxu0 0.0
    %6787 = vmatpush1.msra.mxu0 0.0
    %6788 = vmatprep.subr.mxu0 0.0
    %6789 = vmatpush1.msra.mxu0 0.0
    %6790 = vmatprep.subr.mxu0 0.0
    %6791 = vmatpush1.msra.mxu0 0.0
    %6792 = vmatprep.subr.mxu0 0.0
    %6793 = vmatpush1.msra.mxu0 0.0
    %6794 = vmatprep.subr.mxu0 0.0
    %6795 = vmatpush1.msra.mxu0 0.0
    %6796 = vmatprep.subr.mxu0 0.0
    %6797 = vmatpush1.msra.mxu0 0.0
    %6798 = vmatprep.subr.mxu0 0.0
    %6799 = vmatpush1.msra.mxu0 0.0
    %6800 = vmatprep.subr.mxu0 0.0
    %6801 = vmatpush1.msra.mxu0 0.0
    %6802 = vmatprep.subr.mxu0 0.0
    %6803 = vmatpush1.msra.mxu0 0.0
    %6804 = vmatprep.mubr.f32.mxu0 0.0
    %6805 = vmatmul.mubr.f32.gmra.mrb[0].mxu0 %v6735
    %v6806 = vpop.f32.mrb[0].mxu0
    %v6807 = vadd.f32 0.0, %v6806
    %v6808 = vpop.f32.mrb[0].mxu0
    %6809 = vdwg.mxu0
    %v6810 = vadd.f32 %v6730, %v6807
    %v6811 = vld [vmem:[#allocation2 + $0x16c8] sm:$0x1]
    %v6812 = vlaneseq
    %v6813 = vshrl.u32 %v6812, 7
    %v6814 = vsub.s32 0, %v6813
    %v6815 = vrot.slane %v6811, %v6814
    %v6816 = vadd.f32 %v6810, %v6815
    %v6817 = vmax.f32 %v6816, 0.0
    %v6818 = vld [vmem:[#allocation2 + $0x16e0] sm:$0xff]
    %v6819 = vld [vmem:[#allocation2 + $0x16e8] sm:$0xff]
    %v6820 = vld [vmem:[#allocation2 + $0x16f0] sm:$0xff]
    %v6821 = vld [vmem:[#allocation2 + $0x16f8] sm:$0xff]
    %v6822 = vld [vmem:[#allocation2 + $0x1700] sm:$0xff]
    %v6823 = vld [vmem:[#allocation2 + $0x1708] sm:$0xff]
    %v6824 = vld [vmem:[#allocation2 + $0x1710] sm:$0xff]
    %v6825 = vld [vmem:[#allocation2 + $0x1718] sm:$0xff]
    %v6826 = vld [vmem:[#allocation2 + $0x1720] sm:$0xff]
    %v6827 = vld [vmem:[#allocation2 + $0x1728] sm:$0xff]
    %v6828 = vld [vmem:[#allocation2 + $0x1730] sm:$0xff]
    %v6829 = vld [vmem:[#allocation2 + $0x1738] sm:$0xff]
    %v6830 = vld [vmem:[#allocation2 + $0x1740] sm:$0xff]
    %v6831 = vld [vmem:[#allocation2 + $0x1748] sm:$0xff]
    %v6832 = vld [vmem:[#allocation2 + $0x1750] sm:$0xff]
    %v6833 = vld [vmem:[#allocation2 + $0x1758] sm:$0xff]
    %6834 = vmatprep.subr.mxu0 0.0
    %6835 = vmatpush1.msra.mxu0 %v6818
    %6836 = vmatprep.subr.mxu0 0.0
    %6837 = vmatpush1.msra.mxu0 %v6819
    %6838 = vmatprep.subr.mxu0 0.0
    %6839 = vmatpush1.msra.mxu0 %v6820
    %6840 = vmatprep.subr.mxu0 0.0
    %6841 = vmatpush1.msra.mxu0 %v6821
    %6842 = vmatprep.subr.mxu0 0.0
    %6843 = vmatpush1.msra.mxu0 %v6822
    %6844 = vmatprep.subr.mxu0 0.0
    %6845 = vmatpush1.msra.mxu0 %v6823
    %6846 = vmatprep.subr.mxu0 0.0
    %6847 = vmatpush1.msra.mxu0 %v6824
    %6848 = vmatprep.subr.mxu0 0.0
    %6849 = vmatpush1.msra.mxu0 %v6825
    %6850 = vmatprep.subr.mxu0 0.0
    %6851 = vmatpush1.msra.mxu0 %v6826
    %6852 = vmatprep.subr.mxu0 0.0
    %6853 = vmatpush1.msra.mxu0 %v6827
    %6854 = vmatprep.subr.mxu0 0.0
    %6855 = vmatpush1.msra.mxu0 %v6828
    %6856 = vmatprep.subr.mxu0 0.0
    %6857 = vmatpush1.msra.mxu0 %v6829
    %6858 = vmatprep.subr.mxu0 0.0
    %6859 = vmatpush1.msra.mxu0 %v6830
    %6860 = vmatprep.subr.mxu0 0.0
    %6861 = vmatpush1.msra.mxu0 %v6831
    %6862 = vmatprep.subr.mxu0 0.0
    %6863 = vmatpush1.msra.mxu0 %v6832
    %6864 = vmatprep.subr.mxu0 0.0
    %6865 = vmatpush1.msra.mxu0 %v6833
    %6866 = vmatprep.subr.mxu0 0.0
    %6867 = vmatpush1.msra.mxu0 0.0
    %6868 = vmatprep.subr.mxu0 0.0
    %6869 = vmatpush1.msra.mxu0 0.0
    %6870 = vmatprep.subr.mxu0 0.0
    %6871 = vmatpush1.msra.mxu0 0.0
    %6872 = vmatprep.subr.mxu0 0.0
    %6873 = vmatpush1.msra.mxu0 0.0
    %6874 = vmatprep.subr.mxu0 0.0
    %6875 = vmatpush1.msra.mxu0 0.0
    %6876 = vmatprep.subr.mxu0 0.0
    %6877 = vmatpush1.msra.mxu0 0.0
    %6878 = vmatprep.subr.mxu0 0.0
    %6879 = vmatpush1.msra.mxu0 0.0
    %6880 = vmatprep.subr.mxu0 0.0
    %6881 = vmatpush1.msra.mxu0 0.0
    %6882 = vmatprep.subr.mxu0 0.0
    %6883 = vmatpush1.msra.mxu0 0.0
    %6884 = vmatprep.subr.mxu0 0.0
    %6885 = vmatpush1.msra.mxu0 0.0
    %6886 = vmatprep.subr.mxu0 0.0
    %6887 = vmatpush1.msra.mxu0 0.0
    %6888 = vmatprep.subr.mxu0 0.0
    %6889 = vmatpush1.msra.mxu0 0.0
    %6890 = vmatprep.subr.mxu0 0.0
    %6891 = vmatpush1.msra.mxu0 0.0
    %6892 = vmatprep.subr.mxu0 0.0
    %6893 = vmatpush1.msra.mxu0 0.0
    %6894 = vmatprep.subr.mxu0 0.0
    %6895 = vmatpush1.msra.mxu0 0.0
    %6896 = vmatprep.subr.mxu0 0.0
    %6897 = vmatpush1.msra.mxu0 0.0
    %6898 = vmatprep.mubr.f32.mxu0 0.0
    %6899 = vmatmul.mubr.f32.gmra.mrb[0].mxu0 %v6817
    %v6900 = vpop.f32.mrb[0].mxu0
    %v6901 = vadd.f32 0.0, %v6900
    %v6902 = vpop.f32.mrb[0].mxu0
    %6903 = vdwg.mxu0
    %v6904 = vld [vmem:[#allocation2 + $0x1760] sm:$0xff]
    %v6905 = vld [vmem:[#allocation2 + $0x1768] sm:$0xff]
    %v6906 = vld [vmem:[#allocation2 + $0x1770] sm:$0xff]
    %v6907 = vld [vmem:[#allocation2 + $0x1778] sm:$0xff]
    %v6908 = vld [vmem:[#allocation2 + $0x1780] sm:$0xff]
    %v6909 = vld [vmem:[#allocation2 + $0x1788] sm:$0xff]
    %v6910 = vld [vmem:[#allocation2 + $0x1790] sm:$0xff]
    %v6911 = vld [vmem:[#allocation2 + $0x1798] sm:$0xff]
    %v6912 = vld [vmem:[#allocation2 + $0x17a0] sm:$0xff]
    %v6913 = vld [vmem:[#allocation2 + $0x17a8] sm:$0xff]
    %v6914 = vld [vmem:[#allocation2 + $0x17b0] sm:$0xff]
    %v6915 = vld [vmem:[#allocation2 + $0x17b8] sm:$0xff]
    %v6916 = vld [vmem:[#allocation2 + $0x17c0] sm:$0xff]
    %v6917 = vld [vmem:[#allocation2 + $0x17c8] sm:$0xff]
    %v6918 = vld [vmem:[#allocation2 + $0x17d0] sm:$0xff]
    %v6919 = vld [vmem:[#allocation2 + $0x17d8] sm:$0xff]
    %v6920 = vld [vmem:[#allocation2 + $0x17e0] sm:$0xff]
    %v6921 = vld [vmem:[#allocation2 + $0x17e8] sm:$0xff]
    %v6922 = vld [vmem:[#allocation2 + $0x17f0] sm:$0xff]
    %v6923 = vld [vmem:[#allocation2 + $0x17f8] sm:$0xff]
    %v6924 = vld [vmem:[#allocation2 + $0x1800] sm:$0xff]
    %v6925 = vld [vmem:[#allocation2 + $0x1808] sm:$0xff]
    %v6926 = vld [vmem:[#allocation2 + $0x1810] sm:$0xff]
    %v6927 = vld [vmem:[#allocation2 + $0x1818] sm:$0xff]
    %v6928 = vld [vmem:[#allocation2 + $0x1820] sm:$0xff]
    %v6929 = vld [vmem:[#allocation2 + $0x1828] sm:$0xff]
    %v6930 = vld [vmem:[#allocation2 + $0x1830] sm:$0xff]
    %v6931 = vld [vmem:[#allocation2 + $0x1838] sm:$0xff]
    %v6932 = vld [vmem:[#allocation2 + $0x1840] sm:$0xff]
    %v6933 = vld [vmem:[#allocation2 + $0x1848] sm:$0xff]
    %v6934 = vld [vmem:[#allocation2 + $0x1850] sm:$0xff]
    %v6935 = vld [vmem:[#allocation2 + $0x1858] sm:$0xff]
    %6936 = vmatprep.subr.mxu0 0.0
    %6937 = vmatpush1.msra.mxu0 %v6920
    %6938 = vmatprep.subr.mxu0 0.0
    %6939 = vmatpush1.msra.mxu0 %v6921
    %6940 = vmatprep.subr.mxu0 0.0
    %6941 = vmatpush1.msra.mxu0 %v6922
    %6942 = vmatprep.subr.mxu0 0.0
    %6943 = vmatpush1.msra.mxu0 %v6923
    %6944 = vmatprep.subr.mxu0 0.0
    %6945 = vmatpush1.msra.mxu0 %v6924
    %6946 = vmatprep.subr.mxu0 0.0
    %6947 = vmatpush1.msra.mxu0 %v6925
    %6948 = vmatprep.subr.mxu0 0.0
    %6949 = vmatpush1.msra.mxu0 %v6926
    %6950 = vmatprep.subr.mxu0 0.0
    %6951 = vmatpush1.msra.mxu0 %v6927
    %6952 = vmatprep.subr.mxu0 0.0
    %6953 = vmatpush1.msra.mxu0 %v6928
    %6954 = vmatprep.subr.mxu0 0.0
    %6955 = vmatpush1.msra.mxu0 %v6929
    %6956 = vmatprep.subr.mxu0 0.0
    %6957 = vmatpush1.msra.mxu0 %v6930
    %6958 = vmatprep.subr.mxu0 0.0
    %6959 = vmatpush1.msra.mxu0 %v6931
    %6960 = vmatprep.subr.mxu0 0.0
    %6961 = vmatpush1.msra.mxu0 %v6932
    %6962 = vmatprep.subr.mxu0 0.0
    %6963 = vmatpush1.msra.mxu0 %v6933
    %6964 = vmatprep.subr.mxu0 0.0
    %6965 = vmatpush1.msra.mxu0 %v6934
    %6966 = vmatprep.subr.mxu0 0.0
    %6967 = vmatpush1.msra.mxu0 %v6935
    %6968 = vmatprep.subr.mxu0 0.0
    %6969 = vmatpush1.msra.mxu0 0.0
    %6970 = vmatprep.subr.mxu0 0.0
    %6971 = vmatpush1.msra.mxu0 0.0
    %6972 = vmatprep.subr.mxu0 0.0
    %6973 = vmatpush1.msra.mxu0 0.0
    %6974 = vmatprep.subr.mxu0 0.0
    %6975 = vmatpush1.msra.mxu0 0.0
    %6976 = vmatprep.subr.mxu0 0.0
    %6977 = vmatpush1.msra.mxu0 0.0
    %6978 = vmatprep.subr.mxu0 0.0
    %6979 = vmatpush1.msra.mxu0 0.0
    %6980 = vmatprep.subr.mxu0 0.0
    %6981 = vmatpush1.msra.mxu0 0.0
    %6982 = vmatprep.subr.mxu0 0.0
    %6983 = vmatpush1.msra.mxu0 0.0
    %6984 = vmatprep.subr.mxu0 0.0
    %6985 = vmatpush1.msra.mxu0 0.0
    %6986 = vmatprep.subr.mxu0 0.0
    %6987 = vmatpush1.msra.mxu0 0.0
    %6988 = vmatprep.subr.mxu0 0.0
    %6989 = vmatpush1.msra.mxu0 0.0
    %6990 = vmatprep.subr.mxu0 0.0
    %6991 = vmatpush1.msra.mxu0 0.0
    %6992 = vmatprep.subr.mxu0 0.0
    %6993 = vmatpush1.msra.mxu0 0.0
    %6994 = vmatprep.subr.mxu0 0.0
    %6995 = vmatpush1.msra.mxu0 0.0
    %6996 = vmatprep.subr.mxu0 0.0
    %6997 = vmatpush1.msra.mxu0 0.0
    %6998 = vmatprep.subr.mxu0 0.0
    %6999 = vmatpush1.msra.mxu0 0.0
    %7000 = vmatprep.mubr.f32.mxu0 0.0
    %7001 = vmatmul.mubr.f32.gmra.mrb[0].mxu0 %v6817
    %v7002 = vpop.f32.mrb[0].mxu0
    %v7003 = vadd.f32 0.0, %v7002
    %v7004 = vpop.f32.mrb[0].mxu0
    %7005 = vdwg.mxu0
    %v7007 = vsel %vm6589, %v6901, 0
    %7009 = vmatprep.subr.mxu0 0.0
    %7010 = vmatpush1.msra.mxu0 %v7007
    %7011 = vmatprep.subr.mxu0 0.0
    %7012 = vmatpush1.msra.mxu0 0.0
    %7013 = vmatprep.subr.mxu0 0.0
    %7014 = vmatpush1.msra.mxu0 0.0
    %7015 = vmatprep.subr.mxu0 0.0
    %7016 = vmatpush1.msra.mxu0 0.0
    %7017 = vmatprep.subr.mxu0 0.0
    %7018 = vmatpush1.msra.mxu0 0.0
    %7019 = vmatprep.subr.mxu0 0.0
    %7020 = vmatpush1.msra.mxu0 0.0
    %7021 = vmatprep.subr.mxu0 0.0
    %7022 = vmatpush1.msra.mxu0 0.0
    %7023 = vmatprep.subr.mxu0 0.0
    %7024 = vmatpush1.msra.mxu0 0.0
    %7025 = vmatprep.subr.mxu0 0.0
    %7026 = vmatpush1.msra.mxu0 0.0
    %7027 = vmatprep.subr.mxu0 0.0
    %7028 = vmatpush1.msra.mxu0 0.0
    %7029 = vmatprep.subr.mxu0 0.0
    %7030 = vmatpush1.msra.mxu0 0.0
    %7031 = vmatprep.subr.mxu0 0.0
    %7032 = vmatpush1.msra.mxu0 0.0
    %7033 = vmatprep.subr.mxu0 0.0
    %7034 = vmatpush1.msra.mxu0 0.0
    %7035 = vmatprep.subr.mxu0 0.0
    %7036 = vmatpush1.msra.mxu0 0.0
    %7037 = vmatprep.subr.mxu0 0.0
    %7038 = vmatpush1.msra.mxu0 0.0
    %7039 = vmatprep.subr.mxu0 0.0
    %7040 = vmatpush1.msra.mxu0 0.0
    %7041 = vmatprep.subr.mxu0 0.0
    %7042 = vmatpush1.msra.mxu0 0.0
    %7043 = vmatprep.subr.mxu0 0.0
    %7044 = vmatpush1.msra.mxu0 0.0
    %7045 = vmatprep.subr.mxu0 0.0
    %7046 = vmatpush1.msra.mxu0 0.0
    %7047 = vmatprep.subr.mxu0 0.0
    %7048 = vmatpush1.msra.mxu0 0.0
    %7049 = vmatprep.subr.mxu0 0.0
    %7050 = vmatpush1.msra.mxu0 0.0
    %7051 = vmatprep.subr.mxu0 0.0
    %7052 = vmatpush1.msra.mxu0 0.0
    %7053 = vmatprep.subr.mxu0 0.0
    %7054 = vmatpush1.msra.mxu0 0.0
    %7055 = vmatprep.subr.mxu0 0.0
    %7056 = vmatpush1.msra.mxu0 0.0
    %7057 = vmatprep.subr.mxu0 0.0
    %7058 = vmatpush1.msra.mxu0 0.0
    %7059 = vmatprep.subr.mxu0 0.0
    %7060 = vmatpush1.msra.mxu0 0.0
    %7061 = vmatprep.subr.mxu0 0.0
    %7062 = vmatpush1.msra.mxu0 0.0
    %7063 = vmatprep.subr.mxu0 0.0
    %7064 = vmatpush1.msra.mxu0 0.0
    %7065 = vmatprep.subr.mxu0 0.0
    %7066 = vmatpush1.msra.mxu0 0.0
    %7067 = vmatprep.subr.mxu0 0.0
    %7068 = vmatpush1.msra.mxu0 0.0
    %7069 = vmatprep.subr.mxu0 0.0
    %7070 = vmatpush1.msra.mxu0 0.0
    %7071 = vmatprep.subr.mxu0 0.0
    %7072 = vmatpush1.msra.mxu0 0.0
    %7073 = vmatprep.mubr.f32.mxu0 0.0
    %7074 = vmatmul.mubr.f32.gmra.mrb[0].mxu0 %v6587
    %v7075 = vpop.f32.mrb[0].mxu0
    %v7076 = vadd.f32 0.0, %v7075
    %v7077 = vpop.f32.mrb[0].mxu0
    %7078 = vdwg.mxu0
    %7079 = vmatprep.subr.mxu0 0.0
    %7080 = vmatpush1.msra.mxu0 %v6904
    %7081 = vmatprep.subr.mxu0 0.0
    %7082 = vmatpush1.msra.mxu0 %v6905
    %7083 = vmatprep.subr.mxu0 0.0
    %7084 = vmatpush1.msra.mxu0 %v6906
    %7085 = vmatprep.subr.mxu0 0.0
    %7086 = vmatpush1.msra.mxu0 %v6907
    %7087 = vmatprep.subr.mxu0 0.0
    %7088 = vmatpush1.msra.mxu0 %v6908
    %7089 = vmatprep.subr.mxu0 0.0
    %7090 = vmatpush1.msra.mxu0 %v6909
    %7091 = vmatprep.subr.mxu0 0.0
    %7092 = vmatpush1.msra.mxu0 %v6910
    %7093 = vmatprep.subr.mxu0 0.0
    %7094 = vmatpush1.msra.mxu0 %v6911
    %7095 = vmatprep.subr.mxu0 0.0
    %7096 = vmatpush1.msra.mxu0 %v6912
    %7097 = vmatprep.subr.mxu0 0.0
    %7098 = vmatpush1.msra.mxu0 %v6913
    %7099 = vmatprep.subr.mxu0 0.0
    %7100 = vmatpush1.msra.mxu0 %v6914
    %7101 = vmatprep.subr.mxu0 0.0
    %7102 = vmatpush1.msra.mxu0 %v6915
    %7103 = vmatprep.subr.mxu0 0.0
    %7104 = vmatpush1.msra.mxu0 %v6916
    %7105 = vmatprep.subr.mxu0 0.0
    %7106 = vmatpush1.msra.mxu0 %v6917
    %7107 = vmatprep.subr.mxu0 0.0
    %7108 = vmatpush1.msra.mxu0 %v6918
    %7109 = vmatprep.subr.mxu0 0.0
    %7110 = vmatpush1.msra.mxu0 %v6919
    %7111 = vmatprep.subr.mxu0 0.0
    %7112 = vmatpush1.msra.mxu0 0.0
    %7113 = vmatprep.subr.mxu0 0.0
    %7114 = vmatpush1.msra.mxu0 0.0
    %7115 = vmatprep.subr.mxu0 0.0
    %7116 = vmatpush1.msra.mxu0 0.0
    %7117 = vmatprep.subr.mxu0 0.0
    %7118 = vmatpush1.msra.mxu0 0.0
    %7119 = vmatprep.subr.mxu0 0.0
    %7120 = vmatpush1.msra.mxu0 0.0
    %7121 = vmatprep.subr.mxu0 0.0
    %7122 = vmatpush1.msra.mxu0 0.0
    %7123 = vmatprep.subr.mxu0 0.0
    %7124 = vmatpush1.msra.mxu0 0.0
    %7125 = vmatprep.subr.mxu0 0.0
    %7126 = vmatpush1.msra.mxu0 0.0
    %7127 = vmatprep.subr.mxu0 0.0
    %7128 = vmatpush1.msra.mxu0 0.0
    %7129 = vmatprep.subr.mxu0 0.0
    %7130 = vmatpush1.msra.mxu0 0.0
    %7131 = vmatprep.subr.mxu0 0.0
    %7132 = vmatpush1.msra.mxu0 0.0
    %7133 = vmatprep.subr.mxu0 0.0
    %7134 = vmatpush1.msra.mxu0 0.0
    %7135 = vmatprep.subr.mxu0 0.0
    %7136 = vmatpush1.msra.mxu0 0.0
    %7137 = vmatprep.subr.mxu0 0.0
    %7138 = vmatpush1.msra.mxu0 0.0
    %7139 = vmatprep.subr.mxu0 0.0
    %7140 = vmatpush1.msra.mxu0 0.0
    %7141 = vmatprep.subr.mxu0 0.0
    %7142 = vmatpush1.msra.mxu0 0.0
    %7143 = vmatprep.mubr.f32.mxu0 0.0
    %7144 = vmatmul.mubr.f32.gmra.mrb[0].mxu0 %v6817
    %v7145 = vpop.f32.mrb[0].mxu0
    %v7146 = vadd.f32 %v7076, %v7145
    %v7147 = vpop.f32.mrb[0].mxu0
    %7148 = vdwg.mxu0
    %v7150 = vsel %vm6589, %v7003, 0
    %7152 = vmatprep.subr.mxu0 0.0
    %7153 = vmatpush1.msra.mxu0 %v7150
    %7154 = vmatprep.subr.mxu0 0.0
    %7155 = vmatpush1.msra.mxu0 0.0
    %7156 = vmatprep.subr.mxu0 0.0
    %7157 = vmatpush1.msra.mxu0 0.0
    %7158 = vmatprep.subr.mxu0 0.0
    %7159 = vmatpush1.msra.mxu0 0.0
    %7160 = vmatprep.subr.mxu0 0.0
    %7161 = vmatpush1.msra.mxu0 0.0
    %7162 = vmatprep.subr.mxu0 0.0
    %7163 = vmatpush1.msra.mxu0 0.0
    %7164 = vmatprep.subr.mxu0 0.0
    %7165 = vmatpush1.msra.mxu0 0.0
    %7166 = vmatprep.subr.mxu0 0.0
    %7167 = vmatpush1.msra.mxu0 0.0
    %7168 = vmatprep.subr.mxu0 0.0
    %7169 = vmatpush1.msra.mxu0 0.0
    %7170 = vmatprep.subr.mxu0 0.0
    %7171 = vmatpush1.msra.mxu0 0.0
    %7172 = vmatprep.subr.mxu0 0.0
    %7173 = vmatpush1.msra.mxu0 0.0
    %7174 = vmatprep.subr.mxu0 0.0
    %7175 = vmatpush1.msra.mxu0 0.0
    %7176 = vmatprep.subr.mxu0 0.0
    %7177 = vmatpush1.msra.mxu0 0.0
    %7178 = vmatprep.subr.mxu0 0.0
    %7179 = vmatpush1.msra.mxu0 0.0
    %7180 = vmatprep.subr.mxu0 0.0
    %7181 = vmatpush1.msra.mxu0 0.0
    %7182 = vmatprep.subr.mxu0 0.0
    %7183 = vmatpush1.msra.mxu0 0.0
    %7184 = vmatprep.subr.mxu0 0.0
    %7185 = vmatpush1.msra.mxu0 0.0
    %7186 = vmatprep.subr.mxu0 0.0
    %7187 = vmatpush1.msra.mxu0 0.0
    %7188 = vmatprep.subr.mxu0 0.0
    %7189 = vmatpush1.msra.mxu0 0.0
    %7190 = vmatprep.subr.mxu0 0.0
    %7191 = vmatpush1.msra.mxu0 0.0
    %7192 = vmatprep.subr.mxu0 0.0
    %7193 = vmatpush1.msra.mxu0 0.0
    %7194 = vmatprep.subr.mxu0 0.0
    %7195 = vmatpush1.msra.mxu0 0.0
    %7196 = vmatprep.subr.mxu0 0.0
    %7197 = vmatpush1.msra.mxu0 0.0
    %7198 = vmatprep.subr.mxu0 0.0
    %7199 = vmatpush1.msra.mxu0 0.0
    %7200 = vmatprep.subr.mxu0 0.0
    %7201 = vmatpush1.msra.mxu0 0.0
    %7202 = vmatprep.subr.mxu0 0.0
    %7203 = vmatpush1.msra.mxu0 0.0
    %7204 = vmatprep.subr.mxu0 0.0
    %7205 = vmatpush1.msra.mxu0 0.0
    %7206 = vmatprep.subr.mxu0 0.0
    %7207 = vmatpush1.msra.mxu0 0.0
    %7208 = vmatprep.subr.mxu0 0.0
    %7209 = vmatpush1.msra.mxu0 0.0
    %7210 = vmatprep.subr.mxu0 0.0
    %7211 = vmatpush1.msra.mxu0 0.0
    %7212 = vmatprep.subr.mxu0 0.0
    %7213 = vmatpush1.msra.mxu0 0.0
    %7214 = vmatprep.subr.mxu0 0.0
    %7215 = vmatpush1.msra.mxu0 0.0
    %7216 = vmatprep.mubr.f32.mxu0 0.0
    %7217 = vmatmul.mubr.f32.gmra.mrb[0].mxu0 %v6735
    %v7218 = vpop.f32.mrb[0].mxu0
    %v7219 = vadd.f32 0.0, %v7218
    %v7220 = vpop.f32.mrb[0].mxu0
    %7221 = vdwg.mxu0
    %v7222 = vadd.f32 %v7146, %v7219
    %v7223 = vld [vmem:[#allocation2 + $0x1860] sm:$0x1]
    %v7224 = vlaneseq
    %v7225 = vshrl.u32 %v7224, 7
    %v7226 = vsub.s32 0, %v7225
    %v7227 = vrot.slane %v7223, %v7226
    %v7228 = vadd.f32 %v7222, %v7227
    %v7229 = vmax.f32 %v7228, 0.0
    %v7230 = vld [vmem:[#allocation2 + $0x1868] sm:$0xff]
    %v7231 = vld [vmem:[#allocation2 + $0x1870] sm:$0xff]
    %v7232 = vld [vmem:[#allocation2 + $0x1878] sm:$0xff]
    %v7233 = vld [vmem:[#allocation2 + $0x1880] sm:$0xff]
    %v7234 = vld [vmem:[#allocation2 + $0x1888] sm:$0xff]
    %v7235 = vld [vmem:[#allocation2 + $0x1890] sm:$0xff]
    %v7236 = vld [vmem:[#allocation2 + $0x1898] sm:$0xff]
    %v7237 = vld [vmem:[#allocation2 + $0x18a0] sm:$0xff]
    %v7238 = vld [vmem:[#allocation2 + $0x18a8] sm:$0xff]
    %v7239 = vld [vmem:[#allocation2 + $0x18b0] sm:$0xff]
    %v7240 = vld [vmem:[#allocation2 + $0x18b8] sm:$0xff]
    %v7241 = vld [vmem:[#allocation2 + $0x18c0] sm:$0xff]
    %v7242 = vld [vmem:[#allocation2 + $0x18c8] sm:$0xff]
    %v7243 = vld [vmem:[#allocation2 + $0x18d0] sm:$0xff]
    %v7244 = vld [vmem:[#allocation2 + $0x18d8] sm:$0xff]
    %v7245 = vld [vmem:[#allocation2 + $0x18e0] sm:$0xff]
    %7246 = vmatprep.subr.mxu0 0.0
    %7247 = vmatpush1.msra.mxu0 %v7230
    %7248 = vmatprep.subr.mxu0 0.0
    %7249 = vmatpush1.msra.mxu0 %v7231
    %7250 = vmatprep.subr.mxu0 0.0
    %7251 = vmatpush1.msra.mxu0 %v7232
    %7252 = vmatprep.subr.mxu0 0.0
    %7253 = vmatpush1.msra.mxu0 %v7233
    %7254 = vmatprep.subr.mxu0 0.0
    %7255 = vmatpush1.msra.mxu0 %v7234
    %7256 = vmatprep.subr.mxu0 0.0
    %7257 = vmatpush1.msra.mxu0 %v7235
    %7258 = vmatprep.subr.mxu0 0.0
    %7259 = vmatpush1.msra.mxu0 %v7236
    %7260 = vmatprep.subr.mxu0 0.0
    %7261 = vmatpush1.msra.mxu0 %v7237
    %7262 = vmatprep.subr.mxu0 0.0
    %7263 = vmatpush1.msra.mxu0 %v7238
    %7264 = vmatprep.subr.mxu0 0.0
    %7265 = vmatpush1.msra.mxu0 %v7239
    %7266 = vmatprep.subr.mxu0 0.0
    %7267 = vmatpush1.msra.mxu0 %v7240
    %7268 = vmatprep.subr.mxu0 0.0
    %7269 = vmatpush1.msra.mxu0 %v7241
    %7270 = vmatprep.subr.mxu0 0.0
    %7271 = vmatpush1.msra.mxu0 %v7242
    %7272 = vmatprep.subr.mxu0 0.0
    %7273 = vmatpush1.msra.mxu0 %v7243
    %7274 = vmatprep.subr.mxu0 0.0
    %7275 = vmatpush1.msra.mxu0 %v7244
    %7276 = vmatprep.subr.mxu0 0.0
    %7277 = vmatpush1.msra.mxu0 %v7245
    %7278 = vmatprep.subr.mxu0 0.0
    %7279 = vmatpush1.msra.mxu0 0.0
    %7280 = vmatprep.subr.mxu0 0.0
    %7281 = vmatpush1.msra.mxu0 0.0
    %7282 = vmatprep.subr.mxu0 0.0
    %7283 = vmatpush1.msra.mxu0 0.0
    %7284 = vmatprep.subr.mxu0 0.0
    %7285 = vmatpush1.msra.mxu0 0.0
    %7286 = vmatprep.subr.mxu0 0.0
    %7287 = vmatpush1.msra.mxu0 0.0
    %7288 = vmatprep.subr.mxu0 0.0
    %7289 = vmatpush1.msra.mxu0 0.0
    %7290 = vmatprep.subr.mxu0 0.0
    %7291 = vmatpush1.msra.mxu0 0.0
    %7292 = vmatprep.subr.mxu0 0.0
    %7293 = vmatpush1.msra.mxu0 0.0
    %7294 = vmatprep.subr.mxu0 0.0
    %7295 = vmatpush1.msra.mxu0 0.0
    %7296 = vmatprep.subr.mxu0 0.0
    %7297 = vmatpush1.msra.mxu0 0.0
    %7298 = vmatprep.subr.mxu0 0.0
    %7299 = vmatpush1.msra.mxu0 0.0
    %7300 = vmatprep.subr.mxu0 0.0
    %7301 = vmatpush1.msra.mxu0 0.0
    %7302 = vmatprep.subr.mxu0 0.0
    %7303 = vmatpush1.msra.mxu0 0.0
    %7304 = vmatprep.subr.mxu0 0.0
    %7305 = vmatpush1.msra.mxu0 0.0
    %7306 = vmatprep.subr.mxu0 0.0
    %7307 = vmatpush1.msra.mxu0 0.0
    %7308 = vmatprep.subr.mxu0 0.0
    %7309 = vmatpush1.msra.mxu0 0.0
    %7310 = vmatprep.mubr.f32.mxu0 0.0
    %7311 = vmatmul.mubr.f32.gmra.mrb[0].mxu0 %v7229
    %v7312 = vpop.f32.mrb[0].mxu0
    %v7313 = vadd.f32 0.0, %v7312
    %v7314 = vpop.f32.mrb[0].mxu0
    %7315 = vdwg.mxu0
    %v7316 = vld [vmem:[#allocation2 + $0x18e8] sm:$0xff]
    %v7317 = vld [vmem:[#allocation2 + $0x18f0] sm:$0xff]
    %v7318 = vld [vmem:[#allocation2 + $0x18f8] sm:$0xff]
    %v7319 = vld [vmem:[#allocation2 + $0x1900] sm:$0xff]
    %v7320 = vld [vmem:[#allocation2 + $0x1908] sm:$0xff]
    %v7321 = vld [vmem:[#allocation2 + $0x1910] sm:$0xff]
    %v7322 = vld [vmem:[#allocation2 + $0x1918] sm:$0xff]
    %v7323 = vld [vmem:[#allocation2 + $0x1920] sm:$0xff]
    %v7324 = vld [vmem:[#allocation2 + $0x1928] sm:$0xff]
    %v7325 = vld [vmem:[#allocation2 + $0x1930] sm:$0xff]
    %v7326 = vld [vmem:[#allocation2 + $0x1938] sm:$0xff]
    %v7327 = vld [vmem:[#allocation2 + $0x1940] sm:$0xff]
    %v7328 = vld [vmem:[#allocation2 + $0x1948] sm:$0xff]
    %v7329 = vld [vmem:[#allocation2 + $0x1950] sm:$0xff]
    %v7330 = vld [vmem:[#allocation2 + $0x1958] sm:$0xff]
    %v7331 = vld [vmem:[#allocation2 + $0x1960] sm:$0xff]
    %v7332 = vld [vmem:[#allocation2 + $0x1968] sm:$0xff]
    %v7333 = vld [vmem:[#allocation2 + $0x1970] sm:$0xff]
    %v7334 = vld [vmem:[#allocation2 + $0x1978] sm:$0xff]
    %v7335 = vld [vmem:[#allocation2 + $0x1980] sm:$0xff]
    %v7336 = vld [vmem:[#allocation2 + $0x1988] sm:$0xff]
    %v7337 = vld [vmem:[#allocation2 + $0x1990] sm:$0xff]
    %v7338 = vld [vmem:[#allocation2 + $0x1998] sm:$0xff]
    %v7339 = vld [vmem:[#allocation2 + $0x19a0] sm:$0xff]
    %v7340 = vld [vmem:[#allocation2 + $0x19a8] sm:$0xff]
    %v7341 = vld [vmem:[#allocation2 + $0x19b0] sm:$0xff]
    %v7342 = vld [vmem:[#allocation2 + $0x19b8] sm:$0xff]
    %v7343 = vld [vmem:[#allocation2 + $0x19c0] sm:$0xff]
    %v7344 = vld [vmem:[#allocation2 + $0x19c8] sm:$0xff]
    %v7345 = vld [vmem:[#allocation2 + $0x19d0] sm:$0xff]
    %v7346 = vld [vmem:[#allocation2 + $0x19d8] sm:$0xff]
    %v7347 = vld [vmem:[#allocation2 + $0x19e0] sm:$0xff]
    %7348 = vmatprep.subr.mxu0 0.0
    %7349 = vmatpush1.msra.mxu0 %v7332
    %7350 = vmatprep.subr.mxu0 0.0
    %7351 = vmatpush1.msra.mxu0 %v7333
    %7352 = vmatprep.subr.mxu0 0.0
    %7353 = vmatpush1.msra.mxu0 %v7334
    %7354 = vmatprep.subr.mxu0 0.0
    %7355 = vmatpush1.msra.mxu0 %v7335
    %7356 = vmatprep.subr.mxu0 0.0
    %7357 = vmatpush1.msra.mxu0 %v7336
    %7358 = vmatprep.subr.mxu0 0.0
    %7359 = vmatpush1.msra.mxu0 %v7337
    %7360 = vmatprep.subr.mxu0 0.0
    %7361 = vmatpush1.msra.mxu0 %v7338
    %7362 = vmatprep.subr.mxu0 0.0
    %7363 = vmatpush1.msra.mxu0 %v7339
    %7364 = vmatprep.subr.mxu0 0.0
    %7365 = vmatpush1.msra.mxu0 %v7340
    %7366 = vmatprep.subr.mxu0 0.0
    %7367 = vmatpush1.msra.mxu0 %v7341
    %7368 = vmatprep.subr.mxu0 0.0
    %7369 = vmatpush1.msra.mxu0 %v7342
    %7370 = vmatprep.subr.mxu0 0.0
    %7371 = vmatpush1.msra.mxu0 %v7343
    %7372 = vmatprep.subr.mxu0 0.0
    %7373 = vmatpush1.msra.mxu0 %v7344
    %7374 = vmatprep.subr.mxu0 0.0
    %7375 = vmatpush1.msra.mxu0 %v7345
    %7376 = vmatprep.subr.mxu0 0.0
    %7377 = vmatpush1.msra.mxu0 %v7346
    %7378 = vmatprep.subr.mxu0 0.0
    %7379 = vmatpush1.msra.mxu0 %v7347
    %7380 = vmatprep.subr.mxu0 0.0
    %7381 = vmatpush1.msra.mxu0 0.0
    %7382 = vmatprep.subr.mxu0 0.0
    %7383 = vmatpush1.msra.mxu0 0.0
    %7384 = vmatprep.subr.mxu0 0.0
    %7385 = vmatpush1.msra.mxu0 0.0
    %7386 = vmatprep.subr.mxu0 0.0
    %7387 = vmatpush1.msra.mxu0 0.0
    %7388 = vmatprep.subr.mxu0 0.0
    %7389 = vmatpush1.msra.mxu0 0.0
    %7390 = vmatprep.subr.mxu0 0.0
    %7391 = vmatpush1.msra.mxu0 0.0
    %7392 = vmatprep.subr.mxu0 0.0
    %7393 = vmatpush1.msra.mxu0 0.0
    %7394 = vmatprep.subr.mxu0 0.0
    %7395 = vmatpush1.msra.mxu0 0.0
    %7396 = vmatprep.subr.mxu0 0.0
    %7397 = vmatpush1.msra.mxu0 0.0
    %7398 = vmatprep.subr.mxu0 0.0
    %7399 = vmatpush1.msra.mxu0 0.0
    %7400 = vmatprep.subr.mxu0 0.0
    %7401 = vmatpush1.msra.mxu0 0.0
    %7402 = vmatprep.subr.mxu0 0.0
    %7403 = vmatpush1.msra.mxu0 0.0
    %7404 = vmatprep.subr.mxu0 0.0
    %7405 = vmatpush1.msra.mxu0 0.0
    %7406 = vmatprep.subr.mxu0 0.0
    %7407 = vmatpush1.msra.mxu0 0.0
    %7408 = vmatprep.subr.mxu0 0.0
    %7409 = vmatpush1.msra.mxu0 0.0
    %7410 = vmatprep.subr.mxu0 0.0
    %7411 = vmatpush1.msra.mxu0 0.0
    %7412 = vmatprep.mubr.f32.mxu0 0.0
    %7413 = vmatmul.mubr.f32.gmra.mrb[0].mxu0 %v7229
    %v7414 = vpop.f32.mrb[0].mxu0
    %v7415 = vadd.f32 0.0, %v7414
    %v7416 = vpop.f32.mrb[0].mxu0
    %7417 = vdwg.mxu0
    %v7419 = vsel %vm6589, %v7313, 0
    %7421 = vmatprep.subr.mxu0 0.0
    %7422 = vmatpush1.msra.mxu0 %v7419
    %7423 = vmatprep.subr.mxu0 0.0
    %7424 = vmatpush1.msra.mxu0 0.0
    %7425 = vmatprep.subr.mxu0 0.0
    %7426 = vmatpush1.msra.mxu0 0.0
    %7427 = vmatprep.subr.mxu0 0.0
    %7428 = vmatpush1.msra.mxu0 0.0
    %7429 = vmatprep.subr.mxu0 0.0
    %7430 = vmatpush1.msra.mxu0 0.0
    %7431 = vmatprep.subr.mxu0 0.0
    %7432 = vmatpush1.msra.mxu0 0.0
    %7433 = vmatprep.subr.mxu0 0.0
    %7434 = vmatpush1.msra.mxu0 0.0
    %7435 = vmatprep.subr.mxu0 0.0
    %7436 = vmatpush1.msra.mxu0 0.0
    %7437 = vmatprep.subr.mxu0 0.0
    %7438 = vmatpush1.msra.mxu0 0.0
    %7439 = vmatprep.subr.mxu0 0.0
    %7440 = vmatpush1.msra.mxu0 0.0
    %7441 = vmatprep.subr.mxu0 0.0
    %7442 = vmatpush1.msra.mxu0 0.0
    %7443 = vmatprep.subr.mxu0 0.0
    %7444 = vmatpush1.msra.mxu0 0.0
    %7445 = vmatprep.subr.mxu0 0.0
    %7446 = vmatpush1.msra.mxu0 0.0
    %7447 = vmatprep.subr.mxu0 0.0
    %7448 = vmatpush1.msra.mxu0 0.0
    %7449 = vmatprep.subr.mxu0 0.0
    %7450 = vmatpush1.msra.mxu0 0.0
    %7451 = vmatprep.subr.mxu0 0.0
    %7452 = vmatpush1.msra.mxu0 0.0
    %7453 = vmatprep.subr.mxu0 0.0
    %7454 = vmatpush1.msra.mxu0 0.0
    %7455 = vmatprep.subr.mxu0 0.0
    %7456 = vmatpush1.msra.mxu0 0.0
    %7457 = vmatprep.subr.mxu0 0.0
    %7458 = vmatpush1.msra.mxu0 0.0
    %7459 = vmatprep.subr.mxu0 0.0
    %7460 = vmatpush1.msra.mxu0 0.0
    %7461 = vmatprep.subr.mxu0 0.0
    %7462 = vmatpush1.msra.mxu0 0.0
    %7463 = vmatprep.subr.mxu0 0.0
    %7464 = vmatpush1.msra.mxu0 0.0
    %7465 = vmatprep.subr.mxu0 0.0
    %7466 = vmatpush1.msra.mxu0 0.0
    %7467 = vmatprep.subr.mxu0 0.0
    %7468 = vmatpush1.msra.mxu0 0.0
    %7469 = vmatprep.subr.mxu0 0.0
    %7470 = vmatpush1.msra.mxu0 0.0
    %7471 = vmatprep.subr.mxu0 0.0
    %7472 = vmatpush1.msra.mxu0 0.0
    %7473 = vmatprep.subr.mxu0 0.0
    %7474 = vmatpush1.msra.mxu0 0.0
    %7475 = vmatprep.subr.mxu0 0.0
    %7476 = vmatpush1.msra.mxu0 0.0
    %7477 = vmatprep.subr.mxu0 0.0
    %7478 = vmatpush1.msra.mxu0 0.0
    %7479 = vmatprep.subr.mxu0 0.0
    %7480 = vmatpush1.msra.mxu0 0.0
    %7481 = vmatprep.subr.mxu0 0.0
    %7482 = vmatpush1.msra.mxu0 0.0
    %7483 = vmatprep.subr.mxu0 0.0
    %7484 = vmatpush1.msra.mxu0 0.0
    %7485 = vmatprep.mubr.f32.mxu0 0.0
    %7486 = vmatmul.mubr.f32.gmra.mrb[0].mxu0 %v6587
    %v7487 = vpop.f32.mrb[0].mxu0
    %v7488 = vadd.f32 0.0, %v7487
    %v7489 = vpop.f32.mrb[0].mxu0
    %7490 = vdwg.mxu0
    %7491 = vmatprep.subr.mxu0 0.0
    %7492 = vmatpush1.msra.mxu0 %v7316
    %7493 = vmatprep.subr.mxu0 0.0
    %7494 = vmatpush1.msra.mxu0 %v7317
    %7495 = vmatprep.subr.mxu0 0.0
    %7496 = vmatpush1.msra.mxu0 %v7318
    %7497 = vmatprep.subr.mxu0 0.0
    %7498 = vmatpush1.msra.mxu0 %v7319
    %7499 = vmatprep.subr.mxu0 0.0
    %7500 = vmatpush1.msra.mxu0 %v7320
    %7501 = vmatprep.subr.mxu0 0.0
    %7502 = vmatpush1.msra.mxu0 %v7321
    %7503 = vmatprep.subr.mxu0 0.0
    %7504 = vmatpush1.msra.mxu0 %v7322
    %7505 = vmatprep.subr.mxu0 0.0
    %7506 = vmatpush1.msra.mxu0 %v7323
    %7507 = vmatprep.subr.mxu0 0.0
    %7508 = vmatpush1.msra.mxu0 %v7324
    %7509 = vmatprep.subr.mxu0 0.0
    %7510 = vmatpush1.msra.mxu0 %v7325
    %7511 = vmatprep.subr.mxu0 0.0
    %7512 = vmatpush1.msra.mxu0 %v7326
    %7513 = vmatprep.subr.mxu0 0.0
    %7514 = vmatpush1.msra.mxu0 %v7327
    %7515 = vmatprep.subr.mxu0 0.0
    %7516 = vmatpush1.msra.mxu0 %v7328
    %7517 = vmatprep.subr.mxu0 0.0
    %7518 = vmatpush1.msra.mxu0 %v7329
    %7519 = vmatprep.subr.mxu0 0.0
    %7520 = vmatpush1.msra.mxu0 %v7330
    %7521 = vmatprep.subr.mxu0 0.0
    %7522 = vmatpush1.msra.mxu0 %v7331
    %7523 = vmatprep.subr.mxu0 0.0
    %7524 = vmatpush1.msra.mxu0 0.0
    %7525 = vmatprep.subr.mxu0 0.0
    %7526 = vmatpush1.msra.mxu0 0.0
    %7527 = vmatprep.subr.mxu0 0.0
    %7528 = vmatpush1.msra.mxu0 0.0
    %7529 = vmatprep.subr.mxu0 0.0
    %7530 = vmatpush1.msra.mxu0 0.0
    %7531 = vmatprep.subr.mxu0 0.0
    %7532 = vmatpush1.msra.mxu0 0.0
    %7533 = vmatprep.subr.mxu0 0.0
    %7534 = vmatpush1.msra.mxu0 0.0
    %7535 = vmatprep.subr.mxu0 0.0
    %7536 = vmatpush1.msra.mxu0 0.0
    %7537 = vmatprep.subr.mxu0 0.0
    %7538 = vmatpush1.msra.mxu0 0.0
    %7539 = vmatprep.subr.mxu0 0.0
    %7540 = vmatpush1.msra.mxu0 0.0
    %7541 = vmatprep.subr.mxu0 0.0
    %7542 = vmatpush1.msra.mxu0 0.0
    %7543 = vmatprep.subr.mxu0 0.0
    %7544 = vmatpush1.msra.mxu0 0.0
    %7545 = vmatprep.subr.mxu0 0.0
    %7546 = vmatpush1.msra.mxu0 0.0
    %7547 = vmatprep.subr.mxu0 0.0
    %7548 = vmatpush1.msra.mxu0 0.0
    %7549 = vmatprep.subr.mxu0 0.0
    %7550 = vmatpush1.msra.mxu0 0.0
    %7551 = vmatprep.subr.mxu0 0.0
    %7552 = vmatpush1.msra.mxu0 0.0
    %7553 = vmatprep.subr.mxu0 0.0
    %7554 = vmatpush1.msra.mxu0 0.0
    %7555 = vmatprep.mubr.f32.mxu0 0.0
    %7556 = vmatmul.mubr.f32.gmra.mrb[0].mxu0 %v7229
    %v7557 = vpop.f32.mrb[0].mxu0
    %v7558 = vadd.f32 %v7488, %v7557
    %v7559 = vpop.f32.mrb[0].mxu0
    %7560 = vdwg.mxu0
    %v7562 = vsel %vm6589, %v7415, 0
    %7564 = vmatprep.subr.mxu0 0.0
    %7565 = vmatpush1.msra.mxu0 %v7562
    %7566 = vmatprep.subr.mxu0 0.0
    %7567 = vmatpush1.msra.mxu0 0.0
    %7568 = vmatprep.subr.mxu0 0.0
    %7569 = vmatpush1.msra.mxu0 0.0
    %7570 = vmatprep.subr.mxu0 0.0
    %7571 = vmatpush1.msra.mxu0 0.0
    %7572 = vmatprep.subr.mxu0 0.0
    %7573 = vmatpush1.msra.mxu0 0.0
    %7574 = vmatprep.subr.mxu0 0.0
    %7575 = vmatpush1.msra.mxu0 0.0
    %7576 = vmatprep.subr.mxu0 0.0
    %7577 = vmatpush1.msra.mxu0 0.0
    %7578 = vmatprep.subr.mxu0 0.0
    %7579 = vmatpush1.msra.mxu0 0.0
    %7580 = vmatprep.subr.mxu0 0.0
    %7581 = vmatpush1.msra.mxu0 0.0
    %7582 = vmatprep.subr.mxu0 0.0
    %7583 = vmatpush1.msra.mxu0 0.0
    %7584 = vmatprep.subr.mxu0 0.0
    %7585 = vmatpush1.msra.mxu0 0.0
    %7586 = vmatprep.subr.mxu0 0.0
    %7587 = vmatpush1.msra.mxu0 0.0
    %7588 = vmatprep.subr.mxu0 0.0
    %7589 = vmatpush1.msra.mxu0 0.0
    %7590 = vmatprep.subr.mxu0 0.0
    %7591 = vmatpush1.msra.mxu0 0.0
    %7592 = vmatprep.subr.mxu0 0.0
    %7593 = vmatpush1.msra.mxu0 0.0
    %7594 = vmatprep.subr.mxu0 0.0
    %7595 = vmatpush1.msra.mxu0 0.0
    %7596 = vmatprep.subr.mxu0 0.0
    %7597 = vmatpush1.msra.mxu0 0.0
    %7598 = vmatprep.subr.mxu0 0.0
    %7599 = vmatpush1.msra.mxu0 0.0
    %7600 = vmatprep.subr.mxu0 0.0
    %7601 = vmatpush1.msra.mxu0 0.0
    %7602 = vmatprep.subr.mxu0 0.0
    %7603 = vmatpush1.msra.mxu0 0.0
    %7604 = vmatprep.subr.mxu0 0.0
    %7605 = vmatpush1.msra.mxu0 0.0
    %7606 = vmatprep.subr.mxu0 0.0
    %7607 = vmatpush1.msra.mxu0 0.0
    %7608 = vmatprep.subr.mxu0 0.0
    %7609 = vmatpush1.msra.mxu0 0.0
    %7610 = vmatprep.subr.mxu0 0.0
    %7611 = vmatpush1.msra.mxu0 0.0
    %7612 = vmatprep.subr.mxu0 0.0
    %7613 = vmatpush1.msra.mxu0 0.0
    %7614 = vmatprep.subr.mxu0 0.0
    %7615 = vmatpush1.msra.mxu0 0.0
    %7616 = vmatprep.subr.mxu0 0.0
    %7617 = vmatpush1.msra.mxu0 0.0
    %7618 = vmatprep.subr.mxu0 0.0
    %7619 = vmatpush1.msra.mxu0 0.0
    %7620 = vmatprep.subr.mxu0 0.0
    %7621 = vmatpush1.msra.mxu0 0.0
    %7622 = vmatprep.subr.mxu0 0.0
    %7623 = vmatpush1.msra.mxu0 0.0
    %7624 = vmatprep.subr.mxu0 0.0
    %7625 = vmatpush1.msra.mxu0 0.0
    %7626 = vmatprep.subr.mxu0 0.0
    %7627 = vmatpush1.msra.mxu0 0.0
    %7628 = vmatprep.mubr.f32.mxu0 0.0
    %7629 = vmatmul.mubr.f32.gmra.mrb[0].mxu0 %v6735
    %v7630 = vpop.f32.mrb[0].mxu0
    %v7631 = vadd.f32 0.0, %v7630
    %v7632 = vpop.f32.mrb[0].mxu0
    %7633 = vdwg.mxu0
    %v7634 = vadd.f32 %v7558, %v7631
    %v7635 = vld [vmem:[#allocation2 + $0x19e8] sm:$0x1]
    %v7636 = vlaneseq
    %v7637 = vshrl.u32 %v7636, 7
    %v7638 = vsub.s32 0, %v7637
    %v7639 = vrot.slane %v7635, %v7638
    %v7640 = vadd.f32 %v7634, %v7639
    %v7641 = vmax.f32 %v7640, 0.0
    %v7642 = vld [vmem:[#allocation2 + $0x19f0] sm:$0x3]
    %v7644 = vsel %vm6585, %v7642, 0
    %v7647 = vsel %vm6589, %v7641, 0
    %7649 = vmatprep.subr.mxu0 0.0
    %7650 = vmatpush1.msra.mxu0 %v7647
    %7651 = vmatprep.subr.mxu0 0.0
    %7652 = vmatpush1.msra.mxu0 0.0
    %7653 = vmatprep.subr.mxu0 0.0
    %7654 = vmatpush1.msra.mxu0 0.0
    %7655 = vmatprep.subr.mxu0 0.0
    %7656 = vmatpush1.msra.mxu0 0.0
    %7657 = vmatprep.subr.mxu0 0.0
    %7658 = vmatpush1.msra.mxu0 0.0
    %7659 = vmatprep.subr.mxu0 0.0
    %7660 = vmatpush1.msra.mxu0 0.0
    %7661 = vmatprep.subr.mxu0 0.0
    %7662 = vmatpush1.msra.mxu0 0.0
    %7663 = vmatprep.subr.mxu0 0.0
    %7664 = vmatpush1.msra.mxu0 0.0
    %7665 = vmatprep.subr.mxu0 0.0
    %7666 = vmatpush1.msra.mxu0 0.0
    %7667 = vmatprep.subr.mxu0 0.0
    %7668 = vmatpush1.msra.mxu0 0.0
    %7669 = vmatprep.subr.mxu0 0.0
    %7670 = vmatpush1.msra.mxu0 0.0
    %7671 = vmatprep.subr.mxu0 0.0
    %7672 = vmatpush1.msra.mxu0 0.0
    %7673 = vmatprep.subr.mxu0 0.0
    %7674 = vmatpush1.msra.mxu0 0.0
    %7675 = vmatprep.subr.mxu0 0.0
    %7676 = vmatpush1.msra.mxu0 0.0
    %7677 = vmatprep.subr.mxu0 0.0
    %7678 = vmatpush1.msra.mxu0 0.0
    %7679 = vmatprep.subr.mxu0 0.0
    %7680 = vmatpush1.msra.mxu0 0.0
    %7681 = vmatprep.subr.mxu0 0.0
    %7682 = vmatpush1.msra.mxu0 0.0
    %7683 = vmatprep.subr.mxu0 0.0
    %7684 = vmatpush1.msra.mxu0 0.0
    %7685 = vmatprep.subr.mxu0 0.0
    %7686 = vmatpush1.msra.mxu0 0.0
    %7687 = vmatprep.subr.mxu0 0.0
    %7688 = vmatpush1.msra.mxu0 0.0
    %7689 = vmatprep.subr.mxu0 0.0
    %7690 = vmatpush1.msra.mxu0 0.0
    %7691 = vmatprep.subr.mxu0 0.0
    %7692 = vmatpush1.msra.mxu0 0.0
    %7693 = vmatprep.subr.mxu0 0.0
    %7694 = vmatpush1.msra.mxu0 0.0
    %7695 = vmatprep.subr.mxu0 0.0
    %7696 = vmatpush1.msra.mxu0 0.0
    %7697 = vmatprep.subr.mxu0 0.0
    %7698 = vmatpush1.msra.mxu0 0.0
    %7699 = vmatprep.subr.mxu0 0.0
    %7700 = vmatpush1.msra.mxu0 0.0
    %7701 = vmatprep.subr.mxu0 0.0
    %7702 = vmatpush1.msra.mxu0 0.0
    %7703 = vmatprep.subr.mxu0 0.0
    %7704 = vmatpush1.msra.mxu0 0.0
    %7705 = vmatprep.subr.mxu0 0.0
    %7706 = vmatpush1.msra.mxu0 0.0
    %7707 = vmatprep.subr.mxu0 0.0
    %7708 = vmatpush1.msra.mxu0 0.0
    %7709 = vmatprep.subr.mxu0 0.0
    %7710 = vmatpush1.msra.mxu0 0.0
    %7711 = vmatprep.subr.mxu0 0.0
    %7712 = vmatpush1.msra.mxu0 0.0
    %7713 = vmatprep.mubr.f32.mxu0 0.0
    %7714 = vmatmul.mubr.f32.gmra.mrb[0].mxu0 %v7644
    %v7715 = vpop.f32.mrb[0].mxu0
    %v7716 = vadd.f32 0.0, %v7715
    %v7717 = vpop.f32.mrb[0].mxu0
    %7718 = vdwg.mxu0
    %v7719 = vld [vmem:[#allocation2 + $0x19f8] sm:$0x3]
    %v7721 = vsel %vm6585, %v7719, 0
    %7723 = vmatprep.subr.mxu0 0.0
    %7724 = vmatpush1.msra.mxu0 %v7647
    %7725 = vmatprep.subr.mxu0 0.0
    %7726 = vmatpush1.msra.mxu0 0.0
    %7727 = vmatprep.subr.mxu0 0.0
    %7728 = vmatpush1.msra.mxu0 0.0
    %7729 = vmatprep.subr.mxu0 0.0
    %7730 = vmatpush1.msra.mxu0 0.0
    %7731 = vmatprep.subr.mxu0 0.0
    %7732 = vmatpush1.msra.mxu0 0.0
    %7733 = vmatprep.subr.mxu0 0.0
    %7734 = vmatpush1.msra.mxu0 0.0
    %7735 = vmatprep.subr.mxu0 0.0
    %7736 = vmatpush1.msra.mxu0 0.0
    %7737 = vmatprep.subr.mxu0 0.0
    %7738 = vmatpush1.msra.mxu0 0.0
    %7739 = vmatprep.subr.mxu0 0.0
    %7740 = vmatpush1.msra.mxu0 0.0
    %7741 = vmatprep.subr.mxu0 0.0
    %7742 = vmatpush1.msra.mxu0 0.0
    %7743 = vmatprep.subr.mxu0 0.0
    %7744 = vmatpush1.msra.mxu0 0.0
    %7745 = vmatprep.subr.mxu0 0.0
    %7746 = vmatpush1.msra.mxu0 0.0
    %7747 = vmatprep.subr.mxu0 0.0
    %7748 = vmatpush1.msra.mxu0 0.0
    %7749 = vmatprep.subr.mxu0 0.0
    %7750 = vmatpush1.msra.mxu0 0.0
    %7751 = vmatprep.subr.mxu0 0.0
    %7752 = vmatpush1.msra.mxu0 0.0
    %7753 = vmatprep.subr.mxu0 0.0
    %7754 = vmatpush1.msra.mxu0 0.0
    %7755 = vmatprep.subr.mxu0 0.0
    %7756 = vmatpush1.msra.mxu0 0.0
    %7757 = vmatprep.subr.mxu0 0.0
    %7758 = vmatpush1.msra.mxu0 0.0
    %7759 = vmatprep.subr.mxu0 0.0
    %7760 = vmatpush1.msra.mxu0 0.0
    %7761 = vmatprep.subr.mxu0 0.0
    %7762 = vmatpush1.msra.mxu0 0.0
    %7763 = vmatprep.subr.mxu0 0.0
    %7764 = vmatpush1.msra.mxu0 0.0
    %7765 = vmatprep.subr.mxu0 0.0
    %7766 = vmatpush1.msra.mxu0 0.0
    %7767 = vmatprep.subr.mxu0 0.0
    %7768 = vmatpush1.msra.mxu0 0.0
    %7769 = vmatprep.subr.mxu0 0.0
    %7770 = vmatpush1.msra.mxu0 0.0
    %7771 = vmatprep.subr.mxu0 0.0
    %7772 = vmatpush1.msra.mxu0 0.0
    %7773 = vmatprep.subr.mxu0 0.0
    %7774 = vmatpush1.msra.mxu0 0.0
    %7775 = vmatprep.subr.mxu0 0.0
    %7776 = vmatpush1.msra.mxu0 0.0
    %7777 = vmatprep.subr.mxu0 0.0
    %7778 = vmatpush1.msra.mxu0 0.0
    %7779 = vmatprep.subr.mxu0 0.0
    %7780 = vmatpush1.msra.mxu0 0.0
    %7781 = vmatprep.subr.mxu0 0.0
    %7782 = vmatpush1.msra.mxu0 0.0
    %7783 = vmatprep.subr.mxu0 0.0
    %7784 = vmatpush1.msra.mxu0 0.0
    %7785 = vmatprep.subr.mxu0 0.0
    %7786 = vmatpush1.msra.mxu0 0.0
    %7787 = vmatprep.mubr.f32.mxu0 0.0
    %7788 = vmatmul.mubr.f32.gmra.mrb[0].mxu0 %v7721
    %v7789 = vpop.f32.mrb[0].mxu0
    %v7790 = vadd.f32 0.0, %v7789
    %v7791 = vpop.f32.mrb[0].mxu0
    %7792 = vdwg.mxu0
    %v7793 = vmax.f32 %v7716, %v7790
    %v7794 = vld [vmem:[#allocation2 + $0x1a00] sm:$0xff]
    %v7795 = vld [vmem:[#allocation2 + $0x1a08] sm:$0xff]
    %v7796 = vld [vmem:[#allocation2 + $0x1a10] sm:$0xff]
    %v7797 = vld [vmem:[#allocation2 + $0x1a18] sm:$0xff]
    %v7798 = vld [vmem:[#allocation2 + $0x1a20] sm:$0xff]
    %v7799 = vld [vmem:[#allocation2 + $0x1a28] sm:$0xff]
    %v7800 = vld [vmem:[#allocation2 + $0x1a30] sm:$0xff]
    %v7801 = vld [vmem:[#allocation2 + $0x1a38] sm:$0xff]
    %v7802 = vld [vmem:[#allocation2 + $0x1a40] sm:$0xff]
    %v7803 = vld [vmem:[#allocation2 + $0x1a48] sm:$0xff]
    %v7804 = vld [vmem:[#allocation2 + $0x1a50] sm:$0xff]
    %v7805 = vld [vmem:[#allocation2 + $0x1a58] sm:$0xff]
    %v7806 = vld [vmem:[#allocation2 + $0x1a60] sm:$0xff]
    %v7807 = vld [vmem:[#allocation2 + $0x1a68] sm:$0xff]
    %v7808 = vld [vmem:[#allocation2 + $0x1a70] sm:$0xff]
    %v7809 = vld [vmem:[#allocation2 + $0x1a78] sm:$0xff]
    %7810 = vmatprep.subr.mxu0 0.0
    %7811 = vmatpush1.msra.mxu0 %v7794
    %7812 = vmatprep.subr.mxu0 0.0
    %7813 = vmatpush1.msra.mxu0 %v7795
    %7814 = vmatprep.subr.mxu0 0.0
    %7815 = vmatpush1.msra.mxu0 %v7796
    %7816 = vmatprep.subr.mxu0 0.0
    %7817 = vmatpush1.msra.mxu0 %v7797
    %7818 = vmatprep.subr.mxu0 0.0
    %7819 = vmatpush1.msra.mxu0 %v7798
    %7820 = vmatprep.subr.mxu0 0.0
    %7821 = vmatpush1.msra.mxu0 %v7799
    %7822 = vmatprep.subr.mxu0 0.0
    %7823 = vmatpush1.msra.mxu0 %v7800
    %7824 = vmatprep.subr.mxu0 0.0
    %7825 = vmatpush1.msra.mxu0 %v7801
    %7826 = vmatprep.subr.mxu0 0.0
    %7827 = vmatpush1.msra.mxu0 %v7802
    %7828 = vmatprep.subr.mxu0 0.0
    %7829 = vmatpush1.msra.mxu0 %v7803
    %7830 = vmatprep.subr.mxu0 0.0
    %7831 = vmatpush1.msra.mxu0 %v7804
    %7832 = vmatprep.subr.mxu0 0.0
    %7833 = vmatpush1.msra.mxu0 %v7805
    %7834 = vmatprep.subr.mxu0 0.0
    %7835 = vmatpush1.msra.mxu0 %v7806
    %7836 = vmatprep.subr.mxu0 0.0
    %7837 = vmatpush1.msra.mxu0 %v7807
    %7838 = vmatprep.subr.mxu0 0.0
    %7839 = vmatpush1.msra.mxu0 %v7808
    %7840 = vmatprep.subr.mxu0 0.0
    %7841 = vmatpush1.msra.mxu0 %v7809
    %7842 = vmatprep.subr.mxu0 0.0
    %7843 = vmatpush1.msra.mxu0 0.0
    %7844 = vmatprep.subr.mxu0 0.0
    %7845 = vmatpush1.msra.mxu0 0.0
    %7846 = vmatprep.subr.mxu0 0.0
    %7847 = vmatpush1.msra.mxu0 0.0
    %7848 = vmatprep.subr.mxu0 0.0
    %7849 = vmatpush1.msra.mxu0 0.0
    %7850 = vmatprep.subr.mxu0 0.0
    %7851 = vmatpush1.msra.mxu0 0.0
    %7852 = vmatprep.subr.mxu0 0.0
    %7853 = vmatpush1.msra.mxu0 0.0
    %7854 = vmatprep.subr.mxu0 0.0
    %7855 = vmatpush1.msra.mxu0 0.0
    %7856 = vmatprep.subr.mxu0 0.0
    %7857 = vmatpush1.msra.mxu0 0.0
    %7858 = vmatprep.subr.mxu0 0.0
    %7859 = vmatpush1.msra.mxu0 0.0
    %7860 = vmatprep.subr.mxu0 0.0
    %7861 = vmatpush1.msra.mxu0 0.0
    %7862 = vmatprep.subr.mxu0 0.0
    %7863 = vmatpush1.msra.mxu0 0.0
    %7864 = vmatprep.subr.mxu0 0.0
    %7865 = vmatpush1.msra.mxu0 0.0
    %7866 = vmatprep.subr.mxu0 0.0
    %7867 = vmatpush1.msra.mxu0 0.0
    %7868 = vmatprep.subr.mxu0 0.0
    %7869 = vmatpush1.msra.mxu0 0.0
    %7870 = vmatprep.subr.mxu0 0.0
    %7871 = vmatpush1.msra.mxu0 0.0
    %7872 = vmatprep.subr.mxu0 0.0
    %7873 = vmatpush1.msra.mxu0 0.0
    %7874 = vmatprep.mubr.f32.mxu0 0.0
    %7875 = vmatmul.mubr.f32.gmra.mrb[0].mxu0 %v7793
    %v7876 = vpop.f32.mrb[0].mxu0
    %v7877 = vadd.f32 0.0, %v7876
    %v7878 = vpop.f32.mrb[0].mxu0
    %7879 = vdwg.mxu0
    %v7880 = vld [vmem:[#allocation2 + $0x1a80] sm:$0xff]
    %v7881 = vld [vmem:[#allocation2 + $0x1a88] sm:$0xff]
    %v7882 = vld [vmem:[#allocation2 + $0x1a90] sm:$0xff]
    %v7883 = vld [vmem:[#allocation2 + $0x1a98] sm:$0xff]
    %v7884 = vld [vmem:[#allocation2 + $0x1aa0] sm:$0xff]
    %v7885 = vld [vmem:[#allocation2 + $0x1aa8] sm:$0xff]
    %v7886 = vld [vmem:[#allocation2 + $0x1ab0] sm:$0xff]
    %v7887 = vld [vmem:[#allocation2 + $0x1ab8] sm:$0xff]
    %v7888 = vld [vmem:[#allocation2 + $0x1ac0] sm:$0xff]
    %v7889 = vld [vmem:[#allocation2 + $0x1ac8] sm:$0xff]
    %v7890 = vld [vmem:[#allocation2 + $0x1ad0] sm:$0xff]
    %v7891 = vld [vmem:[#allocation2 + $0x1ad8] sm:$0xff]
    %v7892 = vld [vmem:[#allocation2 + $0x1ae0] sm:$0xff]
    %v7893 = vld [vmem:[#allocation2 + $0x1ae8] sm:$0xff]
    %v7894 = vld [vmem:[#allocation2 + $0x1af0] sm:$0xff]
    %v7895 = vld [vmem:[#allocation2 + $0x1af8] sm:$0xff]
    %7896 = vmatprep.subr.mxu0 0.0
    %7897 = vmatpush1.msra.mxu0 %v7880
    %7898 = vmatprep.subr.mxu0 0.0
    %7899 = vmatpush1.msra.mxu0 %v7881
    %7900 = vmatprep.subr.mxu0 0.0
    %7901 = vmatpush1.msra.mxu0 %v7882
    %7902 = vmatprep.subr.mxu0 0.0
    %7903 = vmatpush1.msra.mxu0 %v7883
    %7904 = vmatprep.subr.mxu0 0.0
    %7905 = vmatpush1.msra.mxu0 %v7884
    %7906 = vmatprep.subr.mxu0 0.0
    %7907 = vmatpush1.msra.mxu0 %v7885
    %7908 = vmatprep.subr.mxu0 0.0
    %7909 = vmatpush1.msra.mxu0 %v7886
    %7910 = vmatprep.subr.mxu0 0.0
    %7911 = vmatpush1.msra.mxu0 %v7887
    %7912 = vmatprep.subr.mxu0 0.0
    %7913 = vmatpush1.msra.mxu0 %v7888
    %7914 = vmatprep.subr.mxu0 0.0
    %7915 = vmatpush1.msra.mxu0 %v7889
    %7916 = vmatprep.subr.mxu0 0.0
    %7917 = vmatpush1.msra.mxu0 %v7890
    %7918 = vmatprep.subr.mxu0 0.0
    %7919 = vmatpush1.msra.mxu0 %v7891
    %7920 = vmatprep.subr.mxu0 0.0
    %7921 = vmatpush1.msra.mxu0 %v7892
    %7922 = vmatprep.subr.mxu0 0.0
    %7923 = vmatpush1.msra.mxu0 %v7893
    %7924 = vmatprep.subr.mxu0 0.0
    %7925 = vmatpush1.msra.mxu0 %v7894
    %7926 = vmatprep.subr.mxu0 0.0
    %7927 = vmatpush1.msra.mxu0 %v7895
    %7928 = vmatprep.subr.mxu0 0.0
    %7929 = vmatpush1.msra.mxu0 0.0
    %7930 = vmatprep.subr.mxu0 0.0
    %7931 = vmatpush1.msra.mxu0 0.0
    %7932 = vmatprep.subr.mxu0 0.0
    %7933 = vmatpush1.msra.mxu0 0.0
    %7934 = vmatprep.subr.mxu0 0.0
    %7935 = vmatpush1.msra.mxu0 0.0
    %7936 = vmatprep.subr.mxu0 0.0
    %7937 = vmatpush1.msra.mxu0 0.0
    %7938 = vmatprep.subr.mxu0 0.0
    %7939 = vmatpush1.msra.mxu0 0.0
    %7940 = vmatprep.subr.mxu0 0.0
    %7941 = vmatpush1.msra.mxu0 0.0
    %7942 = vmatprep.subr.mxu0 0.0
    %7943 = vmatpush1.msra.mxu0 0.0
    %7944 = vmatprep.subr.mxu0 0.0
    %7945 = vmatpush1.msra.mxu0 0.0
    %7946 = vmatprep.subr.mxu0 0.0
    %7947 = vmatpush1.msra.mxu0 0.0
    %7948 = vmatprep.subr.mxu0 0.0
    %7949 = vmatpush1.msra.mxu0 0.0
    %7950 = vmatprep.subr.mxu0 0.0
    %7951 = vmatpush1.msra.mxu0 0.0
    %7952 = vmatprep.subr.mxu0 0.0
    %7953 = vmatpush1.msra.mxu0 0.0
    %7954 = vmatprep.subr.mxu0 0.0
    %7955 = vmatpush1.msra.mxu0 0.0
    %7956 = vmatprep.subr.mxu0 0.0
    %7957 = vmatpush1.msra.mxu0 0.0
    %7958 = vmatprep.subr.mxu0 0.0
    %7959 = vmatpush1.msra.mxu0 0.0
    %7960 = vmatprep.mubr.f32.mxu0 0.0
    %7961 = vmatmul.mubr.f32.gmra.mrb[0].mxu0 %v7793
    %v7962 = vpop.f32.mrb[0].mxu0
    %v7963 = vadd.f32 0.0, %v7962
    %v7964 = vpop.f32.mrb[0].mxu0
    %7965 = vdwg.mxu0
    %v7966 = vmax.f32 %v7877, %v7963
    %v7967 = vld [vmem:[#allocation2 + $0x1b00] sm:$0xff]
    %v7968 = vld [vmem:[#allocation2 + $0x1b08] sm:$0xff]
    %v7969 = vld [vmem:[#allocation2 + $0x1b10] sm:$0xff]
    %v7970 = vld [vmem:[#allocation2 + $0x1b18] sm:$0xff]
    %v7971 = vld [vmem:[#allocation2 + $0x1b20] sm:$0xff]
    %v7972 = vld [vmem:[#allocation2 + $0x1b28] sm:$0xff]
    %v7973 = vld [vmem:[#allocation2 + $0x1b30] sm:$0xff]
    %v7974 = vld [vmem:[#allocation2 + $0x1b38] sm:$0xff]
    %v7975 = vld [vmem:[#allocation2 + $0x1b40] sm:$0xff]
    %v7976 = vld [vmem:[#allocation2 + $0x1b48] sm:$0xff]
    %v7977 = vld [vmem:[#allocation2 + $0x1b50] sm:$0xff]
    %v7978 = vld [vmem:[#allocation2 + $0x1b58] sm:$0xff]
    %v7979 = vld [vmem:[#allocation2 + $0x1b60] sm:$0xff]
    %v7980 = vld [vmem:[#allocation2 + $0x1b68] sm:$0xff]
    %v7981 = vld [vmem:[#allocation2 + $0x1b70] sm:$0xff]
    %v7982 = vld [vmem:[#allocation2 + $0x1b78] sm:$0xff]
    %v7983 = vld [vmem:[#allocation2 + $0x1b80] sm:$0x1]
    %v7984 = vlaneseq
    %v7985 = vshrl.u32 %v7984, 7
    %v7986 = vsub.s32 0, %v7985
    %v7987 = vrot.slane %v7983, %v7986
    %7988 = vmatprep.subr.mxu0 0.0
    %7989 = vmatpush1.msra.mxu0 %v7967
    %7990 = vmatprep.subr.mxu0 0.0
    %7991 = vmatpush1.msra.mxu0 %v7968
    %7992 = vmatprep.subr.mxu0 0.0
    %7993 = vmatpush1.msra.mxu0 %v7969
    %7994 = vmatprep.subr.mxu0 0.0
    %7995 = vmatpush1.msra.mxu0 %v7970
    %7996 = vmatprep.subr.mxu0 0.0
    %7997 = vmatpush1.msra.mxu0 %v7971
    %7998 = vmatprep.subr.mxu0 0.0
    %7999 = vmatpush1.msra.mxu0 %v7972
    %8000 = vmatprep.subr.mxu0 0.0
    %8001 = vmatpush1.msra.mxu0 %v7973
    %8002 = vmatprep.subr.mxu0 0.0
    %8003 = vmatpush1.msra.mxu0 %v7974
    %8004 = vmatprep.subr.mxu0 0.0
    %8005 = vmatpush1.msra.mxu0 %v7975
    %8006 = vmatprep.subr.mxu0 0.0
    %8007 = vmatpush1.msra.mxu0 %v7976
    %8008 = vmatprep.subr.mxu0 0.0
    %8009 = vmatpush1.msra.mxu0 %v7977
    %8010 = vmatprep.subr.mxu0 0.0
    %8011 = vmatpush1.msra.mxu0 %v7978
    %8012 = vmatprep.subr.mxu0 0.0
    %8013 = vmatpush1.msra.mxu0 %v7979
    %8014 = vmatprep.subr.mxu0 0.0
    %8015 = vmatpush1.msra.mxu0 %v7980
    %8016 = vmatprep.subr.mxu0 0.0
    %8017 = vmatpush1.msra.mxu0 %v7981
    %8018 = vmatprep.subr.mxu0 0.0
    %8019 = vmatpush1.msra.mxu0 %v7982
    %8020 = vmatprep.subr.mxu0 0.0
    %8021 = vmatpush1.msra.mxu0 0.0
    %8022 = vmatprep.subr.mxu0 0.0
    %8023 = vmatpush1.msra.mxu0 0.0
    %8024 = vmatprep.subr.mxu0 0.0
    %8025 = vmatpush1.msra.mxu0 0.0
    %8026 = vmatprep.subr.mxu0 0.0
    %8027 = vmatpush1.msra.mxu0 0.0
    %8028 = vmatprep.subr.mxu0 0.0
    %8029 = vmatpush1.msra.mxu0 0.0
    %8030 = vmatprep.subr.mxu0 0.0
    %8031 = vmatpush1.msra.mxu0 0.0
    %8032 = vmatprep.subr.mxu0 0.0
    %8033 = vmatpush1.msra.mxu0 0.0
    %8034 = vmatprep.subr.mxu0 0.0
    %8035 = vmatpush1.msra.mxu0 0.0
    %8036 = vmatprep.subr.mxu0 0.0
    %8037 = vmatpush1.msra.mxu0 0.0
    %8038 = vmatprep.subr.mxu0 0.0
    %8039 = vmatpush1.msra.mxu0 0.0
    %8040 = vmatprep.subr.mxu0 0.0
    %8041 = vmatpush1.msra.mxu0 0.0
    %8042 = vmatprep.subr.mxu0 0.0
    %8043 = vmatpush1.msra.mxu0 0.0
    %8044 = vmatprep.subr.mxu0 0.0
    %8045 = vmatpush1.msra.mxu0 0.0
    %8046 = vmatprep.subr.mxu0 0.0
    %8047 = vmatpush1.msra.mxu0 0.0
    %8048 = vmatprep.subr.mxu0 0.0
    %8049 = vmatpush1.msra.mxu0 0.0
    %8050 = vmatprep.subr.mxu0 0.0
    %8051 = vmatpush1.msra.mxu0 0.0
    %8052 = vmatprep.mubr.f32.mxu0 0.0
    %8053 = vmatmul.mubr.f32.gmra.mrb[0].mxu0 %v7966
    %v8054 = vpop.f32.mrb[0].mxu0
    %v8055 = vadd.f32 %v7987, %v8054
    %v8056 = vpop.f32.mrb[0].mxu0
    %8057 = vdwg.mxu0
    %v8058 = vmax.f32 %v8055, 0.0
    %v8059 = vld [vmem:[#allocation2 + $0x1b88] sm:$0xff]
    %v8060 = vld [vmem:[#allocation2 + $0x1b90] sm:$0xff]
    %v8061 = vld [vmem:[#allocation2 + $0x1b98] sm:$0xff]
    %v8062 = vld [vmem:[#allocation2 + $0x1ba0] sm:$0xff]
    %v8063 = vld [vmem:[#allocation2 + $0x1ba8] sm:$0xff]
    %v8064 = vld [vmem:[#allocation2 + $0x1bb0] sm:$0xff]
    %v8065 = vld [vmem:[#allocation2 + $0x1bb8] sm:$0xff]
    %v8066 = vld [vmem:[#allocation2 + $0x1bc0] sm:$0xff]
    %v8067 = vld [vmem:[#allocation2 + $0x1bc8] sm:$0xff]
    %v8068 = vld [vmem:[#allocation2 + $0x1bd0] sm:$0xff]
    %v8069 = vld [vmem:[#allocation2 + $0x1bd8] sm:$0xff]
    %v8070 = vld [vmem:[#allocation2 + $0x1be0] sm:$0xff]
    %v8071 = vld [vmem:[#allocation2 + $0x1be8] sm:$0xff]
    %v8072 = vld [vmem:[#allocation2 + $0x1bf0] sm:$0xff]
    %v8073 = vld [vmem:[#allocation2 + $0x1bf8] sm:$0xff]
    %v8074 = vld [vmem:[#allocation2 + $0x1c00] sm:$0xff]
    %v8075 = vld [vmem:[#allocation2 + $0x1c08] sm:$0x1]
    %v8076 = vlaneseq
    %v8077 = vshrl.u32 %v8076, 7
    %v8078 = vsub.s32 0, %v8077
    %v8079 = vrot.slane %v8075, %v8078
    %8080 = vmatprep.subr.mxu0 0.0
    %8081 = vmatpush1.msra.mxu0 %v8059
    %8082 = vmatprep.subr.mxu0 0.0
    %8083 = vmatpush1.msra.mxu0 %v8060
    %8084 = vmatprep.subr.mxu0 0.0
    %8085 = vmatpush1.msra.mxu0 %v8061
    %8086 = vmatprep.subr.mxu0 0.0
    %8087 = vmatpush1.msra.mxu0 %v8062
    %8088 = vmatprep.subr.mxu0 0.0
    %8089 = vmatpush1.msra.mxu0 %v8063
    %8090 = vmatprep.subr.mxu0 0.0
    %8091 = vmatpush1.msra.mxu0 %v8064
    %8092 = vmatprep.subr.mxu0 0.0
    %8093 = vmatpush1.msra.mxu0 %v8065
    %8094 = vmatprep.subr.mxu0 0.0
    %8095 = vmatpush1.msra.mxu0 %v8066
    %8096 = vmatprep.subr.mxu0 0.0
    %8097 = vmatpush1.msra.mxu0 %v8067
    %8098 = vmatprep.subr.mxu0 0.0
    %8099 = vmatpush1.msra.mxu0 %v8068
    %8100 = vmatprep.subr.mxu0 0.0
    %8101 = vmatpush1.msra.mxu0 %v8069
    %8102 = vmatprep.subr.mxu0 0.0
    %8103 = vmatpush1.msra.mxu0 %v8070
    %8104 = vmatprep.subr.mxu0 0.0
    %8105 = vmatpush1.msra.mxu0 %v8071
    %8106 = vmatprep.subr.mxu0 0.0
    %8107 = vmatpush1.msra.mxu0 %v8072
    %8108 = vmatprep.subr.mxu0 0.0
    %8109 = vmatpush1.msra.mxu0 %v8073
    %8110 = vmatprep.subr.mxu0 0.0
    %8111 = vmatpush1.msra.mxu0 %v8074
    %8112 = vmatprep.subr.mxu0 0.0
    %8113 = vmatpush1.msra.mxu0 0.0
    %8114 = vmatprep.subr.mxu0 0.0
    %8115 = vmatpush1.msra.mxu0 0.0
    %8116 = vmatprep.subr.mxu0 0.0
    %8117 = vmatpush1.msra.mxu0 0.0
    %8118 = vmatprep.subr.mxu0 0.0
    %8119 = vmatpush1.msra.mxu0 0.0
    %8120 = vmatprep.subr.mxu0 0.0
    %8121 = vmatpush1.msra.mxu0 0.0
    %8122 = vmatprep.subr.mxu0 0.0
    %8123 = vmatpush1.msra.mxu0 0.0
    %8124 = vmatprep.subr.mxu0 0.0
    %8125 = vmatpush1.msra.mxu0 0.0
    %8126 = vmatprep.subr.mxu0 0.0
    %8127 = vmatpush1.msra.mxu0 0.0
    %8128 = vmatprep.subr.mxu0 0.0
    %8129 = vmatpush1.msra.mxu0 0.0
    %8130 = vmatprep.subr.mxu0 0.0
    %8131 = vmatpush1.msra.mxu0 0.0
    %8132 = vmatprep.subr.mxu0 0.0
    %8133 = vmatpush1.msra.mxu0 0.0
    %8134 = vmatprep.subr.mxu0 0.0
    %8135 = vmatpush1.msra.mxu0 0.0
    %8136 = vmatprep.subr.mxu0 0.0
    %8137 = vmatpush1.msra.mxu0 0.0
    %8138 = vmatprep.subr.mxu0 0.0
    %8139 = vmatpush1.msra.mxu0 0.0
    %8140 = vmatprep.subr.mxu0 0.0
    %8141 = vmatpush1.msra.mxu0 0.0
    %8142 = vmatprep.subr.mxu0 0.0
    %8143 = vmatpush1.msra.mxu0 0.0
    %8144 = vmatprep.mubr.f32.mxu0 0.0
    %8145 = vmatmul.mubr.f32.gmra.mrb[0].mxu0 %v8058
    %v8146 = vpop.f32.mrb[0].mxu0
    %v8147 = vadd.f32 %v8079, %v8146
    %v8148 = vpop.f32.mrb[0].mxu0
    %8149 = vdwg.mxu0
    %v8150 = vmax.f32 %v8147, 0.0
    %v8151 = vld [vmem:[#allocation2 + $0x1c10] sm:$0xff]
    %v8152 = vld [vmem:[#allocation2 + $0x1c18] sm:$0xff]
    %v8153 = vld [vmem:[#allocation2 + $0x1c20] sm:$0xff]
    %v8154 = vld [vmem:[#allocation2 + $0x1c28] sm:$0xff]
    %v8155 = vld [vmem:[#allocation2 + $0x1c30] sm:$0xff]
    %v8156 = vld [vmem:[#allocation2 + $0x1c38] sm:$0xff]
    %v8157 = vld [vmem:[#allocation2 + $0x1c40] sm:$0xff]
    %v8158 = vld [vmem:[#allocation2 + $0x1c48] sm:$0xff]
    %v8159 = vld [vmem:[#allocation2 + $0x1c50] sm:$0xff]
    %v8160 = vld [vmem:[#allocation2 + $0x1c58] sm:$0xff]
    %v8161 = vld [vmem:[#allocation2 + $0x1c60] sm:$0xff]
    %v8162 = vld [vmem:[#allocation2 + $0x1c68] sm:$0xff]
    %v8163 = vld [vmem:[#allocation2 + $0x1c70] sm:$0xff]
    %v8164 = vld [vmem:[#allocation2 + $0x1c78] sm:$0xff]
    %v8165 = vld [vmem:[#allocation2 + $0x1c80] sm:$0xff]
    %v8166 = vld [vmem:[#allocation2 + $0x1c88] sm:$0xff]
    %v8167 = vld [vmem:[#allocation2 + $0x1c90] sm:$0x1]
    %v8168 = vlaneseq
    %v8169 = vshrl.u32 %v8168, 7
    %v8170 = vsub.s32 0, %v8169
    %v8171 = vrot.slane %v8167, %v8170
    %8172 = vmatprep.subr.mxu0 0.0
    %8173 = vmatpush1.msra.mxu0 %v8151
    %8174 = vmatprep.subr.mxu0 0.0
    %8175 = vmatpush1.msra.mxu0 %v8152
    %8176 = vmatprep.subr.mxu0 0.0
    %8177 = vmatpush1.msra.mxu0 %v8153
    %8178 = vmatprep.subr.mxu0 0.0
    %8179 = vmatpush1.msra.mxu0 %v8154
    %8180 = vmatprep.subr.mxu0 0.0
    %8181 = vmatpush1.msra.mxu0 %v8155
    %8182 = vmatprep.subr.mxu0 0.0
    %8183 = vmatpush1.msra.mxu0 %v8156
    %8184 = vmatprep.subr.mxu0 0.0
    %8185 = vmatpush1.msra.mxu0 %v8157
    %8186 = vmatprep.subr.mxu0 0.0
    %8187 = vmatpush1.msra.mxu0 %v8158
    %8188 = vmatprep.subr.mxu0 0.0
    %8189 = vmatpush1.msra.mxu0 %v8159
    %8190 = vmatprep.subr.mxu0 0.0
    %8191 = vmatpush1.msra.mxu0 %v8160
    %8192 = vmatprep.subr.mxu0 0.0
    %8193 = vmatpush1.msra.mxu0 %v8161
    %8194 = vmatprep.subr.mxu0 0.0
    %8195 = vmatpush1.msra.mxu0 %v8162
    %8196 = vmatprep.subr.mxu0 0.0
    %8197 = vmatpush1.msra.mxu0 %v8163
    %8198 = vmatprep.subr.mxu0 0.0
    %8199 = vmatpush1.msra.mxu0 %v8164
    %8200 = vmatprep.subr.mxu0 0.0
    %8201 = vmatpush1.msra.mxu0 %v8165
    %8202 = vmatprep.subr.mxu0 0.0
    %8203 = vmatpush1.msra.mxu0 %v8166
    %8204 = vmatprep.subr.mxu0 0.0
    %8205 = vmatpush1.msra.mxu0 0.0
    %8206 = vmatprep.subr.mxu0 0.0
    %8207 = vmatpush1.msra.mxu0 0.0
    %8208 = vmatprep.subr.mxu0 0.0
    %8209 = vmatpush1.msra.mxu0 0.0
    %8210 = vmatprep.subr.mxu0 0.0
    %8211 = vmatpush1.msra.mxu0 0.0
    %8212 = vmatprep.subr.mxu0 0.0
    %8213 = vmatpush1.msra.mxu0 0.0
    %8214 = vmatprep.subr.mxu0 0.0
    %8215 = vmatpush1.msra.mxu0 0.0
    %8216 = vmatprep.subr.mxu0 0.0
    %8217 = vmatpush1.msra.mxu0 0.0
    %8218 = vmatprep.subr.mxu0 0.0
    %8219 = vmatpush1.msra.mxu0 0.0
    %8220 = vmatprep.subr.mxu0 0.0
    %8221 = vmatpush1.msra.mxu0 0.0
    %8222 = vmatprep.subr.mxu0 0.0
    %8223 = vmatpush1.msra.mxu0 0.0
    %8224 = vmatprep.subr.mxu0 0.0
    %8225 = vmatpush1.msra.mxu0 0.0
    %8226 = vmatprep.subr.mxu0 0.0
    %8227 = vmatpush1.msra.mxu0 0.0
    %8228 = vmatprep.subr.mxu0 0.0
    %8229 = vmatpush1.msra.mxu0 0.0
    %8230 = vmatprep.subr.mxu0 0.0
    %8231 = vmatpush1.msra.mxu0 0.0
    %8232 = vmatprep.subr.mxu0 0.0
    %8233 = vmatpush1.msra.mxu0 0.0
    %8234 = vmatprep.subr.mxu0 0.0
    %8235 = vmatpush1.msra.mxu0 0.0
    %8236 = vmatprep.mubr.f32.mxu0 0.0
    %8237 = vmatmul.mubr.f32.gmra.mrb[0].mxu0 %v8150
    %v8238 = vpop.f32.mrb[0].mxu0
    %v8239 = vadd.f32 %v8171, %v8238
    %v8240 = vpop.f32.mrb[0].mxu0
    %8241 = vdwg.mxu0
    %vm8242 = vcmask 1041408
    %v8243 = vsel %vm8242, %v8239, 0.0
    %v8244 = vrot.slane %v8243, 4
    %v8245 = vadd.f32 %v8243, %v8244
    %v8246 = vrot.slane %v8245, 2
    %v8247 = vadd.f32 %v8245, %v8246
    %v8248 = vrot.slane %v8247, 1
    %v8249 = vadd.f32 %v8247, %v8248
    %v8250 = vrcp.pop 2.0
    %v8251 = vmul.f32 %v8249, %v8250
    %v8252 = vld [vmem:[#allocation2 + $0x1c98] sm:$0xff]
    %v8253 = vld [vmem:[#allocation2 + $0x1ca0] sm:$0xff]
    %v8254 = vld [vmem:[#allocation2 + $0x1ca8] sm:$0xff]
    %v8255 = vld [vmem:[#allocation2 + $0x1cb0] sm:$0xff]
    %v8256 = vld [vmem:[#allocation2 + $0x1cb8] sm:$0xff]
    %v8257 = vld [vmem:[#allocation2 + $0x1cc0] sm:$0xff]
    %v8258 = vld [vmem:[#allocation2 + $0x1cc8] sm:$0xff]
    %v8259 = vld [vmem:[#allocation2 + $0x1cd0] sm:$0xff]
    %v8260 = vld [vmem:[#allocation2 + $0x1cd8] sm:$0xff]
    %v8261 = vld [vmem:[#allocation2 + $0x1ce0] sm:$0xff]
    %v8262 = vld [vmem:[#allocation2 + $0x1ce8] sm:$0xff]
    %v8263 = vld [vmem:[#allocation2 + $0x1cf0] sm:$0xff]
    %v8264 = vld [vmem:[#allocation2 + $0x1cf8] sm:$0xff]
    %v8265 = vld [vmem:[#allocation2 + $0x1d00] sm:$0xff]
    %v8266 = vld [vmem:[#allocation2 + $0x1d08] sm:$0xff]
    %v8267 = vld [vmem:[#allocation2 + $0x1d10] sm:$0xff]
    %v8268 = vld [vmem:[#allocation2 + $0x1e98] sm:$0x1]
    %8269 = vmatprep.subr.mxu0 0.0
    %8270 = vmatpush1.msra.mxu0 %v8252
    %8271 = vmatprep.subr.mxu0 0.0
    %8272 = vmatpush1.msra.mxu0 %v8253
    %8273 = vmatprep.subr.mxu0 0.0
    %8274 = vmatpush1.msra.mxu0 %v8254
    %8275 = vmatprep.subr.mxu0 0.0
    %8276 = vmatpush1.msra.mxu0 %v8255
    %8277 = vmatprep.subr.mxu0 0.0
    %8278 = vmatpush1.msra.mxu0 %v8256
    %8279 = vmatprep.subr.mxu0 0.0
    %8280 = vmatpush1.msra.mxu0 %v8257
    %8281 = vmatprep.subr.mxu0 0.0
    %8282 = vmatpush1.msra.mxu0 %v8258
    %8283 = vmatprep.subr.mxu0 0.0
    %8284 = vmatpush1.msra.mxu0 %v8259
    %8285 = vmatprep.subr.mxu0 0.0
    %8286 = vmatpush1.msra.mxu0 %v8260
    %8287 = vmatprep.subr.mxu0 0.0
    %8288 = vmatpush1.msra.mxu0 %v8261
    %8289 = vmatprep.subr.mxu0 0.0
    %8290 = vmatpush1.msra.mxu0 %v8262
    %8291 = vmatprep.subr.mxu0 0.0
    %8292 = vmatpush1.msra.mxu0 %v8263
    %8293 = vmatprep.subr.mxu0 0.0
    %8294 = vmatpush1.msra.mxu0 %v8264
    %8295 = vmatprep.subr.mxu0 0.0
    %8296 = vmatpush1.msra.mxu0 %v8265
    %8297 = vmatprep.subr.mxu0 0.0
    %8298 = vmatpush1.msra.mxu0 %v8266
    %8299 = vmatprep.subr.mxu0 0.0
    %8300 = vmatpush1.msra.mxu0 %v8267
    %8301 = vmatprep.subr.mxu0 0.0
    %8302 = vmatpush1.msra.mxu0 0.0
    %8303 = vmatprep.subr.mxu0 0.0
    %8304 = vmatpush1.msra.mxu0 0.0
    %8305 = vmatprep.subr.mxu0 0.0
    %8306 = vmatpush1.msra.mxu0 0.0
    %8307 = vmatprep.subr.mxu0 0.0
    %8308 = vmatpush1.msra.mxu0 0.0
    %8309 = vmatprep.subr.mxu0 0.0
    %8310 = vmatpush1.msra.mxu0 0.0
    %8311 = vmatprep.subr.mxu0 0.0
    %8312 = vmatpush1.msra.mxu0 0.0
    %8313 = vmatprep.subr.mxu0 0.0
    %8314 = vmatpush1.msra.mxu0 0.0
    %8315 = vmatprep.subr.mxu0 0.0
    %8316 = vmatpush1.msra.mxu0 0.0
    %8317 = vmatprep.subr.mxu0 0.0
    %8318 = vmatpush1.msra.mxu0 0.0
    %8319 = vmatprep.subr.mxu0 0.0
    %8320 = vmatpush1.msra.mxu0 0.0
    %8321 = vmatprep.subr.mxu0 0.0
    %8322 = vmatpush1.msra.mxu0 0.0
    %8323 = vmatprep.subr.mxu0 0.0
    %8324 = vmatpush1.msra.mxu0 0.0
    %8325 = vmatprep.subr.mxu0 0.0
    %8326 = vmatpush1.msra.mxu0 0.0
    %8327 = vmatprep.subr.mxu0 0.0
    %8328 = vmatpush1.msra.mxu0 0.0
    %8329 = vmatprep.subr.mxu0 0.0
    %8330 = vmatpush1.msra.mxu0 0.0
    %8331 = vmatprep.subr.mxu0 0.0
    %8332 = vmatpush1.msra.mxu0 0.0
    %8333 = vmatprep.mubr.f32.mxu0 0.0
    %8334 = vmatmul.mubr.f32.gmra.mrb[0].mxu0 %v8251
    %v8335 = vpop.f32.mrb[0].mxu0
    %v8336 = vadd.f32 %v8268, %v8335
    %v8337 = vpop.f32.mrb[0].mxu0
    %8338 = vdwg.mxu0
    %v8339 = vld [vmem:[#allocation2 + $0x1d18] sm:$0xff]
    %v8340 = vld [vmem:[#allocation2 + $0x1d20] sm:$0xff]
    %v8341 = vld [vmem:[#allocation2 + $0x1d28] sm:$0xff]
    %v8342 = vld [vmem:[#allocation2 + $0x1d30] sm:$0xff]
    %v8343 = vld [vmem:[#allocation2 + $0x1d38] sm:$0xff]
    %v8344 = vld [vmem:[#allocation2 + $0x1d40] sm:$0xff]
    %v8345 = vld [vmem:[#allocation2 + $0x1d48] sm:$0xff]
    %v8346 = vld [vmem:[#allocation2 + $0x1d50] sm:$0xff]
    %v8347 = vld [vmem:[#allocation2 + $0x1d58] sm:$0xff]
    %v8348 = vld [vmem:[#allocation2 + $0x1d60] sm:$0xff]
    %v8349 = vld [vmem:[#allocation2 + $0x1d68] sm:$0xff]
    %v8350 = vld [vmem:[#allocation2 + $0x1d70] sm:$0xff]
    %v8351 = vld [vmem:[#allocation2 + $0x1d78] sm:$0xff]
    %v8352 = vld [vmem:[#allocation2 + $0x1d80] sm:$0xff]
    %v8353 = vld [vmem:[#allocation2 + $0x1d88] sm:$0xff]
    %v8354 = vld [vmem:[#allocation2 + $0x1d90] sm:$0xff]
    %v8355 = vld [vmem:[#allocation2 + $0x1ea0] sm:$0x1]
    %v8356 = vlaneseq
    %v8357 = vshrl.u32 %v8356, 7
    %v8358 = vsub.s32 0, %v8357
    %v8359 = vrot.slane %v8355, %v8358
    %8360 = vmatprep.subr.mxu0 0.0
    %8361 = vmatpush1.msra.mxu0 %v8339
    %8362 = vmatprep.subr.mxu0 0.0
    %8363 = vmatpush1.msra.mxu0 %v8340
    %8364 = vmatprep.subr.mxu0 0.0
    %8365 = vmatpush1.msra.mxu0 %v8341
    %8366 = vmatprep.subr.mxu0 0.0
    %8367 = vmatpush1.msra.mxu0 %v8342
    %8368 = vmatprep.subr.mxu0 0.0
    %8369 = vmatpush1.msra.mxu0 %v8343
    %8370 = vmatprep.subr.mxu0 0.0
    %8371 = vmatpush1.msra.mxu0 %v8344
    %8372 = vmatprep.subr.mxu0 0.0
    %8373 = vmatpush1.msra.mxu0 %v8345
    %8374 = vmatprep.subr.mxu0 0.0
    %8375 = vmatpush1.msra.mxu0 %v8346
    %8376 = vmatprep.subr.mxu0 0.0
    %8377 = vmatpush1.msra.mxu0 %v8347
    %8378 = vmatprep.subr.mxu0 0.0
    %8379 = vmatpush1.msra.mxu0 %v8348
    %8380 = vmatprep.subr.mxu0 0.0
    %8381 = vmatpush1.msra.mxu0 %v8349
    %8382 = vmatprep.subr.mxu0 0.0
    %8383 = vmatpush1.msra.mxu0 %v8350
    %8384 = vmatprep.subr.mxu0 0.0
    %8385 = vmatpush1.msra.mxu0 %v8351
    %8386 = vmatprep.subr.mxu0 0.0
    %8387 = vmatpush1.msra.mxu0 %v8352
    %8388 = vmatprep.subr.mxu0 0.0
    %8389 = vmatpush1.msra.mxu0 %v8353
    %8390 = vmatprep.subr.mxu0 0.0
    %8391 = vmatpush1.msra.mxu0 %v8354
    %8392 = vmatprep.subr.mxu0 0.0
    %8393 = vmatpush1.msra.mxu0 0.0
    %8394 = vmatprep.subr.mxu0 0.0
    %8395 = vmatpush1.msra.mxu0 0.0
    %8396 = vmatprep.subr.mxu0 0.0
    %8397 = vmatpush1.msra.mxu0 0.0
    %8398 = vmatprep.subr.mxu0 0.0
    %8399 = vmatpush1.msra.mxu0 0.0
    %8400 = vmatprep.subr.mxu0 0.0
    %8401 = vmatpush1.msra.mxu0 0.0
    %8402 = vmatprep.subr.mxu0 0.0
    %8403 = vmatpush1.msra.mxu0 0.0
    %8404 = vmatprep.subr.mxu0 0.0
    %8405 = vmatpush1.msra.mxu0 0.0
    %8406 = vmatprep.subr.mxu0 0.0
    %8407 = vmatpush1.msra.mxu0 0.0
    %8408 = vmatprep.subr.mxu0 0.0
    %8409 = vmatpush1.msra.mxu0 0.0
    %8410 = vmatprep.subr.mxu0 0.0
    %8411 = vmatpush1.msra.mxu0 0.0
    %8412 = vmatprep.subr.mxu0 0.0
    %8413 = vmatpush1.msra.mxu0 0.0
    %8414 = vmatprep.subr.mxu0 0.0
    %8415 = vmatpush1.msra.mxu0 0.0
    %8416 = vmatprep.subr.mxu0 0.0
    %8417 = vmatpush1.msra.mxu0 0.0
    %8418 = vmatprep.subr.mxu0 0.0
    %8419 = vmatpush1.msra.mxu0 0.0
    %8420 = vmatprep.subr.mxu0 0.0
    %8421 = vmatpush1.msra.mxu0 0.0
    %8422 = vmatprep.subr.mxu0 0.0
    %8423 = vmatpush1.msra.mxu0 0.0
    %8424 = vmatprep.mubr.f32.mxu0 0.0
    %8425 = vmatmul.mubr.f32.gmra.mrb[0].mxu0 %v8239
    %v8426 = vpop.f32.mrb[0].mxu0
    %v8427 = vadd.f32 %v8359, %v8426
    %v8428 = vpop.f32.mrb[0].mxu0
    %8429 = vdwg.mxu0
    %v8430 = vld [vmem:[#allocation2 + $0x1d98] sm:$0xff]
    %v8431 = vld [vmem:[#allocation2 + $0x1da0] sm:$0xff]
    %v8432 = vld [vmem:[#allocation2 + $0x1da8] sm:$0xff]
    %v8433 = vld [vmem:[#allocation2 + $0x1db0] sm:$0xff]
    %v8434 = vld [vmem:[#allocation2 + $0x1db8] sm:$0xff]
    %v8435 = vld [vmem:[#allocation2 + $0x1dc0] sm:$0xff]
    %v8436 = vld [vmem:[#allocation2 + $0x1dc8] sm:$0xff]
    %v8437 = vld [vmem:[#allocation2 + $0x1dd0] sm:$0xff]
    %v8438 = vld [vmem:[#allocation2 + $0x1dd8] sm:$0xff]
    %v8439 = vld [vmem:[#allocation2 + $0x1de0] sm:$0xff]
    %v8440 = vld [vmem:[#allocation2 + $0x1de8] sm:$0xff]
    %v8441 = vld [vmem:[#allocation2 + $0x1df0] sm:$0xff]
    %v8442 = vld [vmem:[#allocation2 + $0x1df8] sm:$0xff]
    %v8443 = vld [vmem:[#allocation2 + $0x1e00] sm:$0xff]
    %v8444 = vld [vmem:[#allocation2 + $0x1e08] sm:$0xff]
    %v8445 = vld [vmem:[#allocation2 + $0x1e10] sm:$0xff]
    %v8446 = vld [vmem:[#allocation2 + $0x1ea8] sm:$0x1]
    %v8447 = vlaneseq
    %v8448 = vshrl.u32 %v8447, 7
    %v8449 = vsub.s32 0, %v8448
    %v8450 = vrot.slane %v8446, %v8449
    %8451 = vmatprep.subr.mxu0 0.0
    %8452 = vmatpush1.msra.mxu0 %v8430
    %8453 = vmatprep.subr.mxu0 0.0
    %8454 = vmatpush1.msra.mxu0 %v8431
    %8455 = vmatprep.subr.mxu0 0.0
    %8456 = vmatpush1.msra.mxu0 %v8432
    %8457 = vmatprep.subr.mxu0 0.0
    %8458 = vmatpush1.msra.mxu0 %v8433
    %8459 = vmatprep.subr.mxu0 0.0
    %8460 = vmatpush1.msra.mxu0 %v8434
    %8461 = vmatprep.subr.mxu0 0.0
    %8462 = vmatpush1.msra.mxu0 %v8435
    %8463 = vmatprep.subr.mxu0 0.0
    %8464 = vmatpush1.msra.mxu0 %v8436
    %8465 = vmatprep.subr.mxu0 0.0
    %8466 = vmatpush1.msra.mxu0 %v8437
    %8467 = vmatprep.subr.mxu0 0.0
    %8468 = vmatpush1.msra.mxu0 %v8438
    %8469 = vmatprep.subr.mxu0 0.0
    %8470 = vmatpush1.msra.mxu0 %v8439
    %8471 = vmatprep.subr.mxu0 0.0
    %8472 = vmatpush1.msra.mxu0 %v8440
    %8473 = vmatprep.subr.mxu0 0.0
    %8474 = vmatpush1.msra.mxu0 %v8441
    %8475 = vmatprep.subr.mxu0 0.0
    %8476 = vmatpush1.msra.mxu0 %v8442
    %8477 = vmatprep.subr.mxu0 0.0
    %8478 = vmatpush1.msra.mxu0 %v8443
    %8479 = vmatprep.subr.mxu0 0.0
    %8480 = vmatpush1.msra.mxu0 %v8444
    %8481 = vmatprep.subr.mxu0 0.0
    %8482 = vmatpush1.msra.mxu0 %v8445
    %8483 = vmatprep.subr.mxu0 0.0
    %8484 = vmatpush1.msra.mxu0 0.0
    %8485 = vmatprep.subr.mxu0 0.0
    %8486 = vmatpush1.msra.mxu0 0.0
    %8487 = vmatprep.subr.mxu0 0.0
    %8488 = vmatpush1.msra.mxu0 0.0
    %8489 = vmatprep.subr.mxu0 0.0
    %8490 = vmatpush1.msra.mxu0 0.0
    %8491 = vmatprep.subr.mxu0 0.0
    %8492 = vmatpush1.msra.mxu0 0.0
    %8493 = vmatprep.subr.mxu0 0.0
    %8494 = vmatpush1.msra.mxu0 0.0
    %8495 = vmatprep.subr.mxu0 0.0
    %8496 = vmatpush1.msra.mxu0 0.0
    %8497 = vmatprep.subr.mxu0 0.0
    %8498 = vmatpush1.msra.mxu0 0.0
    %8499 = vmatprep.subr.mxu0 0.0
    %8500 = vmatpush1.msra.mxu0 0.0
    %8501 = vmatprep.subr.mxu0 0.0
    %8502 = vmatpush1.msra.mxu0 0.0
    %8503 = vmatprep.subr.mxu0 0.0
    %8504 = vmatpush1.msra.mxu0 0.0
    %8505 = vmatprep.subr.mxu0 0.0
    %8506 = vmatpush1.msra.mxu0 0.0
    %8507 = vmatprep.subr.mxu0 0.0
    %8508 = vmatpush1.msra.mxu0 0.0
    %8509 = vmatprep.subr.mxu0 0.0
    %8510 = vmatpush1.msra.mxu0 0.0
    %8511 = vmatprep.subr.mxu0 0.0
    %8512 = vmatpush1.msra.mxu0 0.0
    %8513 = vmatprep.subr.mxu0 0.0
    %8514 = vmatpush1.msra.mxu0 0.0
    %8515 = vmatprep.mubr.f32.mxu0 0.0
    %8516 = vmatmul.mubr.f32.gmra.mrb[0].mxu0 %v8239
    %v8517 = vpop.f32.mrb[0].mxu0
    %v8518 = vadd.f32 %v8450, %v8517
    %v8519 = vpop.f32.mrb[0].mxu0
    %8520 = vdwg.mxu0
    %v8521 = vlaneseq
    %v8522 = vshrl.u32 %v8521, 7
    %v8523 = vsub.s32 0, %v8522
    %v8524 = vrot.slane %v8336, %v8523
    %v8525 = vmul.f32 %v8427, %v8524
    %v8526 = vld [vmem:[#allocation2 + $0x1eb8] sm:$0xff]
    %v8527 = vld [vmem:[#allocation2 + $0x1ec0] sm:$0xff]
    %v8528 = vld [vmem:[#allocation2 + $0x1ec8] sm:$0xff]
    %v8529 = vld [vmem:[#allocation2 + $0x1ed0] sm:$0xff]
    %v8530 = vld [vmem:[#allocation2 + $0x1ed8] sm:$0xff]
    %v8531 = vld [vmem:[#allocation2 + $0x1ee0] sm:$0xff]
    %v8532 = vld [vmem:[#allocation2 + $0x1ee8] sm:$0xff]
    %v8533 = vld [vmem:[#allocation2 + $0x1ef0] sm:$0xff]
    %v8534 = vld [vmem:[#allocation2 + $0x1ef8] sm:$0xff]
    %v8535 = vld [vmem:[#allocation2 + $0x1f00] sm:$0xff]
    %v8536 = vld [vmem:[#allocation2 + $0x1f08] sm:$0xff]
    %v8537 = vld [vmem:[#allocation2 + $0x1f10] sm:$0xff]
    %v8538 = vld [vmem:[#allocation2 + $0x1f18] sm:$0xff]
    %v8539 = vld [vmem:[#allocation2 + $0x1f20] sm:$0xff]
    %v8540 = vld [vmem:[#allocation2 + $0x1f28] sm:$0xff]
    %v8541 = vld [vmem:[#allocation2 + $0x1f30] sm:$0xff]
    %8542 = vmatprep.subr.mxu0 0.0
    %8543 = vmatpush1.msra.mxu0 %v8526
    %8544 = vmatprep.subr.mxu0 0.0
    %8545 = vmatpush1.msra.mxu0 %v8527
    %8546 = vmatprep.subr.mxu0 0.0
    %8547 = vmatpush1.msra.mxu0 %v8528
    %8548 = vmatprep.subr.mxu0 0.0
    %8549 = vmatpush1.msra.mxu0 %v8529
    %8550 = vmatprep.subr.mxu0 0.0
    %8551 = vmatpush1.msra.mxu0 %v8530
    %8552 = vmatprep.subr.mxu0 0.0
    %8553 = vmatpush1.msra.mxu0 %v8531
    %8554 = vmatprep.subr.mxu0 0.0
    %8555 = vmatpush1.msra.mxu0 %v8532
    %8556 = vmatprep.subr.mxu0 0.0
    %8557 = vmatpush1.msra.mxu0 %v8533
    %8558 = vmatprep.subr.mxu0 0.0
    %8559 = vmatpush1.msra.mxu0 %v8534
    %8560 = vmatprep.subr.mxu0 0.0
    %8561 = vmatpush1.msra.mxu0 %v8535
    %8562 = vmatprep.subr.mxu0 0.0
    %8563 = vmatpush1.msra.mxu0 %v8536
    %8564 = vmatprep.subr.mxu0 0.0
    %8565 = vmatpush1.msra.mxu0 %v8537
    %8566 = vmatprep.subr.mxu0 0.0
    %8567 = vmatpush1.msra.mxu0 %v8538
    %8568 = vmatprep.subr.mxu0 0.0
    %8569 = vmatpush1.msra.mxu0 %v8539
    %8570 = vmatprep.subr.mxu0 0.0
    %8571 = vmatpush1.msra.mxu0 %v8540
    %8572 = vmatprep.subr.mxu0 0.0
    %8573 = vmatpush1.msra.mxu0 %v8541
    %8574 = vmatprep.subr.mxu0 0.0
    %8575 = vmatpush1.msra.mxu0 0.0
    %8576 = vmatprep.subr.mxu0 0.0
    %8577 = vmatpush1.msra.mxu0 0.0
    %8578 = vmatprep.subr.mxu0 0.0
    %8579 = vmatpush1.msra.mxu0 0.0
    %8580 = vmatprep.subr.mxu0 0.0
    %8581 = vmatpush1.msra.mxu0 0.0
    %8582 = vmatprep.subr.mxu0 0.0
    %8583 = vmatpush1.msra.mxu0 0.0
    %8584 = vmatprep.subr.mxu0 0.0
    %8585 = vmatpush1.msra.mxu0 0.0
    %8586 = vmatprep.subr.mxu0 0.0
    %8587 = vmatpush1.msra.mxu0 0.0
    %8588 = vmatprep.subr.mxu0 0.0
    %8589 = vmatpush1.msra.mxu0 0.0
    %8590 = vmatprep.subr.mxu0 0.0
    %8591 = vmatpush1.msra.mxu0 0.0
    %8592 = vmatprep.subr.mxu0 0.0
    %8593 = vmatpush1.msra.mxu0 0.0
    %8594 = vmatprep.subr.mxu0 0.0
    %8595 = vmatpush1.msra.mxu0 0.0
    %8596 = vmatprep.subr.mxu0 0.0
    %8597 = vmatpush1.msra.mxu0 0.0
    %8598 = vmatprep.subr.mxu0 0.0
    %8599 = vmatpush1.msra.mxu0 0.0
    %8600 = vmatprep.subr.mxu0 0.0
    %8601 = vmatpush1.msra.mxu0 0.0
    %8602 = vmatprep.subr.mxu0 0.0
    %8603 = vmatpush1.msra.mxu0 0.0
    %8604 = vmatprep.subr.mxu0 0.0
    %8605 = vmatpush1.msra.mxu0 0.0
    %8606 = vmatprep.mubr.f32.mxu0 0.0
    %8607 = vmatmul.mubr.f32.gmra.mrb[0].mxu0 %v8525
    %v8608 = vpop.f32.mrb[0].mxu0
    %v8609 = vadd.f32 0.0, %v8608
    %v8610 = vpop.f32.mrb[0].mxu0
    %8611 = vdwg.mxu0
    %v8612 = vmul.f32 %v8609, 0.5
    %v8613 = vsel %vm8242, %v8612, -inf
    %v8614 = vrot.slane %v8613, 4
    %v8615 = vmax.f32 %v8613, %v8614
    %v8616 = vrot.slane %v8615, 2
    %v8617 = vmax.f32 %v8615, %v8616
    %v8618 = vrot.slane %v8617, 1
    %v8619 = vmax.f32 %v8617, %v8618
    %v8620 = vsub.f32 %v8612, %v8619
    %v8621 = vmul.f32 %v8620, 1.442695
    %v8622 = vpow.pop %v8621
    %v8623 = vsel %vm8242, %v8622, 0.0
    %v8624 = vrot.slane %v8623, 4
    %v8625 = vadd.f32 %v8623, %v8624
    %v8626 = vrot.slane %v8625, 2
    %v8627 = vadd.f32 %v8625, %v8626
    %v8628 = vrot.slane %v8627, 1
    %v8629 = vadd.f32 %v8627, %v8628
    %v8630 = vrcp.pop %v8629
    %v8631 = vmul.f32 %v8622, %v8630
    %v8632 = vld [vmem:[#allocation2 + $0x1f38] sm:$0xff]
    %v8633 = vld [vmem:[#allocation2 + $0x1f40] sm:$0xff]
    %v8634 = vld [vmem:[#allocation2 + $0x1f48] sm:$0xff]
    %v8635 = vld [vmem:[#allocation2 + $0x1f50] sm:$0xff]
    %v8636 = vld [vmem:[#allocation2 + $0x1f58] sm:$0xff]
    %v8637 = vld [vmem:[#allocation2 + $0x1f60] sm:$0xff]
    %v8638 = vld [vmem:[#allocation2 + $0x1f68] sm:$0xff]
    %v8639 = vld [vmem:[#allocation2 + $0x1f70] sm:$0xff]
    %v8640 = vld [vmem:[#allocation2 + $0x1f78] sm:$0xff]
    %v8641 = vld [vmem:[#allocation2 + $0x1f80] sm:$0xff]
    %v8642 = vld [vmem:[#allocation2 + $0x1f88] sm:$0xff]
    %v8643 = vld [vmem:[#allocation2 + $0x1f90] sm:$0xff]
    %v8644 = vld [vmem:[#allocation2 + $0x1f98] sm:$0xff]
    %v8645 = vld [vmem:[#allocation2 + $0x1fa0] sm:$0xff]
    %v8646 = vld [vmem:[#allocation2 + $0x1fa8] sm:$0xff]
    %v8647 = vld [vmem:[#allocation2 + $0x1fb0] sm:$0xff]
    %8648 = vmatprep.subr.mxu0 0.0
    %8649 = vmatpush1.msra.mxu0 %v8632
    %8650 = vmatprep.subr.mxu0 0.0
    %8651 = vmatpush1.msra.mxu0 %v8633
    %8652 = vmatprep.subr.mxu0 0.0
    %8653 = vmatpush1.msra.mxu0 %v8634
    %8654 = vmatprep.subr.mxu0 0.0
    %8655 = vmatpush1.msra.mxu0 %v8635
    %8656 = vmatprep.subr.mxu0 0.0
    %8657 = vmatpush1.msra.mxu0 %v8636
    %8658 = vmatprep.subr.mxu0 0.0
    %8659 = vmatpush1.msra.mxu0 %v8637
    %8660 = vmatprep.subr.mxu0 0.0
    %8661 = vmatpush1.msra.mxu0 %v8638
    %8662 = vmatprep.subr.mxu0 0.0
    %8663 = vmatpush1.msra.mxu0 %v8639
    %8664 = vmatprep.subr.mxu0 0.0
    %8665 = vmatpush1.msra.mxu0 %v8640
    %8666 = vmatprep.subr.mxu0 0.0
    %8667 = vmatpush1.msra.mxu0 %v8641
    %8668 = vmatprep.subr.mxu0 0.0
    %8669 = vmatpush1.msra.mxu0 %v8642
    %8670 = vmatprep.subr.mxu0 0.0
    %8671 = vmatpush1.msra.mxu0 %v8643
    %8672 = vmatprep.subr.mxu0 0.0
    %8673 = vmatpush1.msra.mxu0 %v8644
    %8674 = vmatprep.subr.mxu0 0.0
    %8675 = vmatpush1.msra.mxu0 %v8645
    %8676 = vmatprep.subr.mxu0 0.0
    %8677 = vmatpush1.msra.mxu0 %v8646
    %8678 = vmatprep.subr.mxu0 0.0
    %8679 = vmatpush1.msra.mxu0 %v8647
    %8680 = vmatprep.subr.mxu0 0.0
    %8681 = vmatpush1.msra.mxu0 0.0
    %8682 = vmatprep.subr.mxu0 0.0
    %8683 = vmatpush1.msra.mxu0 0.0
    %8684 = vmatprep.subr.mxu0 0.0
    %8685 = vmatpush1.msra.mxu0 0.0
    %8686 = vmatprep.subr.mxu0 0.0
    %8687 = vmatpush1.msra.mxu0 0.0
    %8688 = vmatprep.subr.mxu0 0.0
    %8689 = vmatpush1.msra.mxu0 0.0
    %8690 = vmatprep.subr.mxu0 0.0
    %8691 = vmatpush1.msra.mxu0 0.0
    %8692 = vmatprep.subr.mxu0 0.0
    %8693 = vmatpush1.msra.mxu0 0.0
    %8694 = vmatprep.subr.mxu0 0.0
    %8695 = vmatpush1.msra.mxu0 0.0
    %8696 = vmatprep.subr.mxu0 0.0
    %8697 = vmatpush1.msra.mxu0 0.0
    %8698 = vmatprep.subr.mxu0 0.0
    %8699 = vmatpush1.msra.mxu0 0.0
    %8700 = vmatprep.subr.mxu0 0.0
    %8701 = vmatpush1.msra.mxu0 0.0
    %8702 = vmatprep.subr.mxu0 0.0
    %8703 = vmatpush1.msra.mxu0 0.0
    %8704 = vmatprep.subr.mxu0 0.0
    %8705 = vmatpush1.msra.mxu0 0.0
    %8706 = vmatprep.subr.mxu0 0.0
    %8707 = vmatpush1.msra.mxu0 0.0
    %8708 = vmatprep.subr.mxu0 0.0
    %8709 = vmatpush1.msra.mxu0 0.0
    %8710 = vmatprep.subr.mxu0 0.0
    %8711 = vmatpush1.msra.mxu0 0.0
    %8712 = vmatprep.mubr.f32.mxu0 0.0
    %8713 = vmatmul.mubr.f32.gmra.mrb[0].mxu0 %v8631
    %v8714 = vpop.f32.mrb[0].mxu0
    %v8715 = vadd.f32 0.0, %v8714
    %v8716 = vpop.f32.mrb[0].mxu0
    %8717 = vdwg.mxu0
    %v8718 = vmul.f32 %v8715, %v8518
    %v8719 = vsel %vm8242, %v8718, 0.0
    %v8720 = vrot.slane %v8719, 4
    %v8721 = vadd.f32 %v8719, %v8720
    %v8722 = vrot.slane %v8721, 2
    %v8723 = vadd.f32 %v8721, %v8722
    %v8724 = vrot.slane %v8723, 1
    %v8725 = vadd.f32 %v8723, %v8724
    %v8726 = vld [vmem:[#allocation2 + $0x1e18] sm:$0xff]
    %v8727 = vld [vmem:[#allocation2 + $0x1e20] sm:$0xff]
    %v8728 = vld [vmem:[#allocation2 + $0x1e28] sm:$0xff]
    %v8729 = vld [vmem:[#allocation2 + $0x1e30] sm:$0xff]
    %v8730 = vld [vmem:[#allocation2 + $0x1e38] sm:$0xff]
    %v8731 = vld [vmem:[#allocation2 + $0x1e40] sm:$0xff]
    %v8732 = vld [vmem:[#allocation2 + $0x1e48] sm:$0xff]
    %v8733 = vld [vmem:[#allocation2 + $0x1e50] sm:$0xff]
    %v8734 = vld [vmem:[#allocation2 + $0x1e58] sm:$0xff]
    %v8735 = vld [vmem:[#allocation2 + $0x1e60] sm:$0xff]
    %v8736 = vld [vmem:[#allocation2 + $0x1e68] sm:$0xff]
    %v8737 = vld [vmem:[#allocation2 + $0x1e70] sm:$0xff]
    %v8738 = vld [vmem:[#allocation2 + $0x1e78] sm:$0xff]
    %v8739 = vld [vmem:[#allocation2 + $0x1e80] sm:$0xff]
    %v8740 = vld [vmem:[#allocation2 + $0x1e88] sm:$0xff]
    %v8741 = vld [vmem:[#allocation2 + $0x1e90] sm:$0xff]
    %v8742 = vld [vmem:[#allocation2 + $0x1eb0] sm:$0x1]
    %8743 = vmatprep.subr.mxu0 0.0
    %8744 = vmatpush1.msra.mxu0 %v8726
    %8745 = vmatprep.subr.mxu0 0.0
    %8746 = vmatpush1.msra.mxu0 %v8727
    %8747 = vmatprep.subr.mxu0 0.0
    %8748 = vmatpush1.msra.mxu0 %v8728
    %8749 = vmatprep.subr.mxu0 0.0
    %8750 = vmatpush1.msra.mxu0 %v8729
    %8751 = vmatprep.subr.mxu0 0.0
    %8752 = vmatpush1.msra.mxu0 %v8730
    %8753 = vmatprep.subr.mxu0 0.0
    %8754 = vmatpush1.msra.mxu0 %v8731
    %8755 = vmatprep.subr.mxu0 0.0
    %8756 = vmatpush1.msra.mxu0 %v8732
    %8757 = vmatprep.subr.mxu0 0.0
    %8758 = vmatpush1.msra.mxu0 %v8733
    %8759 = vmatprep.subr.mxu0 0.0
    %8760 = vmatpush1.msra.mxu0 %v8734
    %8761 = vmatprep.subr.mxu0 0.0
    %8762 = vmatpush1.msra.mxu0 %v8735
    %8763 = vmatprep.subr.mxu0 0.0
    %8764 = vmatpush1.msra.mxu0 %v8736
    %8765 = vmatprep.subr.mxu0 0.0
    %8766 = vmatpush1.msra.mxu0 %v8737
    %8767 = vmatprep.subr.mxu0 0.0
    %8768 = vmatpush1.msra.mxu0 %v8738
    %8769 = vmatprep.subr.mxu0 0.0
    %8770 = vmatpush1.msra.mxu0 %v8739
    %8771 = vmatprep.subr.mxu0 0.0
    %8772 = vmatpush1.msra.mxu0 %v8740
    %8773 = vmatprep.subr.mxu0 0.0
    %8774 = vmatpush1.msra.mxu0 %v8741
    %8775 = vmatprep.subr.mxu0 0.0
    %8776 = vmatpush1.msra.mxu0 0.0
    %8777 = vmatprep.subr.mxu0 0.0
    %8778 = vmatpush1.msra.mxu0 0.0
    %8779 = vmatprep.subr.mxu0 0.0
    %8780 = vmatpush1.msra.mxu0 0.0
    %8781 = vmatprep.subr.mxu0 0.0
    %8782 = vmatpush1.msra.mxu0 0.0
    %8783 = vmatprep.subr.mxu0 0.0
    %8784 = vmatpush1.msra.mxu0 0.0
    %8785 = vmatprep.subr.mxu0 0.0
    %8786 = vmatpush1.msra.mxu0 0.0
    %8787 = vmatprep.subr.mxu0 0.0
    %8788 = vmatpush1.msra.mxu0 0.0
    %8789 = vmatprep.subr.mxu0 0.0
    %8790 = vmatpush1.msra.mxu0 0.0
    %8791 = vmatprep.subr.mxu0 0.0
    %8792 = vmatpush1.msra.mxu0 0.0
    %8793 = vmatprep.subr.mxu0 0.0
    %8794 = vmatpush1.msra.mxu0 0.0
    %8795 = vmatprep.subr.mxu0 0.0
    %8796 = vmatpush1.msra.mxu0 0.0
    %8797 = vmatprep.subr.mxu0 0.0
    %8798 = vmatpush1.msra.mxu0 0.0
    %8799 = vmatprep.subr.mxu0 0.0
    %8800 = vmatpush1.msra.mxu0 0.0
    %8801 = vmatprep.subr.mxu0 0.0
    %8802 = vmatpush1.msra.mxu0 0.0
    %8803 = vmatprep.subr.mxu0 0.0
    %8804 = vmatpush1.msra.mxu0 0.0
    %8805 = vmatprep.subr.mxu0 0.0
    %8806 = vmatpush1.msra.mxu0 0.0
    %8807 = vmatprep.mubr.f32.mxu0 0.0
    %8808 = vmatmul.mubr.f32.gmra.mrb[0].mxu0 %v8725
    %v8809 = vpop.f32.mrb[0].mxu0
    %v8810 = vadd.f32 %v8742, %v8809
    %v8811 = vpop.f32.mrb[0].mxu0
    %8812 = vdwg.mxu0
    %v8813 = vld [vmem:[#allocation2 + $0x1fb8] sm:$0xff]
    %v8814 = vld [vmem:[#allocation2 + $0x1fc0] sm:$0xff]
    %v8815 = vld [vmem:[#allocation2 + $0x1fc8] sm:$0xff]
    %v8816 = vld [vmem:[#allocation2 + $0x1fd0] sm:$0xff]
    %v8817 = vld [vmem:[#allocation2 + $0x1fd8] sm:$0xff]
    %v8818 = vld [vmem:[#allocation2 + $0x1fe0] sm:$0xff]
    %v8819 = vld [vmem:[#allocation2 + $0x1fe8] sm:$0xff]
    %v8820 = vld [vmem:[#allocation2 + $0x1ff0] sm:$0xff]
    %v8821 = vld [vmem:[#allocation2 + $0x1ff8] sm:$0xff]
    %v8822 = vld [vmem:[#allocation2 + $0x2000] sm:$0xff]
    %v8823 = vld [vmem:[#allocation2 + $0x2008] sm:$0xff]
    %v8824 = vld [vmem:[#allocation2 + $0x2010] sm:$0xff]
    %v8825 = vld [vmem:[#allocation2 + $0x2018] sm:$0xff]
    %v8826 = vld [vmem:[#allocation2 + $0x2020] sm:$0xff]
    %v8827 = vld [vmem:[#allocation2 + $0x2028] sm:$0xff]
    %v8828 = vld [vmem:[#allocation2 + $0x2030] sm:$0xff]
    %v8829 = vld [vmem:[#allocation2 + $0x2038] sm:$0x1]
    %8830 = vmatprep.subr.mxu0 0.0
    %8831 = vmatpush1.msra.mxu0 %v8813
    %8832 = vmatprep.subr.mxu0 0.0
    %8833 = vmatpush1.msra.mxu0 %v8814
    %8834 = vmatprep.subr.mxu0 0.0
    %8835 = vmatpush1.msra.mxu0 %v8815
    %8836 = vmatprep.subr.mxu0 0.0
    %8837 = vmatpush1.msra.mxu0 %v8816
    %8838 = vmatprep.subr.mxu0 0.0
    %8839 = vmatpush1.msra.mxu0 %v8817
    %8840 = vmatprep.subr.mxu0 0.0
    %8841 = vmatpush1.msra.mxu0 %v8818
    %8842 = vmatprep.subr.mxu0 0.0
    %8843 = vmatpush1.msra.mxu0 %v8819
    %8844 = vmatprep.subr.mxu0 0.0
    %8845 = vmatpush1.msra.mxu0 %v8820
    %8846 = vmatprep.subr.mxu0 0.0
    %8847 = vmatpush1.msra.mxu0 %v8821
    %8848 = vmatprep.subr.mxu0 0.0
    %8849 = vmatpush1.msra.mxu0 %v8822
    %8850 = vmatprep.subr.mxu0 0.0
    %8851 = vmatpush1.msra.mxu0 %v8823
    %8852 = vmatprep.subr.mxu0 0.0
    %8853 = vmatpush1.msra.mxu0 %v8824
    %8854 = vmatprep.subr.mxu0 0.0
    %8855 = vmatpush1.msra.mxu0 %v8825
    %8856 = vmatprep.subr.mxu0 0.0
    %8857 = vmatpush1.msra.mxu0 %v8826
    %8858 = vmatprep.subr.mxu0 0.0
    %8859 = vmatpush1.msra.mxu0 %v8827
    %8860 = vmatprep.subr.mxu0 0.0
    %8861 = vmatpush1.msra.mxu0 %v8828
    %8862 = vmatprep.subr.mxu0 0.0
    %8863 = vmatpush1.msra.mxu0 0.0
    %8864 = vmatprep.subr.mxu0 0.0
    %8865 = vmatpush1.msra.mxu0 0.0
    %8866 = vmatprep.subr.mxu0 0.0
    %8867 = vmatpush1.msra.mxu0 0.0
    %8868 = vmatprep.subr.mxu0 0.0
    %8869 = vmatpush1.msra.mxu0 0.0
    %8870 = vmatprep.subr.mxu0 0.0
    %8871 = vmatpush1.msra.mxu0 0.0
    %8872 = vmatprep.subr.mxu0 0.0
    %8873 = vmatpush1.msra.mxu0 0.0
    %8874 = vmatprep.subr.mxu0 0.0
    %8875 = vmatpush1.msra.mxu0 0.0
    %8876 = vmatprep.subr.mxu0 0.0
    %8877 = vmatpush1.msra.mxu0 0.0
    %8878 = vmatprep.subr.mxu0 0.0
    %8879 = vmatpush1.msra.mxu0 0.0
    %8880 = vmatprep.subr.mxu0 0.0
    %8881 = vmatpush1.msra.mxu0 0.0
    %8882 = vmatprep.subr.mxu0 0.0
    %8883 = vmatpush1.msra.mxu0 0.0
    %8884 = vmatprep.subr.mxu0 0.0
    %8885 = vmatpush1.msra.mxu0 0.0
    %8886 = vmatprep.subr.mxu0 0.0
    %8887 = vmatpush1.msra.mxu0 0.0
    %8888 = vmatprep.subr.mxu0 0.0
    %8889 = vmatpush1.msra.mxu0 0.0
    %8890 = vmatprep.subr.mxu0 0.0
    %8891 = vmatpush1.msra.mxu0 0.0
    %8892 = vmatprep.subr.mxu0 0.0
    %8893 = vmatpush1.msra.mxu0 0.0
    %8894 = vmatprep.mubr.f32.mxu0 0.0
    %8895 = vmatmul.mubr.f32.gmra.mrb[0].mxu0 %v8810
    %v8896 = vpop.f32.mrb[0].mxu0
    %v8897 = vadd.f32 %v8829, %v8896
    %v8898 = vpop.f32.mrb[0].mxu0
    %8899 = vdwg.mxu0
    %vm8900 = vcmask 0
    %8901 = vst.msk [vmem:[#allocation5] sm:$0x1] %vm8900, %v8897
    // Predicated region
    $region14: #{forward.1} parent=1 // pred_check
      _
    $region15: #{forward.1} parent=1 // pred_check_branch
      %8903 = sbr.rel (0) target = $region17
    $region16: #{forward.1} parent=1 // pred_region
      %s8905 = ssub.s32 16, 16
      %8906 = vsyncadd [#allocation4], %s8905
      %s8908 = sshll.u32 [#allocation5], 4
      %s8909 = int_to_ptr.vmem [resolvable:$true] %s8908
      %8911 = dma.vmem_to_hbm [thread:$0]  %s8909, 16, %s2, [#allocation4]
    $region17: #{forward.1} parent=1 // pred_fallthru
      _
    // Predicated region
    $region18: #{forward.1} parent=1 // pred_check
      _
    $region19: #{forward.1} parent=1 // pred_check_branch
      %8913 = sbr.rel (0) target = $region21
    $region20: #{forward.1} parent=1 // pred_region
      %8914 = dma.done [#allocation4], 16
    $region21: #{forward.1} parent=1 // pred_fallthru
      _
    %8915 = vsyncpa [#allocation3], 1
    %8916 = vsyncpa [#allocation4], 1

</llo_original>
